<compile_context>
chip_gen: v6e
topology: v6e:2x2x1
jax: 0.10.0
libtpu: 0.0.40
codegen_flags: <defaults>
</compile_context>

<pallas_src>
import jax
import jax.numpy as jnp
from jax.experimental import pallas as pl
from jax.experimental.pallas import tpu as pltpu


# ----------------------------------------------------------------------------
# Config / synthetic weights
# ----------------------------------------------------------------------------

CFG = dict(
    image_size=32,
    patch_size=8,
    channels=3,
    hidden=32,
    heads=4,
    mlp_dim=64,
    layers=2,
    output_dim=16,   # scaled-down analogue of output_dim=768
    ln_eps=1e-5,
)

CLIP_MEAN = jnp.array([0.48145466, 0.4578275, 0.40821073], dtype=jnp.float32)
CLIP_STD = jnp.array([0.26862954, 0.26130258, 0.27577711], dtype=jnp.float32)

_LANE = 128
_SUB = 8


def _round_up(x, m):
    return -(-x // m) * m


def init_params(key, cfg):
    """Deterministic synthetic weights in the original (per-projection) layout."""
    C, P, D = cfg["channels"], cfg["patch_size"], cfg["hidden"]
    S = (cfg["image_size"] // P) ** 2 + 1   # +1 CLS token
    keys = iter(jax.random.split(key, 64))

    def nrm(shape, scale=0.02):
        return (scale * jax.random.normal(next(keys), shape)).astype(jnp.float32)

    params = {
        "patch_w": nrm((C * P * P, D)),          # conv [D,C,P,P] flattened, no bias (CLIP)
        "class_emb": nrm((D,)),
        "pos_emb": nrm((S, D)),
        "pre_ln_g": jnp.ones((D,), jnp.float32),
        "pre_ln_b": jnp.zeros((D,), jnp.float32),
        "layers": [],
        "proj_w": nrm((D, cfg["output_dim"])),
        "proj_b": jnp.zeros((cfg["output_dim"],), jnp.float32),
    }
    for _ in range(cfg["layers"]):
        params["layers"].append({
            "ln1_g": jnp.ones((D,), jnp.float32), "ln1_b": jnp.zeros((D,), jnp.float32),
            "q_w": nrm((D, D)), "q_b": jnp.zeros((D,), jnp.float32),
            "k_w": nrm((D, D)), "k_b": jnp.zeros((D,), jnp.float32),
            "v_w": nrm((D, D)), "v_b": jnp.zeros((D,), jnp.float32),
            "o_w": nrm((D, D)), "o_b": jnp.zeros((D,), jnp.float32),
            "ln2_g": jnp.ones((D,), jnp.float32), "ln2_b": jnp.zeros((D,), jnp.float32),
            "fc1_w": nrm((D, cfg["mlp_dim"])), "fc1_b": jnp.zeros((cfg["mlp_dim"],), jnp.float32),
            "fc2_w": nrm((cfg["mlp_dim"], D)), "fc2_b": jnp.zeros((D,), jnp.float32),
        })
    return params


def _pack_rows(named_tensors):
    """Pack 2-D (or 1-D, treated as (1,N)) tensors into one (R, 128) f32 buffer.

    Every tensor is placed at a sublane-aligned (multiple-of-8) row offset with its
    last dim zero-padded to 128 lanes.  Returns (packed, offsets) where
    offsets[name] = (row_start, rows, cols) for static in-kernel slicing.
    """
    offsets = {}
    blocks = []
    r = 0
    for name, a in named_tensors:
        a = jnp.asarray(a, jnp.float32)
        if a.ndim == 1:
            a = a[None, :]
        K, N = a.shape
        assert N <= _LANE, (name, a.shape)
        Kp = _round_up(K, _SUB)
        blk = jnp.zeros((Kp, _LANE), jnp.float32).at[:K, :N].set(a)
        offsets[name] = (r, K, N)
        blocks.append(blk)
        r += Kp
    return jnp.concatenate(blocks, axis=0), offsets


def prepare_packed_params(params, cfg):
    """Fold normalization / attention-scale / CLS+pos-emb and pack all weights into
    a single VMEM-resident buffer."""
    C, P, D = cfg["channels"], cfg["patch_size"], cfg["hidden"]
    Hn = cfg["heads"]
    Dh = D // Hn
    scale = Dh ** -0.5
    Np = (cfg["image_size"] // P) ** 2
    S = Np + 1
    S_pad = _round_up(S, _SUB)

    # CLIP pixel preprocessing ((x+1)/2 - mean)/std == x*(0.5/std) + (0.5-mean)/std,
    # which is linear, so fold it into the (linear) patch-embedding weights.
    ch_scale = 0.5 / CLIP_STD
    ch_shift = (0.5 - CLIP_MEAN) / CLIP_STD
    scale_vec = jnp.repeat(ch_scale, P * P)                      # channel-major (C,P,P) flatten
    shift_vec = jnp.repeat(ch_shift, P * P)
    patch_w_eff = scale_vec[:, None] * params["patch_w"]         # (C*P*P, D)
    patch_b_eff = shift_vec @ params["patch_w"]                  # (D,)

    # Token bias: row 0 = class_emb + pos_emb[0]; rows 1:S = pos_emb[1:] + patch bias;
    # padded rows (S:S_pad) are zeros (they only ever act as masked attention keys).
    tok_bias = params["pos_emb"] + patch_b_eff[None, :]
    tok_bias = tok_bias.at[0].set(params["class_emb"] + params["pos_emb"][0])
    tok_bias = jnp.pad(tok_bias, ((0, S_pad - S), (0, 0)))

    # Additive softmax mask for padded key columns.
    key_bias = jnp.where(jnp.arange(S_pad) < S, 0.0, -1e9).astype(jnp.float32)[None, :]

    named = [
        ("patch_w", patch_w_eff),
        ("tok_bias", tok_bias),
        ("key_bias", key_bias),
        ("pre_g", params["pre_ln_g"]),
        ("pre_b", params["pre_ln_b"]),
    ]
    for l, lyr in enumerate(params["layers"]):
        # Fused QKV with the attention scale folded into Q weight AND bias (matches a
        # reference that scales after the bias add).
        qkv_w = jnp.concatenate([lyr["q_w"] * scale, lyr["k_w"], lyr["v_w"]], axis=1)
        qkv_b = jnp.concatenate([lyr["q_b"] * scale, lyr["k_b"], lyr["v_b"]])
        named += [
            (f"l{l}_ln1_g", lyr["ln1_g"]), (f"l{l}_ln1_b", lyr["ln1_b"]),
            (f"l{l}_qkv_w", qkv_w), (f"l{l}_qkv_b", qkv_b),
            (f"l{l}_o_w", lyr["o_w"]), (f"l{l}_o_b", lyr["o_b"]),
            (f"l{l}_ln2_g", lyr["ln2_g"]), (f"l{l}_ln2_b", lyr["ln2_b"]),
            (f"l{l}_fc1_w", lyr["fc1_w"]), (f"l{l}_fc1_b", lyr["fc1_b"]),
            (f"l{l}_fc2_w", lyr["fc2_w"]), (f"l{l}_fc2_b", lyr["fc2_b"]),
        ]
    named += [("proj_w", params["proj_w"]), ("proj_b", params["proj_b"])]

    return _pack_rows(named)


# ----------------------------------------------------------------------------
# Fused Pallas kernel: whole encoder forward, Bt images per grid step
# ----------------------------------------------------------------------------

def cloth_encoder_forward(cloth_images, packed_w, offsets, cfg=CFG, num_shards=None):
    B, C, H, W = cloth_images.shape
    P, D, Hn, L = cfg["patch_size"], cfg["hidden"], cfg["heads"], cfg["layers"]
    O = cfg["output_dim"]
    Dh = D // Hn
    eps = cfg["ln_eps"]
    gh, gw = H // P, W // P
    Np = gh * gw
    S = Np + 1
    S_pad = _round_up(S, _SUB)
    CPP = C * P * P

    if num_shards is None:
        # 2 parallel shards -> both TensorCores on v7x; on 1-TC v5e/v6e the extra
        # step is ~0.35us. Pass num_shards=1 to collapse to a single invocation.
        num_shards = 2 if (B % 2 == 0 and B >= 2) else 1
    assert B % num_shards == 0
    Bt = B // num_shards

    # TODO(synk): PIL ToPILImage + CLIPImageProcessor bicubic resize to 224x224 is
    # host-side preprocessing with no Pallas equivalent; only the (x+1)/2 rescale +
    # per-channel mean/std normalization is reproduced (folded into patch weights).
    # TODO(synk): patch extraction (NCHW -> [B, S_pad, C*P*P]) stays as one tiny XLA
    # reshape/transpose/pad; at real 224x224 scale it should move into the kernel via
    # a strided-DMA index_map to avoid the extra HBM round trip.
    patches = cloth_images.reshape(B, C, gh, P, gw, P)
    patches = patches.transpose(0, 2, 4, 1, 3, 5).reshape(B, Np, CPP)
    patches = jnp.pad(patches, ((0, 0), (1, S_pad - S), (0, 0)))      # CLS slot + seq pad

    def kernel(patches_ref, w_ref, out_ref):
        f32 = jnp.float32

        def get(name):
            r, k, n = offsets[name]
            return w_ref[r:r + k, 0:n]          # static slice of the packed weight buffer

        def layer_norm(x, g, b):
            mu = jnp.mean(x, axis=-1, keepdims=True)
            var = jnp.mean((x - mu) ** 2, axis=-1, keepdims=True)
            return (x - mu) * jax.lax.rsqrt(var + eps) * g + b

        def stack_rows(pieces):
            return pieces[0] if len(pieces) == 1 else jnp.concatenate(pieces, axis=0)

        # -- patch embedding over all folded images (pixel normalize folded into weights) --
        patches_2d = stack_rows([patches_ref[b] for b in range(Bt)])       # (Bt*S_pad, CPP)
        tok_bias = get("tok_bias")                                         # (S_pad, D)
        h = jnp.dot(patches_2d, get("patch_w"), preferred_element_type=f32)
        h = h + stack_rows([tok_bias] * Bt)

        # -- CLIP pre-layernorm --
        h = layer_norm(h, get("pre_g"), get("pre_b"))

        key_bias = get("key_bias")                                         # (1, S_pad)

        # -- transformer encoder (layers / images / heads statically unrolled) --
        for l in range(L):
            # self-attention block (pre-LN, fused QKV over all rows, ONE O-proj per layer)
            resid = h
            hn = layer_norm(h, get(f"l{l}_ln1_g"), get(f"l{l}_ln1_b"))
            qkv = (jnp.dot(hn, get(f"l{l}_qkv_w"), preferred_element_type=f32)
                   + get(f"l{l}_qkv_b"))
            q, k, v = qkv[:, :D], qkv[:, D:2 * D], qkv[:, 2 * D:3 * D]

            ctx_imgs = []
            for b in range(Bt):
                rows = slice(b * S_pad, (b + 1) * S_pad)
                qb, kb, vb = q[rows], k[rows], v[rows]
                head_ctx = []
                for hh in range(Hn):
                    cols = slice(hh * Dh, (hh + 1) * Dh)
                    # q is pre-scaled by Dh**-0.5 (folded into the QKV weights)
                    s = jax.lax.dot_general(qb[:, cols], kb[:, cols],
                                            (((1,), (1,)), ((), ())),
                                            preferred_element_type=f32)    # (S_pad, S_pad)
                    s = s + key_bias                                       # mask padded keys
                    s = s - jnp.max(s, axis=-1, keepdims=True)
                    p = jnp.exp(s)
                    p = p * pl.reciprocal(jnp.sum(p, axis=-1, keepdims=True), approx=True)
                    head_ctx.append(jnp.dot(p, vb[:, cols], preferred_element_type=f32))
                ctx_imgs.append(jnp.concatenate(head_ctx, axis=-1))        # (S_pad, D)
            ctx = stack_rows(ctx_imgs)                                     # (Bt*S_pad, D)
            attn = (jnp.dot(ctx, get(f"l{l}_o_w"), preferred_element_type=f32)
                    + get(f"l{l}_o_b"))
            h = resid + attn

            # MLP block (pre-LN, quick-GELU), batched over all folded rows
            resid = h
            hn = layer_norm(h, get(f"l{l}_ln2_g"), get(f"l{l}_ln2_b"))
            hn = (jnp.dot(hn, get(f"l{l}_fc1_w"), preferred_element_type=f32)
                  + get(f"l{l}_fc1_b"))
            hn = hn * jax.nn.sigmoid(1.702 * hn)                           # quick-GELU
            hn = (jnp.dot(hn, get(f"l{l}_fc2_w"), preferred_element_type=f32)
                  + get(f"l{l}_fc2_b"))
            h = resid + hn

        # -- CLS rows of last_hidden_state (no post-LN, matching module) -> projection --
        cls = stack_rows([h[b * S_pad:b * S_pad + 1, :] for b in range(Bt)])   # (Bt, D)
        out = jnp.dot(cls, get("proj_w"), preferred_element_type=f32) + get("proj_b")
        out_ref[0] = out.astype(out_ref.dtype)

    out = pl.pallas_call(
        kernel,
        out_shape=jax.ShapeDtypeStruct((num_shards, Bt, O), jnp.float32),
        grid=(num_shards,),
        in_specs=[
            pl.BlockSpec((Bt, S_pad, CPP), lambda i: (i, 0, 0)),   # Bt images per step
            pl.BlockSpec(packed_w.shape, lambda i: (0, 0)),        # one packed weight buffer
        ],
        out_specs=pl.BlockSpec((1, Bt, O), lambda i: (i, 0, 0)),
        compiler_params=pltpu.CompilerParams(dimension_semantics=("parallel",)),
    )(patches, packed_w)
    return out.reshape(B, O)


# ----------------------------------------------------------------------------
# Pure-JAX reference (high precision) for correctness checking
# ----------------------------------------------------------------------------

def reference_forward(cloth_images, params, cfg=CFG):
    hp = jax.lax.Precision.HIGHEST
    B, C, H, W = cloth_images.shape
    P, D, Hn = cfg["patch_size"], cfg["hidden"], cfg["heads"]
    Dh = D // Hn
    gh, gw = H // P, W // P
    eps = cfg["ln_eps"]

    v = (cloth_images + 1.0) * 0.5
    v = (v - CLIP_MEAN[None, :, None, None]) / CLIP_STD[None, :, None, None]
    patches = v.reshape(B, C, gh, P, gw, P).transpose(0, 2, 4, 1, 3, 5)
    patches = patches.reshape(B, gh * gw, C * P * P)
    pe = jnp.einsum('bnk,kd->bnd', patches, params["patch_w"], precision=hp)
    cls = jnp.broadcast_to(params["class_emb"][None, None, :], (B, 1, D))
    h = jnp.concatenate([cls, pe], axis=1) + params["pos_emb"][None]

    def ln(x, g, b):
        mu = x.mean(-1, keepdims=True)
        var = ((x - mu) ** 2).mean(-1, keepdims=True)
        return (x - mu) * jax.lax.rsqrt(var + eps) * g + b

    h = ln(h, params["pre_ln_g"], params["pre_ln_b"])
    S = h.shape[1]
    scale = Dh ** -0.5
    for lyr in params["layers"]:
        resid = h
        x = ln(h, lyr["ln1_g"], lyr["ln1_b"])
        q = (jnp.einsum('bsd,de->bse', x, lyr["q_w"], precision=hp) + lyr["q_b"]) * scale
        k = jnp.einsum('bsd,de->bse', x, lyr["k_w"], precision=hp) + lyr["k_b"]
        vv = jnp.einsum('bsd,de->bse', x, lyr["v_w"], precision=hp) + lyr["v_b"]

        def sh(t):
            return t.reshape(B, S, Hn, Dh).transpose(0, 2, 1, 3)

        qh, kh, vh = sh(q), sh(k), sh(vv)
        s = jnp.einsum('bhqd,bhkd->bhqk', qh, kh, precision=hp)
        p = jax.nn.softmax(s, axis=-1)
        a = jnp.einsum('bhqk,bhkd->bhqd', p, vh, precision=hp)
        a = a.transpose(0, 2, 1, 3).reshape(B, S, D)
        a = jnp.einsum('bsd,de->bse', a, lyr["o_w"], precision=hp) + lyr["o_b"]
        h = resid + a

        resid = h
        x = ln(h, lyr["ln2_g"], lyr["ln2_b"])
        x = jnp.einsum('bsd,de->bse', x, lyr["fc1_w"], precision=hp) + lyr["fc1_b"]
        x = x * jax.nn.sigmoid(1.702 * x)
        x = jnp.einsum('bsd,de->bse', x, lyr["fc2_w"], precision=hp) + lyr["fc2_b"]
        h = resid + x

    cls_feat = h[:, 0, :]
    return jnp.einsum('bd,do->bo', cls_feat, params["proj_w"], precision=hp) + params["proj_b"]


# ----------------------------------------------------------------------------

if __name__ == "__main__":
    key = jax.random.PRNGKey(0)
    k_img, k_par = jax.random.split(key)

    B = 4   # folded 2-per-step across 2 parallel grid steps
    cloth_images = jax.random.uniform(
        k_img, (B, CFG["channels"], CFG["image_size"], CFG["image_size"]),
        minval=-1.0, maxval=1.0, dtype=jnp.float32)

    params = init_params(k_par, CFG)
    packed_w, offsets = prepare_packed_params(params, CFG)

    out = cloth_encoder_forward(cloth_images, packed_w, offsets)
    out = jax.block_until_ready(out)

    assert out.shape == (B, CFG["output_dim"]), out.shape
    assert bool(jnp.all(jnp.isfinite(out)))

    ref = reference_forward(cloth_images, params)
    assert bool(jnp.allclose(out, ref, rtol=1e-2, atol=1e-2)), (out, ref)

    print("KERNEL_OK")
</pallas_src>

<mosaic_0001>
module attributes {stable_mosaic.version = 11 : i64} {
  func.func @kernel(%arg0: i32, %arg1: memref<2x24x192xf32, #tpu.memory_space<vmem>>, %arg2: memref<728x128xf32, #tpu.memory_space<vmem>>, %arg3: memref<1x2x16xf32, #tpu.memory_space<vmem>>) attributes {dimension_semantics = [#tpu.dimension_semantics<parallel>], iteration_bounds = array<i64: 2>, scalar_prefetch = 0 : i64, scratch_operands = 0 : i64, tpu.core_type = #tpu.core_type<tc>, window_params = [{transform_indices = @transform_0, window_bounds = array<i64: 2, 24, 192>}, {pipeline_mode = #tpu.pipeline_mode<synchronous>, transform_indices = @transform_1, window_bounds = array<i64: 728, 128>}, {transform_indices = @transform_2, window_bounds = array<i64: 1, 2, 16>}]} {
    %c0 = arith.constant 0 : index
    %c0_0 = arith.constant 0 : index
    %c0_1 = arith.constant 0 : index
    %0 = vector.load %arg1[%c0, %c0_0, %c0_1] : memref<2x24x192xf32, #tpu.memory_space<vmem>>, vector<1x24x192xf32>
    %1 = vector.shape_cast %0 : vector<1x24x192xf32> to vector<24x192xf32>
    %c1 = arith.constant 1 : index
    %c0_2 = arith.constant 0 : index
    %c0_3 = arith.constant 0 : index
    %2 = vector.load %arg1[%c1, %c0_2, %c0_3] : memref<2x24x192xf32, #tpu.memory_space<vmem>>, vector<1x24x192xf32>
    %3 = vector.shape_cast %2 : vector<1x24x192xf32> to vector<24x192xf32>
    %4 = tpu.concatenate %1, %3 in 0 : vector<24x192xf32>, vector<24x192xf32> -> vector<48x192xf32>
    %c192 = arith.constant 192 : index
    %c0_4 = arith.constant 0 : index
    %5 = vector.load %arg2[%c192, %c0_4] : memref<728x128xf32, #tpu.memory_space<vmem>>, vector<24x32xf32>
    %c0_5 = arith.constant 0 : index
    %c0_6 = arith.constant 0 : index
    %6 = vector.load %arg2[%c0_5, %c0_6] : memref<728x128xf32, #tpu.memory_space<vmem>>, vector<192x32xf32>
    %cst = arith.constant dense<0.000000e+00> : vector<48x32xf32>
    %7 = tpu.matmul %4, %6, %cst {dimension_numbers = #tpu.dot_dimension_numbers<[1], [0], [0], [1], [0, 0, 1, 1], [], []>} : vector<48x192xf32>, vector<192x32xf32>, vector<48x32xf32> -> vector<48x32xf32>
    %8 = tpu.concatenate %5, %5 in 0 : vector<24x32xf32>, vector<24x32xf32> -> vector<48x32xf32>
    %9 = arith.addf %7, %8 : vector<48x32xf32>
    %c224 = arith.constant 224 : index
    %c0_7 = arith.constant 0 : index
    %10 = vector.load %arg2[%c224, %c0_7] : memref<728x128xf32, #tpu.memory_space<vmem>>, vector<1x32xf32>
    %c232 = arith.constant 232 : index
    %c0_8 = arith.constant 0 : index
    %11 = vector.load %arg2[%c232, %c0_8] : memref<728x128xf32, #tpu.memory_space<vmem>>, vector<1x32xf32>
    %cst_9 = arith.constant dense<0.000000e+00> : vector<48xf32>
    %12 = vector.multi_reduction <add>, %9, %cst_9 [1] : vector<48x32xf32> to vector<48xf32>
    %13 = vector.shape_cast %12 : vector<48xf32> to vector<48x1xf32>
    %cst_10 = arith.constant 3.200000e+01 : f32
    %14 = vector.broadcast %cst_10 : f32 to vector<48x1xf32>
    %15 = arith.divf %13, %14 : vector<48x1xf32>
    %16 = vector.broadcast %15 : vector<48x1xf32> to vector<48x32xf32>
    %17 = arith.subf %9, %16 : vector<48x32xf32>
    %18 = arith.mulf %17, %17 : vector<48x32xf32>
    %cst_11 = arith.constant dense<0.000000e+00> : vector<48xf32>
    %19 = vector.multi_reduction <add>, %18, %cst_11 [1] : vector<48x32xf32> to vector<48xf32>
    %20 = vector.shape_cast %19 : vector<48xf32> to vector<48x1xf32>
    %cst_12 = arith.constant 3.200000e+01 : f32
    %21 = vector.broadcast %cst_12 : f32 to vector<48x1xf32>
    %22 = arith.divf %20, %21 : vector<48x1xf32>
    %23 = vector.broadcast %15 : vector<48x1xf32> to vector<48x32xf32>
    %24 = arith.subf %9, %23 : vector<48x32xf32>
    %cst_13 = arith.constant 9.99999974E-6 : f32
    %25 = vector.broadcast %cst_13 : f32 to vector<48x1xf32>
    %26 = arith.addf %22, %25 : vector<48x1xf32>
    %27 = math.rsqrt %26 : vector<48x1xf32>
    %28 = vector.broadcast %27 : vector<48x1xf32> to vector<48x32xf32>
    %29 = arith.mulf %24, %28 : vector<48x32xf32>
    %30 = vector.broadcast %10 : vector<1x32xf32> to vector<48x32xf32>
    %31 = arith.mulf %29, %30 : vector<48x32xf32>
    %32 = vector.broadcast %11 : vector<1x32xf32> to vector<48x32xf32>
    %33 = arith.addf %31, %32 : vector<48x32xf32>
    %c216 = arith.constant 216 : index
    %c0_14 = arith.constant 0 : index
    %34 = vector.load %arg2[%c216, %c0_14] : memref<728x128xf32, #tpu.memory_space<vmem>>, vector<1x24xf32>
    %c240 = arith.constant 240 : index
    %c0_15 = arith.constant 0 : index
    %35 = vector.load %arg2[%c240, %c0_15] : memref<728x128xf32, #tpu.memory_space<vmem>>, vector<1x32xf32>
    %c248 = arith.constant 248 : index
    %c0_16 = arith.constant 0 : index
    %36 = vector.load %arg2[%c248, %c0_16] : memref<728x128xf32, #tpu.memory_space<vmem>>, vector<1x32xf32>
    %cst_17 = arith.constant dense<0.000000e+00> : vector<48xf32>
    %37 = vector.multi_reduction <add>, %33, %cst_17 [1] : vector<48x32xf32> to vector<48xf32>
    %38 = vector.shape_cast %37 : vector<48xf32> to vector<48x1xf32>
    %cst_18 = arith.constant 3.200000e+01 : f32
    %39 = vector.broadcast %cst_18 : f32 to vector<48x1xf32>
    %40 = arith.divf %38, %39 : vector<48x1xf32>
    %41 = vector.broadcast %40 : vector<48x1xf32> to vector<48x32xf32>
    %42 = arith.subf %33, %41 : vector<48x32xf32>
    %43 = arith.mulf %42, %42 : vector<48x32xf32>
    %cst_19 = arith.constant dense<0.000000e+00> : vector<48xf32>
    %44 = vector.multi_reduction <add>, %43, %cst_19 [1] : vector<48x32xf32> to vector<48xf32>
    %45 = vector.shape_cast %44 : vector<48xf32> to vector<48x1xf32>
    %cst_20 = arith.constant 3.200000e+01 : f32
    %46 = vector.broadcast %cst_20 : f32 to vector<48x1xf32>
    %47 = arith.divf %45, %46 : vector<48x1xf32>
    %48 = vector.broadcast %40 : vector<48x1xf32> to vector<48x32xf32>
    %49 = arith.subf %33, %48 : vector<48x32xf32>
    %cst_21 = arith.constant 9.99999974E-6 : f32
    %50 = vector.broadcast %cst_21 : f32 to vector<48x1xf32>
    %51 = arith.addf %47, %50 : vector<48x1xf32>
    %52 = math.rsqrt %51 : vector<48x1xf32>
    %53 = vector.broadcast %52 : vector<48x1xf32> to vector<48x32xf32>
    %54 = arith.mulf %49, %53 : vector<48x32xf32>
    %55 = vector.broadcast %35 : vector<1x32xf32> to vector<48x32xf32>
    %56 = arith.mulf %54, %55 : vector<48x32xf32>
    %57 = vector.broadcast %36 : vector<1x32xf32> to vector<48x32xf32>
    %58 = arith.addf %56, %57 : vector<48x32xf32>
    %c256 = arith.constant 256 : index
    %c0_22 = arith.constant 0 : index
    %59 = vector.load %arg2[%c256, %c0_22] : memref<728x128xf32, #tpu.memory_space<vmem>>, vector<32x96xf32>
    %cst_23 = arith.constant dense<0.000000e+00> : vector<48x96xf32>
    %60 = tpu.matmul %58, %59, %cst_23 {dimension_numbers = #tpu.dot_dimension_numbers<[1], [0], [0], [1], [0, 0, 1, 1], [], []>} : vector<48x32xf32>, vector<32x96xf32>, vector<48x96xf32> -> vector<48x96xf32>
    %c288 = arith.constant 288 : index
    %c0_24 = arith.constant 0 : index
    %61 = vector.load %arg2[%c288, %c0_24] : memref<728x128xf32, #tpu.memory_space<vmem>>, vector<1x96xf32>
    %62 = vector.broadcast %61 : vector<1x96xf32> to vector<48x96xf32>
    %63 = arith.addf %60, %62 : vector<48x96xf32>
    %64 = vector.extract_strided_slice %63 {offsets = [0, 0], sizes = [48, 32], strides = [1, 1]} : vector<48x96xf32> to vector<48x32xf32>
    %65 = vector.extract_strided_slice %63 {offsets = [0, 32], sizes = [48, 32], strides = [1, 1]} : vector<48x96xf32> to vector<48x32xf32>
    %66 = vector.extract_strided_slice %63 {offsets = [0, 64], sizes = [48, 32], strides = [1, 1]} : vector<48x96xf32> to vector<48x32xf32>
    %67 = vector.extract_strided_slice %64 {offsets = [0, 0], sizes = [24, 32], strides = [1, 1]} : vector<48x32xf32> to vector<24x32xf32>
    %68 = vector.extract_strided_slice %65 {offsets = [0, 0], sizes = [24, 32], strides = [1, 1]} : vector<48x32xf32> to vector<24x32xf32>
    %69 = vector.extract_strided_slice %66 {offsets = [0, 0], sizes = [24, 32], strides = [1, 1]} : vector<48x32xf32> to vector<24x32xf32>
    %70 = vector.extract_strided_slice %67 {offsets = [0, 0], sizes = [24, 8], strides = [1, 1]} : vector<24x32xf32> to vector<24x8xf32>
    %71 = vector.extract_strided_slice %68 {offsets = [0, 0], sizes = [24, 8], strides = [1, 1]} : vector<24x32xf32> to vector<24x8xf32>
    %cst_25 = arith.constant dense<0.000000e+00> : vector<24x24xf32>
    %72 = tpu.matmul %70, %71, %cst_25 {dimension_numbers = #tpu.dot_dimension_numbers<[1], [1], [0], [0], [0, 0, 1, 0], [], []>} : vector<24x8xf32>, vector<24x8xf32>, vector<24x24xf32> -> vector<24x24xf32>
    %73 = vector.broadcast %34 : vector<1x24xf32> to vector<24x24xf32>
    %74 = arith.addf %72, %73 : vector<24x24xf32>
    %cst_26 = arith.constant dense<0xFF800000> : vector<24xf32>
    %75 = vector.multi_reduction <maximumf>, %74, %cst_26 [1] : vector<24x24xf32> to vector<24xf32>
    %76 = vector.shape_cast %75 : vector<24xf32> to vector<24x1xf32>
    %77 = vector.broadcast %76 : vector<24x1xf32> to vector<24x24xf32>
    %78 = arith.subf %74, %77 : vector<24x24xf32>
    %79 = math.exp %78 : vector<24x24xf32>
    %cst_27 = arith.constant dense<0.000000e+00> : vector<24xf32>
    %80 = vector.multi_reduction <add>, %79, %cst_27 [1] : vector<24x24xf32> to vector<24xf32>
    %81 = vector.shape_cast %80 : vector<24xf32> to vector<24x1xf32>
    %82 = tpu.reciprocal %81 {approx = true} : vector<24x1xf32> -> vector<24x1xf32>
    %83 = vector.broadcast %82 : vector<24x1xf32> to vector<24x24xf32>
    %84 = arith.mulf %79, %83 : vector<24x24xf32>
    %85 = vector.extract_strided_slice %69 {offsets = [0, 0], sizes = [24, 8], strides = [1, 1]} : vector<24x32xf32> to vector<24x8xf32>
    %cst_28 = arith.constant dense<0.000000e+00> : vector<24x8xf32>
    %86 = tpu.matmul %84, %85, %cst_28 {dimension_numbers = #tpu.dot_dimension_numbers<[1], [0], [0], [1], [0, 0, 1, 1], [], []>} : vector<24x24xf32>, vector<24x8xf32>, vector<24x8xf32> -> vector<24x8xf32>
    %87 = vector.extract_strided_slice %67 {offsets = [0, 8], sizes = [24, 8], strides = [1, 1]} : vector<24x32xf32> to vector<24x8xf32>
    %88 = vector.extract_strided_slice %68 {offsets = [0, 8], sizes = [24, 8], strides = [1, 1]} : vector<24x32xf32> to vector<24x8xf32>
    %cst_29 = arith.constant dense<0.000000e+00> : vector<24x24xf32>
    %89 = tpu.matmul %87, %88, %cst_29 {dimension_numbers = #tpu.dot_dimension_numbers<[1], [1], [0], [0], [0, 0, 1, 0], [], []>} : vector<24x8xf32>, vector<24x8xf32>, vector<24x24xf32> -> vector<24x24xf32>
    %90 = vector.broadcast %34 : vector<1x24xf32> to vector<24x24xf32>
    %91 = arith.addf %89, %90 : vector<24x24xf32>
    %cst_30 = arith.constant dense<0xFF800000> : vector<24xf32>
    %92 = vector.multi_reduction <maximumf>, %91, %cst_30 [1] : vector<24x24xf32> to vector<24xf32>
    %93 = vector.shape_cast %92 : vector<24xf32> to vector<24x1xf32>
    %94 = vector.broadcast %93 : vector<24x1xf32> to vector<24x24xf32>
    %95 = arith.subf %91, %94 : vector<24x24xf32>
    %96 = math.exp %95 : vector<24x24xf32>
    %cst_31 = arith.constant dense<0.000000e+00> : vector<24xf32>
    %97 = vector.multi_reduction <add>, %96, %cst_31 [1] : vector<24x24xf32> to vector<24xf32>
    %98 = vector.shape_cast %97 : vector<24xf32> to vector<24x1xf32>
    %99 = tpu.reciprocal %98 {approx = true} : vector<24x1xf32> -> vector<24x1xf32>
    %100 = vector.broadcast %99 : vector<24x1xf32> to vector<24x24xf32>
    %101 = arith.mulf %96, %100 : vector<24x24xf32>
    %102 = vector.extract_strided_slice %69 {offsets = [0, 8], sizes = [24, 8], strides = [1, 1]} : vector<24x32xf32> to vector<24x8xf32>
    %cst_32 = arith.constant dense<0.000000e+00> : vector<24x8xf32>
    %103 = tpu.matmul %101, %102, %cst_32 {dimension_numbers = #tpu.dot_dimension_numbers<[1], [0], [0], [1], [0, 0, 1, 1], [], []>} : vector<24x24xf32>, vector<24x8xf32>, vector<24x8xf32> -> vector<24x8xf32>
    %104 = vector.extract_strided_slice %67 {offsets = [0, 16], sizes = [24, 8], strides = [1, 1]} : vector<24x32xf32> to vector<24x8xf32>
    %105 = vector.extract_strided_slice %68 {offsets = [0, 16], sizes = [24, 8], strides = [1, 1]} : vector<24x32xf32> to vector<24x8xf32>
    %cst_33 = arith.constant dense<0.000000e+00> : vector<24x24xf32>
    %106 = tpu.matmul %104, %105, %cst_33 {dimension_numbers = #tpu.dot_dimension_numbers<[1], [1], [0], [0], [0, 0, 1, 0], [], []>} : vector<24x8xf32>, vector<24x8xf32>, vector<24x24xf32> -> vector<24x24xf32>
    %107 = vector.broadcast %34 : vector<1x24xf32> to vector<24x24xf32>
    %108 = arith.addf %106, %107 : vector<24x24xf32>
    %cst_34 = arith.constant dense<0xFF800000> : vector<24xf32>
    %109 = vector.multi_reduction <maximumf>, %108, %cst_34 [1] : vector<24x24xf32> to vector<24xf32>
    %110 = vector.shape_cast %109 : vector<24xf32> to vector<24x1xf32>
    %111 = vector.broadcast %110 : vector<24x1xf32> to vector<24x24xf32>
    %112 = arith.subf %108, %111 : vector<24x24xf32>
    %113 = math.exp %112 : vector<24x24xf32>
    %cst_35 = arith.constant dense<0.000000e+00> : vector<24xf32>
    %114 = vector.multi_reduction <add>, %113, %cst_35 [1] : vector<24x24xf32> to vector<24xf32>
    %115 = vector.shape_cast %114 : vector<24xf32> to vector<24x1xf32>
    %116 = tpu.reciprocal %115 {approx = true} : vector<24x1xf32> -> vector<24x1xf32>
    %117 = vector.broadcast %116 : vector<24x1xf32> to vector<24x24xf32>
    %118 = arith.mulf %113, %117 : vector<24x24xf32>
    %119 = vector.extract_strided_slice %69 {offsets = [0, 16], sizes = [24, 8], strides = [1, 1]} : vector<24x32xf32> to vector<24x8xf32>
    %cst_36 = arith.constant dense<0.000000e+00> : vector<24x8xf32>
    %120 = tpu.matmul %118, %119, %cst_36 {dimension_numbers = #tpu.dot_dimension_numbers<[1], [0], [0], [1], [0, 0, 1, 1], [], []>} : vector<24x24xf32>, vector<24x8xf32>, vector<24x8xf32> -> vector<24x8xf32>
    %121 = vector.extract_strided_slice %67 {offsets = [0, 24], sizes = [24, 8], strides = [1, 1]} : vector<24x32xf32> to vector<24x8xf32>
    %122 = vector.extract_strided_slice %68 {offsets = [0, 24], sizes = [24, 8], strides = [1, 1]} : vector<24x32xf32> to vector<24x8xf32>
    %cst_37 = arith.constant dense<0.000000e+00> : vector<24x24xf32>
    %123 = tpu.matmul %121, %122, %cst_37 {dimension_numbers = #tpu.dot_dimension_numbers<[1], [1], [0], [0], [0, 0, 1, 0], [], []>} : vector<24x8xf32>, vector<24x8xf32>, vector<24x24xf32> -> vector<24x24xf32>
    %124 = vector.broadcast %34 : vector<1x24xf32> to vector<24x24xf32>
    %125 = arith.addf %123, %124 : vector<24x24xf32>
    %cst_38 = arith.constant dense<0xFF800000> : vector<24xf32>
    %126 = vector.multi_reduction <maximumf>, %125, %cst_38 [1] : vector<24x24xf32> to vector<24xf32>
    %127 = vector.shape_cast %126 : vector<24xf32> to vector<24x1xf32>
    %128 = vector.broadcast %127 : vector<24x1xf32> to vector<24x24xf32>
    %129 = arith.subf %125, %128 : vector<24x24xf32>
    %130 = math.exp %129 : vector<24x24xf32>
    %cst_39 = arith.constant dense<0.000000e+00> : vector<24xf32>
    %131 = vector.multi_reduction <add>, %130, %cst_39 [1] : vector<24x24xf32> to vector<24xf32>
    %132 = vector.shape_cast %131 : vector<24xf32> to vector<24x1xf32>
    %133 = tpu.reciprocal %132 {approx = true} : vector<24x1xf32> -> vector<24x1xf32>
    %134 = vector.broadcast %133 : vector<24x1xf32> to vector<24x24xf32>
    %135 = arith.mulf %130, %134 : vector<24x24xf32>
    %136 = vector.extract_strided_slice %69 {offsets = [0, 24], sizes = [24, 8], strides = [1, 1]} : vector<24x32xf32> to vector<24x8xf32>
    %cst_40 = arith.constant dense<0.000000e+00> : vector<24x8xf32>
    %137 = tpu.matmul %135, %136, %cst_40 {dimension_numbers = #tpu.dot_dimension_numbers<[1], [0], [0], [1], [0, 0, 1, 1], [], []>} : vector<24x24xf32>, vector<24x8xf32>, vector<24x8xf32> -> vector<24x8xf32>
    %138 = tpu.concatenate %86, %103, %120, %137 in 1 : vector<24x8xf32>, vector<24x8xf32>, vector<24x8xf32>, vector<24x8xf32> -> vector<24x32xf32>
    %139 = vector.extract_strided_slice %64 {offsets = [24, 0], sizes = [24, 32], strides = [1, 1]} : vector<48x32xf32> to vector<24x32xf32>
    %140 = vector.extract_strided_slice %65 {offsets = [24, 0], sizes = [24, 32], strides = [1, 1]} : vector<48x32xf32> to vector<24x32xf32>
    %141 = vector.extract_strided_slice %66 {offsets = [24, 0], sizes = [24, 32], strides = [1, 1]} : vector<48x32xf32> to vector<24x32xf32>
    %142 = vector.extract_strided_slice %139 {offsets = [0, 0], sizes = [24, 8], strides = [1, 1]} : vector<24x32xf32> to vector<24x8xf32>
    %143 = vector.extract_strided_slice %140 {offsets = [0, 0], sizes = [24, 8], strides = [1, 1]} : vector<24x32xf32> to vector<24x8xf32>
    %cst_41 = arith.constant dense<0.000000e+00> : vector<24x24xf32>
    %144 = tpu.matmul %142, %143, %cst_41 {dimension_numbers = #tpu.dot_dimension_numbers<[1], [1], [0], [0], [0, 0, 1, 0], [], []>} : vector<24x8xf32>, vector<24x8xf32>, vector<24x24xf32> -> vector<24x24xf32>
    %145 = vector.broadcast %34 : vector<1x24xf32> to vector<24x24xf32>
    %146 = arith.addf %144, %145 : vector<24x24xf32>
    %cst_42 = arith.constant dense<0xFF800000> : vector<24xf32>
    %147 = vector.multi_reduction <maximumf>, %146, %cst_42 [1] : vector<24x24xf32> to vector<24xf32>
    %148 = vector.shape_cast %147 : vector<24xf32> to vector<24x1xf32>
    %149 = vector.broadcast %148 : vector<24x1xf32> to vector<24x24xf32>
    %150 = arith.subf %146, %149 : vector<24x24xf32>
    %151 = math.exp %150 : vector<24x24xf32>
    %cst_43 = arith.constant dense<0.000000e+00> : vector<24xf32>
    %152 = vector.multi_reduction <add>, %151, %cst_43 [1] : vector<24x24xf32> to vector<24xf32>
    %153 = vector.shape_cast %152 : vector<24xf32> to vector<24x1xf32>
    %154 = tpu.reciprocal %153 {approx = true} : vector<24x1xf32> -> vector<24x1xf32>
    %155 = vector.broadcast %154 : vector<24x1xf32> to vector<24x24xf32>
    %156 = arith.mulf %151, %155 : vector<24x24xf32>
    %157 = vector.extract_strided_slice %141 {offsets = [0, 0], sizes = [24, 8], strides = [1, 1]} : vector<24x32xf32> to vector<24x8xf32>
    %cst_44 = arith.constant dense<0.000000e+00> : vector<24x8xf32>
    %158 = tpu.matmul %156, %157, %cst_44 {dimension_numbers = #tpu.dot_dimension_numbers<[1], [0], [0], [1], [0, 0, 1, 1], [], []>} : vector<24x24xf32>, vector<24x8xf32>, vector<24x8xf32> -> vector<24x8xf32>
    %159 = vector.extract_strided_slice %139 {offsets = [0, 8], sizes = [24, 8], strides = [1, 1]} : vector<24x32xf32> to vector<24x8xf32>
    %160 = vector.extract_strided_slice %140 {offsets = [0, 8], sizes = [24, 8], strides = [1, 1]} : vector<24x32xf32> to vector<24x8xf32>
    %cst_45 = arith.constant dense<0.000000e+00> : vector<24x24xf32>
    %161 = tpu.matmul %159, %160, %cst_45 {dimension_numbers = #tpu.dot_dimension_numbers<[1], [1], [0], [0], [0, 0, 1, 0], [], []>} : vector<24x8xf32>, vector<24x8xf32>, vector<24x24xf32> -> vector<24x24xf32>
    %162 = vector.broadcast %34 : vector<1x24xf32> to vector<24x24xf32>
    %163 = arith.addf %161, %162 : vector<24x24xf32>
    %cst_46 = arith.constant dense<0xFF800000> : vector<24xf32>
    %164 = vector.multi_reduction <maximumf>, %163, %cst_46 [1] : vector<24x24xf32> to vector<24xf32>
    %165 = vector.shape_cast %164 : vector<24xf32> to vector<24x1xf32>
    %166 = vector.broadcast %165 : vector<24x1xf32> to vector<24x24xf32>
    %167 = arith.subf %163, %166 : vector<24x24xf32>
    %168 = math.exp %167 : vector<24x24xf32>
    %cst_47 = arith.constant dense<0.000000e+00> : vector<24xf32>
    %169 = vector.multi_reduction <add>, %168, %cst_47 [1] : vector<24x24xf32> to vector<24xf32>
    %170 = vector.shape_cast %169 : vector<24xf32> to vector<24x1xf32>
    %171 = tpu.reciprocal %170 {approx = true} : vector<24x1xf32> -> vector<24x1xf32>
    %172 = vector.broadcast %171 : vector<24x1xf32> to vector<24x24xf32>
    %173 = arith.mulf %168, %172 : vector<24x24xf32>
    %174 = vector.extract_strided_slice %141 {offsets = [0, 8], sizes = [24, 8], strides = [1, 1]} : vector<24x32xf32> to vector<24x8xf32>
    %cst_48 = arith.constant dense<0.000000e+00> : vector<24x8xf32>
    %175 = tpu.matmul %173, %174, %cst_48 {dimension_numbers = #tpu.dot_dimension_numbers<[1], [0], [0], [1], [0, 0, 1, 1], [], []>} : vector<24x24xf32>, vector<24x8xf32>, vector<24x8xf32> -> vector<24x8xf32>
    %176 = vector.extract_strided_slice %139 {offsets = [0, 16], sizes = [24, 8], strides = [1, 1]} : vector<24x32xf32> to vector<24x8xf32>
    %177 = vector.extract_strided_slice %140 {offsets = [0, 16], sizes = [24, 8], strides = [1, 1]} : vector<24x32xf32> to vector<24x8xf32>
    %cst_49 = arith.constant dense<0.000000e+00> : vector<24x24xf32>
    %178 = tpu.matmul %176, %177, %cst_49 {dimension_numbers = #tpu.dot_dimension_numbers<[1], [1], [0], [0], [0, 0, 1, 0], [], []>} : vector<24x8xf32>, vector<24x8xf32>, vector<24x24xf32> -> vector<24x24xf32>
    %179 = vector.broadcast %34 : vector<1x24xf32> to vector<24x24xf32>
    %180 = arith.addf %178, %179 : vector<24x24xf32>
    %cst_50 = arith.constant dense<0xFF800000> : vector<24xf32>
    %181 = vector.multi_reduction <maximumf>, %180, %cst_50 [1] : vector<24x24xf32> to vector<24xf32>
    %182 = vector.shape_cast %181 : vector<24xf32> to vector<24x1xf32>
    %183 = vector.broadcast %182 : vector<24x1xf32> to vector<24x24xf32>
    %184 = arith.subf %180, %183 : vector<24x24xf32>
    %185 = math.exp %184 : vector<24x24xf32>
    %cst_51 = arith.constant dense<0.000000e+00> : vector<24xf32>
    %186 = vector.multi_reduction <add>, %185, %cst_51 [1] : vector<24x24xf32> to vector<24xf32>
    %187 = vector.shape_cast %186 : vector<24xf32> to vector<24x1xf32>
    %188 = tpu.reciprocal %187 {approx = true} : vector<24x1xf32> -> vector<24x1xf32>
    %189 = vector.broadcast %188 : vector<24x1xf32> to vector<24x24xf32>
    %190 = arith.mulf %185, %189 : vector<24x24xf32>
    %191 = vector.extract_strided_slice %141 {offsets = [0, 16], sizes = [24, 8], strides = [1, 1]} : vector<24x32xf32> to vector<24x8xf32>
    %cst_52 = arith.constant dense<0.000000e+00> : vector<24x8xf32>
    %192 = tpu.matmul %190, %191, %cst_52 {dimension_numbers = #tpu.dot_dimension_numbers<[1], [0], [0], [1], [0, 0, 1, 1], [], []>} : vector<24x24xf32>, vector<24x8xf32>, vector<24x8xf32> -> vector<24x8xf32>
    %193 = vector.extract_strided_slice %139 {offsets = [0, 24], sizes = [24, 8], strides = [1, 1]} : vector<24x32xf32> to vector<24x8xf32>
    %194 = vector.extract_strided_slice %140 {offsets = [0, 24], sizes = [24, 8], strides = [1, 1]} : vector<24x32xf32> to vector<24x8xf32>
    %cst_53 = arith.constant dense<0.000000e+00> : vector<24x24xf32>
    %195 = tpu.matmul %193, %194, %cst_53 {dimension_numbers = #tpu.dot_dimension_numbers<[1], [1], [0], [0], [0, 0, 1, 0], [], []>} : vector<24x8xf32>, vector<24x8xf32>, vector<24x24xf32> -> vector<24x24xf32>
    %196 = vector.broadcast %34 : vector<1x24xf32> to vector<24x24xf32>
    %197 = arith.addf %195, %196 : vector<24x24xf32>
    %cst_54 = arith.constant dense<0xFF800000> : vector<24xf32>
    %198 = vector.multi_reduction <maximumf>, %197, %cst_54 [1] : vector<24x24xf32> to vector<24xf32>
    %199 = vector.shape_cast %198 : vector<24xf32> to vector<24x1xf32>
    %200 = vector.broadcast %199 : vector<24x1xf32> to vector<24x24xf32>
    %201 = arith.subf %197, %200 : vector<24x24xf32>
    %202 = math.exp %201 : vector<24x24xf32>
    %cst_55 = arith.constant dense<0.000000e+00> : vector<24xf32>
    %203 = vector.multi_reduction <add>, %202, %cst_55 [1] : vector<24x24xf32> to vector<24xf32>
    %204 = vector.shape_cast %203 : vector<24xf32> to vector<24x1xf32>
    %205 = tpu.reciprocal %204 {approx = true} : vector<24x1xf32> -> vector<24x1xf32>
    %206 = vector.broadcast %205 : vector<24x1xf32> to vector<24x24xf32>
    %207 = arith.mulf %202, %206 : vector<24x24xf32>
    %208 = vector.extract_strided_slice %141 {offsets = [0, 24], sizes = [24, 8], strides = [1, 1]} : vector<24x32xf32> to vector<24x8xf32>
    %cst_56 = arith.constant dense<0.000000e+00> : vector<24x8xf32>
    %209 = tpu.matmul %207, %208, %cst_56 {dimension_numbers = #tpu.dot_dimension_numbers<[1], [0], [0], [1], [0, 0, 1, 1], [], []>} : vector<24x24xf32>, vector<24x8xf32>, vector<24x8xf32> -> vector<24x8xf32>
    %210 = tpu.concatenate %158, %175, %192, %209 in 1 : vector<24x8xf32>, vector<24x8xf32>, vector<24x8xf32>, vector<24x8xf32> -> vector<24x32xf32>
    %211 = tpu.concatenate %138, %210 in 0 : vector<24x32xf32>, vector<24x32xf32> -> vector<48x32xf32>
    %c296 = arith.constant 296 : index
    %c0_57 = arith.constant 0 : index
    %212 = vector.load %arg2[%c296, %c0_57] : memref<728x128xf32, #tpu.memory_space<vmem>>, vector<32x32xf32>
    %cst_58 = arith.constant dense<0.000000e+00> : vector<48x32xf32>
    %213 = tpu.matmul %211, %212, %cst_58 {dimension_numbers = #tpu.dot_dimension_numbers<[1], [0], [0], [1], [0, 0, 1, 1], [], []>} : vector<48x32xf32>, vector<32x32xf32>, vector<48x32xf32> -> vector<48x32xf32>
    %c328 = arith.constant 328 : index
    %c0_59 = arith.constant 0 : index
    %214 = vector.load %arg2[%c328, %c0_59] : memref<728x128xf32, #tpu.memory_space<vmem>>, vector<1x32xf32>
    %215 = vector.broadcast %214 : vector<1x32xf32> to vector<48x32xf32>
    %216 = arith.addf %213, %215 : vector<48x32xf32>
    %217 = arith.addf %33, %216 : vector<48x32xf32>
    %c336 = arith.constant 336 : index
    %c0_60 = arith.constant 0 : index
    %218 = vector.load %arg2[%c336, %c0_60] : memref<728x128xf32, #tpu.memory_space<vmem>>, vector<1x32xf32>
    %c344 = arith.constant 344 : index
    %c0_61 = arith.constant 0 : index
    %219 = vector.load %arg2[%c344, %c0_61] : memref<728x128xf32, #tpu.memory_space<vmem>>, vector<1x32xf32>
    %cst_62 = arith.constant dense<0.000000e+00> : vector<48xf32>
    %220 = vector.multi_reduction <add>, %217, %cst_62 [1] : vector<48x32xf32> to vector<48xf32>
    %221 = vector.shape_cast %220 : vector<48xf32> to vector<48x1xf32>
    %cst_63 = arith.constant 3.200000e+01 : f32
    %222 = vector.broadcast %cst_63 : f32 to vector<48x1xf32>
    %223 = arith.divf %221, %222 : vector<48x1xf32>
    %224 = vector.broadcast %223 : vector<48x1xf32> to vector<48x32xf32>
    %225 = arith.subf %217, %224 : vector<48x32xf32>
    %226 = arith.mulf %225, %225 : vector<48x32xf32>
    %cst_64 = arith.constant dense<0.000000e+00> : vector<48xf32>
    %227 = vector.multi_reduction <add>, %226, %cst_64 [1] : vector<48x32xf32> to vector<48xf32>
    %228 = vector.shape_cast %227 : vector<48xf32> to vector<48x1xf32>
    %cst_65 = arith.constant 3.200000e+01 : f32
    %229 = vector.broadcast %cst_65 : f32 to vector<48x1xf32>
    %230 = arith.divf %228, %229 : vector<48x1xf32>
    %231 = vector.broadcast %223 : vector<48x1xf32> to vector<48x32xf32>
    %232 = arith.subf %217, %231 : vector<48x32xf32>
    %cst_66 = arith.constant 9.99999974E-6 : f32
    %233 = vector.broadcast %cst_66 : f32 to vector<48x1xf32>
    %234 = arith.addf %230, %233 : vector<48x1xf32>
    %235 = math.rsqrt %234 : vector<48x1xf32>
    %236 = vector.broadcast %235 : vector<48x1xf32> to vector<48x32xf32>
    %237 = arith.mulf %232, %236 : vector<48x32xf32>
    %238 = vector.broadcast %218 : vector<1x32xf32> to vector<48x32xf32>
    %239 = arith.mulf %237, %238 : vector<48x32xf32>
    %240 = vector.broadcast %219 : vector<1x32xf32> to vector<48x32xf32>
    %241 = arith.addf %239, %240 : vector<48x32xf32>
    %c352 = arith.constant 352 : index
    %c0_67 = arith.constant 0 : index
    %242 = vector.load %arg2[%c352, %c0_67] : memref<728x128xf32, #tpu.memory_space<vmem>>, vector<32x64xf32>
    %cst_68 = arith.constant dense<0.000000e+00> : vector<48x64xf32>
    %243 = tpu.matmul %241, %242, %cst_68 {dimension_numbers = #tpu.dot_dimension_numbers<[1], [0], [0], [1], [0, 0, 1, 1], [], []>} : vector<48x32xf32>, vector<32x64xf32>, vector<48x64xf32> -> vector<48x64xf32>
    %c384 = arith.constant 384 : index
    %c0_69 = arith.constant 0 : index
    %244 = vector.load %arg2[%c384, %c0_69] : memref<728x128xf32, #tpu.memory_space<vmem>>, vector<1x64xf32>
    %245 = vector.broadcast %244 : vector<1x64xf32> to vector<48x64xf32>
    %246 = arith.addf %243, %245 : vector<48x64xf32>
    %cst_70 = arith.constant 1.702000e+00 : f32
    %247 = vector.broadcast %cst_70 : f32 to vector<48x64xf32>
    %248 = arith.mulf %247, %246 : vector<48x64xf32>
    %249 = arith.negf %248 : vector<48x64xf32>
    %250 = math.exp %249 : vector<48x64xf32>
    %cst_71 = arith.constant 1.000000e+00 : f32
    %251 = vector.broadcast %cst_71 : f32 to vector<48x64xf32>
    %252 = arith.addf %251, %250 : vector<48x64xf32>
    %253 = arith.divf %251, %252 : vector<48x64xf32>
    %254 = arith.mulf %246, %253 : vector<48x64xf32>
    %c392 = arith.constant 392 : index
    %c0_72 = arith.constant 0 : index
    %255 = vector.load %arg2[%c392, %c0_72] : memref<728x128xf32, #tpu.memory_space<vmem>>, vector<64x32xf32>
    %cst_73 = arith.constant dense<0.000000e+00> : vector<48x32xf32>
    %256 = tpu.matmul %254, %255, %cst_73 {dimension_numbers = #tpu.dot_dimension_numbers<[1], [0], [0], [1], [0, 0, 1, 1], [], []>} : vector<48x64xf32>, vector<64x32xf32>, vector<48x32xf32> -> vector<48x32xf32>
    %c456 = arith.constant 456 : index
    %c0_74 = arith.constant 0 : index
    %257 = vector.load %arg2[%c456, %c0_74] : memref<728x128xf32, #tpu.memory_space<vmem>>, vector<1x32xf32>
    %258 = vector.broadcast %257 : vector<1x32xf32> to vector<48x32xf32>
    %259 = arith.addf %256, %258 : vector<48x32xf32>
    %260 = arith.addf %217, %259 : vector<48x32xf32>
    %c464 = arith.constant 464 : index
    %c0_75 = arith.constant 0 : index
    %261 = vector.load %arg2[%c464, %c0_75] : memref<728x128xf32, #tpu.memory_space<vmem>>, vector<1x32xf32>
    %c472 = arith.constant 472 : index
    %c0_76 = arith.constant 0 : index
    %262 = vector.load %arg2[%c472, %c0_76] : memref<728x128xf32, #tpu.memory_space<vmem>>, vector<1x32xf32>
    %cst_77 = arith.constant dense<0.000000e+00> : vector<48xf32>
    %263 = vector.multi_reduction <add>, %260, %cst_77 [1] : vector<48x32xf32> to vector<48xf32>
    %264 = vector.shape_cast %263 : vector<48xf32> to vector<48x1xf32>
    %cst_78 = arith.constant 3.200000e+01 : f32
    %265 = vector.broadcast %cst_78 : f32 to vector<48x1xf32>
    %266 = arith.divf %264, %265 : vector<48x1xf32>
    %267 = vector.broadcast %266 : vector<48x1xf32> to vector<48x32xf32>
    %268 = arith.subf %260, %267 : vector<48x32xf32>
    %269 = arith.mulf %268, %268 : vector<48x32xf32>
    %cst_79 = arith.constant dense<0.000000e+00> : vector<48xf32>
    %270 = vector.multi_reduction <add>, %269, %cst_79 [1] : vector<48x32xf32> to vector<48xf32>
    %271 = vector.shape_cast %270 : vector<48xf32> to vector<48x1xf32>
    %cst_80 = arith.constant 3.200000e+01 : f32
    %272 = vector.broadcast %cst_80 : f32 to vector<48x1xf32>
    %273 = arith.divf %271, %272 : vector<48x1xf32>
    %274 = vector.broadcast %266 : vector<48x1xf32> to vector<48x32xf32>
    %275 = arith.subf %260, %274 : vector<48x32xf32>
    %cst_81 = arith.constant 9.99999974E-6 : f32
    %276 = vector.broadcast %cst_81 : f32 to vector<48x1xf32>
    %277 = arith.addf %273, %276 : vector<48x1xf32>
    %278 = math.rsqrt %277 : vector<48x1xf32>
    %279 = vector.broadcast %278 : vector<48x1xf32> to vector<48x32xf32>
    %280 = arith.mulf %275, %279 : vector<48x32xf32>
    %281 = vector.broadcast %261 : vector<1x32xf32> to vector<48x32xf32>
    %282 = arith.mulf %280, %281 : vector<48x32xf32>
    %283 = vector.broadcast %262 : vector<1x32xf32> to vector<48x32xf32>
    %284 = arith.addf %282, %283 : vector<48x32xf32>
    %c480 = arith.constant 480 : index
    %c0_82 = arith.constant 0 : index
    %285 = vector.load %arg2[%c480, %c0_82] : memref<728x128xf32, #tpu.memory_space<vmem>>, vector<32x96xf32>
    %cst_83 = arith.constant dense<0.000000e+00> : vector<48x96xf32>
    %286 = tpu.matmul %284, %285, %cst_83 {dimension_numbers = #tpu.dot_dimension_numbers<[1], [0], [0], [1], [0, 0, 1, 1], [], []>} : vector<48x32xf32>, vector<32x96xf32>, vector<48x96xf32> -> vector<48x96xf32>
    %c512 = arith.constant 512 : index
    %c0_84 = arith.constant 0 : index
    %287 = vector.load %arg2[%c512, %c0_84] : memref<728x128xf32, #tpu.memory_space<vmem>>, vector<1x96xf32>
    %288 = vector.broadcast %287 : vector<1x96xf32> to vector<48x96xf32>
    %289 = arith.addf %286, %288 : vector<48x96xf32>
    %290 = vector.extract_strided_slice %289 {offsets = [0, 0], sizes = [48, 32], strides = [1, 1]} : vector<48x96xf32> to vector<48x32xf32>
    %291 = vector.extract_strided_slice %289 {offsets = [0, 32], sizes = [48, 32], strides = [1, 1]} : vector<48x96xf32> to vector<48x32xf32>
    %292 = vector.extract_strided_slice %289 {offsets = [0, 64], sizes = [48, 32], strides = [1, 1]} : vector<48x96xf32> to vector<48x32xf32>
    %293 = vector.extract_strided_slice %290 {offsets = [0, 0], sizes = [24, 32], strides = [1, 1]} : vector<48x32xf32> to vector<24x32xf32>
    %294 = vector.extract_strided_slice %291 {offsets = [0, 0], sizes = [24, 32], strides = [1, 1]} : vector<48x32xf32> to vector<24x32xf32>
    %295 = vector.extract_strided_slice %292 {offsets = [0, 0], sizes = [24, 32], strides = [1, 1]} : vector<48x32xf32> to vector<24x32xf32>
    %296 = vector.extract_strided_slice %293 {offsets = [0, 0], sizes = [24, 8], strides = [1, 1]} : vector<24x32xf32> to vector<24x8xf32>
    %297 = vector.extract_strided_slice %294 {offsets = [0, 0], sizes = [24, 8], strides = [1, 1]} : vector<24x32xf32> to vector<24x8xf32>
    %cst_85 = arith.constant dense<0.000000e+00> : vector<24x24xf32>
    %298 = tpu.matmul %296, %297, %cst_85 {dimension_numbers = #tpu.dot_dimension_numbers<[1], [1], [0], [0], [0, 0, 1, 0], [], []>} : vector<24x8xf32>, vector<24x8xf32>, vector<24x24xf32> -> vector<24x24xf32>
    %299 = vector.broadcast %34 : vector<1x24xf32> to vector<24x24xf32>
    %300 = arith.addf %298, %299 : vector<24x24xf32>
    %cst_86 = arith.constant dense<0xFF800000> : vector<24xf32>
    %301 = vector.multi_reduction <maximumf>, %300, %cst_86 [1] : vector<24x24xf32> to vector<24xf32>
    %302 = vector.shape_cast %301 : vector<24xf32> to vector<24x1xf32>
    %303 = vector.broadcast %302 : vector<24x1xf32> to vector<24x24xf32>
    %304 = arith.subf %300, %303 : vector<24x24xf32>
    %305 = math.exp %304 : vector<24x24xf32>
    %cst_87 = arith.constant dense<0.000000e+00> : vector<24xf32>
    %306 = vector.multi_reduction <add>, %305, %cst_87 [1] : vector<24x24xf32> to vector<24xf32>
    %307 = vector.shape_cast %306 : vector<24xf32> to vector<24x1xf32>
    %308 = tpu.reciprocal %307 {approx = true} : vector<24x1xf32> -> vector<24x1xf32>
    %309 = vector.broadcast %308 : vector<24x1xf32> to vector<24x24xf32>
    %310 = arith.mulf %305, %309 : vector<24x24xf32>
    %311 = vector.extract_strided_slice %295 {offsets = [0, 0], sizes = [24, 8], strides = [1, 1]} : vector<24x32xf32> to vector<24x8xf32>
    %cst_88 = arith.constant dense<0.000000e+00> : vector<24x8xf32>
    %312 = tpu.matmul %310, %311, %cst_88 {dimension_numbers = #tpu.dot_dimension_numbers<[1], [0], [0], [1], [0, 0, 1, 1], [], []>} : vector<24x24xf32>, vector<24x8xf32>, vector<24x8xf32> -> vector<24x8xf32>
    %313 = vector.extract_strided_slice %293 {offsets = [0, 8], sizes = [24, 8], strides = [1, 1]} : vector<24x32xf32> to vector<24x8xf32>
    %314 = vector.extract_strided_slice %294 {offsets = [0, 8], sizes = [24, 8], strides = [1, 1]} : vector<24x32xf32> to vector<24x8xf32>
    %cst_89 = arith.constant dense<0.000000e+00> : vector<24x24xf32>
    %315 = tpu.matmul %313, %314, %cst_89 {dimension_numbers = #tpu.dot_dimension_numbers<[1], [1], [0], [0], [0, 0, 1, 0], [], []>} : vector<24x8xf32>, vector<24x8xf32>, vector<24x24xf32> -> vector<24x24xf32>
    %316 = vector.broadcast %34 : vector<1x24xf32> to vector<24x24xf32>
    %317 = arith.addf %315, %316 : vector<24x24xf32>
    %cst_90 = arith.constant dense<0xFF800000> : vector<24xf32>
    %318 = vector.multi_reduction <maximumf>, %317, %cst_90 [1] : vector<24x24xf32> to vector<24xf32>
    %319 = vector.shape_cast %318 : vector<24xf32> to vector<24x1xf32>
    %320 = vector.broadcast %319 : vector<24x1xf32> to vector<24x24xf32>
    %321 = arith.subf %317, %320 : vector<24x24xf32>
    %322 = math.exp %321 : vector<24x24xf32>
    %cst_91 = arith.constant dense<0.000000e+00> : vector<24xf32>
    %323 = vector.multi_reduction <add>, %322, %cst_91 [1] : vector<24x24xf32> to vector<24xf32>
    %324 = vector.shape_cast %323 : vector<24xf32> to vector<24x1xf32>
    %325 = tpu.reciprocal %324 {approx = true} : vector<24x1xf32> -> vector<24x1xf32>
    %326 = vector.broadcast %325 : vector<24x1xf32> to vector<24x24xf32>
    %327 = arith.mulf %322, %326 : vector<24x24xf32>
    %328 = vector.extract_strided_slice %295 {offsets = [0, 8], sizes = [24, 8], strides = [1, 1]} : vector<24x32xf32> to vector<24x8xf32>
    %cst_92 = arith.constant dense<0.000000e+00> : vector<24x8xf32>
    %329 = tpu.matmul %327, %328, %cst_92 {dimension_numbers = #tpu.dot_dimension_numbers<[1], [0], [0], [1], [0, 0, 1, 1], [], []>} : vector<24x24xf32>, vector<24x8xf32>, vector<24x8xf32> -> vector<24x8xf32>
    %330 = vector.extract_strided_slice %293 {offsets = [0, 16], sizes = [24, 8], strides = [1, 1]} : vector<24x32xf32> to vector<24x8xf32>
    %331 = vector.extract_strided_slice %294 {offsets = [0, 16], sizes = [24, 8], strides = [1, 1]} : vector<24x32xf32> to vector<24x8xf32>
    %cst_93 = arith.constant dense<0.000000e+00> : vector<24x24xf32>
    %332 = tpu.matmul %330, %331, %cst_93 {dimension_numbers = #tpu.dot_dimension_numbers<[1], [1], [0], [0], [0, 0, 1, 0], [], []>} : vector<24x8xf32>, vector<24x8xf32>, vector<24x24xf32> -> vector<24x24xf32>
    %333 = vector.broadcast %34 : vector<1x24xf32> to vector<24x24xf32>
    %334 = arith.addf %332, %333 : vector<24x24xf32>
    %cst_94 = arith.constant dense<0xFF800000> : vector<24xf32>
    %335 = vector.multi_reduction <maximumf>, %334, %cst_94 [1] : vector<24x24xf32> to vector<24xf32>
    %336 = vector.shape_cast %335 : vector<24xf32> to vector<24x1xf32>
    %337 = vector.broadcast %336 : vector<24x1xf32> to vector<24x24xf32>
    %338 = arith.subf %334, %337 : vector<24x24xf32>
    %339 = math.exp %338 : vector<24x24xf32>
    %cst_95 = arith.constant dense<0.000000e+00> : vector<24xf32>
    %340 = vector.multi_reduction <add>, %339, %cst_95 [1] : vector<24x24xf32> to vector<24xf32>
    %341 = vector.shape_cast %340 : vector<24xf32> to vector<24x1xf32>
    %342 = tpu.reciprocal %341 {approx = true} : vector<24x1xf32> -> vector<24x1xf32>
    %343 = vector.broadcast %342 : vector<24x1xf32> to vector<24x24xf32>
    %344 = arith.mulf %339, %343 : vector<24x24xf32>
    %345 = vector.extract_strided_slice %295 {offsets = [0, 16], sizes = [24, 8], strides = [1, 1]} : vector<24x32xf32> to vector<24x8xf32>
    %cst_96 = arith.constant dense<0.000000e+00> : vector<24x8xf32>
    %346 = tpu.matmul %344, %345, %cst_96 {dimension_numbers = #tpu.dot_dimension_numbers<[1], [0], [0], [1], [0, 0, 1, 1], [], []>} : vector<24x24xf32>, vector<24x8xf32>, vector<24x8xf32> -> vector<24x8xf32>
    %347 = vector.extract_strided_slice %293 {offsets = [0, 24], sizes = [24, 8], strides = [1, 1]} : vector<24x32xf32> to vector<24x8xf32>
    %348 = vector.extract_strided_slice %294 {offsets = [0, 24], sizes = [24, 8], strides = [1, 1]} : vector<24x32xf32> to vector<24x8xf32>
    %cst_97 = arith.constant dense<0.000000e+00> : vector<24x24xf32>
    %349 = tpu.matmul %347, %348, %cst_97 {dimension_numbers = #tpu.dot_dimension_numbers<[1], [1], [0], [0], [0, 0, 1, 0], [], []>} : vector<24x8xf32>, vector<24x8xf32>, vector<24x24xf32> -> vector<24x24xf32>
    %350 = vector.broadcast %34 : vector<1x24xf32> to vector<24x24xf32>
    %351 = arith.addf %349, %350 : vector<24x24xf32>
    %cst_98 = arith.constant dense<0xFF800000> : vector<24xf32>
    %352 = vector.multi_reduction <maximumf>, %351, %cst_98 [1] : vector<24x24xf32> to vector<24xf32>
    %353 = vector.shape_cast %352 : vector<24xf32> to vector<24x1xf32>
    %354 = vector.broadcast %353 : vector<24x1xf32> to vector<24x24xf32>
    %355 = arith.subf %351, %354 : vector<24x24xf32>
    %356 = math.exp %355 : vector<24x24xf32>
    %cst_99 = arith.constant dense<0.000000e+00> : vector<24xf32>
    %357 = vector.multi_reduction <add>, %356, %cst_99 [1] : vector<24x24xf32> to vector<24xf32>
    %358 = vector.shape_cast %357 : vector<24xf32> to vector<24x1xf32>
    %359 = tpu.reciprocal %358 {approx = true} : vector<24x1xf32> -> vector<24x1xf32>
    %360 = vector.broadcast %359 : vector<24x1xf32> to vector<24x24xf32>
    %361 = arith.mulf %356, %360 : vector<24x24xf32>
    %362 = vector.extract_strided_slice %295 {offsets = [0, 24], sizes = [24, 8], strides = [1, 1]} : vector<24x32xf32> to vector<24x8xf32>
    %cst_100 = arith.constant dense<0.000000e+00> : vector<24x8xf32>
    %363 = tpu.matmul %361, %362, %cst_100 {dimension_numbers = #tpu.dot_dimension_numbers<[1], [0], [0], [1], [0, 0, 1, 1], [], []>} : vector<24x24xf32>, vector<24x8xf32>, vector<24x8xf32> -> vector<24x8xf32>
    %364 = tpu.concatenate %312, %329, %346, %363 in 1 : vector<24x8xf32>, vector<24x8xf32>, vector<24x8xf32>, vector<24x8xf32> -> vector<24x32xf32>
    %365 = vector.extract_strided_slice %290 {offsets = [24, 0], sizes = [24, 32], strides = [1, 1]} : vector<48x32xf32> to vector<24x32xf32>
    %366 = vector.extract_strided_slice %291 {offsets = [24, 0], sizes = [24, 32], strides = [1, 1]} : vector<48x32xf32> to vector<24x32xf32>
    %367 = vector.extract_strided_slice %292 {offsets = [24, 0], sizes = [24, 32], strides = [1, 1]} : vector<48x32xf32> to vector<24x32xf32>
    %368 = vector.extract_strided_slice %365 {offsets = [0, 0], sizes = [24, 8], strides = [1, 1]} : vector<24x32xf32> to vector<24x8xf32>
    %369 = vector.extract_strided_slice %366 {offsets = [0, 0], sizes = [24, 8], strides = [1, 1]} : vector<24x32xf32> to vector<24x8xf32>
    %cst_101 = arith.constant dense<0.000000e+00> : vector<24x24xf32>
    %370 = tpu.matmul %368, %369, %cst_101 {dimension_numbers = #tpu.dot_dimension_numbers<[1], [1], [0], [0], [0, 0, 1, 0], [], []>} : vector<24x8xf32>, vector<24x8xf32>, vector<24x24xf32> -> vector<24x24xf32>
    %371 = vector.broadcast %34 : vector<1x24xf32> to vector<24x24xf32>
    %372 = arith.addf %370, %371 : vector<24x24xf32>
    %cst_102 = arith.constant dense<0xFF800000> : vector<24xf32>
    %373 = vector.multi_reduction <maximumf>, %372, %cst_102 [1] : vector<24x24xf32> to vector<24xf32>
    %374 = vector.shape_cast %373 : vector<24xf32> to vector<24x1xf32>
    %375 = vector.broadcast %374 : vector<24x1xf32> to vector<24x24xf32>
    %376 = arith.subf %372, %375 : vector<24x24xf32>
    %377 = math.exp %376 : vector<24x24xf32>
    %cst_103 = arith.constant dense<0.000000e+00> : vector<24xf32>
    %378 = vector.multi_reduction <add>, %377, %cst_103 [1] : vector<24x24xf32> to vector<24xf32>
    %379 = vector.shape_cast %378 : vector<24xf32> to vector<24x1xf32>
    %380 = tpu.reciprocal %379 {approx = true} : vector<24x1xf32> -> vector<24x1xf32>
    %381 = vector.broadcast %380 : vector<24x1xf32> to vector<24x24xf32>
    %382 = arith.mulf %377, %381 : vector<24x24xf32>
    %383 = vector.extract_strided_slice %367 {offsets = [0, 0], sizes = [24, 8], strides = [1, 1]} : vector<24x32xf32> to vector<24x8xf32>
    %cst_104 = arith.constant dense<0.000000e+00> : vector<24x8xf32>
    %384 = tpu.matmul %382, %383, %cst_104 {dimension_numbers = #tpu.dot_dimension_numbers<[1], [0], [0], [1], [0, 0, 1, 1], [], []>} : vector<24x24xf32>, vector<24x8xf32>, vector<24x8xf32> -> vector<24x8xf32>
    %385 = vector.extract_strided_slice %365 {offsets = [0, 8], sizes = [24, 8], strides = [1, 1]} : vector<24x32xf32> to vector<24x8xf32>
    %386 = vector.extract_strided_slice %366 {offsets = [0, 8], sizes = [24, 8], strides = [1, 1]} : vector<24x32xf32> to vector<24x8xf32>
    %cst_105 = arith.constant dense<0.000000e+00> : vector<24x24xf32>
    %387 = tpu.matmul %385, %386, %cst_105 {dimension_numbers = #tpu.dot_dimension_numbers<[1], [1], [0], [0], [0, 0, 1, 0], [], []>} : vector<24x8xf32>, vector<24x8xf32>, vector<24x24xf32> -> vector<24x24xf32>
    %388 = vector.broadcast %34 : vector<1x24xf32> to vector<24x24xf32>
    %389 = arith.addf %387, %388 : vector<24x24xf32>
    %cst_106 = arith.constant dense<0xFF800000> : vector<24xf32>
    %390 = vector.multi_reduction <maximumf>, %389, %cst_106 [1] : vector<24x24xf32> to vector<24xf32>
    %391 = vector.shape_cast %390 : vector<24xf32> to vector<24x1xf32>
    %392 = vector.broadcast %391 : vector<24x1xf32> to vector<24x24xf32>
    %393 = arith.subf %389, %392 : vector<24x24xf32>
    %394 = math.exp %393 : vector<24x24xf32>
    %cst_107 = arith.constant dense<0.000000e+00> : vector<24xf32>
    %395 = vector.multi_reduction <add>, %394, %cst_107 [1] : vector<24x24xf32> to vector<24xf32>
    %396 = vector.shape_cast %395 : vector<24xf32> to vector<24x1xf32>
    %397 = tpu.reciprocal %396 {approx = true} : vector<24x1xf32> -> vector<24x1xf32>
    %398 = vector.broadcast %397 : vector<24x1xf32> to vector<24x24xf32>
    %399 = arith.mulf %394, %398 : vector<24x24xf32>
    %400 = vector.extract_strided_slice %367 {offsets = [0, 8], sizes = [24, 8], strides = [1, 1]} : vector<24x32xf32> to vector<24x8xf32>
    %cst_108 = arith.constant dense<0.000000e+00> : vector<24x8xf32>
    %401 = tpu.matmul %399, %400, %cst_108 {dimension_numbers = #tpu.dot_dimension_numbers<[1], [0], [0], [1], [0, 0, 1, 1], [], []>} : vector<24x24xf32>, vector<24x8xf32>, vector<24x8xf32> -> vector<24x8xf32>
    %402 = vector.extract_strided_slice %365 {offsets = [0, 16], sizes = [24, 8], strides = [1, 1]} : vector<24x32xf32> to vector<24x8xf32>
    %403 = vector.extract_strided_slice %366 {offsets = [0, 16], sizes = [24, 8], strides = [1, 1]} : vector<24x32xf32> to vector<24x8xf32>
    %cst_109 = arith.constant dense<0.000000e+00> : vector<24x24xf32>
    %404 = tpu.matmul %402, %403, %cst_109 {dimension_numbers = #tpu.dot_dimension_numbers<[1], [1], [0], [0], [0, 0, 1, 0], [], []>} : vector<24x8xf32>, vector<24x8xf32>, vector<24x24xf32> -> vector<24x24xf32>
    %405 = vector.broadcast %34 : vector<1x24xf32> to vector<24x24xf32>
    %406 = arith.addf %404, %405 : vector<24x24xf32>
    %cst_110 = arith.constant dense<0xFF800000> : vector<24xf32>
    %407 = vector.multi_reduction <maximumf>, %406, %cst_110 [1] : vector<24x24xf32> to vector<24xf32>
    %408 = vector.shape_cast %407 : vector<24xf32> to vector<24x1xf32>
    %409 = vector.broadcast %408 : vector<24x1xf32> to vector<24x24xf32>
    %410 = arith.subf %406, %409 : vector<24x24xf32>
    %411 = math.exp %410 : vector<24x24xf32>
    %cst_111 = arith.constant dense<0.000000e+00> : vector<24xf32>
    %412 = vector.multi_reduction <add>, %411, %cst_111 [1] : vector<24x24xf32> to vector<24xf32>
    %413 = vector.shape_cast %412 : vector<24xf32> to vector<24x1xf32>
    %414 = tpu.reciprocal %413 {approx = true} : vector<24x1xf32> -> vector<24x1xf32>
    %415 = vector.broadcast %414 : vector<24x1xf32> to vector<24x24xf32>
    %416 = arith.mulf %411, %415 : vector<24x24xf32>
    %417 = vector.extract_strided_slice %367 {offsets = [0, 16], sizes = [24, 8], strides = [1, 1]} : vector<24x32xf32> to vector<24x8xf32>
    %cst_112 = arith.constant dense<0.000000e+00> : vector<24x8xf32>
    %418 = tpu.matmul %416, %417, %cst_112 {dimension_numbers = #tpu.dot_dimension_numbers<[1], [0], [0], [1], [0, 0, 1, 1], [], []>} : vector<24x24xf32>, vector<24x8xf32>, vector<24x8xf32> -> vector<24x8xf32>
    %419 = vector.extract_strided_slice %365 {offsets = [0, 24], sizes = [24, 8], strides = [1, 1]} : vector<24x32xf32> to vector<24x8xf32>
    %420 = vector.extract_strided_slice %366 {offsets = [0, 24], sizes = [24, 8], strides = [1, 1]} : vector<24x32xf32> to vector<24x8xf32>
    %cst_113 = arith.constant dense<0.000000e+00> : vector<24x24xf32>
    %421 = tpu.matmul %419, %420, %cst_113 {dimension_numbers = #tpu.dot_dimension_numbers<[1], [1], [0], [0], [0, 0, 1, 0], [], []>} : vector<24x8xf32>, vector<24x8xf32>, vector<24x24xf32> -> vector<24x24xf32>
    %422 = vector.broadcast %34 : vector<1x24xf32> to vector<24x24xf32>
    %423 = arith.addf %421, %422 : vector<24x24xf32>
    %cst_114 = arith.constant dense<0xFF800000> : vector<24xf32>
    %424 = vector.multi_reduction <maximumf>, %423, %cst_114 [1] : vector<24x24xf32> to vector<24xf32>
    %425 = vector.shape_cast %424 : vector<24xf32> to vector<24x1xf32>
    %426 = vector.broadcast %425 : vector<24x1xf32> to vector<24x24xf32>
    %427 = arith.subf %423, %426 : vector<24x24xf32>
    %428 = math.exp %427 : vector<24x24xf32>
    %cst_115 = arith.constant dense<0.000000e+00> : vector<24xf32>
    %429 = vector.multi_reduction <add>, %428, %cst_115 [1] : vector<24x24xf32> to vector<24xf32>
    %430 = vector.shape_cast %429 : vector<24xf32> to vector<24x1xf32>
    %431 = tpu.reciprocal %430 {approx = true} : vector<24x1xf32> -> vector<24x1xf32>
    %432 = vector.broadcast %431 : vector<24x1xf32> to vector<24x24xf32>
    %433 = arith.mulf %428, %432 : vector<24x24xf32>
    %434 = vector.extract_strided_slice %367 {offsets = [0, 24], sizes = [24, 8], strides = [1, 1]} : vector<24x32xf32> to vector<24x8xf32>
    %cst_116 = arith.constant dense<0.000000e+00> : vector<24x8xf32>
    %435 = tpu.matmul %433, %434, %cst_116 {dimension_numbers = #tpu.dot_dimension_numbers<[1], [0], [0], [1], [0, 0, 1, 1], [], []>} : vector<24x24xf32>, vector<24x8xf32>, vector<24x8xf32> -> vector<24x8xf32>
    %436 = tpu.concatenate %384, %401, %418, %435 in 1 : vector<24x8xf32>, vector<24x8xf32>, vector<24x8xf32>, vector<24x8xf32> -> vector<24x32xf32>
    %437 = tpu.concatenate %364, %436 in 0 : vector<24x32xf32>, vector<24x32xf32> -> vector<48x32xf32>
    %c520 = arith.constant 520 : index
    %c0_117 = arith.constant 0 : index
    %438 = vector.load %arg2[%c520, %c0_117] : memref<728x128xf32, #tpu.memory_space<vmem>>, vector<32x32xf32>
    %cst_118 = arith.constant dense<0.000000e+00> : vector<48x32xf32>
    %439 = tpu.matmul %437, %438, %cst_118 {dimension_numbers = #tpu.dot_dimension_numbers<[1], [0], [0], [1], [0, 0, 1, 1], [], []>} : vector<48x32xf32>, vector<32x32xf32>, vector<48x32xf32> -> vector<48x32xf32>
    %c552 = arith.constant 552 : index
    %c0_119 = arith.constant 0 : index
    %440 = vector.load %arg2[%c552, %c0_119] : memref<728x128xf32, #tpu.memory_space<vmem>>, vector<1x32xf32>
    %441 = vector.broadcast %440 : vector<1x32xf32> to vector<48x32xf32>
    %442 = arith.addf %439, %441 : vector<48x32xf32>
    %443 = arith.addf %260, %442 : vector<48x32xf32>
    %c560 = arith.constant 560 : index
    %c0_120 = arith.constant 0 : index
    %444 = vector.load %arg2[%c560, %c0_120] : memref<728x128xf32, #tpu.memory_space<vmem>>, vector<1x32xf32>
    %c568 = arith.constant 568 : index
    %c0_121 = arith.constant 0 : index
    %445 = vector.load %arg2[%c568, %c0_121] : memref<728x128xf32, #tpu.memory_space<vmem>>, vector<1x32xf32>
    %cst_122 = arith.constant dense<0.000000e+00> : vector<48xf32>
    %446 = vector.multi_reduction <add>, %443, %cst_122 [1] : vector<48x32xf32> to vector<48xf32>
    %447 = vector.shape_cast %446 : vector<48xf32> to vector<48x1xf32>
    %cst_123 = arith.constant 3.200000e+01 : f32
    %448 = vector.broadcast %cst_123 : f32 to vector<48x1xf32>
    %449 = arith.divf %447, %448 : vector<48x1xf32>
    %450 = vector.broadcast %449 : vector<48x1xf32> to vector<48x32xf32>
    %451 = arith.subf %443, %450 : vector<48x32xf32>
    %452 = arith.mulf %451, %451 : vector<48x32xf32>
    %cst_124 = arith.constant dense<0.000000e+00> : vector<48xf32>
    %453 = vector.multi_reduction <add>, %452, %cst_124 [1] : vector<48x32xf32> to vector<48xf32>
    %454 = vector.shape_cast %453 : vector<48xf32> to vector<48x1xf32>
    %cst_125 = arith.constant 3.200000e+01 : f32
    %455 = vector.broadcast %cst_125 : f32 to vector<48x1xf32>
    %456 = arith.divf %454, %455 : vector<48x1xf32>
    %457 = vector.broadcast %449 : vector<48x1xf32> to vector<48x32xf32>
    %458 = arith.subf %443, %457 : vector<48x32xf32>
    %cst_126 = arith.constant 9.99999974E-6 : f32
    %459 = vector.broadcast %cst_126 : f32 to vector<48x1xf32>
    %460 = arith.addf %456, %459 : vector<48x1xf32>
    %461 = math.rsqrt %460 : vector<48x1xf32>
    %462 = vector.broadcast %461 : vector<48x1xf32> to vector<48x32xf32>
    %463 = arith.mulf %458, %462 : vector<48x32xf32>
    %464 = vector.broadcast %444 : vector<1x32xf32> to vector<48x32xf32>
    %465 = arith.mulf %463, %464 : vector<48x32xf32>
    %466 = vector.broadcast %445 : vector<1x32xf32> to vector<48x32xf32>
    %467 = arith.addf %465, %466 : vector<48x32xf32>
    %c576 = arith.constant 576 : index
    %c0_127 = arith.constant 0 : index
    %468 = vector.load %arg2[%c576, %c0_127] : memref<728x128xf32, #tpu.memory_space<vmem>>, vector<32x64xf32>
    %cst_128 = arith.constant dense<0.000000e+00> : vector<48x64xf32>
    %469 = tpu.matmul %467, %468, %cst_128 {dimension_numbers = #tpu.dot_dimension_numbers<[1], [0], [0], [1], [0, 0, 1, 1], [], []>} : vector<48x32xf32>, vector<32x64xf32>, vector<48x64xf32> -> vector<48x64xf32>
    %c608 = arith.constant 608 : index
    %c0_129 = arith.constant 0 : index
    %470 = vector.load %arg2[%c608, %c0_129] : memref<728x128xf32, #tpu.memory_space<vmem>>, vector<1x64xf32>
    %471 = vector.broadcast %470 : vector<1x64xf32> to vector<48x64xf32>
    %472 = arith.addf %469, %471 : vector<48x64xf32>
    %cst_130 = arith.constant 1.702000e+00 : f32
    %473 = vector.broadcast %cst_130 : f32 to vector<48x64xf32>
    %474 = arith.mulf %473, %472 : vector<48x64xf32>
    %475 = arith.negf %474 : vector<48x64xf32>
    %476 = math.exp %475 : vector<48x64xf32>
    %cst_131 = arith.constant 1.000000e+00 : f32
    %477 = vector.broadcast %cst_131 : f32 to vector<48x64xf32>
    %478 = arith.addf %477, %476 : vector<48x64xf32>
    %479 = arith.divf %477, %478 : vector<48x64xf32>
    %480 = arith.mulf %472, %479 : vector<48x64xf32>
    %c616 = arith.constant 616 : index
    %c0_132 = arith.constant 0 : index
    %481 = vector.load %arg2[%c616, %c0_132] : memref<728x128xf32, #tpu.memory_space<vmem>>, vector<64x32xf32>
    %cst_133 = arith.constant dense<0.000000e+00> : vector<48x32xf32>
    %482 = tpu.matmul %480, %481, %cst_133 {dimension_numbers = #tpu.dot_dimension_numbers<[1], [0], [0], [1], [0, 0, 1, 1], [], []>} : vector<48x64xf32>, vector<64x32xf32>, vector<48x32xf32> -> vector<48x32xf32>
    %c680 = arith.constant 680 : index
    %c0_134 = arith.constant 0 : index
    %483 = vector.load %arg2[%c680, %c0_134] : memref<728x128xf32, #tpu.memory_space<vmem>>, vector<1x32xf32>
    %484 = vector.broadcast %483 : vector<1x32xf32> to vector<48x32xf32>
    %485 = arith.addf %482, %484 : vector<48x32xf32>
    %486 = arith.addf %443, %485 : vector<48x32xf32>
    %487 = vector.extract_strided_slice %486 {offsets = [0, 0], sizes = [1, 32], strides = [1, 1]} : vector<48x32xf32> to vector<1x32xf32>
    %488 = vector.extract_strided_slice %486 {offsets = [24, 0], sizes = [1, 32], strides = [1, 1]} : vector<48x32xf32> to vector<1x32xf32>
    %489 = tpu.concatenate %487, %488 in 0 : vector<1x32xf32>, vector<1x32xf32> -> vector<2x32xf32>
    %c688 = arith.constant 688 : index
    %c0_135 = arith.constant 0 : index
    %490 = vector.load %arg2[%c688, %c0_135] : memref<728x128xf32, #tpu.memory_space<vmem>>, vector<32x16xf32>
    %cst_136 = arith.constant dense<0.000000e+00> : vector<2x16xf32>
    %491 = tpu.matmul %489, %490, %cst_136 {dimension_numbers = #tpu.dot_dimension_numbers<[1], [0], [0], [1], [0, 0, 1, 1], [], []>} : vector<2x32xf32>, vector<32x16xf32>, vector<2x16xf32> -> vector<2x16xf32>
    %c720 = arith.constant 720 : index
    %c0_137 = arith.constant 0 : index
    %492 = vector.load %arg2[%c720, %c0_137] : memref<728x128xf32, #tpu.memory_space<vmem>>, vector<1x16xf32>
    %493 = vector.broadcast %492 : vector<1x16xf32> to vector<2x16xf32>
    %494 = arith.addf %491, %493 : vector<2x16xf32>
    %c0_138 = arith.constant 0 : index
    %c0_139 = arith.constant 0 : index
    %c0_140 = arith.constant 0 : index
    %495 = vector.load %arg3[%c0_138, %c0_139, %c0_140] : memref<1x2x16xf32, #tpu.memory_space<vmem>>, vector<1x2x16xf32>
    %496 = vector.shape_cast %495 : vector<1x2x16xf32> to vector<2x16xf32>
    %497 = vector.shape_cast %494 : vector<2x16xf32> to vector<1x2x16xf32>
    tpu.vector_store %arg3[%c0_138, %c0_139, %c0_140], %497 {strides = array<i32>} : memref<1x2x16xf32, #tpu.memory_space<vmem>>, vector<1x2x16xf32>,
    return
  }
  func.func @transform_0(%arg0: i32) -> (i32, i32, i32) {
    %c0_i32 = arith.constant 0 : i32
    %c0_i32_0 = arith.constant 0 : i32
    %c0_i32_1 = arith.constant 0 : i32
    return %arg0, %c0_i32, %c0_i32_0 : i32, i32, i32
  }
  func.func @transform_1(%arg0: i32) -> (i32, i32) {
    %c0_i32 = arith.constant 0 : i32
    %c0_i32_0 = arith.constant 0 : i32
    %c0_i32_1 = arith.constant 0 : i32
    return %c0_i32, %c0_i32_0 : i32, i32
  }
  func.func @transform_2(%arg0: i32) -> (i32, i32, i32) {
    %c0_i32 = arith.constant 0 : i32
    %c0_i32_0 = arith.constant 0 : i32
    %c0_i32_1 = arith.constant 0 : i32
    return %arg0, %c0_i32, %c0_i32_0 : i32, i32, i32
  }
}

</mosaic_0001>

<llo_original>
// kernel: tpu_custom_call.1
$region0: #{tpu_custom_call.1}
  #allocation0 [shape = 'u32[]', space=smem, size = 0x4, offset = 0x4, fixed_abs, tag = 'smem constant byte address 0x4 - core index']
  #allocation1 [shape = 'u32[144,128]{1,0:T(1,128)}', space=vmem, size = 0x12000, scoped, tag = 'internal scratch']
  %s0 = inlined_call_operand.hbm [shape: f32[4,24,192], index: 0, kind: input, shape index: {}]
  %s1 = inlined_call_operand.hbm [shape: f32[728,128], index: 1, kind: input, shape index: {}]
  %s2 = inlined_call_operand.hbm [shape: f32[2,2,16], index: 2, kind: output, shape index: {}]
  %s3 = sld [smem:[#allocation0]]
  $region49: #{tpu_custom_call.1} parent=0
    _
  %s5 = ssub.s32 1, %s3
  %s6 = scalar_select 0, %s5, %s3
  $region1: #{tpu_custom_call.1} parent=0
    #allocation2 [shape = 'u8[98304]{0}', space=vmem, size = 0x18000, scoped, tag = 'input window, operand 0']
    #allocation3 [shape = 's32[2]{0}', space=sflag, size = 0x8, scoped, tag = 'scoped memory for tpu_custom_call.1']
    #allocation4 [shape = 's32[2]{0}', space=sflag, size = 0x8, scoped, tag = 'scoped memory for tpu_custom_call.1']
    #allocation5 [shape = 'u8[372736]{0}', space=vmem, size = 0x5b000, scoped, tag = 'input window, operand 1, single buffered']
    #allocation6 [shape = 's32[1]{0}', space=sflag, size = 0x4, scoped, tag = 'scoped memory for tpu_custom_call.1']
    #allocation7 [shape = 'u8[2048]{0}', space=vmem, size = 0x800, scoped, tag = 'output window, operand 0']
    %7 = vsyncpa [#allocation3], 0
    %s8 = scalar_lea.sflag [#allocation3], 1
    %9 = vsyncpa %s8, 0
    %10 = vsyncpa [#allocation6], 0
    %11 = vsyncpa [#allocation4], 0
    %s12 = scalar_lea.sflag [#allocation4], 1
    %13 = vsyncpa %s12, 0
    loop: start=0, step=1, limit=4
    $region2: #{tpu_custom_call.1} parent=1 // loop_pre_header
      _
    $region3: #{tpu_custom_call.1} parent=1 // loop_header
      %s15 = sphi 0, %s19
      %p16 = scmp.ge.s32.totalorder %s15, 4
      %s25 = sphi 0, %s27
      %s28 = sphi 0, %s25
      %s29 = sphi 0, %s28
      %s45 = sphi 0, %s29
      %s49 = sphi 0, %s49
      %s51 = sphi 0, %s49
      %s52 = sphi 0, %s51
      %s66 = sphi 0, %s52
      %s72 = sphi 0, %s74
      %s75 = sphi 0, %s72
      %s76 = sphi 0, %s75
      %s92 = sphi 0, %s76
    $region4: #{tpu_custom_call.1} parent=1 // loop_header_branch
      %18 = sbr.rel (%p16) target = $region8
    $region5: #{tpu_custom_call.1} parent=1 // loop_body
      %s20 = ssub.s32 %s15, 1
      %s21 = ssub.s32 %s15, 2
      %s22 = sadd.s32 %s15, 1
      %s23 = ssub.s32 %s15, %s22
      %p24 = scmp.eq.s32.totalorder %s23, 0
      %s26 = sadd.s32 %s25, 1
      %s27 = scalar_select %p24, %s25, %s26
      %p30 = pneg %p24
      %p31 = scmp.eq.s32.totalorder %s15, 1
      %p32 = por %p30, %p31
      %p33 = scmp.ne.s32.totalorder %s25, %s28
      %p34 = scmp.eq.s32.totalorder %s15, 0
      %p35 = por %p33, %p34
      %p36 = scmp.ne.s32.totalorder %s25, %s28
      %p37 = scmp.eq.s32.totalorder %s20, 1
      %p38 = por %p36, %p37
      %p39 = scmp.ne.s32.totalorder %s28, %s29
      %p40 = scmp.eq.s32.totalorder %s20, 0
      %p41 = por %p39, %p40
      %p42 = scmp.ne.s32.totalorder %s28, %s29
      %p43 = scmp.eq.s32.totalorder %s21, 1
      %p44 = por %p42, %p43
      %p46 = scmp.ne.s32.totalorder %s29, %s45
      %p47 = scmp.eq.s32.totalorder %s21, 0
      %p48 = por %p46, %p47
      %s50 = sadd.s32 %s49, 1
      %p53 = scmp.eq.s32.totalorder %s15, 1
      %p54 = scmp.ne.s32.totalorder %s49, %s51
      %p55 = scmp.eq.s32.totalorder %s15, 0
      %p56 = por %p54, %p55
      %p57 = scmp.ne.s32.totalorder %s49, %s51
      %p58 = scmp.eq.s32.totalorder %s20, 1
      %p59 = por %p57, %p58
      %p60 = scmp.ne.s32.totalorder %s51, %s52
      %p61 = scmp.eq.s32.totalorder %s20, 0
      %p62 = por %p60, %p61
      %p63 = scmp.ne.s32.totalorder %s51, %s52
      %p64 = scmp.eq.s32.totalorder %s21, 1
      %p65 = por %p63, %p64
      %p67 = scmp.ne.s32.totalorder %s52, %s66
      %p68 = scmp.eq.s32.totalorder %s21, 0
      %p69 = por %p67, %p68
      %s70 = ssub.s32 %s15, %s22
      %p71 = scmp.eq.s32.totalorder %s70, 0
      %s73 = sadd.s32 %s72, 1
      %s74 = scalar_select %p71, %s72, %s73
      %p77 = pneg %p71
      %p78 = scmp.eq.s32.totalorder %s15, 1
      %p79 = por %p77, %p78
      %p80 = scmp.ne.s32.totalorder %s72, %s75
      %p81 = scmp.eq.s32.totalorder %s15, 0
      %p82 = por %p80, %p81
      %p83 = scmp.ne.s32.totalorder %s72, %s75
      %p84 = scmp.eq.s32.totalorder %s20, 1
      %p85 = por %p83, %p84
      %p86 = scmp.ne.s32.totalorder %s75, %s76
      %p87 = scmp.eq.s32.totalorder %s20, 0
      %p88 = por %p86, %p87
      %p89 = scmp.ne.s32.totalorder %s75, %s76
      %p90 = scmp.eq.s32.totalorder %s21, 1
      %p91 = por %p89, %p90
      %p93 = scmp.ne.s32.totalorder %s76, %s92
      %p94 = scmp.eq.s32.totalorder %s21, 0
      %p95 = por %p93, %p94
      %p96 = scmp.le.s32.totalorder 1, %s15
      %p97 = scmp.lt.s32.totalorder %s15, 3
      %p98 = pnand %p96, %p97
      %p99 = pneg %p98
      // Predicated region
      $region9: #{tpu_custom_call.1} parent=5 // pred_check
        _
      $region10: #{tpu_custom_call.1} parent=5 // pred_check_branch
        %101 = sbr.rel (%p98) target = $region12
      $region11: #{tpu_custom_call.1} parent=5 // pred_region
        %s102 = ssub.s32 %s15, 1
        // Predicated region
        $region13: #{tpu_custom_call.1} parent=11 // pred_check
          %p103 = pneg %p62
        $region14: #{tpu_custom_call.1} parent=11 // pred_check_branch
          %105 = sbr.rel (%p103) target = $region16
        $region15: #{tpu_custom_call.1} parent=11 // pred_region
          %s107 = ssub.s32 11648, 11648
          %108 = vsyncadd [#allocation6], %s107
          %s109 = sshll.u32 [#allocation5], 4
          %s110 = int_to_ptr.vmem [resolvable:$true] %s109
          %115 = dma.hbm_to_vmem [thread:$0]  %s1, 11648, %s110, [#allocation6], 128, 128, 8
        $region16: #{tpu_custom_call.1} parent=11 // pred_fallthru
          _
      $region12: #{tpu_custom_call.1} parent=5 // pred_fallthru
        _
      %p116 = scmp.lt.s32.totalorder %s15, 2
      // Predicated region
      $region17: #{tpu_custom_call.1} parent=5 // pred_check
        %p117 = pneg %p116
      $region18: #{tpu_custom_call.1} parent=5 // pred_check_branch
        %119 = sbr.rel (%p117) target = $region20
      $region19: #{tpu_custom_call.1} parent=5 // pred_region
        // Predicated region
        $region21: #{tpu_custom_call.1} parent=19 // pred_check
          %p120 = pneg %p35
        $region22: #{tpu_custom_call.1} parent=19 // pred_check_branch
          %122 = sbr.rel (%p120) target = $region24
        $region23: #{tpu_custom_call.1} parent=19 // pred_region
          %s123 = sand.u32 %s25, 1
          %s124 = scalar_lea.sflag [#allocation3], %s123
          %s125 = sand.u32 %s25, 1
          %s126 = smul.addr %s125, 96
          %s127 = scalar_lea.vmem [#allocation2], %s126
          %s128 = smul.u32 2, %s15
          %s130 = ssub.s32 1536, 1536
          %131 = vsyncadd %s124, %s130
          %s132 = smul.addr %s128, 6
          %s133 = smul.addr %s132, 128
          %s134 = scalar_lea.hbm %s0, %s133
          %s135 = sshll.u32 %s127, 4
          %s136 = int_to_ptr.vmem [resolvable:$true] %s135
          %141 = dma.hbm_to_vmem [thread:$0]  %s134, 1536, %s136, %s124, 256, 256, 16
        $region24: #{tpu_custom_call.1} parent=19 // pred_fallthru
          _
      $region20: #{tpu_custom_call.1} parent=5 // pred_fallthru
        _
      %p142 = scmp.le.s32.totalorder 1, %s15
      %p143 = scmp.lt.s32.totalorder %s15, 3
      %p144 = pnand %p142, %p143
      %p145 = pneg %p144
      // Predicated region
      $region25: #{tpu_custom_call.1} parent=5 // pred_check
        _
      $region26: #{tpu_custom_call.1} parent=5 // pred_check_branch
        %147 = sbr.rel (%p144) target = $region28
      $region27: #{tpu_custom_call.1} parent=5 // pred_region
        %s148 = ssub.s32 %s15, 1
        %s149 = sand.u32 %s28, 1
        %s150 = scalar_lea.sflag [#allocation3], %s149
        %s151 = sand.u32 %s28, 1
        %s152 = smul.addr %s151, 96
        %s153 = scalar_lea.vmem [#allocation2], %s152
        // Predicated region
        $region29: #{tpu_custom_call.1} parent=27 // pred_check
          %p154 = pneg %p41
        $region30: #{tpu_custom_call.1} parent=27 // pred_check_branch
          %156 = sbr.rel (%p154) target = $region32
        $region31: #{tpu_custom_call.1} parent=27 // pred_region
          %157 = dma.done %s150, 1536
        $region32: #{tpu_custom_call.1} parent=27 // pred_fallthru
          _
        // Predicated region
        $region33: #{tpu_custom_call.1} parent=27 // pred_check
          %p158 = pneg %p62
        $region34: #{tpu_custom_call.1} parent=27 // pred_check_branch
          %160 = sbr.rel (%p158) target = $region36
        $region35: #{tpu_custom_call.1} parent=27 // pred_region
          %161 = dma.done [#allocation6], 11648
        $region36: #{tpu_custom_call.1} parent=27 // pred_fallthru
          _
        %s162 = sand.u32 %s28, 1
        %s163 = scalar_lea.sflag [#allocation3], %s162
        %s164 = sand.u32 %s28, 1
        %s165 = smul.addr %s164, 96
        %s166 = scalar_lea.vmem [#allocation2], %s165
        %p167 = pneg %p41
        %p168 = pneg %p38
        %p169 = pneg %p62
        %p170 = pneg %p59
        %p171 = pneg %p88
        %p172 = pneg %p85
        %s173 = sand.u32 %s75, 1
        %s174 = scalar_lea.sflag [#allocation4], %s173
        %s175 = sand.u32 %s75, 1
        %s176 = smul.addr %s175, 2
        %s177 = scalar_lea.vmem [#allocation7], %s176
        %s178 = smul.u32 2, %s20
        %v179 = vld [vmem:[%s153] sm:$0xff]
        %v180 = vld [vmem:[%s153 + $0x8] sm:$0xff]
        %v181 = vld [vmem:[%s153 + $0x10] sm:$0xff]
        %v182 = vld [vmem:[%s153 + $0x18] sm:$0xff]
        %v183 = vld [vmem:[%s153 + $0x20] sm:$0xff]
        %v184 = vld [vmem:[%s153 + $0x28] sm:$0xff]
        %s185 = scalar_lea.vmem %s153, 48 [#allocation2]
        %v186 = vld [vmem:[%s185] sm:$0xff]
        %v187 = vld [vmem:[%s185 + $0x8] sm:$0xff]
        %v188 = vld [vmem:[%s185 + $0x10] sm:$0xff]
        %v189 = vld [vmem:[%s185 + $0x18] sm:$0xff]
        %v190 = vld [vmem:[%s185 + $0x20] sm:$0xff]
        %v191 = vld [vmem:[%s185 + $0x28] sm:$0xff]
        %v192 = vld [vmem:[#allocation5 + $0xc0] sm:$0xff]
        %v193 = vld [vmem:[#allocation5 + $0xc8] sm:$0xff]
        %v194 = vld [vmem:[#allocation5 + $0xd0] sm:$0xff]
        %v195 = vld [vmem:[#allocation5] sm:$0xff]
        %v196 = vld [vmem:[#allocation5 + $0x8] sm:$0xff]
        %v197 = vld [vmem:[#allocation5 + $0x10] sm:$0xff]
        %v198 = vld [vmem:[#allocation5 + $0x18] sm:$0xff]
        %v199 = vld [vmem:[#allocation5 + $0x20] sm:$0xff]
        %v200 = vld [vmem:[#allocation5 + $0x28] sm:$0xff]
        %v201 = vld [vmem:[#allocation5 + $0x30] sm:$0xff]
        %v202 = vld [vmem:[#allocation5 + $0x38] sm:$0xff]
        %v203 = vld [vmem:[#allocation5 + $0x40] sm:$0xff]
        %v204 = vld [vmem:[#allocation5 + $0x48] sm:$0xff]
        %v205 = vld [vmem:[#allocation5 + $0x50] sm:$0xff]
        %v206 = vld [vmem:[#allocation5 + $0x58] sm:$0xff]
        %v207 = vld [vmem:[#allocation5 + $0x60] sm:$0xff]
        %v208 = vld [vmem:[#allocation5 + $0x68] sm:$0xff]
        %v209 = vld [vmem:[#allocation5 + $0x70] sm:$0xff]
        %v210 = vld [vmem:[#allocation5 + $0x78] sm:$0xff]
        %v211 = vld [vmem:[#allocation5 + $0x80] sm:$0xff]
        %v212 = vld [vmem:[#allocation5 + $0x88] sm:$0xff]
        %v213 = vld [vmem:[#allocation5 + $0x90] sm:$0xff]
        %v214 = vld [vmem:[#allocation5 + $0x98] sm:$0xff]
        %v215 = vld [vmem:[#allocation5 + $0xa0] sm:$0xff]
        %v216 = vld [vmem:[#allocation5 + $0xa8] sm:$0xff]
        %v217 = vld [vmem:[#allocation5 + $0xb0] sm:$0xff]
        %v218 = vld [vmem:[#allocation5 + $0xb8] sm:$0xff]
        %vm219 = vcmask 523264
        %v221 = vsel %vm219, %v180, 0
        %v224 = vsel %vm219, %v182, 0
        %v227 = vsel %vm219, %v184, 0
        %v230 = vsel %vm219, %v187, 0
        %v233 = vsel %vm219, %v189, 0
        %v236 = vsel %vm219, %v191, 0
        %238 = vmatprep.subr.mxu0 0.0
        %239 = vmatpush1.msra.mxu0 %v210
        %240 = vmatprep.subr.mxu0 0.0
        %241 = vmatpush1.msra.mxu0 %v209
        %242 = vmatprep.subr.mxu0 0.0
        %243 = vmatpush1.msra.mxu0 %v208
        %244 = vmatprep.subr.mxu0 0.0
        %245 = vmatpush1.msra.mxu0 %v207
        %246 = vmatprep.subr.mxu0 0.0
        %247 = vmatpush1.msra.mxu0 %v206
        %248 = vmatprep.subr.mxu0 0.0
        %249 = vmatpush1.msra.mxu0 %v205
        %250 = vmatprep.subr.mxu0 0.0
        %251 = vmatpush1.msra.mxu0 %v204
        %252 = vmatprep.subr.mxu0 0.0
        %253 = vmatpush1.msra.mxu0 %v203
        %254 = vmatprep.subr.mxu0 0.0
        %255 = vmatpush1.msra.mxu0 %v202
        %256 = vmatprep.subr.mxu0 0.0
        %257 = vmatpush1.msra.mxu0 %v201
        %258 = vmatprep.subr.mxu0 0.0
        %259 = vmatpush1.msra.mxu0 %v200
        %260 = vmatprep.subr.mxu0 0.0
        %261 = vmatpush1.msra.mxu0 %v199
        %262 = vmatprep.subr.mxu0 0.0
        %263 = vmatpush1.msra.mxu0 %v198
        %264 = vmatprep.subr.mxu0 0.0
        %265 = vmatpush1.msra.mxu0 %v197
        %266 = vmatprep.subr.mxu0 0.0
        %267 = vmatpush1.msra.mxu0 %v196
        %268 = vmatprep.subr.mxu0 0.0
        %269 = vmatpush1.msra.mxu0 %v195
        %270 = vmatprep.subr.mxu0 0.0
        %271 = vmatpush2.msra.mxu0 0.0
        %272 = vmatprep.subr.mxu0 0.0
        %273 = vmatpush2.msra.mxu0 0.0
        %274 = vmatprep.subr.mxu0 0.0
        %275 = vmatpush2.msra.mxu0 0.0
        %276 = vmatprep.subr.mxu0 0.0
        %277 = vmatpush2.msra.mxu0 0.0
        %278 = vmatprep.subr.mxu0 0.0
        %279 = vmatpush2.msra.mxu0 0.0
        %280 = vmatprep.subr.mxu0 0.0
        %281 = vmatpush2.msra.mxu0 0.0
        %282 = vmatprep.subr.mxu0 0.0
        %283 = vmatpush2.msra.mxu0 0.0
        %284 = vmatprep.subr.mxu0 0.0
        %285 = vmatpush2.msra.mxu0 0.0
        %286 = vmatprep.subr.mxu0 0.0
        %287 = vmatpush2.msra.mxu0 %v218
        %288 = vmatprep.subr.mxu0 0.0
        %289 = vmatpush2.msra.mxu0 %v217
        %290 = vmatprep.subr.mxu0 0.0
        %291 = vmatpush2.msra.mxu0 %v216
        %292 = vmatprep.subr.mxu0 0.0
        %293 = vmatpush2.msra.mxu0 %v215
        %294 = vmatprep.subr.mxu0 0.0
        %295 = vmatpush2.msra.mxu0 %v214
        %296 = vmatprep.subr.mxu0 0.0
        %297 = vmatpush2.msra.mxu0 %v213
        %298 = vmatprep.subr.mxu0 0.0
        %299 = vmatpush2.msra.mxu0 %v212
        %300 = vmatprep.subr.mxu0 0.0
        %301 = vmatpush2.msra.mxu0 %v211
        %302 = vmatprep.mubr.f32.mxu0 %v221
        %303 = vmatmul.mubr.f32.gmra.mxu0 %v179
        %v304 = vpop.f32.mrf.mxu0
        %v305 = vadd.f32 %v192, %v304
        %v306 = vpop.f32.mrf.mxu0
        %307 = vmatprep.mubr.f32.mxu0 %v224
        %308 = vmatmul.mubr.f32.gmra.mxu0 %v181
        %v309 = vpop.f32.mrf.mxu0
        %v310 = vadd.f32 %v193, %v309
        %v311 = vpop.f32.mrf.mxu0
        %312 = vmatprep.mubr.f32.mxu0 %v227
        %313 = vmatmul.mubr.f32.gmra.mxu0 %v183
        %v314 = vpop.f32.mrf.mxu0
        %v315 = vadd.f32 %v194, %v314
        %v316 = vpop.f32.mrf.mxu0
        %317 = vmatprep.mubr.f32.mxu0 %v230
        %318 = vmatmul.mubr.f32.gmra.mxu0 %v186
        %v319 = vpop.f32.mrf.mxu0
        %v320 = vadd.f32 %v192, %v319
        %v321 = vpop.f32.mrf.mxu0
        %322 = vmatprep.mubr.f32.mxu0 %v233
        %323 = vmatmul.mubr.f32.gmra.mxu0 %v188
        %v324 = vpop.f32.mrf.mxu0
        %v325 = vadd.f32 %v193, %v324
        %v326 = vpop.f32.mrf.mxu0
        %327 = vmatprep.mubr.f32.mxu0 %v236
        %328 = vmatmul.mubr.f32.gmra.mxu0 %v190
        %v329 = vpop.f32.mrf.mxu0
        %v330 = vadd.f32 %v194, %v329
        %v331 = vpop.f32.mrf.mxu0
        %332 = vdwg.mxu0
        %v333 = vld [vmem:[#allocation5 + $0xe0] sm:$0x1]
        %v334 = vld [vmem:[#allocation5 + $0xe8] sm:$0x1]
        %vm335 = vcmask 261120
        %v336 = vsel %vm335, %v305, 0.0
        %337 = vadd.xlane.f32.xlu0 %v336
        %v338 = vpop.xlane.xlu0 %337
        %v339 = vsel %vm335, %v310, 0.0
        %340 = vadd.xlane.f32.xlu0 %v339
        %v341 = vpop.xlane.xlu0 %340
        %v342 = vsel %vm335, %v315, 0.0
        %343 = vadd.xlane.f32.xlu0 %v342
        %v344 = vpop.xlane.xlu0 %343
        %v345 = vsel %vm335, %v320, 0.0
        %346 = vadd.xlane.f32.xlu0 %v345
        %v347 = vpop.xlane.xlu0 %346
        %v348 = vsel %vm335, %v325, 0.0
        %349 = vadd.xlane.f32.xlu0 %v348
        %v350 = vpop.xlane.xlu0 %349
        %v351 = vsel %vm335, %v330, 0.0
        %352 = vadd.xlane.f32.xlu0 %v351
        %v353 = vpop.xlane.xlu0 %352
        %v354 = vrcp.pop 32.0
        %v355 = vmul.f32 %v338, %v354
        %v356 = vmul.f32 %v341, %v354
        %v357 = vmul.f32 %v344, %v354
        %v358 = vmul.f32 %v347, %v354
        %v359 = vmul.f32 %v350, %v354
        %v360 = vmul.f32 %v353, %v354
        %v361 = vsub.f32 %v305, %v355
        %v362 = vsub.f32 %v310, %v356
        %v363 = vsub.f32 %v315, %v357
        %v364 = vsub.f32 %v320, %v358
        %v365 = vsub.f32 %v325, %v359
        %v366 = vsub.f32 %v330, %v360
        %v367 = vmul.f32 %v361, %v361
        %v368 = vmul.f32 %v362, %v362
        %v369 = vmul.f32 %v363, %v363
        %v370 = vmul.f32 %v364, %v364
        %v371 = vmul.f32 %v365, %v365
        %v372 = vmul.f32 %v366, %v366
        %v373 = vsel %vm335, %v367, 0.0
        %374 = vadd.xlane.f32.xlu0 %v373
        %v375 = vpop.xlane.xlu0 %374
        %v376 = vsel %vm335, %v368, 0.0
        %377 = vadd.xlane.f32.xlu0 %v376
        %v378 = vpop.xlane.xlu0 %377
        %v379 = vsel %vm335, %v369, 0.0
        %380 = vadd.xlane.f32.xlu0 %v379
        %v381 = vpop.xlane.xlu0 %380
        %v382 = vsel %vm335, %v370, 0.0
        %383 = vadd.xlane.f32.xlu0 %v382
        %v384 = vpop.xlane.xlu0 %383
        %v385 = vsel %vm335, %v371, 0.0
        %386 = vadd.xlane.f32.xlu0 %v385
        %v387 = vpop.xlane.xlu0 %386
        %v388 = vsel %vm335, %v372, 0.0
        %389 = vadd.xlane.f32.xlu0 %v388
        %v390 = vpop.xlane.xlu0 %389
        %v391 = vmul.f32 %v375, %v354
        %v392 = vmul.f32 %v378, %v354
        %v393 = vmul.f32 %v381, %v354
        %v394 = vmul.f32 %v384, %v354
        %v395 = vmul.f32 %v387, %v354
        %v396 = vmul.f32 %v390, %v354
        %v397 = vadd.f32 %v391, 1e-05
        %v398 = vadd.f32 %v392, 1e-05
        %v399 = vadd.f32 %v393, 1e-05
        %v400 = vadd.f32 %v394, 1e-05
        %v401 = vadd.f32 %v395, 1e-05
        %v402 = vadd.f32 %v396, 1e-05
        %v403 = vrsqrt.pop %v397
        %v404 = vrsqrt.pop %v398
        %v405 = vrsqrt.pop %v399
        %v406 = vrsqrt.pop %v400
        %v407 = vrsqrt.pop %v401
        %v408 = vrsqrt.pop %v402
        %v409 = vmul.f32 %v361, %v403
        %v410 = vmul.f32 %v362, %v404
        %v411 = vmul.f32 %v363, %v405
        %v412 = vmul.f32 %v364, %v406
        %v413 = vmul.f32 %v365, %v407
        %v414 = vmul.f32 %v366, %v408
        %v415 = vlaneseq
        %v416 = vshrl.u32 %v415, 7
        %v417 = vsub.s32 0, %v416
        %v418 = vrot.slane %v333, %v417
        %v419 = vmul.f32 %v409, %v418
        %v420 = vmul.f32 %v410, %v418
        %v421 = vmul.f32 %v411, %v418
        %v422 = vmul.f32 %v412, %v418
        %v423 = vmul.f32 %v413, %v418
        %v424 = vmul.f32 %v414, %v418
        %v425 = vlaneseq
        %v426 = vshrl.u32 %v425, 7
        %v427 = vsub.s32 0, %v426
        %v428 = vrot.slane %v334, %v427
        %v429 = vadd.f32 %v419, %v428
        %v430 = vadd.f32 %v420, %v428
        %v431 = vadd.f32 %v421, %v428
        %v432 = vadd.f32 %v422, %v428
        %v433 = vadd.f32 %v423, %v428
        %v434 = vadd.f32 %v424, %v428
        %v435 = vld [vmem:[#allocation5 + $0xd8] sm:$0x1]
        %v436 = vld [vmem:[#allocation5 + $0xf0] sm:$0x1]
        %v437 = vld [vmem:[#allocation5 + $0xf8] sm:$0x1]
        %v438 = vsel %vm335, %v429, 0.0
        %439 = vadd.xlane.f32.xlu0 %v438
        %v440 = vpop.xlane.xlu0 %439
        %v441 = vsel %vm335, %v430, 0.0
        %442 = vadd.xlane.f32.xlu0 %v441
        %v443 = vpop.xlane.xlu0 %442
        %v444 = vsel %vm335, %v431, 0.0
        %445 = vadd.xlane.f32.xlu0 %v444
        %v446 = vpop.xlane.xlu0 %445
        %v447 = vsel %vm335, %v432, 0.0
        %448 = vadd.xlane.f32.xlu0 %v447
        %v449 = vpop.xlane.xlu0 %448
        %v450 = vsel %vm335, %v433, 0.0
        %451 = vadd.xlane.f32.xlu0 %v450
        %v452 = vpop.xlane.xlu0 %451
        %v453 = vsel %vm335, %v434, 0.0
        %454 = vadd.xlane.f32.xlu0 %v453
        %v455 = vpop.xlane.xlu0 %454
        %v456 = vmul.f32 %v440, %v354
        %v457 = vmul.f32 %v443, %v354
        %v458 = vmul.f32 %v446, %v354
        %v459 = vmul.f32 %v449, %v354
        %v460 = vmul.f32 %v452, %v354
        %v461 = vmul.f32 %v455, %v354
        %v462 = vsub.f32 %v429, %v456
        %v463 = vsub.f32 %v430, %v457
        %v464 = vsub.f32 %v431, %v458
        %v465 = vsub.f32 %v432, %v459
        %v466 = vsub.f32 %v433, %v460
        %v467 = vsub.f32 %v434, %v461
        %v468 = vmul.f32 %v462, %v462
        %v469 = vmul.f32 %v463, %v463
        %v470 = vmul.f32 %v464, %v464
        %v471 = vmul.f32 %v465, %v465
        %v472 = vmul.f32 %v466, %v466
        %v473 = vmul.f32 %v467, %v467
        %v474 = vsel %vm335, %v468, 0.0
        %475 = vadd.xlane.f32.xlu0 %v474
        %v476 = vpop.xlane.xlu0 %475
        %v477 = vsel %vm335, %v469, 0.0
        %478 = vadd.xlane.f32.xlu0 %v477
        %v479 = vpop.xlane.xlu0 %478
        %v480 = vsel %vm335, %v470, 0.0
        %481 = vadd.xlane.f32.xlu0 %v480
        %v482 = vpop.xlane.xlu0 %481
        %v483 = vsel %vm335, %v471, 0.0
        %484 = vadd.xlane.f32.xlu0 %v483
        %v485 = vpop.xlane.xlu0 %484
        %v486 = vsel %vm335, %v472, 0.0
        %487 = vadd.xlane.f32.xlu0 %v486
        %v488 = vpop.xlane.xlu0 %487
        %v489 = vsel %vm335, %v473, 0.0
        %490 = vadd.xlane.f32.xlu0 %v489
        %v491 = vpop.xlane.xlu0 %490
        %v492 = vmul.f32 %v476, %v354
        %v493 = vmul.f32 %v479, %v354
        %v494 = vmul.f32 %v482, %v354
        %v495 = vmul.f32 %v485, %v354
        %v496 = vmul.f32 %v488, %v354
        %v497 = vmul.f32 %v491, %v354
        %v498 = vadd.f32 %v492, 1e-05
        %v499 = vadd.f32 %v493, 1e-05
        %v500 = vadd.f32 %v494, 1e-05
        %v501 = vadd.f32 %v495, 1e-05
        %v502 = vadd.f32 %v496, 1e-05
        %v503 = vadd.f32 %v497, 1e-05
        %v504 = vrsqrt.pop %v498
        %v505 = vrsqrt.pop %v499
        %v506 = vrsqrt.pop %v500
        %v507 = vrsqrt.pop %v501
        %v508 = vrsqrt.pop %v502
        %v509 = vrsqrt.pop %v503
        %v510 = vmul.f32 %v462, %v504
        %v511 = vmul.f32 %v463, %v505
        %v512 = vmul.f32 %v464, %v506
        %v513 = vmul.f32 %v465, %v507
        %v514 = vmul.f32 %v466, %v508
        %v515 = vmul.f32 %v467, %v509
        %v516 = vlaneseq
        %v517 = vshrl.u32 %v516, 7
        %v518 = vsub.s32 0, %v517
        %v519 = vrot.slane %v436, %v518
        %v520 = vmul.f32 %v510, %v519
        %v521 = vmul.f32 %v511, %v519
        %v522 = vmul.f32 %v512, %v519
        %v523 = vmul.f32 %v513, %v519
        %v524 = vmul.f32 %v514, %v519
        %v525 = vmul.f32 %v515, %v519
        %v526 = vlaneseq
        %v527 = vshrl.u32 %v526, 7
        %v528 = vsub.s32 0, %v527
        %v529 = vrot.slane %v437, %v528
        %v530 = vadd.f32 %v520, %v529
        %v531 = vadd.f32 %v521, %v529
        %v532 = vadd.f32 %v522, %v529
        %v533 = vadd.f32 %v523, %v529
        %v534 = vadd.f32 %v524, %v529
        %v535 = vadd.f32 %v525, %v529
        %v536 = vld [vmem:[#allocation5 + $0x100] sm:$0xff]
        %v537 = vld [vmem:[#allocation5 + $0x108] sm:$0xff]
        %v538 = vld [vmem:[#allocation5 + $0x110] sm:$0xff]
        %v539 = vld [vmem:[#allocation5 + $0x118] sm:$0xff]
        %v540 = vld [vmem:[#allocation5 + $0x120] sm:$0x1]
        %v541 = vlaneseq
        %v542 = vshrl.u32 %v541, 7
        %v543 = vsub.s32 0, %v542
        %v544 = vrot.slane %v540, %v543
        %v546 = vsel %vm335, %v530, 0
        %v549 = vsel %vm335, %v531, 0
        %v552 = vsel %vm335, %v532, 0
        %v555 = vsel %vm335, %v533, 0
        %v558 = vsel %vm335, %v534, 0
        %v561 = vsel %vm335, %v535, 0
        %563 = vmatprep.subr.mxu0 0.0
        %564 = vmatpush1.msra.mxu0 0.0
        %565 = vmatprep.subr.mxu0 0.0
        %566 = vmatpush1.msra.mxu0 0.0
        %567 = vmatprep.subr.mxu0 0.0
        %568 = vmatpush1.msra.mxu0 0.0
        %569 = vmatprep.subr.mxu0 0.0
        %570 = vmatpush1.msra.mxu0 0.0
        %571 = vmatprep.subr.mxu0 0.0
        %572 = vmatpush1.msra.mxu0 0.0
        %573 = vmatprep.subr.mxu0 0.0
        %574 = vmatpush1.msra.mxu0 0.0
        %575 = vmatprep.subr.mxu0 0.0
        %576 = vmatpush1.msra.mxu0 0.0
        %577 = vmatprep.subr.mxu0 0.0
        %578 = vmatpush1.msra.mxu0 0.0
        %579 = vmatprep.subr.mxu0 0.0
        %580 = vmatpush1.msra.mxu0 0.0
        %581 = vmatprep.subr.mxu0 0.0
        %582 = vmatpush1.msra.mxu0 0.0
        %583 = vmatprep.subr.mxu0 0.0
        %584 = vmatpush1.msra.mxu0 0.0
        %585 = vmatprep.subr.mxu0 0.0
        %586 = vmatpush1.msra.mxu0 0.0
        %587 = vmatprep.subr.mxu0 0.0
        %588 = vmatpush1.msra.mxu0 %v539
        %589 = vmatprep.subr.mxu0 0.0
        %590 = vmatpush1.msra.mxu0 %v538
        %591 = vmatprep.subr.mxu0 0.0
        %592 = vmatpush1.msra.mxu0 %v537
        %593 = vmatprep.subr.mxu0 0.0
        %594 = vmatpush1.msra.mxu0 %v536
        %595 = vmatprep.subr.mxu0 0.0
        %596 = vmatpush2.msra.mxu0 0.0
        %597 = vmatprep.subr.mxu0 0.0
        %598 = vmatpush2.msra.mxu0 0.0
        %599 = vmatprep.subr.mxu0 0.0
        %600 = vmatpush2.msra.mxu0 0.0
        %601 = vmatprep.subr.mxu0 0.0
        %602 = vmatpush2.msra.mxu0 0.0
        %603 = vmatprep.subr.mxu0 0.0
        %604 = vmatpush2.msra.mxu0 0.0
        %605 = vmatprep.subr.mxu0 0.0
        %606 = vmatpush2.msra.mxu0 0.0
        %607 = vmatprep.subr.mxu0 0.0
        %608 = vmatpush2.msra.mxu0 0.0
        %609 = vmatprep.subr.mxu0 0.0
        %610 = vmatpush2.msra.mxu0 0.0
        %611 = vmatprep.subr.mxu0 0.0
        %612 = vmatpush2.msra.mxu0 0.0
        %613 = vmatprep.subr.mxu0 0.0
        %614 = vmatpush2.msra.mxu0 0.0
        %615 = vmatprep.subr.mxu0 0.0
        %616 = vmatpush2.msra.mxu0 0.0
        %617 = vmatprep.subr.mxu0 0.0
        %618 = vmatpush2.msra.mxu0 0.0
        %619 = vmatprep.subr.mxu0 0.0
        %620 = vmatpush2.msra.mxu0 0.0
        %621 = vmatprep.subr.mxu0 0.0
        %622 = vmatpush2.msra.mxu0 0.0
        %623 = vmatprep.subr.mxu0 0.0
        %624 = vmatpush2.msra.mxu0 0.0
        %625 = vmatprep.subr.mxu0 0.0
        %626 = vmatpush2.msra.mxu0 0.0
        %627 = vmatprep.mubr.f32.mxu0 0.0
        %628 = vmatmul.mubr.f32.gmra.mxu0 %v546
        %v629 = vpop.f32.mrf.mxu0
        %v630 = vadd.f32 %v544, %v629
        %v631 = vpop.f32.mrf.mxu0
        %632 = vmatprep.mubr.f32.mxu0 0.0
        %633 = vmatmul.mubr.f32.gmra.mxu0 %v549
        %v634 = vpop.f32.mrf.mxu0
        %v635 = vadd.f32 %v544, %v634
        %v636 = vpop.f32.mrf.mxu0
        %637 = vmatprep.mubr.f32.mxu0 0.0
        %638 = vmatmul.mubr.f32.gmra.mxu0 %v552
        %v639 = vpop.f32.mrf.mxu0
        %v640 = vadd.f32 %v544, %v639
        %v641 = vpop.f32.mrf.mxu0
        %642 = vmatprep.mubr.f32.mxu0 0.0
        %643 = vmatmul.mubr.f32.gmra.mxu0 %v555
        %v644 = vpop.f32.mrf.mxu0
        %v645 = vadd.f32 %v544, %v644
        %v646 = vpop.f32.mrf.mxu0
        %647 = vmatprep.mubr.f32.mxu0 0.0
        %648 = vmatmul.mubr.f32.gmra.mxu0 %v558
        %v649 = vpop.f32.mrf.mxu0
        %v650 = vadd.f32 %v544, %v649
        %v651 = vpop.f32.mrf.mxu0
        %652 = vmatprep.mubr.f32.mxu0 0.0
        %653 = vmatmul.mubr.f32.gmra.mxu0 %v561
        %v654 = vpop.f32.mrf.mxu0
        %v655 = vadd.f32 %v544, %v654
        %v656 = vpop.f32.mrf.mxu0
        %657 = vdwg.mxu0
        %v658 = vlaneseq
        %v659 = vshrl.u32 %v658, 7
        %v660 = vsub.s32 0, %v659
        %v661 = vrot.slane %v435, %v660
        %665 = vrot.lane.b32.xlu0 %v630, 96
        %v666 = vpop.permute.xlu0 %665
        %667 = vrot.lane.b32.xlu0 %v635, 96
        %v668 = vpop.permute.xlu0 %667
        %669 = vrot.lane.b32.xlu0 %v640, 96
        %v670 = vpop.permute.xlu0 %669
        %vm671 = vcmask 64512
        %v672 = vsel %vm671, %v630, 0
        %v674 = vsel %vm671, %v635, 0
        %v676 = vsel %vm671, %v640, 0
        %v678 = vsel %vm671, %v666, 0
        %v680 = vsel %vm671, %v668, 0
        %v682 = vsel %vm671, %v670, 0
        %684 = vmatprep.subr.mxu0 0.0
        %685 = vmatpush1.xpose.msra.mxu0 0.0
        %686 = vmatprep.subr.mxu0 0.0
        %687 = vmatpush1.xpose.msra.mxu0 0.0
        %688 = vmatprep.subr.mxu0 0.0
        %689 = vmatpush1.xpose.msra.mxu0 0.0
        %690 = vmatprep.subr.mxu0 0.0
        %691 = vmatpush1.xpose.msra.mxu0 0.0
        %692 = vmatprep.subr.mxu0 0.0
        %693 = vmatpush1.xpose.msra.mxu0 0.0
        %694 = vmatprep.subr.mxu0 0.0
        %695 = vmatpush1.xpose.msra.mxu0 0.0
        %696 = vmatprep.subr.mxu0 0.0
        %697 = vmatpush1.xpose.msra.mxu0 0.0
        %698 = vmatprep.subr.mxu0 0.0
        %699 = vmatpush1.xpose.msra.mxu0 0.0
        %700 = vmatprep.subr.mxu0 0.0
        %701 = vmatpush1.xpose.msra.mxu0 0.0
        %702 = vmatprep.subr.mxu0 0.0
        %703 = vmatpush1.xpose.msra.mxu0 0.0
        %704 = vmatprep.subr.mxu0 0.0
        %705 = vmatpush1.xpose.msra.mxu0 0.0
        %706 = vmatprep.subr.mxu0 0.0
        %707 = vmatpush1.xpose.msra.mxu0 0.0
        %708 = vmatprep.subr.mxu0 0.0
        %709 = vmatpush1.xpose.msra.mxu0 0.0
        %710 = vmatprep.subr.mxu0 0.0
        %711 = vmatpush1.xpose.msra.mxu0 %v682
        %712 = vmatprep.subr.mxu0 0.0
        %713 = vmatpush1.xpose.msra.mxu0 %v680
        %714 = vmatprep.subr.mxu0 0.0
        %715 = vmatpush1.xpose.msra.mxu0 %v678
        %716 = vmatprep.subr.mxu0 0.0
        %717 = vmatpush2.xpose.msra.mxu0 0.0
        %718 = vmatprep.subr.mxu0 0.0
        %719 = vmatpush2.xpose.msra.mxu0 0.0
        %720 = vmatprep.subr.mxu0 0.0
        %721 = vmatpush2.xpose.msra.mxu0 0.0
        %722 = vmatprep.subr.mxu0 0.0
        %723 = vmatpush2.xpose.msra.mxu0 0.0
        %724 = vmatprep.subr.mxu0 0.0
        %725 = vmatpush2.xpose.msra.mxu0 0.0
        %726 = vmatprep.subr.mxu0 0.0
        %727 = vmatpush2.xpose.msra.mxu0 0.0
        %728 = vmatprep.subr.mxu0 0.0
        %729 = vmatpush2.xpose.msra.mxu0 0.0
        %730 = vmatprep.subr.mxu0 0.0
        %731 = vmatpush2.xpose.msra.mxu0 0.0
        %732 = vmatprep.subr.mxu0 0.0
        %733 = vmatpush2.xpose.msra.mxu0 0.0
        %734 = vmatprep.subr.mxu0 0.0
        %735 = vmatpush2.xpose.msra.mxu0 0.0
        %736 = vmatprep.subr.mxu0 0.0
        %737 = vmatpush2.xpose.msra.mxu0 0.0
        %738 = vmatprep.subr.mxu0 0.0
        %739 = vmatpush2.xpose.msra.mxu0 0.0
        %740 = vmatprep.subr.mxu0 0.0
        %741 = vmatpush2.xpose.msra.mxu0 0.0
        %742 = vmatprep.subr.mxu0 0.0
        %743 = vmatpush2.xpose.msra.mxu0 0.0
        %744 = vmatprep.subr.mxu0 0.0
        %745 = vmatpush2.xpose.msra.mxu0 0.0
        %746 = vmatprep.subr.mxu0 0.0
        %747 = vmatpush2.xpose.msra.mxu0 0.0
        %748 = vmatprep.mubr.f32.mxu0 0.0
        %749 = vmatmul.mubr.f32.gmra.mxu0 %v672
        %v750 = vpop.f32.mrf.mxu0
        %v751 = vadd.f32 %v661, %v750
        %v752 = vpop.f32.mrf.mxu0
        %753 = vmatprep.mubr.f32.mxu0 0.0
        %754 = vmatmul.mubr.f32.gmra.mxu0 %v674
        %v755 = vpop.f32.mrf.mxu0
        %v756 = vadd.f32 %v661, %v755
        %v757 = vpop.f32.mrf.mxu0
        %758 = vmatprep.mubr.f32.mxu0 0.0
        %759 = vmatmul.mubr.f32.gmra.mxu0 %v676
        %v760 = vpop.f32.mrf.mxu0
        %v761 = vadd.f32 %v661, %v760
        %v762 = vpop.f32.mrf.mxu0
        %763 = vdwg.mxu0
        %vm764 = vcmask 195584
        %v765 = vsel %vm764, %v751, -inf
        %766 = vmax.xlane.f32.xlu0 %v765
        %v767 = vpop.xlane.xlu0 %766
        %v768 = vsel %vm764, %v756, -inf
        %769 = vmax.xlane.f32.xlu0 %v768
        %v770 = vpop.xlane.xlu0 %769
        %v771 = vsel %vm764, %v761, -inf
        %772 = vmax.xlane.f32.xlu0 %v771
        %v773 = vpop.xlane.xlu0 %772
        %v774 = vsub.f32 %v751, %v767
        %v775 = vsub.f32 %v756, %v770
        %v776 = vsub.f32 %v761, %v773
        %v777 = vmul.f32 %v774, 1.442695
        %v778 = vpow.pop %v777
        %v779 = vmul.f32 %v775, 1.442695
        %v780 = vpow.pop %v779
        %v781 = vmul.f32 %v776, 1.442695
        %v782 = vpow.pop %v781
        %v783 = vsel %vm764, %v778, 0.0
        %784 = vadd.xlane.f32.xlu0 %v783
        %v785 = vpop.xlane.xlu0 %784
        %v786 = vsel %vm764, %v780, 0.0
        %787 = vadd.xlane.f32.xlu0 %v786
        %v788 = vpop.xlane.xlu0 %787
        %v789 = vsel %vm764, %v782, 0.0
        %790 = vadd.xlane.f32.xlu0 %v789
        %v791 = vpop.xlane.xlu0 %790
        %v792 = vrcp.pop %v785
        %v793 = vrcp.pop %v788
        %v794 = vrcp.pop %v791
        %v795 = vmul.f32 %v778, %v792
        %v796 = vmul.f32 %v780, %v793
        %v797 = vmul.f32 %v782, %v794
        %798 = vrot.lane.b32.xlu0 %v630, 64
        %v799 = vpop.permute.xlu0 %798
        %800 = vrot.lane.b32.xlu0 %v635, 64
        %v801 = vpop.permute.xlu0 %800
        %802 = vrot.lane.b32.xlu0 %v640, 64
        %v803 = vpop.permute.xlu0 %802
        %v808 = vsel %vm764, %v795, 0
        %v811 = vsel %vm764, %v796, 0
        %v814 = vsel %vm764, %v797, 0
        %816 = vmatprep.subr.mxu0 0.0
        %817 = vmatpush1.msra.mxu0 0.0
        %818 = vmatprep.subr.mxu0 0.0
        %819 = vmatpush1.msra.mxu0 0.0
        %820 = vmatprep.subr.mxu0 0.0
        %821 = vmatpush1.msra.mxu0 0.0
        %822 = vmatprep.subr.mxu0 0.0
        %823 = vmatpush1.msra.mxu0 0.0
        %824 = vmatprep.subr.mxu0 0.0
        %825 = vmatpush1.msra.mxu0 0.0
        %826 = vmatprep.subr.mxu0 0.0
        %827 = vmatpush1.msra.mxu0 0.0
        %828 = vmatprep.subr.mxu0 0.0
        %829 = vmatpush1.msra.mxu0 0.0
        %830 = vmatprep.subr.mxu0 0.0
        %831 = vmatpush1.msra.mxu0 0.0
        %832 = vmatprep.subr.mxu0 0.0
        %833 = vmatpush1.msra.mxu0 0.0
        %834 = vmatprep.subr.mxu0 0.0
        %835 = vmatpush1.msra.mxu0 0.0
        %836 = vmatprep.subr.mxu0 0.0
        %837 = vmatpush1.msra.mxu0 0.0
        %838 = vmatprep.subr.mxu0 0.0
        %839 = vmatpush1.msra.mxu0 0.0
        %840 = vmatprep.subr.mxu0 0.0
        %841 = vmatpush1.msra.mxu0 0.0
        %842 = vmatprep.subr.mxu0 0.0
        %843 = vmatpush1.msra.mxu0 %v803
        %844 = vmatprep.subr.mxu0 0.0
        %845 = vmatpush1.msra.mxu0 %v801
        %846 = vmatprep.subr.mxu0 0.0
        %847 = vmatpush1.msra.mxu0 %v799
        %848 = vmatprep.subr.mxu0 0.0
        %849 = vmatpush2.msra.mxu0 0.0
        %850 = vmatprep.subr.mxu0 0.0
        %851 = vmatpush2.msra.mxu0 0.0
        %852 = vmatprep.subr.mxu0 0.0
        %853 = vmatpush2.msra.mxu0 0.0
        %854 = vmatprep.subr.mxu0 0.0
        %855 = vmatpush2.msra.mxu0 0.0
        %856 = vmatprep.subr.mxu0 0.0
        %857 = vmatpush2.msra.mxu0 0.0
        %858 = vmatprep.subr.mxu0 0.0
        %859 = vmatpush2.msra.mxu0 0.0
        %860 = vmatprep.subr.mxu0 0.0
        %861 = vmatpush2.msra.mxu0 0.0
        %862 = vmatprep.subr.mxu0 0.0
        %863 = vmatpush2.msra.mxu0 0.0
        %864 = vmatprep.subr.mxu0 0.0
        %865 = vmatpush2.msra.mxu0 0.0
        %866 = vmatprep.subr.mxu0 0.0
        %867 = vmatpush2.msra.mxu0 0.0
        %868 = vmatprep.subr.mxu0 0.0
        %869 = vmatpush2.msra.mxu0 0.0
        %870 = vmatprep.subr.mxu0 0.0
        %871 = vmatpush2.msra.mxu0 0.0
        %872 = vmatprep.subr.mxu0 0.0
        %873 = vmatpush2.msra.mxu0 0.0
        %874 = vmatprep.subr.mxu0 0.0
        %875 = vmatpush2.msra.mxu0 0.0
        %876 = vmatprep.subr.mxu0 0.0
        %877 = vmatpush2.msra.mxu0 0.0
        %878 = vmatprep.subr.mxu0 0.0
        %879 = vmatpush2.msra.mxu0 0.0
        %880 = vmatprep.mubr.f32.mxu0 0.0
        %881 = vmatmul.mubr.f32.gmra.mxu0 %v808
        %v882 = vpop.f32.mrf.mxu0
        %v883 = vadd.f32 0.0, %v882
        %v884 = vpop.f32.mrf.mxu0
        %885 = vmatprep.mubr.f32.mxu0 0.0
        %886 = vmatmul.mubr.f32.gmra.mxu0 %v811
        %v887 = vpop.f32.mrf.mxu0
        %v888 = vadd.f32 0.0, %v887
        %v889 = vpop.f32.mrf.mxu0
        %890 = vmatprep.mubr.f32.mxu0 0.0
        %891 = vmatmul.mubr.f32.gmra.mxu0 %v814
        %v892 = vpop.f32.mrf.mxu0
        %v893 = vadd.f32 0.0, %v892
        %v894 = vpop.f32.mrf.mxu0
        %895 = vdwg.mxu0
        %896 = vrot.lane.b32.xlu0 %v630, 120
        %v897 = vpop.permute.xlu0 %896
        %898 = vrot.lane.b32.xlu0 %v635, 120
        %v899 = vpop.permute.xlu0 %898
        %900 = vrot.lane.b32.xlu0 %v640, 120
        %v901 = vpop.permute.xlu0 %900
        %902 = vrot.lane.b32.xlu0 %v630, 88
        %v903 = vpop.permute.xlu0 %902
        %904 = vrot.lane.b32.xlu0 %v635, 88
        %v905 = vpop.permute.xlu0 %904
        %906 = vrot.lane.b32.xlu0 %v640, 88
        %v907 = vpop.permute.xlu0 %906
        %v908 = vsel %vm671, %v897, 0
        %v910 = vsel %vm671, %v899, 0
        %v912 = vsel %vm671, %v901, 0
        %v914 = vsel %vm671, %v903, 0
        %v916 = vsel %vm671, %v905, 0
        %v918 = vsel %vm671, %v907, 0
        %920 = vmatprep.subr.mxu0 0.0
        %921 = vmatpush1.xpose.msra.mxu0 0.0
        %922 = vmatprep.subr.mxu0 0.0
        %923 = vmatpush1.xpose.msra.mxu0 0.0
        %924 = vmatprep.subr.mxu0 0.0
        %925 = vmatpush1.xpose.msra.mxu0 0.0
        %926 = vmatprep.subr.mxu0 0.0
        %927 = vmatpush1.xpose.msra.mxu0 0.0
        %928 = vmatprep.subr.mxu0 0.0
        %929 = vmatpush1.xpose.msra.mxu0 0.0
        %930 = vmatprep.subr.mxu0 0.0
        %931 = vmatpush1.xpose.msra.mxu0 0.0
        %932 = vmatprep.subr.mxu0 0.0
        %933 = vmatpush1.xpose.msra.mxu0 0.0
        %934 = vmatprep.subr.mxu0 0.0
        %935 = vmatpush1.xpose.msra.mxu0 0.0
        %936 = vmatprep.subr.mxu0 0.0
        %937 = vmatpush1.xpose.msra.mxu0 0.0
        %938 = vmatprep.subr.mxu0 0.0
        %939 = vmatpush1.xpose.msra.mxu0 0.0
        %940 = vmatprep.subr.mxu0 0.0
        %941 = vmatpush1.xpose.msra.mxu0 0.0
        %942 = vmatprep.subr.mxu0 0.0
        %943 = vmatpush1.xpose.msra.mxu0 0.0
        %944 = vmatprep.subr.mxu0 0.0
        %945 = vmatpush1.xpose.msra.mxu0 0.0
        %946 = vmatprep.subr.mxu0 0.0
        %947 = vmatpush1.xpose.msra.mxu0 %v918
        %948 = vmatprep.subr.mxu0 0.0
        %949 = vmatpush1.xpose.msra.mxu0 %v916
        %950 = vmatprep.subr.mxu0 0.0
        %951 = vmatpush1.xpose.msra.mxu0 %v914
        %952 = vmatprep.subr.mxu0 0.0
        %953 = vmatpush2.xpose.msra.mxu0 0.0
        %954 = vmatprep.subr.mxu0 0.0
        %955 = vmatpush2.xpose.msra.mxu0 0.0
        %956 = vmatprep.subr.mxu0 0.0
        %957 = vmatpush2.xpose.msra.mxu0 0.0
        %958 = vmatprep.subr.mxu0 0.0
        %959 = vmatpush2.xpose.msra.mxu0 0.0
        %960 = vmatprep.subr.mxu0 0.0
        %961 = vmatpush2.xpose.msra.mxu0 0.0
        %962 = vmatprep.subr.mxu0 0.0
        %963 = vmatpush2.xpose.msra.mxu0 0.0
        %964 = vmatprep.subr.mxu0 0.0
        %965 = vmatpush2.xpose.msra.mxu0 0.0
        %966 = vmatprep.subr.mxu0 0.0
        %967 = vmatpush2.xpose.msra.mxu0 0.0
        %968 = vmatprep.subr.mxu0 0.0
        %969 = vmatpush2.xpose.msra.mxu0 0.0
        %970 = vmatprep.subr.mxu0 0.0
        %971 = vmatpush2.xpose.msra.mxu0 0.0
        %972 = vmatprep.subr.mxu0 0.0
        %973 = vmatpush2.xpose.msra.mxu0 0.0
        %974 = vmatprep.subr.mxu0 0.0
        %975 = vmatpush2.xpose.msra.mxu0 0.0
        %976 = vmatprep.subr.mxu0 0.0
        %977 = vmatpush2.xpose.msra.mxu0 0.0
        %978 = vmatprep.subr.mxu0 0.0
        %979 = vmatpush2.xpose.msra.mxu0 0.0
        %980 = vmatprep.subr.mxu0 0.0
        %981 = vmatpush2.xpose.msra.mxu0 0.0
        %982 = vmatprep.subr.mxu0 0.0
        %983 = vmatpush2.xpose.msra.mxu0 0.0
        %984 = vmatprep.mubr.f32.mxu0 0.0
        %985 = vmatmul.mubr.f32.gmra.mxu0 %v908
        %v986 = vpop.f32.mrf.mxu0
        %v987 = vadd.f32 %v661, %v986
        %v988 = vpop.f32.mrf.mxu0
        %989 = vmatprep.mubr.f32.mxu0 0.0
        %990 = vmatmul.mubr.f32.gmra.mxu0 %v910
        %v991 = vpop.f32.mrf.mxu0
        %v992 = vadd.f32 %v661, %v991
        %v993 = vpop.f32.mrf.mxu0
        %994 = vmatprep.mubr.f32.mxu0 0.0
        %995 = vmatmul.mubr.f32.gmra.mxu0 %v912
        %v996 = vpop.f32.mrf.mxu0
        %v997 = vadd.f32 %v661, %v996
        %v998 = vpop.f32.mrf.mxu0
        %999 = vdwg.mxu0
        %v1000 = vsel %vm764, %v987, -inf
        %1001 = vmax.xlane.f32.xlu0 %v1000
        %v1002 = vpop.xlane.xlu0 %1001
        %v1003 = vsel %vm764, %v992, -inf
        %1004 = vmax.xlane.f32.xlu0 %v1003
        %v1005 = vpop.xlane.xlu0 %1004
        %v1006 = vsel %vm764, %v997, -inf
        %1007 = vmax.xlane.f32.xlu0 %v1006
        %v1008 = vpop.xlane.xlu0 %1007
        %v1009 = vsub.f32 %v987, %v1002
        %v1010 = vsub.f32 %v992, %v1005
        %v1011 = vsub.f32 %v997, %v1008
        %v1012 = vmul.f32 %v1009, 1.442695
        %v1013 = vpow.pop %v1012
        %v1014 = vmul.f32 %v1010, 1.442695
        %v1015 = vpow.pop %v1014
        %v1016 = vmul.f32 %v1011, 1.442695
        %v1017 = vpow.pop %v1016
        %v1018 = vsel %vm764, %v1013, 0.0
        %1019 = vadd.xlane.f32.xlu0 %v1018
        %v1020 = vpop.xlane.xlu0 %1019
        %v1021 = vsel %vm764, %v1015, 0.0
        %1022 = vadd.xlane.f32.xlu0 %v1021
        %v1023 = vpop.xlane.xlu0 %1022
        %v1024 = vsel %vm764, %v1017, 0.0
        %1025 = vadd.xlane.f32.xlu0 %v1024
        %v1026 = vpop.xlane.xlu0 %1025
        %v1027 = vrcp.pop %v1020
        %v1028 = vrcp.pop %v1023
        %v1029 = vrcp.pop %v1026
        %v1030 = vmul.f32 %v1013, %v1027
        %v1031 = vmul.f32 %v1015, %v1028
        %v1032 = vmul.f32 %v1017, %v1029
        %1033 = vrot.lane.b32.xlu0 %v630, 56
        %v1034 = vpop.permute.xlu0 %1033
        %1035 = vrot.lane.b32.xlu0 %v635, 56
        %v1036 = vpop.permute.xlu0 %1035
        %1037 = vrot.lane.b32.xlu0 %v640, 56
        %v1038 = vpop.permute.xlu0 %1037
        %v1043 = vsel %vm764, %v1030, 0
        %v1046 = vsel %vm764, %v1031, 0
        %v1049 = vsel %vm764, %v1032, 0
        %1051 = vmatprep.subr.mxu0 0.0
        %1052 = vmatpush1.msra.mxu0 0.0
        %1053 = vmatprep.subr.mxu0 0.0
        %1054 = vmatpush1.msra.mxu0 0.0
        %1055 = vmatprep.subr.mxu0 0.0
        %1056 = vmatpush1.msra.mxu0 0.0
        %1057 = vmatprep.subr.mxu0 0.0
        %1058 = vmatpush1.msra.mxu0 0.0
        %1059 = vmatprep.subr.mxu0 0.0
        %1060 = vmatpush1.msra.mxu0 0.0
        %1061 = vmatprep.subr.mxu0 0.0
        %1062 = vmatpush1.msra.mxu0 0.0
        %1063 = vmatprep.subr.mxu0 0.0
        %1064 = vmatpush1.msra.mxu0 0.0
        %1065 = vmatprep.subr.mxu0 0.0
        %1066 = vmatpush1.msra.mxu0 0.0
        %1067 = vmatprep.subr.mxu0 0.0
        %1068 = vmatpush1.msra.mxu0 0.0
        %1069 = vmatprep.subr.mxu0 0.0
        %1070 = vmatpush1.msra.mxu0 0.0
        %1071 = vmatprep.subr.mxu0 0.0
        %1072 = vmatpush1.msra.mxu0 0.0
        %1073 = vmatprep.subr.mxu0 0.0
        %1074 = vmatpush1.msra.mxu0 0.0
        %1075 = vmatprep.subr.mxu0 0.0
        %1076 = vmatpush1.msra.mxu0 0.0
        %1077 = vmatprep.subr.mxu0 0.0
        %1078 = vmatpush1.msra.mxu0 %v1038
        %1079 = vmatprep.subr.mxu0 0.0
        %1080 = vmatpush1.msra.mxu0 %v1036
        %1081 = vmatprep.subr.mxu0 0.0
        %1082 = vmatpush1.msra.mxu0 %v1034
        %1083 = vmatprep.subr.mxu0 0.0
        %1084 = vmatpush2.msra.mxu0 0.0
        %1085 = vmatprep.subr.mxu0 0.0
        %1086 = vmatpush2.msra.mxu0 0.0
        %1087 = vmatprep.subr.mxu0 0.0
        %1088 = vmatpush2.msra.mxu0 0.0
        %1089 = vmatprep.subr.mxu0 0.0
        %1090 = vmatpush2.msra.mxu0 0.0
        %1091 = vmatprep.subr.mxu0 0.0
        %1092 = vmatpush2.msra.mxu0 0.0
        %1093 = vmatprep.subr.mxu0 0.0
        %1094 = vmatpush2.msra.mxu0 0.0
        %1095 = vmatprep.subr.mxu0 0.0
        %1096 = vmatpush2.msra.mxu0 0.0
        %1097 = vmatprep.subr.mxu0 0.0
        %1098 = vmatpush2.msra.mxu0 0.0
        %1099 = vmatprep.subr.mxu0 0.0
        %1100 = vmatpush2.msra.mxu0 0.0
        %1101 = vmatprep.subr.mxu0 0.0
        %1102 = vmatpush2.msra.mxu0 0.0
        %1103 = vmatprep.subr.mxu0 0.0
        %1104 = vmatpush2.msra.mxu0 0.0
        %1105 = vmatprep.subr.mxu0 0.0
        %1106 = vmatpush2.msra.mxu0 0.0
        %1107 = vmatprep.subr.mxu0 0.0
        %1108 = vmatpush2.msra.mxu0 0.0
        %1109 = vmatprep.subr.mxu0 0.0
        %1110 = vmatpush2.msra.mxu0 0.0
        %1111 = vmatprep.subr.mxu0 0.0
        %1112 = vmatpush2.msra.mxu0 0.0
        %1113 = vmatprep.subr.mxu0 0.0
        %1114 = vmatpush2.msra.mxu0 0.0
        %1115 = vmatprep.mubr.f32.mxu0 0.0
        %1116 = vmatmul.mubr.f32.gmra.mxu0 %v1043
        %v1117 = vpop.f32.mrf.mxu0
        %v1118 = vadd.f32 0.0, %v1117
        %v1119 = vpop.f32.mrf.mxu0
        %1120 = vmatprep.mubr.f32.mxu0 0.0
        %1121 = vmatmul.mubr.f32.gmra.mxu0 %v1046
        %v1122 = vpop.f32.mrf.mxu0
        %v1123 = vadd.f32 0.0, %v1122
        %v1124 = vpop.f32.mrf.mxu0
        %1125 = vmatprep.mubr.f32.mxu0 0.0
        %1126 = vmatmul.mubr.f32.gmra.mxu0 %v1049
        %v1127 = vpop.f32.mrf.mxu0
        %v1128 = vadd.f32 0.0, %v1127
        %v1129 = vpop.f32.mrf.mxu0
        %1130 = vdwg.mxu0
        %1131 = vrot.lane.b32.xlu0 %v630, 112
        %v1132 = vpop.permute.xlu0 %1131
        %1133 = vrot.lane.b32.xlu0 %v635, 112
        %v1134 = vpop.permute.xlu0 %1133
        %1135 = vrot.lane.b32.xlu0 %v640, 112
        %v1136 = vpop.permute.xlu0 %1135
        %1137 = vrot.lane.b32.xlu0 %v630, 80
        %v1138 = vpop.permute.xlu0 %1137
        %1139 = vrot.lane.b32.xlu0 %v635, 80
        %v1140 = vpop.permute.xlu0 %1139
        %1141 = vrot.lane.b32.xlu0 %v640, 80
        %v1142 = vpop.permute.xlu0 %1141
        %v1143 = vsel %vm671, %v1132, 0
        %v1145 = vsel %vm671, %v1134, 0
        %v1147 = vsel %vm671, %v1136, 0
        %v1149 = vsel %vm671, %v1138, 0
        %v1151 = vsel %vm671, %v1140, 0
        %v1153 = vsel %vm671, %v1142, 0
        %1155 = vmatprep.subr.mxu0 0.0
        %1156 = vmatpush1.xpose.msra.mxu0 0.0
        %1157 = vmatprep.subr.mxu0 0.0
        %1158 = vmatpush1.xpose.msra.mxu0 0.0
        %1159 = vmatprep.subr.mxu0 0.0
        %1160 = vmatpush1.xpose.msra.mxu0 0.0
        %1161 = vmatprep.subr.mxu0 0.0
        %1162 = vmatpush1.xpose.msra.mxu0 0.0
        %1163 = vmatprep.subr.mxu0 0.0
        %1164 = vmatpush1.xpose.msra.mxu0 0.0
        %1165 = vmatprep.subr.mxu0 0.0
        %1166 = vmatpush1.xpose.msra.mxu0 0.0
        %1167 = vmatprep.subr.mxu0 0.0
        %1168 = vmatpush1.xpose.msra.mxu0 0.0
        %1169 = vmatprep.subr.mxu0 0.0
        %1170 = vmatpush1.xpose.msra.mxu0 0.0
        %1171 = vmatprep.subr.mxu0 0.0
        %1172 = vmatpush1.xpose.msra.mxu0 0.0
        %1173 = vmatprep.subr.mxu0 0.0
        %1174 = vmatpush1.xpose.msra.mxu0 0.0
        %1175 = vmatprep.subr.mxu0 0.0
        %1176 = vmatpush1.xpose.msra.mxu0 0.0
        %1177 = vmatprep.subr.mxu0 0.0
        %1178 = vmatpush1.xpose.msra.mxu0 0.0
        %1179 = vmatprep.subr.mxu0 0.0
        %1180 = vmatpush1.xpose.msra.mxu0 0.0
        %1181 = vmatprep.subr.mxu0 0.0
        %1182 = vmatpush1.xpose.msra.mxu0 %v1153
        %1183 = vmatprep.subr.mxu0 0.0
        %1184 = vmatpush1.xpose.msra.mxu0 %v1151
        %1185 = vmatprep.subr.mxu0 0.0
        %1186 = vmatpush1.xpose.msra.mxu0 %v1149
        %1187 = vmatprep.subr.mxu0 0.0
        %1188 = vmatpush2.xpose.msra.mxu0 0.0
        %1189 = vmatprep.subr.mxu0 0.0
        %1190 = vmatpush2.xpose.msra.mxu0 0.0
        %1191 = vmatprep.subr.mxu0 0.0
        %1192 = vmatpush2.xpose.msra.mxu0 0.0
        %1193 = vmatprep.subr.mxu0 0.0
        %1194 = vmatpush2.xpose.msra.mxu0 0.0
        %1195 = vmatprep.subr.mxu0 0.0
        %1196 = vmatpush2.xpose.msra.mxu0 0.0
        %1197 = vmatprep.subr.mxu0 0.0
        %1198 = vmatpush2.xpose.msra.mxu0 0.0
        %1199 = vmatprep.subr.mxu0 0.0
        %1200 = vmatpush2.xpose.msra.mxu0 0.0
        %1201 = vmatprep.subr.mxu0 0.0
        %1202 = vmatpush2.xpose.msra.mxu0 0.0
        %1203 = vmatprep.subr.mxu0 0.0
        %1204 = vmatpush2.xpose.msra.mxu0 0.0
        %1205 = vmatprep.subr.mxu0 0.0
        %1206 = vmatpush2.xpose.msra.mxu0 0.0
        %1207 = vmatprep.subr.mxu0 0.0
        %1208 = vmatpush2.xpose.msra.mxu0 0.0
        %1209 = vmatprep.subr.mxu0 0.0
        %1210 = vmatpush2.xpose.msra.mxu0 0.0
        %1211 = vmatprep.subr.mxu0 0.0
        %1212 = vmatpush2.xpose.msra.mxu0 0.0
        %1213 = vmatprep.subr.mxu0 0.0
        %1214 = vmatpush2.xpose.msra.mxu0 0.0
        %1215 = vmatprep.subr.mxu0 0.0
        %1216 = vmatpush2.xpose.msra.mxu0 0.0
        %1217 = vmatprep.subr.mxu0 0.0
        %1218 = vmatpush2.xpose.msra.mxu0 0.0
        %1219 = vmatprep.mubr.f32.mxu0 0.0
        %1220 = vmatmul.mubr.f32.gmra.mxu0 %v1143
        %v1221 = vpop.f32.mrf.mxu0
        %v1222 = vadd.f32 %v661, %v1221
        %v1223 = vpop.f32.mrf.mxu0
        %1224 = vmatprep.mubr.f32.mxu0 0.0
        %1225 = vmatmul.mubr.f32.gmra.mxu0 %v1145
        %v1226 = vpop.f32.mrf.mxu0
        %v1227 = vadd.f32 %v661, %v1226
        %v1228 = vpop.f32.mrf.mxu0
        %1229 = vmatprep.mubr.f32.mxu0 0.0
        %1230 = vmatmul.mubr.f32.gmra.mxu0 %v1147
        %v1231 = vpop.f32.mrf.mxu0
        %v1232 = vadd.f32 %v661, %v1231
        %v1233 = vpop.f32.mrf.mxu0
        %1234 = vdwg.mxu0
        %v1235 = vsel %vm764, %v1222, -inf
        %1236 = vmax.xlane.f32.xlu0 %v1235
        %v1237 = vpop.xlane.xlu0 %1236
        %v1238 = vsel %vm764, %v1227, -inf
        %1239 = vmax.xlane.f32.xlu0 %v1238
        %v1240 = vpop.xlane.xlu0 %1239
        %v1241 = vsel %vm764, %v1232, -inf
        %1242 = vmax.xlane.f32.xlu0 %v1241
        %v1243 = vpop.xlane.xlu0 %1242
        %v1244 = vsub.f32 %v1222, %v1237
        %v1245 = vsub.f32 %v1227, %v1240
        %v1246 = vsub.f32 %v1232, %v1243
        %v1247 = vmul.f32 %v1244, 1.442695
        %v1248 = vpow.pop %v1247
        %v1249 = vmul.f32 %v1245, 1.442695
        %v1250 = vpow.pop %v1249
        %v1251 = vmul.f32 %v1246, 1.442695
        %v1252 = vpow.pop %v1251
        %v1253 = vsel %vm764, %v1248, 0.0
        %1254 = vadd.xlane.f32.xlu0 %v1253
        %v1255 = vpop.xlane.xlu0 %1254
        %v1256 = vsel %vm764, %v1250, 0.0
        %1257 = vadd.xlane.f32.xlu0 %v1256
        %v1258 = vpop.xlane.xlu0 %1257
        %v1259 = vsel %vm764, %v1252, 0.0
        %1260 = vadd.xlane.f32.xlu0 %v1259
        %v1261 = vpop.xlane.xlu0 %1260
        %v1262 = vrcp.pop %v1255
        %v1263 = vrcp.pop %v1258
        %v1264 = vrcp.pop %v1261
        %v1265 = vmul.f32 %v1248, %v1262
        %v1266 = vmul.f32 %v1250, %v1263
        %v1267 = vmul.f32 %v1252, %v1264
        %1268 = vrot.lane.b32.xlu0 %v630, 48
        %v1269 = vpop.permute.xlu0 %1268
        %1270 = vrot.lane.b32.xlu0 %v635, 48
        %v1271 = vpop.permute.xlu0 %1270
        %1272 = vrot.lane.b32.xlu0 %v640, 48
        %v1273 = vpop.permute.xlu0 %1272
        %v1278 = vsel %vm764, %v1265, 0
        %v1281 = vsel %vm764, %v1266, 0
        %v1284 = vsel %vm764, %v1267, 0
        %1286 = vmatprep.subr.mxu0 0.0
        %1287 = vmatpush1.msra.mxu0 0.0
        %1288 = vmatprep.subr.mxu0 0.0
        %1289 = vmatpush1.msra.mxu0 0.0
        %1290 = vmatprep.subr.mxu0 0.0
        %1291 = vmatpush1.msra.mxu0 0.0
        %1292 = vmatprep.subr.mxu0 0.0
        %1293 = vmatpush1.msra.mxu0 0.0
        %1294 = vmatprep.subr.mxu0 0.0
        %1295 = vmatpush1.msra.mxu0 0.0
        %1296 = vmatprep.subr.mxu0 0.0
        %1297 = vmatpush1.msra.mxu0 0.0
        %1298 = vmatprep.subr.mxu0 0.0
        %1299 = vmatpush1.msra.mxu0 0.0
        %1300 = vmatprep.subr.mxu0 0.0
        %1301 = vmatpush1.msra.mxu0 0.0
        %1302 = vmatprep.subr.mxu0 0.0
        %1303 = vmatpush1.msra.mxu0 0.0
        %1304 = vmatprep.subr.mxu0 0.0
        %1305 = vmatpush1.msra.mxu0 0.0
        %1306 = vmatprep.subr.mxu0 0.0
        %1307 = vmatpush1.msra.mxu0 0.0
        %1308 = vmatprep.subr.mxu0 0.0
        %1309 = vmatpush1.msra.mxu0 0.0
        %1310 = vmatprep.subr.mxu0 0.0
        %1311 = vmatpush1.msra.mxu0 0.0
        %1312 = vmatprep.subr.mxu0 0.0
        %1313 = vmatpush1.msra.mxu0 %v1273
        %1314 = vmatprep.subr.mxu0 0.0
        %1315 = vmatpush1.msra.mxu0 %v1271
        %1316 = vmatprep.subr.mxu0 0.0
        %1317 = vmatpush1.msra.mxu0 %v1269
        %1318 = vmatprep.subr.mxu0 0.0
        %1319 = vmatpush2.msra.mxu0 0.0
        %1320 = vmatprep.subr.mxu0 0.0
        %1321 = vmatpush2.msra.mxu0 0.0
        %1322 = vmatprep.subr.mxu0 0.0
        %1323 = vmatpush2.msra.mxu0 0.0
        %1324 = vmatprep.subr.mxu0 0.0
        %1325 = vmatpush2.msra.mxu0 0.0
        %1326 = vmatprep.subr.mxu0 0.0
        %1327 = vmatpush2.msra.mxu0 0.0
        %1328 = vmatprep.subr.mxu0 0.0
        %1329 = vmatpush2.msra.mxu0 0.0
        %1330 = vmatprep.subr.mxu0 0.0
        %1331 = vmatpush2.msra.mxu0 0.0
        %1332 = vmatprep.subr.mxu0 0.0
        %1333 = vmatpush2.msra.mxu0 0.0
        %1334 = vmatprep.subr.mxu0 0.0
        %1335 = vmatpush2.msra.mxu0 0.0
        %1336 = vmatprep.subr.mxu0 0.0
        %1337 = vmatpush2.msra.mxu0 0.0
        %1338 = vmatprep.subr.mxu0 0.0
        %1339 = vmatpush2.msra.mxu0 0.0
        %1340 = vmatprep.subr.mxu0 0.0
        %1341 = vmatpush2.msra.mxu0 0.0
        %1342 = vmatprep.subr.mxu0 0.0
        %1343 = vmatpush2.msra.mxu0 0.0
        %1344 = vmatprep.subr.mxu0 0.0
        %1345 = vmatpush2.msra.mxu0 0.0
        %1346 = vmatprep.subr.mxu0 0.0
        %1347 = vmatpush2.msra.mxu0 0.0
        %1348 = vmatprep.subr.mxu0 0.0
        %1349 = vmatpush2.msra.mxu0 0.0
        %1350 = vmatprep.mubr.f32.mxu0 0.0
        %1351 = vmatmul.mubr.f32.gmra.mxu0 %v1278
        %v1352 = vpop.f32.mrf.mxu0
        %v1353 = vadd.f32 0.0, %v1352
        %v1354 = vpop.f32.mrf.mxu0
        %1355 = vmatprep.mubr.f32.mxu0 0.0
        %1356 = vmatmul.mubr.f32.gmra.mxu0 %v1281
        %v1357 = vpop.f32.mrf.mxu0
        %v1358 = vadd.f32 0.0, %v1357
        %v1359 = vpop.f32.mrf.mxu0
        %1360 = vmatprep.mubr.f32.mxu0 0.0
        %1361 = vmatmul.mubr.f32.gmra.mxu0 %v1284
        %v1362 = vpop.f32.mrf.mxu0
        %v1363 = vadd.f32 0.0, %v1362
        %v1364 = vpop.f32.mrf.mxu0
        %1365 = vdwg.mxu0
        %1366 = vrot.lane.b32.xlu0 %v630, 104
        %v1367 = vpop.permute.xlu0 %1366
        %1368 = vrot.lane.b32.xlu0 %v635, 104
        %v1369 = vpop.permute.xlu0 %1368
        %1370 = vrot.lane.b32.xlu0 %v640, 104
        %v1371 = vpop.permute.xlu0 %1370
        %1372 = vrot.lane.b32.xlu0 %v630, 72
        %v1373 = vpop.permute.xlu0 %1372
        %1374 = vrot.lane.b32.xlu0 %v635, 72
        %v1375 = vpop.permute.xlu0 %1374
        %1376 = vrot.lane.b32.xlu0 %v640, 72
        %v1377 = vpop.permute.xlu0 %1376
        %v1378 = vsel %vm671, %v1367, 0
        %v1380 = vsel %vm671, %v1369, 0
        %v1382 = vsel %vm671, %v1371, 0
        %v1384 = vsel %vm671, %v1373, 0
        %v1386 = vsel %vm671, %v1375, 0
        %v1388 = vsel %vm671, %v1377, 0
        %1390 = vmatprep.subr.mxu0 0.0
        %1391 = vmatpush1.xpose.msra.mxu0 0.0
        %1392 = vmatprep.subr.mxu0 0.0
        %1393 = vmatpush1.xpose.msra.mxu0 0.0
        %1394 = vmatprep.subr.mxu0 0.0
        %1395 = vmatpush1.xpose.msra.mxu0 0.0
        %1396 = vmatprep.subr.mxu0 0.0
        %1397 = vmatpush1.xpose.msra.mxu0 0.0
        %1398 = vmatprep.subr.mxu0 0.0
        %1399 = vmatpush1.xpose.msra.mxu0 0.0
        %1400 = vmatprep.subr.mxu0 0.0
        %1401 = vmatpush1.xpose.msra.mxu0 0.0
        %1402 = vmatprep.subr.mxu0 0.0
        %1403 = vmatpush1.xpose.msra.mxu0 0.0
        %1404 = vmatprep.subr.mxu0 0.0
        %1405 = vmatpush1.xpose.msra.mxu0 0.0
        %1406 = vmatprep.subr.mxu0 0.0
        %1407 = vmatpush1.xpose.msra.mxu0 0.0
        %1408 = vmatprep.subr.mxu0 0.0
        %1409 = vmatpush1.xpose.msra.mxu0 0.0
        %1410 = vmatprep.subr.mxu0 0.0
        %1411 = vmatpush1.xpose.msra.mxu0 0.0
        %1412 = vmatprep.subr.mxu0 0.0
        %1413 = vmatpush1.xpose.msra.mxu0 0.0
        %1414 = vmatprep.subr.mxu0 0.0
        %1415 = vmatpush1.xpose.msra.mxu0 0.0
        %1416 = vmatprep.subr.mxu0 0.0
        %1417 = vmatpush1.xpose.msra.mxu0 %v1388
        %1418 = vmatprep.subr.mxu0 0.0
        %1419 = vmatpush1.xpose.msra.mxu0 %v1386
        %1420 = vmatprep.subr.mxu0 0.0
        %1421 = vmatpush1.xpose.msra.mxu0 %v1384
        %1422 = vmatprep.subr.mxu0 0.0
        %1423 = vmatpush2.xpose.msra.mxu0 0.0
        %1424 = vmatprep.subr.mxu0 0.0
        %1425 = vmatpush2.xpose.msra.mxu0 0.0
        %1426 = vmatprep.subr.mxu0 0.0
        %1427 = vmatpush2.xpose.msra.mxu0 0.0
        %1428 = vmatprep.subr.mxu0 0.0
        %1429 = vmatpush2.xpose.msra.mxu0 0.0
        %1430 = vmatprep.subr.mxu0 0.0
        %1431 = vmatpush2.xpose.msra.mxu0 0.0
        %1432 = vmatprep.subr.mxu0 0.0
        %1433 = vmatpush2.xpose.msra.mxu0 0.0
        %1434 = vmatprep.subr.mxu0 0.0
        %1435 = vmatpush2.xpose.msra.mxu0 0.0
        %1436 = vmatprep.subr.mxu0 0.0
        %1437 = vmatpush2.xpose.msra.mxu0 0.0
        %1438 = vmatprep.subr.mxu0 0.0
        %1439 = vmatpush2.xpose.msra.mxu0 0.0
        %1440 = vmatprep.subr.mxu0 0.0
        %1441 = vmatpush2.xpose.msra.mxu0 0.0
        %1442 = vmatprep.subr.mxu0 0.0
        %1443 = vmatpush2.xpose.msra.mxu0 0.0
        %1444 = vmatprep.subr.mxu0 0.0
        %1445 = vmatpush2.xpose.msra.mxu0 0.0
        %1446 = vmatprep.subr.mxu0 0.0
        %1447 = vmatpush2.xpose.msra.mxu0 0.0
        %1448 = vmatprep.subr.mxu0 0.0
        %1449 = vmatpush2.xpose.msra.mxu0 0.0
        %1450 = vmatprep.subr.mxu0 0.0
        %1451 = vmatpush2.xpose.msra.mxu0 0.0
        %1452 = vmatprep.subr.mxu0 0.0
        %1453 = vmatpush2.xpose.msra.mxu0 0.0
        %1454 = vmatprep.mubr.f32.mxu0 0.0
        %1455 = vmatmul.mubr.f32.gmra.mxu0 %v1378
        %v1456 = vpop.f32.mrf.mxu0
        %v1457 = vadd.f32 %v661, %v1456
        %v1458 = vpop.f32.mrf.mxu0
        %1459 = vmatprep.mubr.f32.mxu0 0.0
        %1460 = vmatmul.mubr.f32.gmra.mxu0 %v1380
        %v1461 = vpop.f32.mrf.mxu0
        %v1462 = vadd.f32 %v661, %v1461
        %v1463 = vpop.f32.mrf.mxu0
        %1464 = vmatprep.mubr.f32.mxu0 0.0
        %1465 = vmatmul.mubr.f32.gmra.mxu0 %v1382
        %v1466 = vpop.f32.mrf.mxu0
        %v1467 = vadd.f32 %v661, %v1466
        %v1468 = vpop.f32.mrf.mxu0
        %1469 = vdwg.mxu0
        %v1470 = vsel %vm764, %v1457, -inf
        %1471 = vmax.xlane.f32.xlu0 %v1470
        %v1472 = vpop.xlane.xlu0 %1471
        %v1473 = vsel %vm764, %v1462, -inf
        %1474 = vmax.xlane.f32.xlu0 %v1473
        %v1475 = vpop.xlane.xlu0 %1474
        %v1476 = vsel %vm764, %v1467, -inf
        %1477 = vmax.xlane.f32.xlu0 %v1476
        %v1478 = vpop.xlane.xlu0 %1477
        %v1479 = vsub.f32 %v1457, %v1472
        %v1480 = vsub.f32 %v1462, %v1475
        %v1481 = vsub.f32 %v1467, %v1478
        %v1482 = vmul.f32 %v1479, 1.442695
        %v1483 = vpow.pop %v1482
        %v1484 = vmul.f32 %v1480, 1.442695
        %v1485 = vpow.pop %v1484
        %v1486 = vmul.f32 %v1481, 1.442695
        %v1487 = vpow.pop %v1486
        %v1488 = vsel %vm764, %v1483, 0.0
        %1489 = vadd.xlane.f32.xlu0 %v1488
        %v1490 = vpop.xlane.xlu0 %1489
        %v1491 = vsel %vm764, %v1485, 0.0
        %1492 = vadd.xlane.f32.xlu0 %v1491
        %v1493 = vpop.xlane.xlu0 %1492
        %v1494 = vsel %vm764, %v1487, 0.0
        %1495 = vadd.xlane.f32.xlu0 %v1494
        %v1496 = vpop.xlane.xlu0 %1495
        %v1497 = vrcp.pop %v1490
        %v1498 = vrcp.pop %v1493
        %v1499 = vrcp.pop %v1496
        %v1500 = vmul.f32 %v1483, %v1497
        %v1501 = vmul.f32 %v1485, %v1498
        %v1502 = vmul.f32 %v1487, %v1499
        %1503 = vrot.lane.b32.xlu0 %v630, 40
        %v1504 = vpop.permute.xlu0 %1503
        %1505 = vrot.lane.b32.xlu0 %v635, 40
        %v1506 = vpop.permute.xlu0 %1505
        %1507 = vrot.lane.b32.xlu0 %v640, 40
        %v1508 = vpop.permute.xlu0 %1507
        %v1513 = vsel %vm764, %v1500, 0
        %v1516 = vsel %vm764, %v1501, 0
        %v1519 = vsel %vm764, %v1502, 0
        %1521 = vmatprep.subr.mxu0 0.0
        %1522 = vmatpush1.msra.mxu0 0.0
        %1523 = vmatprep.subr.mxu0 0.0
        %1524 = vmatpush1.msra.mxu0 0.0
        %1525 = vmatprep.subr.mxu0 0.0
        %1526 = vmatpush1.msra.mxu0 0.0
        %1527 = vmatprep.subr.mxu0 0.0
        %1528 = vmatpush1.msra.mxu0 0.0
        %1529 = vmatprep.subr.mxu0 0.0
        %1530 = vmatpush1.msra.mxu0 0.0
        %1531 = vmatprep.subr.mxu0 0.0
        %1532 = vmatpush1.msra.mxu0 0.0
        %1533 = vmatprep.subr.mxu0 0.0
        %1534 = vmatpush1.msra.mxu0 0.0
        %1535 = vmatprep.subr.mxu0 0.0
        %1536 = vmatpush1.msra.mxu0 0.0
        %1537 = vmatprep.subr.mxu0 0.0
        %1538 = vmatpush1.msra.mxu0 0.0
        %1539 = vmatprep.subr.mxu0 0.0
        %1540 = vmatpush1.msra.mxu0 0.0
        %1541 = vmatprep.subr.mxu0 0.0
        %1542 = vmatpush1.msra.mxu0 0.0
        %1543 = vmatprep.subr.mxu0 0.0
        %1544 = vmatpush1.msra.mxu0 0.0
        %1545 = vmatprep.subr.mxu0 0.0
        %1546 = vmatpush1.msra.mxu0 0.0
        %1547 = vmatprep.subr.mxu0 0.0
        %1548 = vmatpush1.msra.mxu0 %v1508
        %1549 = vmatprep.subr.mxu0 0.0
        %1550 = vmatpush1.msra.mxu0 %v1506
        %1551 = vmatprep.subr.mxu0 0.0
        %1552 = vmatpush1.msra.mxu0 %v1504
        %1553 = vmatprep.subr.mxu0 0.0
        %1554 = vmatpush2.msra.mxu0 0.0
        %1555 = vmatprep.subr.mxu0 0.0
        %1556 = vmatpush2.msra.mxu0 0.0
        %1557 = vmatprep.subr.mxu0 0.0
        %1558 = vmatpush2.msra.mxu0 0.0
        %1559 = vmatprep.subr.mxu0 0.0
        %1560 = vmatpush2.msra.mxu0 0.0
        %1561 = vmatprep.subr.mxu0 0.0
        %1562 = vmatpush2.msra.mxu0 0.0
        %1563 = vmatprep.subr.mxu0 0.0
        %1564 = vmatpush2.msra.mxu0 0.0
        %1565 = vmatprep.subr.mxu0 0.0
        %1566 = vmatpush2.msra.mxu0 0.0
        %1567 = vmatprep.subr.mxu0 0.0
        %1568 = vmatpush2.msra.mxu0 0.0
        %1569 = vmatprep.subr.mxu0 0.0
        %1570 = vmatpush2.msra.mxu0 0.0
        %1571 = vmatprep.subr.mxu0 0.0
        %1572 = vmatpush2.msra.mxu0 0.0
        %1573 = vmatprep.subr.mxu0 0.0
        %1574 = vmatpush2.msra.mxu0 0.0
        %1575 = vmatprep.subr.mxu0 0.0
        %1576 = vmatpush2.msra.mxu0 0.0
        %1577 = vmatprep.subr.mxu0 0.0
        %1578 = vmatpush2.msra.mxu0 0.0
        %1579 = vmatprep.subr.mxu0 0.0
        %1580 = vmatpush2.msra.mxu0 0.0
        %1581 = vmatprep.subr.mxu0 0.0
        %1582 = vmatpush2.msra.mxu0 0.0
        %1583 = vmatprep.subr.mxu0 0.0
        %1584 = vmatpush2.msra.mxu0 0.0
        %1585 = vmatprep.mubr.f32.mxu0 0.0
        %1586 = vmatmul.mubr.f32.gmra.mxu0 %v1513
        %v1587 = vpop.f32.mrf.mxu0
        %v1588 = vadd.f32 0.0, %v1587
        %v1589 = vpop.f32.mrf.mxu0
        %1590 = vmatprep.mubr.f32.mxu0 0.0
        %1591 = vmatmul.mubr.f32.gmra.mxu0 %v1516
        %v1592 = vpop.f32.mrf.mxu0
        %v1593 = vadd.f32 0.0, %v1592
        %v1594 = vpop.f32.mrf.mxu0
        %1595 = vmatprep.mubr.f32.mxu0 0.0
        %1596 = vmatmul.mubr.f32.gmra.mxu0 %v1519
        %v1597 = vpop.f32.mrf.mxu0
        %v1598 = vadd.f32 0.0, %v1597
        %v1599 = vpop.f32.mrf.mxu0
        %1600 = vdwg.mxu0
        %1604 = vrot.lane.b32.xlu0 %v1118, 8
        %v1605 = vpop.permute.xlu0 %1604
        %1606 = vrot.lane.b32.xlu0 %v1123, 8
        %v1607 = vpop.permute.xlu0 %1606
        %1608 = vrot.lane.b32.xlu0 %v1128, 8
        %v1609 = vpop.permute.xlu0 %1608
        %1616 = vrot.lane.b32.xlu0 %v1353, 16
        %v1617 = vpop.permute.xlu0 %1616
        %1618 = vrot.lane.b32.xlu0 %v1358, 16
        %v1619 = vpop.permute.xlu0 %1618
        %1620 = vrot.lane.b32.xlu0 %v1363, 16
        %v1621 = vpop.permute.xlu0 %1620
        %1628 = vrot.lane.b32.xlu0 %v1588, 24
        %v1629 = vpop.permute.xlu0 %1628
        %1630 = vrot.lane.b32.xlu0 %v1593, 24
        %v1631 = vpop.permute.xlu0 %1630
        %1632 = vrot.lane.b32.xlu0 %v1598, 24
        %v1633 = vpop.permute.xlu0 %1632
        %v1637 = vsel %vm671, %v883, %v1605
        %v1638 = vsel %vm671, %v888, %v1607
        %v1639 = vsel %vm671, %v893, %v1609
        %vm1640 = vcmask 130048
        %v1641 = vsel %vm1640, %v1637, %v1617
        %v1642 = vsel %vm1640, %v1638, %v1619
        %v1643 = vsel %vm1640, %v1639, %v1621
        %v1644 = vsel %vm764, %v1641, %v1629
        %v1645 = vsel %vm764, %v1642, %v1631
        %v1646 = vsel %vm764, %v1643, %v1633
        %1650 = vrot.lane.b32.xlu0 %v645, 96
        %v1651 = vpop.permute.xlu0 %1650
        %1652 = vrot.lane.b32.xlu0 %v650, 96
        %v1653 = vpop.permute.xlu0 %1652
        %1654 = vrot.lane.b32.xlu0 %v655, 96
        %v1655 = vpop.permute.xlu0 %1654
        %v1656 = vsel %vm671, %v645, 0
        %v1658 = vsel %vm671, %v650, 0
        %v1660 = vsel %vm671, %v655, 0
        %v1662 = vsel %vm671, %v1651, 0
        %v1664 = vsel %vm671, %v1653, 0
        %v1666 = vsel %vm671, %v1655, 0
        %1668 = vmatprep.subr.mxu0 0.0
        %1669 = vmatpush1.xpose.msra.mxu0 0.0
        %1670 = vmatprep.subr.mxu0 0.0
        %1671 = vmatpush1.xpose.msra.mxu0 0.0
        %1672 = vmatprep.subr.mxu0 0.0
        %1673 = vmatpush1.xpose.msra.mxu0 0.0
        %1674 = vmatprep.subr.mxu0 0.0
        %1675 = vmatpush1.xpose.msra.mxu0 0.0
        %1676 = vmatprep.subr.mxu0 0.0
        %1677 = vmatpush1.xpose.msra.mxu0 0.0
        %1678 = vmatprep.subr.mxu0 0.0
        %1679 = vmatpush1.xpose.msra.mxu0 0.0
        %1680 = vmatprep.subr.mxu0 0.0
        %1681 = vmatpush1.xpose.msra.mxu0 0.0
        %1682 = vmatprep.subr.mxu0 0.0
        %1683 = vmatpush1.xpose.msra.mxu0 0.0
        %1684 = vmatprep.subr.mxu0 0.0
        %1685 = vmatpush1.xpose.msra.mxu0 0.0
        %1686 = vmatprep.subr.mxu0 0.0
        %1687 = vmatpush1.xpose.msra.mxu0 0.0
        %1688 = vmatprep.subr.mxu0 0.0
        %1689 = vmatpush1.xpose.msra.mxu0 0.0
        %1690 = vmatprep.subr.mxu0 0.0
        %1691 = vmatpush1.xpose.msra.mxu0 0.0
        %1692 = vmatprep.subr.mxu0 0.0
        %1693 = vmatpush1.xpose.msra.mxu0 0.0
        %1694 = vmatprep.subr.mxu0 0.0
        %1695 = vmatpush1.xpose.msra.mxu0 %v1666
        %1696 = vmatprep.subr.mxu0 0.0
        %1697 = vmatpush1.xpose.msra.mxu0 %v1664
        %1698 = vmatprep.subr.mxu0 0.0
        %1699 = vmatpush1.xpose.msra.mxu0 %v1662
        %1700 = vmatprep.subr.mxu0 0.0
        %1701 = vmatpush2.xpose.msra.mxu0 0.0
        %1702 = vmatprep.subr.mxu0 0.0
        %1703 = vmatpush2.xpose.msra.mxu0 0.0
        %1704 = vmatprep.subr.mxu0 0.0
        %1705 = vmatpush2.xpose.msra.mxu0 0.0
        %1706 = vmatprep.subr.mxu0 0.0
        %1707 = vmatpush2.xpose.msra.mxu0 0.0
        %1708 = vmatprep.subr.mxu0 0.0
        %1709 = vmatpush2.xpose.msra.mxu0 0.0
        %1710 = vmatprep.subr.mxu0 0.0
        %1711 = vmatpush2.xpose.msra.mxu0 0.0
        %1712 = vmatprep.subr.mxu0 0.0
        %1713 = vmatpush2.xpose.msra.mxu0 0.0
        %1714 = vmatprep.subr.mxu0 0.0
        %1715 = vmatpush2.xpose.msra.mxu0 0.0
        %1716 = vmatprep.subr.mxu0 0.0
        %1717 = vmatpush2.xpose.msra.mxu0 0.0
        %1718 = vmatprep.subr.mxu0 0.0
        %1719 = vmatpush2.xpose.msra.mxu0 0.0
        %1720 = vmatprep.subr.mxu0 0.0
        %1721 = vmatpush2.xpose.msra.mxu0 0.0
        %1722 = vmatprep.subr.mxu0 0.0
        %1723 = vmatpush2.xpose.msra.mxu0 0.0
        %1724 = vmatprep.subr.mxu0 0.0
        %1725 = vmatpush2.xpose.msra.mxu0 0.0
        %1726 = vmatprep.subr.mxu0 0.0
        %1727 = vmatpush2.xpose.msra.mxu0 0.0
        %1728 = vmatprep.subr.mxu0 0.0
        %1729 = vmatpush2.xpose.msra.mxu0 0.0
        %1730 = vmatprep.subr.mxu0 0.0
        %1731 = vmatpush2.xpose.msra.mxu0 0.0
        %1732 = vmatprep.mubr.f32.mxu0 0.0
        %1733 = vmatmul.mubr.f32.gmra.mxu0 %v1656
        %v1734 = vpop.f32.mrf.mxu0
        %v1735 = vadd.f32 %v661, %v1734
        %v1736 = vpop.f32.mrf.mxu0
        %1737 = vmatprep.mubr.f32.mxu0 0.0
        %1738 = vmatmul.mubr.f32.gmra.mxu0 %v1658
        %v1739 = vpop.f32.mrf.mxu0
        %v1740 = vadd.f32 %v661, %v1739
        %v1741 = vpop.f32.mrf.mxu0
        %1742 = vmatprep.mubr.f32.mxu0 0.0
        %1743 = vmatmul.mubr.f32.gmra.mxu0 %v1660
        %v1744 = vpop.f32.mrf.mxu0
        %v1745 = vadd.f32 %v661, %v1744
        %v1746 = vpop.f32.mrf.mxu0
        %1747 = vdwg.mxu0
        %v1748 = vsel %vm764, %v1735, -inf
        %1749 = vmax.xlane.f32.xlu0 %v1748
        %v1750 = vpop.xlane.xlu0 %1749
        %v1751 = vsel %vm764, %v1740, -inf
        %1752 = vmax.xlane.f32.xlu0 %v1751
        %v1753 = vpop.xlane.xlu0 %1752
        %v1754 = vsel %vm764, %v1745, -inf
        %1755 = vmax.xlane.f32.xlu0 %v1754
        %v1756 = vpop.xlane.xlu0 %1755
        %v1757 = vsub.f32 %v1735, %v1750
        %v1758 = vsub.f32 %v1740, %v1753
        %v1759 = vsub.f32 %v1745, %v1756
        %v1760 = vmul.f32 %v1757, 1.442695
        %v1761 = vpow.pop %v1760
        %v1762 = vmul.f32 %v1758, 1.442695
        %v1763 = vpow.pop %v1762
        %v1764 = vmul.f32 %v1759, 1.442695
        %v1765 = vpow.pop %v1764
        %v1766 = vsel %vm764, %v1761, 0.0
        %1767 = vadd.xlane.f32.xlu0 %v1766
        %v1768 = vpop.xlane.xlu0 %1767
        %v1769 = vsel %vm764, %v1763, 0.0
        %1770 = vadd.xlane.f32.xlu0 %v1769
        %v1771 = vpop.xlane.xlu0 %1770
        %v1772 = vsel %vm764, %v1765, 0.0
        %1773 = vadd.xlane.f32.xlu0 %v1772
        %v1774 = vpop.xlane.xlu0 %1773
        %v1775 = vrcp.pop %v1768
        %v1776 = vrcp.pop %v1771
        %v1777 = vrcp.pop %v1774
        %v1778 = vmul.f32 %v1761, %v1775
        %v1779 = vmul.f32 %v1763, %v1776
        %v1780 = vmul.f32 %v1765, %v1777
        %1781 = vrot.lane.b32.xlu0 %v645, 64
        %v1782 = vpop.permute.xlu0 %1781
        %1783 = vrot.lane.b32.xlu0 %v650, 64
        %v1784 = vpop.permute.xlu0 %1783
        %1785 = vrot.lane.b32.xlu0 %v655, 64
        %v1786 = vpop.permute.xlu0 %1785
        %v1791 = vsel %vm764, %v1778, 0
        %v1794 = vsel %vm764, %v1779, 0
        %v1797 = vsel %vm764, %v1780, 0
        %1799 = vmatprep.subr.mxu0 0.0
        %1800 = vmatpush1.msra.mxu0 0.0
        %1801 = vmatprep.subr.mxu0 0.0
        %1802 = vmatpush1.msra.mxu0 0.0
        %1803 = vmatprep.subr.mxu0 0.0
        %1804 = vmatpush1.msra.mxu0 0.0
        %1805 = vmatprep.subr.mxu0 0.0
        %1806 = vmatpush1.msra.mxu0 0.0
        %1807 = vmatprep.subr.mxu0 0.0
        %1808 = vmatpush1.msra.mxu0 0.0
        %1809 = vmatprep.subr.mxu0 0.0
        %1810 = vmatpush1.msra.mxu0 0.0
        %1811 = vmatprep.subr.mxu0 0.0
        %1812 = vmatpush1.msra.mxu0 0.0
        %1813 = vmatprep.subr.mxu0 0.0
        %1814 = vmatpush1.msra.mxu0 0.0
        %1815 = vmatprep.subr.mxu0 0.0
        %1816 = vmatpush1.msra.mxu0 0.0
        %1817 = vmatprep.subr.mxu0 0.0
        %1818 = vmatpush1.msra.mxu0 0.0
        %1819 = vmatprep.subr.mxu0 0.0
        %1820 = vmatpush1.msra.mxu0 0.0
        %1821 = vmatprep.subr.mxu0 0.0
        %1822 = vmatpush1.msra.mxu0 0.0
        %1823 = vmatprep.subr.mxu0 0.0
        %1824 = vmatpush1.msra.mxu0 0.0
        %1825 = vmatprep.subr.mxu0 0.0
        %1826 = vmatpush1.msra.mxu0 %v1786
        %1827 = vmatprep.subr.mxu0 0.0
        %1828 = vmatpush1.msra.mxu0 %v1784
        %1829 = vmatprep.subr.mxu0 0.0
        %1830 = vmatpush1.msra.mxu0 %v1782
        %1831 = vmatprep.subr.mxu0 0.0
        %1832 = vmatpush2.msra.mxu0 0.0
        %1833 = vmatprep.subr.mxu0 0.0
        %1834 = vmatpush2.msra.mxu0 0.0
        %1835 = vmatprep.subr.mxu0 0.0
        %1836 = vmatpush2.msra.mxu0 0.0
        %1837 = vmatprep.subr.mxu0 0.0
        %1838 = vmatpush2.msra.mxu0 0.0
        %1839 = vmatprep.subr.mxu0 0.0
        %1840 = vmatpush2.msra.mxu0 0.0
        %1841 = vmatprep.subr.mxu0 0.0
        %1842 = vmatpush2.msra.mxu0 0.0
        %1843 = vmatprep.subr.mxu0 0.0
        %1844 = vmatpush2.msra.mxu0 0.0
        %1845 = vmatprep.subr.mxu0 0.0
        %1846 = vmatpush2.msra.mxu0 0.0
        %1847 = vmatprep.subr.mxu0 0.0
        %1848 = vmatpush2.msra.mxu0 0.0
        %1849 = vmatprep.subr.mxu0 0.0
        %1850 = vmatpush2.msra.mxu0 0.0
        %1851 = vmatprep.subr.mxu0 0.0
        %1852 = vmatpush2.msra.mxu0 0.0
        %1853 = vmatprep.subr.mxu0 0.0
        %1854 = vmatpush2.msra.mxu0 0.0
        %1855 = vmatprep.subr.mxu0 0.0
        %1856 = vmatpush2.msra.mxu0 0.0
        %1857 = vmatprep.subr.mxu0 0.0
        %1858 = vmatpush2.msra.mxu0 0.0
        %1859 = vmatprep.subr.mxu0 0.0
        %1860 = vmatpush2.msra.mxu0 0.0
        %1861 = vmatprep.subr.mxu0 0.0
        %1862 = vmatpush2.msra.mxu0 0.0
        %1863 = vmatprep.mubr.f32.mxu0 0.0
        %1864 = vmatmul.mubr.f32.gmra.mxu0 %v1791
        %v1865 = vpop.f32.mrf.mxu0
        %v1866 = vadd.f32 0.0, %v1865
        %v1867 = vpop.f32.mrf.mxu0
        %1868 = vmatprep.mubr.f32.mxu0 0.0
        %1869 = vmatmul.mubr.f32.gmra.mxu0 %v1794
        %v1870 = vpop.f32.mrf.mxu0
        %v1871 = vadd.f32 0.0, %v1870
        %v1872 = vpop.f32.mrf.mxu0
        %1873 = vmatprep.mubr.f32.mxu0 0.0
        %1874 = vmatmul.mubr.f32.gmra.mxu0 %v1797
        %v1875 = vpop.f32.mrf.mxu0
        %v1876 = vadd.f32 0.0, %v1875
        %v1877 = vpop.f32.mrf.mxu0
        %1878 = vdwg.mxu0
        %1879 = vrot.lane.b32.xlu0 %v645, 120
        %v1880 = vpop.permute.xlu0 %1879
        %1881 = vrot.lane.b32.xlu0 %v650, 120
        %v1882 = vpop.permute.xlu0 %1881
        %1883 = vrot.lane.b32.xlu0 %v655, 120
        %v1884 = vpop.permute.xlu0 %1883
        %1885 = vrot.lane.b32.xlu0 %v645, 88
        %v1886 = vpop.permute.xlu0 %1885
        %1887 = vrot.lane.b32.xlu0 %v650, 88
        %v1888 = vpop.permute.xlu0 %1887
        %1889 = vrot.lane.b32.xlu0 %v655, 88
        %v1890 = vpop.permute.xlu0 %1889
        %v1891 = vsel %vm671, %v1880, 0
        %v1893 = vsel %vm671, %v1882, 0
        %v1895 = vsel %vm671, %v1884, 0
        %v1897 = vsel %vm671, %v1886, 0
        %v1899 = vsel %vm671, %v1888, 0
        %v1901 = vsel %vm671, %v1890, 0
        %1903 = vmatprep.subr.mxu0 0.0
        %1904 = vmatpush1.xpose.msra.mxu0 0.0
        %1905 = vmatprep.subr.mxu0 0.0
        %1906 = vmatpush1.xpose.msra.mxu0 0.0
        %1907 = vmatprep.subr.mxu0 0.0
        %1908 = vmatpush1.xpose.msra.mxu0 0.0
        %1909 = vmatprep.subr.mxu0 0.0
        %1910 = vmatpush1.xpose.msra.mxu0 0.0
        %1911 = vmatprep.subr.mxu0 0.0
        %1912 = vmatpush1.xpose.msra.mxu0 0.0
        %1913 = vmatprep.subr.mxu0 0.0
        %1914 = vmatpush1.xpose.msra.mxu0 0.0
        %1915 = vmatprep.subr.mxu0 0.0
        %1916 = vmatpush1.xpose.msra.mxu0 0.0
        %1917 = vmatprep.subr.mxu0 0.0
        %1918 = vmatpush1.xpose.msra.mxu0 0.0
        %1919 = vmatprep.subr.mxu0 0.0
        %1920 = vmatpush1.xpose.msra.mxu0 0.0
        %1921 = vmatprep.subr.mxu0 0.0
        %1922 = vmatpush1.xpose.msra.mxu0 0.0
        %1923 = vmatprep.subr.mxu0 0.0
        %1924 = vmatpush1.xpose.msra.mxu0 0.0
        %1925 = vmatprep.subr.mxu0 0.0
        %1926 = vmatpush1.xpose.msra.mxu0 0.0
        %1927 = vmatprep.subr.mxu0 0.0
        %1928 = vmatpush1.xpose.msra.mxu0 0.0
        %1929 = vmatprep.subr.mxu0 0.0
        %1930 = vmatpush1.xpose.msra.mxu0 %v1901
        %1931 = vmatprep.subr.mxu0 0.0
        %1932 = vmatpush1.xpose.msra.mxu0 %v1899
        %1933 = vmatprep.subr.mxu0 0.0
        %1934 = vmatpush1.xpose.msra.mxu0 %v1897
        %1935 = vmatprep.subr.mxu0 0.0
        %1936 = vmatpush2.xpose.msra.mxu0 0.0
        %1937 = vmatprep.subr.mxu0 0.0
        %1938 = vmatpush2.xpose.msra.mxu0 0.0
        %1939 = vmatprep.subr.mxu0 0.0
        %1940 = vmatpush2.xpose.msra.mxu0 0.0
        %1941 = vmatprep.subr.mxu0 0.0
        %1942 = vmatpush2.xpose.msra.mxu0 0.0
        %1943 = vmatprep.subr.mxu0 0.0
        %1944 = vmatpush2.xpose.msra.mxu0 0.0
        %1945 = vmatprep.subr.mxu0 0.0
        %1946 = vmatpush2.xpose.msra.mxu0 0.0
        %1947 = vmatprep.subr.mxu0 0.0
        %1948 = vmatpush2.xpose.msra.mxu0 0.0
        %1949 = vmatprep.subr.mxu0 0.0
        %1950 = vmatpush2.xpose.msra.mxu0 0.0
        %1951 = vmatprep.subr.mxu0 0.0
        %1952 = vmatpush2.xpose.msra.mxu0 0.0
        %1953 = vmatprep.subr.mxu0 0.0
        %1954 = vmatpush2.xpose.msra.mxu0 0.0
        %1955 = vmatprep.subr.mxu0 0.0
        %1956 = vmatpush2.xpose.msra.mxu0 0.0
        %1957 = vmatprep.subr.mxu0 0.0
        %1958 = vmatpush2.xpose.msra.mxu0 0.0
        %1959 = vmatprep.subr.mxu0 0.0
        %1960 = vmatpush2.xpose.msra.mxu0 0.0
        %1961 = vmatprep.subr.mxu0 0.0
        %1962 = vmatpush2.xpose.msra.mxu0 0.0
        %1963 = vmatprep.subr.mxu0 0.0
        %1964 = vmatpush2.xpose.msra.mxu0 0.0
        %1965 = vmatprep.subr.mxu0 0.0
        %1966 = vmatpush2.xpose.msra.mxu0 0.0
        %1967 = vmatprep.mubr.f32.mxu0 0.0
        %1968 = vmatmul.mubr.f32.gmra.mxu0 %v1891
        %v1969 = vpop.f32.mrf.mxu0
        %v1970 = vadd.f32 %v661, %v1969
        %v1971 = vpop.f32.mrf.mxu0
        %1972 = vmatprep.mubr.f32.mxu0 0.0
        %1973 = vmatmul.mubr.f32.gmra.mxu0 %v1893
        %v1974 = vpop.f32.mrf.mxu0
        %v1975 = vadd.f32 %v661, %v1974
        %v1976 = vpop.f32.mrf.mxu0
        %1977 = vmatprep.mubr.f32.mxu0 0.0
        %1978 = vmatmul.mubr.f32.gmra.mxu0 %v1895
        %v1979 = vpop.f32.mrf.mxu0
        %v1980 = vadd.f32 %v661, %v1979
        %v1981 = vpop.f32.mrf.mxu0
        %1982 = vdwg.mxu0
        %v1983 = vsel %vm764, %v1970, -inf
        %1984 = vmax.xlane.f32.xlu0 %v1983
        %v1985 = vpop.xlane.xlu0 %1984
        %v1986 = vsel %vm764, %v1975, -inf
        %1987 = vmax.xlane.f32.xlu0 %v1986
        %v1988 = vpop.xlane.xlu0 %1987
        %v1989 = vsel %vm764, %v1980, -inf
        %1990 = vmax.xlane.f32.xlu0 %v1989
        %v1991 = vpop.xlane.xlu0 %1990
        %v1992 = vsub.f32 %v1970, %v1985
        %v1993 = vsub.f32 %v1975, %v1988
        %v1994 = vsub.f32 %v1980, %v1991
        %v1995 = vmul.f32 %v1992, 1.442695
        %v1996 = vpow.pop %v1995
        %v1997 = vmul.f32 %v1993, 1.442695
        %v1998 = vpow.pop %v1997
        %v1999 = vmul.f32 %v1994, 1.442695
        %v2000 = vpow.pop %v1999
        %v2001 = vsel %vm764, %v1996, 0.0
        %2002 = vadd.xlane.f32.xlu0 %v2001
        %v2003 = vpop.xlane.xlu0 %2002
        %v2004 = vsel %vm764, %v1998, 0.0
        %2005 = vadd.xlane.f32.xlu0 %v2004
        %v2006 = vpop.xlane.xlu0 %2005
        %v2007 = vsel %vm764, %v2000, 0.0
        %2008 = vadd.xlane.f32.xlu0 %v2007
        %v2009 = vpop.xlane.xlu0 %2008
        %v2010 = vrcp.pop %v2003
        %v2011 = vrcp.pop %v2006
        %v2012 = vrcp.pop %v2009
        %v2013 = vmul.f32 %v1996, %v2010
        %v2014 = vmul.f32 %v1998, %v2011
        %v2015 = vmul.f32 %v2000, %v2012
        %2016 = vrot.lane.b32.xlu0 %v645, 56
        %v2017 = vpop.permute.xlu0 %2016
        %2018 = vrot.lane.b32.xlu0 %v650, 56
        %v2019 = vpop.permute.xlu0 %2018
        %2020 = vrot.lane.b32.xlu0 %v655, 56
        %v2021 = vpop.permute.xlu0 %2020
        %v2026 = vsel %vm764, %v2013, 0
        %v2029 = vsel %vm764, %v2014, 0
        %v2032 = vsel %vm764, %v2015, 0
        %2034 = vmatprep.subr.mxu0 0.0
        %2035 = vmatpush1.msra.mxu0 0.0
        %2036 = vmatprep.subr.mxu0 0.0
        %2037 = vmatpush1.msra.mxu0 0.0
        %2038 = vmatprep.subr.mxu0 0.0
        %2039 = vmatpush1.msra.mxu0 0.0
        %2040 = vmatprep.subr.mxu0 0.0
        %2041 = vmatpush1.msra.mxu0 0.0
        %2042 = vmatprep.subr.mxu0 0.0
        %2043 = vmatpush1.msra.mxu0 0.0
        %2044 = vmatprep.subr.mxu0 0.0
        %2045 = vmatpush1.msra.mxu0 0.0
        %2046 = vmatprep.subr.mxu0 0.0
        %2047 = vmatpush1.msra.mxu0 0.0
        %2048 = vmatprep.subr.mxu0 0.0
        %2049 = vmatpush1.msra.mxu0 0.0
        %2050 = vmatprep.subr.mxu0 0.0
        %2051 = vmatpush1.msra.mxu0 0.0
        %2052 = vmatprep.subr.mxu0 0.0
        %2053 = vmatpush1.msra.mxu0 0.0
        %2054 = vmatprep.subr.mxu0 0.0
        %2055 = vmatpush1.msra.mxu0 0.0
        %2056 = vmatprep.subr.mxu0 0.0
        %2057 = vmatpush1.msra.mxu0 0.0
        %2058 = vmatprep.subr.mxu0 0.0
        %2059 = vmatpush1.msra.mxu0 0.0
        %2060 = vmatprep.subr.mxu0 0.0
        %2061 = vmatpush1.msra.mxu0 %v2021
        %2062 = vmatprep.subr.mxu0 0.0
        %2063 = vmatpush1.msra.mxu0 %v2019
        %2064 = vmatprep.subr.mxu0 0.0
        %2065 = vmatpush1.msra.mxu0 %v2017
        %2066 = vmatprep.subr.mxu0 0.0
        %2067 = vmatpush2.msra.mxu0 0.0
        %2068 = vmatprep.subr.mxu0 0.0
        %2069 = vmatpush2.msra.mxu0 0.0
        %2070 = vmatprep.subr.mxu0 0.0
        %2071 = vmatpush2.msra.mxu0 0.0
        %2072 = vmatprep.subr.mxu0 0.0
        %2073 = vmatpush2.msra.mxu0 0.0
        %2074 = vmatprep.subr.mxu0 0.0
        %2075 = vmatpush2.msra.mxu0 0.0
        %2076 = vmatprep.subr.mxu0 0.0
        %2077 = vmatpush2.msra.mxu0 0.0
        %2078 = vmatprep.subr.mxu0 0.0
        %2079 = vmatpush2.msra.mxu0 0.0
        %2080 = vmatprep.subr.mxu0 0.0
        %2081 = vmatpush2.msra.mxu0 0.0
        %2082 = vmatprep.subr.mxu0 0.0
        %2083 = vmatpush2.msra.mxu0 0.0
        %2084 = vmatprep.subr.mxu0 0.0
        %2085 = vmatpush2.msra.mxu0 0.0
        %2086 = vmatprep.subr.mxu0 0.0
        %2087 = vmatpush2.msra.mxu0 0.0
        %2088 = vmatprep.subr.mxu0 0.0
        %2089 = vmatpush2.msra.mxu0 0.0
        %2090 = vmatprep.subr.mxu0 0.0
        %2091 = vmatpush2.msra.mxu0 0.0
        %2092 = vmatprep.subr.mxu0 0.0
        %2093 = vmatpush2.msra.mxu0 0.0
        %2094 = vmatprep.subr.mxu0 0.0
        %2095 = vmatpush2.msra.mxu0 0.0
        %2096 = vmatprep.subr.mxu0 0.0
        %2097 = vmatpush2.msra.mxu0 0.0
        %2098 = vmatprep.mubr.f32.mxu0 0.0
        %2099 = vmatmul.mubr.f32.gmra.mxu0 %v2026
        %v2100 = vpop.f32.mrf.mxu0
        %v2101 = vadd.f32 0.0, %v2100
        %v2102 = vpop.f32.mrf.mxu0
        %2103 = vmatprep.mubr.f32.mxu0 0.0
        %2104 = vmatmul.mubr.f32.gmra.mxu0 %v2029
        %v2105 = vpop.f32.mrf.mxu0
        %v2106 = vadd.f32 0.0, %v2105
        %v2107 = vpop.f32.mrf.mxu0
        %2108 = vmatprep.mubr.f32.mxu0 0.0
        %2109 = vmatmul.mubr.f32.gmra.mxu0 %v2032
        %v2110 = vpop.f32.mrf.mxu0
        %v2111 = vadd.f32 0.0, %v2110
        %v2112 = vpop.f32.mrf.mxu0
        %2113 = vdwg.mxu0
        %2114 = vrot.lane.b32.xlu0 %v645, 112
        %v2115 = vpop.permute.xlu0 %2114
        %2116 = vrot.lane.b32.xlu0 %v650, 112
        %v2117 = vpop.permute.xlu0 %2116
        %2118 = vrot.lane.b32.xlu0 %v655, 112
        %v2119 = vpop.permute.xlu0 %2118
        %2120 = vrot.lane.b32.xlu0 %v645, 80
        %v2121 = vpop.permute.xlu0 %2120
        %2122 = vrot.lane.b32.xlu0 %v650, 80
        %v2123 = vpop.permute.xlu0 %2122
        %2124 = vrot.lane.b32.xlu0 %v655, 80
        %v2125 = vpop.permute.xlu0 %2124
        %v2126 = vsel %vm671, %v2115, 0
        %v2128 = vsel %vm671, %v2117, 0
        %v2130 = vsel %vm671, %v2119, 0
        %v2132 = vsel %vm671, %v2121, 0
        %v2134 = vsel %vm671, %v2123, 0
        %v2136 = vsel %vm671, %v2125, 0
        %2138 = vmatprep.subr.mxu0 0.0
        %2139 = vmatpush1.xpose.msra.mxu0 0.0
        %2140 = vmatprep.subr.mxu0 0.0
        %2141 = vmatpush1.xpose.msra.mxu0 0.0
        %2142 = vmatprep.subr.mxu0 0.0
        %2143 = vmatpush1.xpose.msra.mxu0 0.0
        %2144 = vmatprep.subr.mxu0 0.0
        %2145 = vmatpush1.xpose.msra.mxu0 0.0
        %2146 = vmatprep.subr.mxu0 0.0
        %2147 = vmatpush1.xpose.msra.mxu0 0.0
        %2148 = vmatprep.subr.mxu0 0.0
        %2149 = vmatpush1.xpose.msra.mxu0 0.0
        %2150 = vmatprep.subr.mxu0 0.0
        %2151 = vmatpush1.xpose.msra.mxu0 0.0
        %2152 = vmatprep.subr.mxu0 0.0
        %2153 = vmatpush1.xpose.msra.mxu0 0.0
        %2154 = vmatprep.subr.mxu0 0.0
        %2155 = vmatpush1.xpose.msra.mxu0 0.0
        %2156 = vmatprep.subr.mxu0 0.0
        %2157 = vmatpush1.xpose.msra.mxu0 0.0
        %2158 = vmatprep.subr.mxu0 0.0
        %2159 = vmatpush1.xpose.msra.mxu0 0.0
        %2160 = vmatprep.subr.mxu0 0.0
        %2161 = vmatpush1.xpose.msra.mxu0 0.0
        %2162 = vmatprep.subr.mxu0 0.0
        %2163 = vmatpush1.xpose.msra.mxu0 0.0
        %2164 = vmatprep.subr.mxu0 0.0
        %2165 = vmatpush1.xpose.msra.mxu0 %v2136
        %2166 = vmatprep.subr.mxu0 0.0
        %2167 = vmatpush1.xpose.msra.mxu0 %v2134
        %2168 = vmatprep.subr.mxu0 0.0
        %2169 = vmatpush1.xpose.msra.mxu0 %v2132
        %2170 = vmatprep.subr.mxu0 0.0
        %2171 = vmatpush2.xpose.msra.mxu0 0.0
        %2172 = vmatprep.subr.mxu0 0.0
        %2173 = vmatpush2.xpose.msra.mxu0 0.0
        %2174 = vmatprep.subr.mxu0 0.0
        %2175 = vmatpush2.xpose.msra.mxu0 0.0
        %2176 = vmatprep.subr.mxu0 0.0
        %2177 = vmatpush2.xpose.msra.mxu0 0.0
        %2178 = vmatprep.subr.mxu0 0.0
        %2179 = vmatpush2.xpose.msra.mxu0 0.0
        %2180 = vmatprep.subr.mxu0 0.0
        %2181 = vmatpush2.xpose.msra.mxu0 0.0
        %2182 = vmatprep.subr.mxu0 0.0
        %2183 = vmatpush2.xpose.msra.mxu0 0.0
        %2184 = vmatprep.subr.mxu0 0.0
        %2185 = vmatpush2.xpose.msra.mxu0 0.0
        %2186 = vmatprep.subr.mxu0 0.0
        %2187 = vmatpush2.xpose.msra.mxu0 0.0
        %2188 = vmatprep.subr.mxu0 0.0
        %2189 = vmatpush2.xpose.msra.mxu0 0.0
        %2190 = vmatprep.subr.mxu0 0.0
        %2191 = vmatpush2.xpose.msra.mxu0 0.0
        %2192 = vmatprep.subr.mxu0 0.0
        %2193 = vmatpush2.xpose.msra.mxu0 0.0
        %2194 = vmatprep.subr.mxu0 0.0
        %2195 = vmatpush2.xpose.msra.mxu0 0.0
        %2196 = vmatprep.subr.mxu0 0.0
        %2197 = vmatpush2.xpose.msra.mxu0 0.0
        %2198 = vmatprep.subr.mxu0 0.0
        %2199 = vmatpush2.xpose.msra.mxu0 0.0
        %2200 = vmatprep.subr.mxu0 0.0
        %2201 = vmatpush2.xpose.msra.mxu0 0.0
        %2202 = vmatprep.mubr.f32.mxu0 0.0
        %2203 = vmatmul.mubr.f32.gmra.mxu0 %v2126
        %v2204 = vpop.f32.mrf.mxu0
        %v2205 = vadd.f32 %v661, %v2204
        %v2206 = vpop.f32.mrf.mxu0
        %2207 = vmatprep.mubr.f32.mxu0 0.0
        %2208 = vmatmul.mubr.f32.gmra.mxu0 %v2128
        %v2209 = vpop.f32.mrf.mxu0
        %v2210 = vadd.f32 %v661, %v2209
        %v2211 = vpop.f32.mrf.mxu0
        %2212 = vmatprep.mubr.f32.mxu0 0.0
        %2213 = vmatmul.mubr.f32.gmra.mxu0 %v2130
        %v2214 = vpop.f32.mrf.mxu0
        %v2215 = vadd.f32 %v661, %v2214
        %v2216 = vpop.f32.mrf.mxu0
        %2217 = vdwg.mxu0
        %v2218 = vsel %vm764, %v2205, -inf
        %2219 = vmax.xlane.f32.xlu0 %v2218
        %v2220 = vpop.xlane.xlu0 %2219
        %v2221 = vsel %vm764, %v2210, -inf
        %2222 = vmax.xlane.f32.xlu0 %v2221
        %v2223 = vpop.xlane.xlu0 %2222
        %v2224 = vsel %vm764, %v2215, -inf
        %2225 = vmax.xlane.f32.xlu0 %v2224
        %v2226 = vpop.xlane.xlu0 %2225
        %v2227 = vsub.f32 %v2205, %v2220
        %v2228 = vsub.f32 %v2210, %v2223
        %v2229 = vsub.f32 %v2215, %v2226
        %v2230 = vmul.f32 %v2227, 1.442695
        %v2231 = vpow.pop %v2230
        %v2232 = vmul.f32 %v2228, 1.442695
        %v2233 = vpow.pop %v2232
        %v2234 = vmul.f32 %v2229, 1.442695
        %v2235 = vpow.pop %v2234
        %v2236 = vsel %vm764, %v2231, 0.0
        %2237 = vadd.xlane.f32.xlu0 %v2236
        %v2238 = vpop.xlane.xlu0 %2237
        %v2239 = vsel %vm764, %v2233, 0.0
        %2240 = vadd.xlane.f32.xlu0 %v2239
        %v2241 = vpop.xlane.xlu0 %2240
        %v2242 = vsel %vm764, %v2235, 0.0
        %2243 = vadd.xlane.f32.xlu0 %v2242
        %v2244 = vpop.xlane.xlu0 %2243
        %v2245 = vrcp.pop %v2238
        %v2246 = vrcp.pop %v2241
        %v2247 = vrcp.pop %v2244
        %v2248 = vmul.f32 %v2231, %v2245
        %v2249 = vmul.f32 %v2233, %v2246
        %v2250 = vmul.f32 %v2235, %v2247
        %2251 = vrot.lane.b32.xlu0 %v645, 48
        %v2252 = vpop.permute.xlu0 %2251
        %2253 = vrot.lane.b32.xlu0 %v650, 48
        %v2254 = vpop.permute.xlu0 %2253
        %2255 = vrot.lane.b32.xlu0 %v655, 48
        %v2256 = vpop.permute.xlu0 %2255
        %v2261 = vsel %vm764, %v2248, 0
        %v2264 = vsel %vm764, %v2249, 0
        %v2267 = vsel %vm764, %v2250, 0
        %2269 = vmatprep.subr.mxu0 0.0
        %2270 = vmatpush1.msra.mxu0 0.0
        %2271 = vmatprep.subr.mxu0 0.0
        %2272 = vmatpush1.msra.mxu0 0.0
        %2273 = vmatprep.subr.mxu0 0.0
        %2274 = vmatpush1.msra.mxu0 0.0
        %2275 = vmatprep.subr.mxu0 0.0
        %2276 = vmatpush1.msra.mxu0 0.0
        %2277 = vmatprep.subr.mxu0 0.0
        %2278 = vmatpush1.msra.mxu0 0.0
        %2279 = vmatprep.subr.mxu0 0.0
        %2280 = vmatpush1.msra.mxu0 0.0
        %2281 = vmatprep.subr.mxu0 0.0
        %2282 = vmatpush1.msra.mxu0 0.0
        %2283 = vmatprep.subr.mxu0 0.0
        %2284 = vmatpush1.msra.mxu0 0.0
        %2285 = vmatprep.subr.mxu0 0.0
        %2286 = vmatpush1.msra.mxu0 0.0
        %2287 = vmatprep.subr.mxu0 0.0
        %2288 = vmatpush1.msra.mxu0 0.0
        %2289 = vmatprep.subr.mxu0 0.0
        %2290 = vmatpush1.msra.mxu0 0.0
        %2291 = vmatprep.subr.mxu0 0.0
        %2292 = vmatpush1.msra.mxu0 0.0
        %2293 = vmatprep.subr.mxu0 0.0
        %2294 = vmatpush1.msra.mxu0 0.0
        %2295 = vmatprep.subr.mxu0 0.0
        %2296 = vmatpush1.msra.mxu0 %v2256
        %2297 = vmatprep.subr.mxu0 0.0
        %2298 = vmatpush1.msra.mxu0 %v2254
        %2299 = vmatprep.subr.mxu0 0.0
        %2300 = vmatpush1.msra.mxu0 %v2252
        %2301 = vmatprep.subr.mxu0 0.0
        %2302 = vmatpush2.msra.mxu0 0.0
        %2303 = vmatprep.subr.mxu0 0.0
        %2304 = vmatpush2.msra.mxu0 0.0
        %2305 = vmatprep.subr.mxu0 0.0
        %2306 = vmatpush2.msra.mxu0 0.0
        %2307 = vmatprep.subr.mxu0 0.0
        %2308 = vmatpush2.msra.mxu0 0.0
        %2309 = vmatprep.subr.mxu0 0.0
        %2310 = vmatpush2.msra.mxu0 0.0
        %2311 = vmatprep.subr.mxu0 0.0
        %2312 = vmatpush2.msra.mxu0 0.0
        %2313 = vmatprep.subr.mxu0 0.0
        %2314 = vmatpush2.msra.mxu0 0.0
        %2315 = vmatprep.subr.mxu0 0.0
        %2316 = vmatpush2.msra.mxu0 0.0
        %2317 = vmatprep.subr.mxu0 0.0
        %2318 = vmatpush2.msra.mxu0 0.0
        %2319 = vmatprep.subr.mxu0 0.0
        %2320 = vmatpush2.msra.mxu0 0.0
        %2321 = vmatprep.subr.mxu0 0.0
        %2322 = vmatpush2.msra.mxu0 0.0
        %2323 = vmatprep.subr.mxu0 0.0
        %2324 = vmatpush2.msra.mxu0 0.0
        %2325 = vmatprep.subr.mxu0 0.0
        %2326 = vmatpush2.msra.mxu0 0.0
        %2327 = vmatprep.subr.mxu0 0.0
        %2328 = vmatpush2.msra.mxu0 0.0
        %2329 = vmatprep.subr.mxu0 0.0
        %2330 = vmatpush2.msra.mxu0 0.0
        %2331 = vmatprep.subr.mxu0 0.0
        %2332 = vmatpush2.msra.mxu0 0.0
        %2333 = vmatprep.mubr.f32.mxu0 0.0
        %2334 = vmatmul.mubr.f32.gmra.mxu0 %v2261
        %v2335 = vpop.f32.mrf.mxu0
        %v2336 = vadd.f32 0.0, %v2335
        %v2337 = vpop.f32.mrf.mxu0
        %2338 = vmatprep.mubr.f32.mxu0 0.0
        %2339 = vmatmul.mubr.f32.gmra.mxu0 %v2264
        %v2340 = vpop.f32.mrf.mxu0
        %v2341 = vadd.f32 0.0, %v2340
        %v2342 = vpop.f32.mrf.mxu0
        %2343 = vmatprep.mubr.f32.mxu0 0.0
        %2344 = vmatmul.mubr.f32.gmra.mxu0 %v2267
        %v2345 = vpop.f32.mrf.mxu0
        %v2346 = vadd.f32 0.0, %v2345
        %v2347 = vpop.f32.mrf.mxu0
        %2348 = vdwg.mxu0
        %2349 = vrot.lane.b32.xlu0 %v645, 104
        %v2350 = vpop.permute.xlu0 %2349
        %2351 = vrot.lane.b32.xlu0 %v650, 104
        %v2352 = vpop.permute.xlu0 %2351
        %2353 = vrot.lane.b32.xlu0 %v655, 104
        %v2354 = vpop.permute.xlu0 %2353
        %2355 = vrot.lane.b32.xlu0 %v645, 72
        %v2356 = vpop.permute.xlu0 %2355
        %2357 = vrot.lane.b32.xlu0 %v650, 72
        %v2358 = vpop.permute.xlu0 %2357
        %2359 = vrot.lane.b32.xlu0 %v655, 72
        %v2360 = vpop.permute.xlu0 %2359
        %v2361 = vsel %vm671, %v2350, 0
        %v2363 = vsel %vm671, %v2352, 0
        %v2365 = vsel %vm671, %v2354, 0
        %v2367 = vsel %vm671, %v2356, 0
        %v2369 = vsel %vm671, %v2358, 0
        %v2371 = vsel %vm671, %v2360, 0
        %2373 = vmatprep.subr.mxu0 0.0
        %2374 = vmatpush1.xpose.msra.mxu0 0.0
        %2375 = vmatprep.subr.mxu0 0.0
        %2376 = vmatpush1.xpose.msra.mxu0 0.0
        %2377 = vmatprep.subr.mxu0 0.0
        %2378 = vmatpush1.xpose.msra.mxu0 0.0
        %2379 = vmatprep.subr.mxu0 0.0
        %2380 = vmatpush1.xpose.msra.mxu0 0.0
        %2381 = vmatprep.subr.mxu0 0.0
        %2382 = vmatpush1.xpose.msra.mxu0 0.0
        %2383 = vmatprep.subr.mxu0 0.0
        %2384 = vmatpush1.xpose.msra.mxu0 0.0
        %2385 = vmatprep.subr.mxu0 0.0
        %2386 = vmatpush1.xpose.msra.mxu0 0.0
        %2387 = vmatprep.subr.mxu0 0.0
        %2388 = vmatpush1.xpose.msra.mxu0 0.0
        %2389 = vmatprep.subr.mxu0 0.0
        %2390 = vmatpush1.xpose.msra.mxu0 0.0
        %2391 = vmatprep.subr.mxu0 0.0
        %2392 = vmatpush1.xpose.msra.mxu0 0.0
        %2393 = vmatprep.subr.mxu0 0.0
        %2394 = vmatpush1.xpose.msra.mxu0 0.0
        %2395 = vmatprep.subr.mxu0 0.0
        %2396 = vmatpush1.xpose.msra.mxu0 0.0
        %2397 = vmatprep.subr.mxu0 0.0
        %2398 = vmatpush1.xpose.msra.mxu0 0.0
        %2399 = vmatprep.subr.mxu0 0.0
        %2400 = vmatpush1.xpose.msra.mxu0 %v2371
        %2401 = vmatprep.subr.mxu0 0.0
        %2402 = vmatpush1.xpose.msra.mxu0 %v2369
        %2403 = vmatprep.subr.mxu0 0.0
        %2404 = vmatpush1.xpose.msra.mxu0 %v2367
        %2405 = vmatprep.subr.mxu0 0.0
        %2406 = vmatpush2.xpose.msra.mxu0 0.0
        %2407 = vmatprep.subr.mxu0 0.0
        %2408 = vmatpush2.xpose.msra.mxu0 0.0
        %2409 = vmatprep.subr.mxu0 0.0
        %2410 = vmatpush2.xpose.msra.mxu0 0.0
        %2411 = vmatprep.subr.mxu0 0.0
        %2412 = vmatpush2.xpose.msra.mxu0 0.0
        %2413 = vmatprep.subr.mxu0 0.0
        %2414 = vmatpush2.xpose.msra.mxu0 0.0
        %2415 = vmatprep.subr.mxu0 0.0
        %2416 = vmatpush2.xpose.msra.mxu0 0.0
        %2417 = vmatprep.subr.mxu0 0.0
        %2418 = vmatpush2.xpose.msra.mxu0 0.0
        %2419 = vmatprep.subr.mxu0 0.0
        %2420 = vmatpush2.xpose.msra.mxu0 0.0
        %2421 = vmatprep.subr.mxu0 0.0
        %2422 = vmatpush2.xpose.msra.mxu0 0.0
        %2423 = vmatprep.subr.mxu0 0.0
        %2424 = vmatpush2.xpose.msra.mxu0 0.0
        %2425 = vmatprep.subr.mxu0 0.0
        %2426 = vmatpush2.xpose.msra.mxu0 0.0
        %2427 = vmatprep.subr.mxu0 0.0
        %2428 = vmatpush2.xpose.msra.mxu0 0.0
        %2429 = vmatprep.subr.mxu0 0.0
        %2430 = vmatpush2.xpose.msra.mxu0 0.0
        %2431 = vmatprep.subr.mxu0 0.0
        %2432 = vmatpush2.xpose.msra.mxu0 0.0
        %2433 = vmatprep.subr.mxu0 0.0
        %2434 = vmatpush2.xpose.msra.mxu0 0.0
        %2435 = vmatprep.subr.mxu0 0.0
        %2436 = vmatpush2.xpose.msra.mxu0 0.0
        %2437 = vmatprep.mubr.f32.mxu0 0.0
        %2438 = vmatmul.mubr.f32.gmra.mxu0 %v2361
        %v2439 = vpop.f32.mrf.mxu0
        %v2440 = vadd.f32 %v661, %v2439
        %v2441 = vpop.f32.mrf.mxu0
        %2442 = vmatprep.mubr.f32.mxu0 0.0
        %2443 = vmatmul.mubr.f32.gmra.mxu0 %v2363
        %v2444 = vpop.f32.mrf.mxu0
        %v2445 = vadd.f32 %v661, %v2444
        %v2446 = vpop.f32.mrf.mxu0
        %2447 = vmatprep.mubr.f32.mxu0 0.0
        %2448 = vmatmul.mubr.f32.gmra.mxu0 %v2365
        %v2449 = vpop.f32.mrf.mxu0
        %v2450 = vadd.f32 %v661, %v2449
        %v2451 = vpop.f32.mrf.mxu0
        %2452 = vdwg.mxu0
        %v2453 = vsel %vm764, %v2440, -inf
        %2454 = vmax.xlane.f32.xlu0 %v2453
        %v2455 = vpop.xlane.xlu0 %2454
        %v2456 = vsel %vm764, %v2445, -inf
        %2457 = vmax.xlane.f32.xlu0 %v2456
        %v2458 = vpop.xlane.xlu0 %2457
        %v2459 = vsel %vm764, %v2450, -inf
        %2460 = vmax.xlane.f32.xlu0 %v2459
        %v2461 = vpop.xlane.xlu0 %2460
        %v2462 = vsub.f32 %v2440, %v2455
        %v2463 = vsub.f32 %v2445, %v2458
        %v2464 = vsub.f32 %v2450, %v2461
        %v2465 = vmul.f32 %v2462, 1.442695
        %v2466 = vpow.pop %v2465
        %v2467 = vmul.f32 %v2463, 1.442695
        %v2468 = vpow.pop %v2467
        %v2469 = vmul.f32 %v2464, 1.442695
        %v2470 = vpow.pop %v2469
        %v2471 = vsel %vm764, %v2466, 0.0
        %2472 = vadd.xlane.f32.xlu0 %v2471
        %v2473 = vpop.xlane.xlu0 %2472
        %v2474 = vsel %vm764, %v2468, 0.0
        %2475 = vadd.xlane.f32.xlu0 %v2474
        %v2476 = vpop.xlane.xlu0 %2475
        %v2477 = vsel %vm764, %v2470, 0.0
        %2478 = vadd.xlane.f32.xlu0 %v2477
        %v2479 = vpop.xlane.xlu0 %2478
        %v2480 = vrcp.pop %v2473
        %v2481 = vrcp.pop %v2476
        %v2482 = vrcp.pop %v2479
        %v2483 = vmul.f32 %v2466, %v2480
        %v2484 = vmul.f32 %v2468, %v2481
        %v2485 = vmul.f32 %v2470, %v2482
        %2486 = vrot.lane.b32.xlu0 %v645, 40
        %v2487 = vpop.permute.xlu0 %2486
        %2488 = vrot.lane.b32.xlu0 %v650, 40
        %v2489 = vpop.permute.xlu0 %2488
        %2490 = vrot.lane.b32.xlu0 %v655, 40
        %v2491 = vpop.permute.xlu0 %2490
        %v2496 = vsel %vm764, %v2483, 0
        %v2499 = vsel %vm764, %v2484, 0
        %v2502 = vsel %vm764, %v2485, 0
        %2504 = vmatprep.subr.mxu0 0.0
        %2505 = vmatpush1.msra.mxu0 0.0
        %2506 = vmatprep.subr.mxu0 0.0
        %2507 = vmatpush1.msra.mxu0 0.0
        %2508 = vmatprep.subr.mxu0 0.0
        %2509 = vmatpush1.msra.mxu0 0.0
        %2510 = vmatprep.subr.mxu0 0.0
        %2511 = vmatpush1.msra.mxu0 0.0
        %2512 = vmatprep.subr.mxu0 0.0
        %2513 = vmatpush1.msra.mxu0 0.0
        %2514 = vmatprep.subr.mxu0 0.0
        %2515 = vmatpush1.msra.mxu0 0.0
        %2516 = vmatprep.subr.mxu0 0.0
        %2517 = vmatpush1.msra.mxu0 0.0
        %2518 = vmatprep.subr.mxu0 0.0
        %2519 = vmatpush1.msra.mxu0 0.0
        %2520 = vmatprep.subr.mxu0 0.0
        %2521 = vmatpush1.msra.mxu0 0.0
        %2522 = vmatprep.subr.mxu0 0.0
        %2523 = vmatpush1.msra.mxu0 0.0
        %2524 = vmatprep.subr.mxu0 0.0
        %2525 = vmatpush1.msra.mxu0 0.0
        %2526 = vmatprep.subr.mxu0 0.0
        %2527 = vmatpush1.msra.mxu0 0.0
        %2528 = vmatprep.subr.mxu0 0.0
        %2529 = vmatpush1.msra.mxu0 0.0
        %2530 = vmatprep.subr.mxu0 0.0
        %2531 = vmatpush1.msra.mxu0 %v2491
        %2532 = vmatprep.subr.mxu0 0.0
        %2533 = vmatpush1.msra.mxu0 %v2489
        %2534 = vmatprep.subr.mxu0 0.0
        %2535 = vmatpush1.msra.mxu0 %v2487
        %2536 = vmatprep.subr.mxu0 0.0
        %2537 = vmatpush2.msra.mxu0 0.0
        %2538 = vmatprep.subr.mxu0 0.0
        %2539 = vmatpush2.msra.mxu0 0.0
        %2540 = vmatprep.subr.mxu0 0.0
        %2541 = vmatpush2.msra.mxu0 0.0
        %2542 = vmatprep.subr.mxu0 0.0
        %2543 = vmatpush2.msra.mxu0 0.0
        %2544 = vmatprep.subr.mxu0 0.0
        %2545 = vmatpush2.msra.mxu0 0.0
        %2546 = vmatprep.subr.mxu0 0.0
        %2547 = vmatpush2.msra.mxu0 0.0
        %2548 = vmatprep.subr.mxu0 0.0
        %2549 = vmatpush2.msra.mxu0 0.0
        %2550 = vmatprep.subr.mxu0 0.0
        %2551 = vmatpush2.msra.mxu0 0.0
        %2552 = vmatprep.subr.mxu0 0.0
        %2553 = vmatpush2.msra.mxu0 0.0
        %2554 = vmatprep.subr.mxu0 0.0
        %2555 = vmatpush2.msra.mxu0 0.0
        %2556 = vmatprep.subr.mxu0 0.0
        %2557 = vmatpush2.msra.mxu0 0.0
        %2558 = vmatprep.subr.mxu0 0.0
        %2559 = vmatpush2.msra.mxu0 0.0
        %2560 = vmatprep.subr.mxu0 0.0
        %2561 = vmatpush2.msra.mxu0 0.0
        %2562 = vmatprep.subr.mxu0 0.0
        %2563 = vmatpush2.msra.mxu0 0.0
        %2564 = vmatprep.subr.mxu0 0.0
        %2565 = vmatpush2.msra.mxu0 0.0
        %2566 = vmatprep.subr.mxu0 0.0
        %2567 = vmatpush2.msra.mxu0 0.0
        %2568 = vmatprep.mubr.f32.mxu0 0.0
        %2569 = vmatmul.mubr.f32.gmra.mxu0 %v2496
        %v2570 = vpop.f32.mrf.mxu0
        %v2571 = vadd.f32 0.0, %v2570
        %v2572 = vpop.f32.mrf.mxu0
        %2573 = vmatprep.mubr.f32.mxu0 0.0
        %2574 = vmatmul.mubr.f32.gmra.mxu0 %v2499
        %v2575 = vpop.f32.mrf.mxu0
        %v2576 = vadd.f32 0.0, %v2575
        %v2577 = vpop.f32.mrf.mxu0
        %2578 = vmatprep.mubr.f32.mxu0 0.0
        %2579 = vmatmul.mubr.f32.gmra.mxu0 %v2502
        %v2580 = vpop.f32.mrf.mxu0
        %v2581 = vadd.f32 0.0, %v2580
        %v2582 = vpop.f32.mrf.mxu0
        %2583 = vdwg.mxu0
        %2587 = vrot.lane.b32.xlu0 %v2101, 8
        %v2588 = vpop.permute.xlu0 %2587
        %2589 = vrot.lane.b32.xlu0 %v2106, 8
        %v2590 = vpop.permute.xlu0 %2589
        %2591 = vrot.lane.b32.xlu0 %v2111, 8
        %v2592 = vpop.permute.xlu0 %2591
        %2599 = vrot.lane.b32.xlu0 %v2336, 16
        %v2600 = vpop.permute.xlu0 %2599
        %2601 = vrot.lane.b32.xlu0 %v2341, 16
        %v2602 = vpop.permute.xlu0 %2601
        %2603 = vrot.lane.b32.xlu0 %v2346, 16
        %v2604 = vpop.permute.xlu0 %2603
        %2611 = vrot.lane.b32.xlu0 %v2571, 24
        %v2612 = vpop.permute.xlu0 %2611
        %2613 = vrot.lane.b32.xlu0 %v2576, 24
        %v2614 = vpop.permute.xlu0 %2613
        %2615 = vrot.lane.b32.xlu0 %v2581, 24
        %v2616 = vpop.permute.xlu0 %2615
        %v2620 = vsel %vm671, %v1866, %v2588
        %v2621 = vsel %vm671, %v1871, %v2590
        %v2622 = vsel %vm671, %v1876, %v2592
        %v2623 = vsel %vm1640, %v2620, %v2600
        %v2624 = vsel %vm1640, %v2621, %v2602
        %v2625 = vsel %vm1640, %v2622, %v2604
        %v2626 = vsel %vm764, %v2623, %v2612
        %v2627 = vsel %vm764, %v2624, %v2614
        %v2628 = vsel %vm764, %v2625, %v2616
        %v2629 = vld [vmem:[#allocation5 + $0x128] sm:$0xff]
        %v2630 = vld [vmem:[#allocation5 + $0x130] sm:$0xff]
        %v2631 = vld [vmem:[#allocation5 + $0x138] sm:$0xff]
        %v2632 = vld [vmem:[#allocation5 + $0x140] sm:$0xff]
        %v2633 = vld [vmem:[#allocation5 + $0x148] sm:$0x1]
        %v2634 = vlaneseq
        %v2635 = vshrl.u32 %v2634, 7
        %v2636 = vsub.s32 0, %v2635
        %v2637 = vrot.slane %v2633, %v2636
        %v2639 = vsel %vm335, %v1644, 0
        %v2642 = vsel %vm335, %v1645, 0
        %v2645 = vsel %vm335, %v1646, 0
        %v2648 = vsel %vm335, %v2626, 0
        %v2651 = vsel %vm335, %v2627, 0
        %v2654 = vsel %vm335, %v2628, 0
        %2656 = vmatprep.subr.mxu0 0.0
        %2657 = vmatpush1.msra.mxu0 0.0
        %2658 = vmatprep.subr.mxu0 0.0
        %2659 = vmatpush1.msra.mxu0 0.0
        %2660 = vmatprep.subr.mxu0 0.0
        %2661 = vmatpush1.msra.mxu0 0.0
        %2662 = vmatprep.subr.mxu0 0.0
        %2663 = vmatpush1.msra.mxu0 0.0
        %2664 = vmatprep.subr.mxu0 0.0
        %2665 = vmatpush1.msra.mxu0 0.0
        %2666 = vmatprep.subr.mxu0 0.0
        %2667 = vmatpush1.msra.mxu0 0.0
        %2668 = vmatprep.subr.mxu0 0.0
        %2669 = vmatpush1.msra.mxu0 0.0
        %2670 = vmatprep.subr.mxu0 0.0
        %2671 = vmatpush1.msra.mxu0 0.0
        %2672 = vmatprep.subr.mxu0 0.0
        %2673 = vmatpush1.msra.mxu0 0.0
        %2674 = vmatprep.subr.mxu0 0.0
        %2675 = vmatpush1.msra.mxu0 0.0
        %2676 = vmatprep.subr.mxu0 0.0
        %2677 = vmatpush1.msra.mxu0 0.0
        %2678 = vmatprep.subr.mxu0 0.0
        %2679 = vmatpush1.msra.mxu0 0.0
        %2680 = vmatprep.subr.mxu0 0.0
        %2681 = vmatpush1.msra.mxu0 %v2632
        %2682 = vmatprep.subr.mxu0 0.0
        %2683 = vmatpush1.msra.mxu0 %v2631
        %2684 = vmatprep.subr.mxu0 0.0
        %2685 = vmatpush1.msra.mxu0 %v2630
        %2686 = vmatprep.subr.mxu0 0.0
        %2687 = vmatpush1.msra.mxu0 %v2629
        %2688 = vmatprep.subr.mxu0 0.0
        %2689 = vmatpush2.msra.mxu0 0.0
        %2690 = vmatprep.subr.mxu0 0.0
        %2691 = vmatpush2.msra.mxu0 0.0
        %2692 = vmatprep.subr.mxu0 0.0
        %2693 = vmatpush2.msra.mxu0 0.0
        %2694 = vmatprep.subr.mxu0 0.0
        %2695 = vmatpush2.msra.mxu0 0.0
        %2696 = vmatprep.subr.mxu0 0.0
        %2697 = vmatpush2.msra.mxu0 0.0
        %2698 = vmatprep.subr.mxu0 0.0
        %2699 = vmatpush2.msra.mxu0 0.0
        %2700 = vmatprep.subr.mxu0 0.0
        %2701 = vmatpush2.msra.mxu0 0.0
        %2702 = vmatprep.subr.mxu0 0.0
        %2703 = vmatpush2.msra.mxu0 0.0
        %2704 = vmatprep.subr.mxu0 0.0
        %2705 = vmatpush2.msra.mxu0 0.0
        %2706 = vmatprep.subr.mxu0 0.0
        %2707 = vmatpush2.msra.mxu0 0.0
        %2708 = vmatprep.subr.mxu0 0.0
        %2709 = vmatpush2.msra.mxu0 0.0
        %2710 = vmatprep.subr.mxu0 0.0
        %2711 = vmatpush2.msra.mxu0 0.0
        %2712 = vmatprep.subr.mxu0 0.0
        %2713 = vmatpush2.msra.mxu0 0.0
        %2714 = vmatprep.subr.mxu0 0.0
        %2715 = vmatpush2.msra.mxu0 0.0
        %2716 = vmatprep.subr.mxu0 0.0
        %2717 = vmatpush2.msra.mxu0 0.0
        %2718 = vmatprep.subr.mxu0 0.0
        %2719 = vmatpush2.msra.mxu0 0.0
        %2720 = vmatprep.mubr.f32.mxu0 0.0
        %2721 = vmatmul.mubr.f32.gmra.mxu0 %v2639
        %v2722 = vpop.f32.mrf.mxu0
        %v2723 = vadd.f32 %v2637, %v2722
        %v2724 = vpop.f32.mrf.mxu0
        %2725 = vmatprep.mubr.f32.mxu0 0.0
        %2726 = vmatmul.mubr.f32.gmra.mxu0 %v2642
        %v2727 = vpop.f32.mrf.mxu0
        %v2728 = vadd.f32 %v2637, %v2727
        %v2729 = vpop.f32.mrf.mxu0
        %2730 = vmatprep.mubr.f32.mxu0 0.0
        %2731 = vmatmul.mubr.f32.gmra.mxu0 %v2645
        %v2732 = vpop.f32.mrf.mxu0
        %v2733 = vadd.f32 %v2637, %v2732
        %v2734 = vpop.f32.mrf.mxu0
        %2735 = vmatprep.mubr.f32.mxu0 0.0
        %2736 = vmatmul.mubr.f32.gmra.mxu0 %v2648
        %v2737 = vpop.f32.mrf.mxu0
        %v2738 = vadd.f32 %v2637, %v2737
        %v2739 = vpop.f32.mrf.mxu0
        %2740 = vmatprep.mubr.f32.mxu0 0.0
        %2741 = vmatmul.mubr.f32.gmra.mxu0 %v2651
        %v2742 = vpop.f32.mrf.mxu0
        %v2743 = vadd.f32 %v2637, %v2742
        %v2744 = vpop.f32.mrf.mxu0
        %2745 = vmatprep.mubr.f32.mxu0 0.0
        %2746 = vmatmul.mubr.f32.gmra.mxu0 %v2654
        %v2747 = vpop.f32.mrf.mxu0
        %v2748 = vadd.f32 %v2637, %v2747
        %v2749 = vpop.f32.mrf.mxu0
        %2750 = vdwg.mxu0
        %v2751 = vadd.f32 %v429, %v2723
        %v2752 = vadd.f32 %v430, %v2728
        %v2753 = vadd.f32 %v431, %v2733
        %v2754 = vadd.f32 %v432, %v2738
        %v2755 = vadd.f32 %v433, %v2743
        %v2756 = vadd.f32 %v434, %v2748
        %v2757 = vld [vmem:[#allocation5 + $0x150] sm:$0x1]
        %v2758 = vld [vmem:[#allocation5 + $0x158] sm:$0x1]
        %v2759 = vsel %vm335, %v2751, 0.0
        %2760 = vadd.xlane.f32.xlu0 %v2759
        %v2761 = vpop.xlane.xlu0 %2760
        %v2762 = vsel %vm335, %v2752, 0.0
        %2763 = vadd.xlane.f32.xlu0 %v2762
        %v2764 = vpop.xlane.xlu0 %2763
        %v2765 = vsel %vm335, %v2753, 0.0
        %2766 = vadd.xlane.f32.xlu0 %v2765
        %v2767 = vpop.xlane.xlu0 %2766
        %v2768 = vsel %vm335, %v2754, 0.0
        %2769 = vadd.xlane.f32.xlu0 %v2768
        %v2770 = vpop.xlane.xlu0 %2769
        %v2771 = vsel %vm335, %v2755, 0.0
        %2772 = vadd.xlane.f32.xlu0 %v2771
        %v2773 = vpop.xlane.xlu0 %2772
        %v2774 = vsel %vm335, %v2756, 0.0
        %2775 = vadd.xlane.f32.xlu0 %v2774
        %v2776 = vpop.xlane.xlu0 %2775
        %v2777 = vmul.f32 %v2761, %v354
        %v2778 = vmul.f32 %v2764, %v354
        %v2779 = vmul.f32 %v2767, %v354
        %v2780 = vmul.f32 %v2770, %v354
        %v2781 = vmul.f32 %v2773, %v354
        %v2782 = vmul.f32 %v2776, %v354
        %v2783 = vsub.f32 %v2751, %v2777
        %v2784 = vsub.f32 %v2752, %v2778
        %v2785 = vsub.f32 %v2753, %v2779
        %v2786 = vsub.f32 %v2754, %v2780
        %v2787 = vsub.f32 %v2755, %v2781
        %v2788 = vsub.f32 %v2756, %v2782
        %v2789 = vmul.f32 %v2783, %v2783
        %v2790 = vmul.f32 %v2784, %v2784
        %v2791 = vmul.f32 %v2785, %v2785
        %v2792 = vmul.f32 %v2786, %v2786
        %v2793 = vmul.f32 %v2787, %v2787
        %v2794 = vmul.f32 %v2788, %v2788
        %v2795 = vsel %vm335, %v2789, 0.0
        %2796 = vadd.xlane.f32.xlu0 %v2795
        %v2797 = vpop.xlane.xlu0 %2796
        %v2798 = vsel %vm335, %v2790, 0.0
        %2799 = vadd.xlane.f32.xlu0 %v2798
        %v2800 = vpop.xlane.xlu0 %2799
        %v2801 = vsel %vm335, %v2791, 0.0
        %2802 = vadd.xlane.f32.xlu0 %v2801
        %v2803 = vpop.xlane.xlu0 %2802
        %v2804 = vsel %vm335, %v2792, 0.0
        %2805 = vadd.xlane.f32.xlu0 %v2804
        %v2806 = vpop.xlane.xlu0 %2805
        %v2807 = vsel %vm335, %v2793, 0.0
        %2808 = vadd.xlane.f32.xlu0 %v2807
        %v2809 = vpop.xlane.xlu0 %2808
        %v2810 = vsel %vm335, %v2794, 0.0
        %2811 = vadd.xlane.f32.xlu0 %v2810
        %v2812 = vpop.xlane.xlu0 %2811
        %v2813 = vmul.f32 %v2797, %v354
        %v2814 = vmul.f32 %v2800, %v354
        %v2815 = vmul.f32 %v2803, %v354
        %v2816 = vmul.f32 %v2806, %v354
        %v2817 = vmul.f32 %v2809, %v354
        %v2818 = vmul.f32 %v2812, %v354
        %v2819 = vadd.f32 %v2813, 1e-05
        %v2820 = vadd.f32 %v2814, 1e-05
        %v2821 = vadd.f32 %v2815, 1e-05
        %v2822 = vadd.f32 %v2816, 1e-05
        %v2823 = vadd.f32 %v2817, 1e-05
        %v2824 = vadd.f32 %v2818, 1e-05
        %v2825 = vrsqrt.pop %v2819
        %v2826 = vrsqrt.pop %v2820
        %v2827 = vrsqrt.pop %v2821
        %v2828 = vrsqrt.pop %v2822
        %v2829 = vrsqrt.pop %v2823
        %v2830 = vrsqrt.pop %v2824
        %v2831 = vmul.f32 %v2783, %v2825
        %v2832 = vmul.f32 %v2784, %v2826
        %v2833 = vmul.f32 %v2785, %v2827
        %v2834 = vmul.f32 %v2786, %v2828
        %v2835 = vmul.f32 %v2787, %v2829
        %v2836 = vmul.f32 %v2788, %v2830
        %v2837 = vlaneseq
        %v2838 = vshrl.u32 %v2837, 7
        %v2839 = vsub.s32 0, %v2838
        %v2840 = vrot.slane %v2757, %v2839
        %v2841 = vmul.f32 %v2831, %v2840
        %v2842 = vmul.f32 %v2832, %v2840
        %v2843 = vmul.f32 %v2833, %v2840
        %v2844 = vmul.f32 %v2834, %v2840
        %v2845 = vmul.f32 %v2835, %v2840
        %v2846 = vmul.f32 %v2836, %v2840
        %v2847 = vlaneseq
        %v2848 = vshrl.u32 %v2847, 7
        %v2849 = vsub.s32 0, %v2848
        %v2850 = vrot.slane %v2758, %v2849
        %v2851 = vadd.f32 %v2841, %v2850
        %v2852 = vadd.f32 %v2842, %v2850
        %v2853 = vadd.f32 %v2843, %v2850
        %v2854 = vadd.f32 %v2844, %v2850
        %v2855 = vadd.f32 %v2845, %v2850
        %v2856 = vadd.f32 %v2846, %v2850
        %v2857 = vld [vmem:[#allocation5 + $0x160] sm:$0xff]
        %v2858 = vld [vmem:[#allocation5 + $0x168] sm:$0xff]
        %v2859 = vld [vmem:[#allocation5 + $0x170] sm:$0xff]
        %v2860 = vld [vmem:[#allocation5 + $0x178] sm:$0xff]
        %v2861 = vld [vmem:[#allocation5 + $0x180] sm:$0x1]
        %v2862 = vlaneseq
        %v2863 = vshrl.u32 %v2862, 7
        %v2864 = vsub.s32 0, %v2863
        %v2865 = vrot.slane %v2861, %v2864
        %v2867 = vsel %vm335, %v2851, 0
        %v2870 = vsel %vm335, %v2852, 0
        %v2873 = vsel %vm335, %v2853, 0
        %v2876 = vsel %vm335, %v2854, 0
        %v2879 = vsel %vm335, %v2855, 0
        %v2882 = vsel %vm335, %v2856, 0
        %2884 = vmatprep.subr.mxu0 0.0
        %2885 = vmatpush1.msra.mxu0 0.0
        %2886 = vmatprep.subr.mxu0 0.0
        %2887 = vmatpush1.msra.mxu0 0.0
        %2888 = vmatprep.subr.mxu0 0.0
        %2889 = vmatpush1.msra.mxu0 0.0
        %2890 = vmatprep.subr.mxu0 0.0
        %2891 = vmatpush1.msra.mxu0 0.0
        %2892 = vmatprep.subr.mxu0 0.0
        %2893 = vmatpush1.msra.mxu0 0.0
        %2894 = vmatprep.subr.mxu0 0.0
        %2895 = vmatpush1.msra.mxu0 0.0
        %2896 = vmatprep.subr.mxu0 0.0
        %2897 = vmatpush1.msra.mxu0 0.0
        %2898 = vmatprep.subr.mxu0 0.0
        %2899 = vmatpush1.msra.mxu0 0.0
        %2900 = vmatprep.subr.mxu0 0.0
        %2901 = vmatpush1.msra.mxu0 0.0
        %2902 = vmatprep.subr.mxu0 0.0
        %2903 = vmatpush1.msra.mxu0 0.0
        %2904 = vmatprep.subr.mxu0 0.0
        %2905 = vmatpush1.msra.mxu0 0.0
        %2906 = vmatprep.subr.mxu0 0.0
        %2907 = vmatpush1.msra.mxu0 0.0
        %2908 = vmatprep.subr.mxu0 0.0
        %2909 = vmatpush1.msra.mxu0 %v2860
        %2910 = vmatprep.subr.mxu0 0.0
        %2911 = vmatpush1.msra.mxu0 %v2859
        %2912 = vmatprep.subr.mxu0 0.0
        %2913 = vmatpush1.msra.mxu0 %v2858
        %2914 = vmatprep.subr.mxu0 0.0
        %2915 = vmatpush1.msra.mxu0 %v2857
        %2916 = vmatprep.subr.mxu0 0.0
        %2917 = vmatpush2.msra.mxu0 0.0
        %2918 = vmatprep.subr.mxu0 0.0
        %2919 = vmatpush2.msra.mxu0 0.0
        %2920 = vmatprep.subr.mxu0 0.0
        %2921 = vmatpush2.msra.mxu0 0.0
        %2922 = vmatprep.subr.mxu0 0.0
        %2923 = vmatpush2.msra.mxu0 0.0
        %2924 = vmatprep.subr.mxu0 0.0
        %2925 = vmatpush2.msra.mxu0 0.0
        %2926 = vmatprep.subr.mxu0 0.0
        %2927 = vmatpush2.msra.mxu0 0.0
        %2928 = vmatprep.subr.mxu0 0.0
        %2929 = vmatpush2.msra.mxu0 0.0
        %2930 = vmatprep.subr.mxu0 0.0
        %2931 = vmatpush2.msra.mxu0 0.0
        %2932 = vmatprep.subr.mxu0 0.0
        %2933 = vmatpush2.msra.mxu0 0.0
        %2934 = vmatprep.subr.mxu0 0.0
        %2935 = vmatpush2.msra.mxu0 0.0
        %2936 = vmatprep.subr.mxu0 0.0
        %2937 = vmatpush2.msra.mxu0 0.0
        %2938 = vmatprep.subr.mxu0 0.0
        %2939 = vmatpush2.msra.mxu0 0.0
        %2940 = vmatprep.subr.mxu0 0.0
        %2941 = vmatpush2.msra.mxu0 0.0
        %2942 = vmatprep.subr.mxu0 0.0
        %2943 = vmatpush2.msra.mxu0 0.0
        %2944 = vmatprep.subr.mxu0 0.0
        %2945 = vmatpush2.msra.mxu0 0.0
        %2946 = vmatprep.subr.mxu0 0.0
        %2947 = vmatpush2.msra.mxu0 0.0
        %2948 = vmatprep.mubr.f32.mxu0 0.0
        %2949 = vmatmul.mubr.f32.gmra.mxu0 %v2867
        %v2950 = vpop.f32.mrf.mxu0
        %v2951 = vadd.f32 %v2865, %v2950
        %v2952 = vpop.f32.mrf.mxu0
        %2953 = vmatprep.mubr.f32.mxu0 0.0
        %2954 = vmatmul.mubr.f32.gmra.mxu0 %v2870
        %v2955 = vpop.f32.mrf.mxu0
        %v2956 = vadd.f32 %v2865, %v2955
        %v2957 = vpop.f32.mrf.mxu0
        %2958 = vmatprep.mubr.f32.mxu0 0.0
        %2959 = vmatmul.mubr.f32.gmra.mxu0 %v2873
        %v2960 = vpop.f32.mrf.mxu0
        %v2961 = vadd.f32 %v2865, %v2960
        %v2962 = vpop.f32.mrf.mxu0
        %2963 = vmatprep.mubr.f32.mxu0 0.0
        %2964 = vmatmul.mubr.f32.gmra.mxu0 %v2876
        %v2965 = vpop.f32.mrf.mxu0
        %v2966 = vadd.f32 %v2865, %v2965
        %v2967 = vpop.f32.mrf.mxu0
        %2968 = vmatprep.mubr.f32.mxu0 0.0
        %2969 = vmatmul.mubr.f32.gmra.mxu0 %v2879
        %v2970 = vpop.f32.mrf.mxu0
        %v2971 = vadd.f32 %v2865, %v2970
        %v2972 = vpop.f32.mrf.mxu0
        %2973 = vmatprep.mubr.f32.mxu0 0.0
        %2974 = vmatmul.mubr.f32.gmra.mxu0 %v2882
        %v2975 = vpop.f32.mrf.mxu0
        %v2976 = vadd.f32 %v2865, %v2975
        %v2977 = vpop.f32.mrf.mxu0
        %2978 = vdwg.mxu0
        %v2979 = vmul.f32 %v2951, 1.702
        %v2980 = vmul.f32 %v2956, 1.702
        %v2981 = vmul.f32 %v2961, 1.702
        %v2982 = vmul.f32 %v2966, 1.702
        %v2983 = vmul.f32 %v2971, 1.702
        %v2984 = vmul.f32 %v2976, 1.702
        %v2985 = vxor.u32 %v2979, 2147483648
        %v2986 = vxor.u32 %v2980, 2147483648
        %v2987 = vxor.u32 %v2981, 2147483648
        %v2988 = vxor.u32 %v2982, 2147483648
        %v2989 = vxor.u32 %v2983, 2147483648
        %v2990 = vxor.u32 %v2984, 2147483648
        %v2991 = vmul.f32 %v2985, 1.442695
        %v2992 = vpow.pop %v2991
        %v2993 = vmul.f32 %v2986, 1.442695
        %v2994 = vpow.pop %v2993
        %v2995 = vmul.f32 %v2987, 1.442695
        %v2996 = vpow.pop %v2995
        %v2997 = vmul.f32 %v2988, 1.442695
        %v2998 = vpow.pop %v2997
        %v2999 = vmul.f32 %v2989, 1.442695
        %v3000 = vpow.pop %v2999
        %v3001 = vmul.f32 %v2990, 1.442695
        %v3002 = vpow.pop %v3001
        %v3003 = vadd.f32 %v2992, 1.0
        %v3004 = vadd.f32 %v2994, 1.0
        %v3005 = vadd.f32 %v2996, 1.0
        %v3006 = vadd.f32 %v2998, 1.0
        %v3007 = vadd.f32 %v3000, 1.0
        %v3008 = vadd.f32 %v3002, 1.0
        %v3009 = vrcp.pop %v3003
        %v3010 = vmul.f32 1.0, %v3009
        %v3011 = vrcp.pop %v3004
        %v3012 = vmul.f32 1.0, %v3011
        %v3013 = vrcp.pop %v3005
        %v3014 = vmul.f32 1.0, %v3013
        %v3015 = vrcp.pop %v3006
        %v3016 = vmul.f32 1.0, %v3015
        %v3017 = vrcp.pop %v3007
        %v3018 = vmul.f32 1.0, %v3017
        %v3019 = vrcp.pop %v3008
        %v3020 = vmul.f32 1.0, %v3019
        %v3021 = vmul.f32 %v2951, %v3010
        %v3022 = vmul.f32 %v2956, %v3012
        %v3023 = vmul.f32 %v2961, %v3014
        %v3024 = vmul.f32 %v2966, %v3016
        %v3025 = vmul.f32 %v2971, %v3018
        %v3026 = vmul.f32 %v2976, %v3020
        %v3027 = vld [vmem:[#allocation5 + $0x188] sm:$0xff]
        %v3028 = vld [vmem:[#allocation5 + $0x190] sm:$0xff]
        %v3029 = vld [vmem:[#allocation5 + $0x198] sm:$0xff]
        %v3030 = vld [vmem:[#allocation5 + $0x1a0] sm:$0xff]
        %v3031 = vld [vmem:[#allocation5 + $0x1a8] sm:$0xff]
        %v3032 = vld [vmem:[#allocation5 + $0x1b0] sm:$0xff]
        %v3033 = vld [vmem:[#allocation5 + $0x1b8] sm:$0xff]
        %v3034 = vld [vmem:[#allocation5 + $0x1c0] sm:$0xff]
        %v3035 = vld [vmem:[#allocation5 + $0x1c8] sm:$0x1]
        %v3036 = vlaneseq
        %v3037 = vshrl.u32 %v3036, 7
        %v3038 = vsub.s32 0, %v3037
        %v3039 = vrot.slane %v3035, %v3038
        %v3041 = vsel %vm219, %v3021, 0
        %v3044 = vsel %vm219, %v3022, 0
        %v3047 = vsel %vm219, %v3023, 0
        %v3050 = vsel %vm219, %v3024, 0
        %v3053 = vsel %vm219, %v3025, 0
        %v3056 = vsel %vm219, %v3026, 0
        %3058 = vmatprep.subr.mxu0 0.0
        %3059 = vmatpush1.msra.mxu0 0.0
        %3060 = vmatprep.subr.mxu0 0.0
        %3061 = vmatpush1.msra.mxu0 0.0
        %3062 = vmatprep.subr.mxu0 0.0
        %3063 = vmatpush1.msra.mxu0 0.0
        %3064 = vmatprep.subr.mxu0 0.0
        %3065 = vmatpush1.msra.mxu0 0.0
        %3066 = vmatprep.subr.mxu0 0.0
        %3067 = vmatpush1.msra.mxu0 0.0
        %3068 = vmatprep.subr.mxu0 0.0
        %3069 = vmatpush1.msra.mxu0 0.0
        %3070 = vmatprep.subr.mxu0 0.0
        %3071 = vmatpush1.msra.mxu0 0.0
        %3072 = vmatprep.subr.mxu0 0.0
        %3073 = vmatpush1.msra.mxu0 0.0
        %3074 = vmatprep.subr.mxu0 0.0
        %3075 = vmatpush1.msra.mxu0 %v3034
        %3076 = vmatprep.subr.mxu0 0.0
        %3077 = vmatpush1.msra.mxu0 %v3033
        %3078 = vmatprep.subr.mxu0 0.0
        %3079 = vmatpush1.msra.mxu0 %v3032
        %3080 = vmatprep.subr.mxu0 0.0
        %3081 = vmatpush1.msra.mxu0 %v3031
        %3082 = vmatprep.subr.mxu0 0.0
        %3083 = vmatpush1.msra.mxu0 %v3030
        %3084 = vmatprep.subr.mxu0 0.0
        %3085 = vmatpush1.msra.mxu0 %v3029
        %3086 = vmatprep.subr.mxu0 0.0
        %3087 = vmatpush1.msra.mxu0 %v3028
        %3088 = vmatprep.subr.mxu0 0.0
        %3089 = vmatpush1.msra.mxu0 %v3027
        %3090 = vmatprep.subr.mxu0 0.0
        %3091 = vmatpush2.msra.mxu0 0.0
        %3092 = vmatprep.subr.mxu0 0.0
        %3093 = vmatpush2.msra.mxu0 0.0
        %3094 = vmatprep.subr.mxu0 0.0
        %3095 = vmatpush2.msra.mxu0 0.0
        %3096 = vmatprep.subr.mxu0 0.0
        %3097 = vmatpush2.msra.mxu0 0.0
        %3098 = vmatprep.subr.mxu0 0.0
        %3099 = vmatpush2.msra.mxu0 0.0
        %3100 = vmatprep.subr.mxu0 0.0
        %3101 = vmatpush2.msra.mxu0 0.0
        %3102 = vmatprep.subr.mxu0 0.0
        %3103 = vmatpush2.msra.mxu0 0.0
        %3104 = vmatprep.subr.mxu0 0.0
        %3105 = vmatpush2.msra.mxu0 0.0
        %3106 = vmatprep.subr.mxu0 0.0
        %3107 = vmatpush2.msra.mxu0 0.0
        %3108 = vmatprep.subr.mxu0 0.0
        %3109 = vmatpush2.msra.mxu0 0.0
        %3110 = vmatprep.subr.mxu0 0.0
        %3111 = vmatpush2.msra.mxu0 0.0
        %3112 = vmatprep.subr.mxu0 0.0
        %3113 = vmatpush2.msra.mxu0 0.0
        %3114 = vmatprep.subr.mxu0 0.0
        %3115 = vmatpush2.msra.mxu0 0.0
        %3116 = vmatprep.subr.mxu0 0.0
        %3117 = vmatpush2.msra.mxu0 0.0
        %3118 = vmatprep.subr.mxu0 0.0
        %3119 = vmatpush2.msra.mxu0 0.0
        %3120 = vmatprep.subr.mxu0 0.0
        %3121 = vmatpush2.msra.mxu0 0.0
        %3122 = vmatprep.mubr.f32.mxu0 0.0
        %3123 = vmatmul.mubr.f32.gmra.mxu0 %v3041
        %v3124 = vpop.f32.mrf.mxu0
        %v3125 = vadd.f32 %v3039, %v3124
        %v3126 = vpop.f32.mrf.mxu0
        %3127 = vmatprep.mubr.f32.mxu0 0.0
        %3128 = vmatmul.mubr.f32.gmra.mxu0 %v3044
        %v3129 = vpop.f32.mrf.mxu0
        %v3130 = vadd.f32 %v3039, %v3129
        %v3131 = vpop.f32.mrf.mxu0
        %3132 = vmatprep.mubr.f32.mxu0 0.0
        %3133 = vmatmul.mubr.f32.gmra.mxu0 %v3047
        %v3134 = vpop.f32.mrf.mxu0
        %v3135 = vadd.f32 %v3039, %v3134
        %v3136 = vpop.f32.mrf.mxu0
        %3137 = vmatprep.mubr.f32.mxu0 0.0
        %3138 = vmatmul.mubr.f32.gmra.mxu0 %v3050
        %v3139 = vpop.f32.mrf.mxu0
        %v3140 = vadd.f32 %v3039, %v3139
        %v3141 = vpop.f32.mrf.mxu0
        %3142 = vmatprep.mubr.f32.mxu0 0.0
        %3143 = vmatmul.mubr.f32.gmra.mxu0 %v3053
        %v3144 = vpop.f32.mrf.mxu0
        %v3145 = vadd.f32 %v3039, %v3144
        %v3146 = vpop.f32.mrf.mxu0
        %3147 = vmatprep.mubr.f32.mxu0 0.0
        %3148 = vmatmul.mubr.f32.gmra.mxu0 %v3056
        %v3149 = vpop.f32.mrf.mxu0
        %v3150 = vadd.f32 %v3039, %v3149
        %v3151 = vpop.f32.mrf.mxu0
        %3152 = vdwg.mxu0
        %v3153 = vadd.f32 %v2751, %v3125
        %v3154 = vadd.f32 %v2752, %v3130
        %v3155 = vadd.f32 %v2753, %v3135
        %v3156 = vadd.f32 %v2754, %v3140
        %v3157 = vadd.f32 %v2755, %v3145
        %v3158 = vadd.f32 %v2756, %v3150
        %v3159 = vld [vmem:[#allocation5 + $0x1d0] sm:$0x1]
        %v3160 = vld [vmem:[#allocation5 + $0x1d8] sm:$0x1]
        %v3161 = vsel %vm335, %v3153, 0.0
        %3162 = vadd.xlane.f32.xlu0 %v3161
        %v3163 = vpop.xlane.xlu0 %3162
        %v3164 = vsel %vm335, %v3154, 0.0
        %3165 = vadd.xlane.f32.xlu0 %v3164
        %v3166 = vpop.xlane.xlu0 %3165
        %v3167 = vsel %vm335, %v3155, 0.0
        %3168 = vadd.xlane.f32.xlu0 %v3167
        %v3169 = vpop.xlane.xlu0 %3168
        %v3170 = vsel %vm335, %v3156, 0.0
        %3171 = vadd.xlane.f32.xlu0 %v3170
        %v3172 = vpop.xlane.xlu0 %3171
        %v3173 = vsel %vm335, %v3157, 0.0
        %3174 = vadd.xlane.f32.xlu0 %v3173
        %v3175 = vpop.xlane.xlu0 %3174
        %v3176 = vsel %vm335, %v3158, 0.0
        %3177 = vadd.xlane.f32.xlu0 %v3176
        %v3178 = vpop.xlane.xlu0 %3177
        %v3179 = vmul.f32 %v3163, %v354
        %v3180 = vmul.f32 %v3166, %v354
        %v3181 = vmul.f32 %v3169, %v354
        %v3182 = vmul.f32 %v3172, %v354
        %v3183 = vmul.f32 %v3175, %v354
        %v3184 = vmul.f32 %v3178, %v354
        %v3185 = vsub.f32 %v3153, %v3179
        %v3186 = vsub.f32 %v3154, %v3180
        %v3187 = vsub.f32 %v3155, %v3181
        %v3188 = vsub.f32 %v3156, %v3182
        %v3189 = vsub.f32 %v3157, %v3183
        %v3190 = vsub.f32 %v3158, %v3184
        %v3191 = vmul.f32 %v3185, %v3185
        %v3192 = vmul.f32 %v3186, %v3186
        %v3193 = vmul.f32 %v3187, %v3187
        %v3194 = vmul.f32 %v3188, %v3188
        %v3195 = vmul.f32 %v3189, %v3189
        %v3196 = vmul.f32 %v3190, %v3190
        %v3197 = vsel %vm335, %v3191, 0.0
        %3198 = vadd.xlane.f32.xlu0 %v3197
        %v3199 = vpop.xlane.xlu0 %3198
        %v3200 = vsel %vm335, %v3192, 0.0
        %3201 = vadd.xlane.f32.xlu0 %v3200
        %v3202 = vpop.xlane.xlu0 %3201
        %v3203 = vsel %vm335, %v3193, 0.0
        %3204 = vadd.xlane.f32.xlu0 %v3203
        %v3205 = vpop.xlane.xlu0 %3204
        %v3206 = vsel %vm335, %v3194, 0.0
        %3207 = vadd.xlane.f32.xlu0 %v3206
        %v3208 = vpop.xlane.xlu0 %3207
        %v3209 = vsel %vm335, %v3195, 0.0
        %3210 = vadd.xlane.f32.xlu0 %v3209
        %v3211 = vpop.xlane.xlu0 %3210
        %v3212 = vsel %vm335, %v3196, 0.0
        %3213 = vadd.xlane.f32.xlu0 %v3212
        %v3214 = vpop.xlane.xlu0 %3213
        %v3215 = vmul.f32 %v3199, %v354
        %v3216 = vmul.f32 %v3202, %v354
        %v3217 = vmul.f32 %v3205, %v354
        %v3218 = vmul.f32 %v3208, %v354
        %v3219 = vmul.f32 %v3211, %v354
        %v3220 = vmul.f32 %v3214, %v354
        %v3221 = vadd.f32 %v3215, 1e-05
        %v3222 = vadd.f32 %v3216, 1e-05
        %v3223 = vadd.f32 %v3217, 1e-05
        %v3224 = vadd.f32 %v3218, 1e-05
        %v3225 = vadd.f32 %v3219, 1e-05
        %v3226 = vadd.f32 %v3220, 1e-05
        %v3227 = vrsqrt.pop %v3221
        %v3228 = vrsqrt.pop %v3222
        %v3229 = vrsqrt.pop %v3223
        %v3230 = vrsqrt.pop %v3224
        %v3231 = vrsqrt.pop %v3225
        %v3232 = vrsqrt.pop %v3226
        %v3233 = vmul.f32 %v3185, %v3227
        %v3234 = vmul.f32 %v3186, %v3228
        %v3235 = vmul.f32 %v3187, %v3229
        %v3236 = vmul.f32 %v3188, %v3230
        %v3237 = vmul.f32 %v3189, %v3231
        %v3238 = vmul.f32 %v3190, %v3232
        %v3239 = vlaneseq
        %v3240 = vshrl.u32 %v3239, 7
        %v3241 = vsub.s32 0, %v3240
        %v3242 = vrot.slane %v3159, %v3241
        %v3243 = vmul.f32 %v3233, %v3242
        %v3244 = vmul.f32 %v3234, %v3242
        %v3245 = vmul.f32 %v3235, %v3242
        %v3246 = vmul.f32 %v3236, %v3242
        %v3247 = vmul.f32 %v3237, %v3242
        %v3248 = vmul.f32 %v3238, %v3242
        %v3249 = vlaneseq
        %v3250 = vshrl.u32 %v3249, 7
        %v3251 = vsub.s32 0, %v3250
        %v3252 = vrot.slane %v3160, %v3251
        %v3253 = vadd.f32 %v3243, %v3252
        %v3254 = vadd.f32 %v3244, %v3252
        %v3255 = vadd.f32 %v3245, %v3252
        %v3256 = vadd.f32 %v3246, %v3252
        %v3257 = vadd.f32 %v3247, %v3252
        %v3258 = vadd.f32 %v3248, %v3252
        %v3259 = vld [vmem:[#allocation5 + $0x1e0] sm:$0xff]
        %v3260 = vld [vmem:[#allocation5 + $0x1e8] sm:$0xff]
        %v3261 = vld [vmem:[#allocation5 + $0x1f0] sm:$0xff]
        %v3262 = vld [vmem:[#allocation5 + $0x1f8] sm:$0xff]
        %v3263 = vld [vmem:[#allocation5 + $0x200] sm:$0x1]
        %v3264 = vlaneseq
        %v3265 = vshrl.u32 %v3264, 7
        %v3266 = vsub.s32 0, %v3265
        %v3267 = vrot.slane %v3263, %v3266
        %v3269 = vsel %vm335, %v3253, 0
        %v3272 = vsel %vm335, %v3254, 0
        %v3275 = vsel %vm335, %v3255, 0
        %v3278 = vsel %vm335, %v3256, 0
        %v3281 = vsel %vm335, %v3257, 0
        %v3284 = vsel %vm335, %v3258, 0
        %3286 = vmatprep.subr.mxu0 0.0
        %3287 = vmatpush1.msra.mxu0 0.0
        %3288 = vmatprep.subr.mxu0 0.0
        %3289 = vmatpush1.msra.mxu0 0.0
        %3290 = vmatprep.subr.mxu0 0.0
        %3291 = vmatpush1.msra.mxu0 0.0
        %3292 = vmatprep.subr.mxu0 0.0
        %3293 = vmatpush1.msra.mxu0 0.0
        %3294 = vmatprep.subr.mxu0 0.0
        %3295 = vmatpush1.msra.mxu0 0.0
        %3296 = vmatprep.subr.mxu0 0.0
        %3297 = vmatpush1.msra.mxu0 0.0
        %3298 = vmatprep.subr.mxu0 0.0
        %3299 = vmatpush1.msra.mxu0 0.0
        %3300 = vmatprep.subr.mxu0 0.0
        %3301 = vmatpush1.msra.mxu0 0.0
        %3302 = vmatprep.subr.mxu0 0.0
        %3303 = vmatpush1.msra.mxu0 0.0
        %3304 = vmatprep.subr.mxu0 0.0
        %3305 = vmatpush1.msra.mxu0 0.0
        %3306 = vmatprep.subr.mxu0 0.0
        %3307 = vmatpush1.msra.mxu0 0.0
        %3308 = vmatprep.subr.mxu0 0.0
        %3309 = vmatpush1.msra.mxu0 0.0
        %3310 = vmatprep.subr.mxu0 0.0
        %3311 = vmatpush1.msra.mxu0 %v3262
        %3312 = vmatprep.subr.mxu0 0.0
        %3313 = vmatpush1.msra.mxu0 %v3261
        %3314 = vmatprep.subr.mxu0 0.0
        %3315 = vmatpush1.msra.mxu0 %v3260
        %3316 = vmatprep.subr.mxu0 0.0
        %3317 = vmatpush1.msra.mxu0 %v3259
        %3318 = vmatprep.subr.mxu0 0.0
        %3319 = vmatpush2.msra.mxu0 0.0
        %3320 = vmatprep.subr.mxu0 0.0
        %3321 = vmatpush2.msra.mxu0 0.0
        %3322 = vmatprep.subr.mxu0 0.0
        %3323 = vmatpush2.msra.mxu0 0.0
        %3324 = vmatprep.subr.mxu0 0.0
        %3325 = vmatpush2.msra.mxu0 0.0
        %3326 = vmatprep.subr.mxu0 0.0
        %3327 = vmatpush2.msra.mxu0 0.0
        %3328 = vmatprep.subr.mxu0 0.0
        %3329 = vmatpush2.msra.mxu0 0.0
        %3330 = vmatprep.subr.mxu0 0.0
        %3331 = vmatpush2.msra.mxu0 0.0
        %3332 = vmatprep.subr.mxu0 0.0
        %3333 = vmatpush2.msra.mxu0 0.0
        %3334 = vmatprep.subr.mxu0 0.0
        %3335 = vmatpush2.msra.mxu0 0.0
        %3336 = vmatprep.subr.mxu0 0.0
        %3337 = vmatpush2.msra.mxu0 0.0
        %3338 = vmatprep.subr.mxu0 0.0
        %3339 = vmatpush2.msra.mxu0 0.0
        %3340 = vmatprep.subr.mxu0 0.0
        %3341 = vmatpush2.msra.mxu0 0.0
        %3342 = vmatprep.subr.mxu0 0.0
        %3343 = vmatpush2.msra.mxu0 0.0
        %3344 = vmatprep.subr.mxu0 0.0
        %3345 = vmatpush2.msra.mxu0 0.0
        %3346 = vmatprep.subr.mxu0 0.0
        %3347 = vmatpush2.msra.mxu0 0.0
        %3348 = vmatprep.subr.mxu0 0.0
        %3349 = vmatpush2.msra.mxu0 0.0
        %3350 = vmatprep.mubr.f32.mxu0 0.0
        %3351 = vmatmul.mubr.f32.gmra.mxu0 %v3269
        %v3352 = vpop.f32.mrf.mxu0
        %v3353 = vadd.f32 %v3267, %v3352
        %v3354 = vpop.f32.mrf.mxu0
        %3355 = vmatprep.mubr.f32.mxu0 0.0
        %3356 = vmatmul.mubr.f32.gmra.mxu0 %v3272
        %v3357 = vpop.f32.mrf.mxu0
        %v3358 = vadd.f32 %v3267, %v3357
        %v3359 = vpop.f32.mrf.mxu0
        %3360 = vmatprep.mubr.f32.mxu0 0.0
        %3361 = vmatmul.mubr.f32.gmra.mxu0 %v3275
        %v3362 = vpop.f32.mrf.mxu0
        %v3363 = vadd.f32 %v3267, %v3362
        %v3364 = vpop.f32.mrf.mxu0
        %3365 = vmatprep.mubr.f32.mxu0 0.0
        %3366 = vmatmul.mubr.f32.gmra.mxu0 %v3278
        %v3367 = vpop.f32.mrf.mxu0
        %v3368 = vadd.f32 %v3267, %v3367
        %v3369 = vpop.f32.mrf.mxu0
        %3370 = vmatprep.mubr.f32.mxu0 0.0
        %3371 = vmatmul.mubr.f32.gmra.mxu0 %v3281
        %v3372 = vpop.f32.mrf.mxu0
        %v3373 = vadd.f32 %v3267, %v3372
        %v3374 = vpop.f32.mrf.mxu0
        %3375 = vmatprep.mubr.f32.mxu0 0.0
        %3376 = vmatmul.mubr.f32.gmra.mxu0 %v3284
        %v3377 = vpop.f32.mrf.mxu0
        %v3378 = vadd.f32 %v3267, %v3377
        %v3379 = vpop.f32.mrf.mxu0
        %3380 = vdwg.mxu0
        %3384 = vrot.lane.b32.xlu0 %v3353, 96
        %v3385 = vpop.permute.xlu0 %3384
        %3386 = vrot.lane.b32.xlu0 %v3358, 96
        %v3387 = vpop.permute.xlu0 %3386
        %3388 = vrot.lane.b32.xlu0 %v3363, 96
        %v3389 = vpop.permute.xlu0 %3388
        %v3390 = vsel %vm671, %v3353, 0
        %v3392 = vsel %vm671, %v3358, 0
        %v3394 = vsel %vm671, %v3363, 0
        %v3396 = vsel %vm671, %v3385, 0
        %v3398 = vsel %vm671, %v3387, 0
        %v3400 = vsel %vm671, %v3389, 0
        %3402 = vmatprep.subr.mxu0 0.0
        %3403 = vmatpush1.xpose.msra.mxu0 0.0
        %3404 = vmatprep.subr.mxu0 0.0
        %3405 = vmatpush1.xpose.msra.mxu0 0.0
        %3406 = vmatprep.subr.mxu0 0.0
        %3407 = vmatpush1.xpose.msra.mxu0 0.0
        %3408 = vmatprep.subr.mxu0 0.0
        %3409 = vmatpush1.xpose.msra.mxu0 0.0
        %3410 = vmatprep.subr.mxu0 0.0
        %3411 = vmatpush1.xpose.msra.mxu0 0.0
        %3412 = vmatprep.subr.mxu0 0.0
        %3413 = vmatpush1.xpose.msra.mxu0 0.0
        %3414 = vmatprep.subr.mxu0 0.0
        %3415 = vmatpush1.xpose.msra.mxu0 0.0
        %3416 = vmatprep.subr.mxu0 0.0
        %3417 = vmatpush1.xpose.msra.mxu0 0.0
        %3418 = vmatprep.subr.mxu0 0.0
        %3419 = vmatpush1.xpose.msra.mxu0 0.0
        %3420 = vmatprep.subr.mxu0 0.0
        %3421 = vmatpush1.xpose.msra.mxu0 0.0
        %3422 = vmatprep.subr.mxu0 0.0
        %3423 = vmatpush1.xpose.msra.mxu0 0.0
        %3424 = vmatprep.subr.mxu0 0.0
        %3425 = vmatpush1.xpose.msra.mxu0 0.0
        %3426 = vmatprep.subr.mxu0 0.0
        %3427 = vmatpush1.xpose.msra.mxu0 0.0
        %3428 = vmatprep.subr.mxu0 0.0
        %3429 = vmatpush1.xpose.msra.mxu0 %v3400
        %3430 = vmatprep.subr.mxu0 0.0
        %3431 = vmatpush1.xpose.msra.mxu0 %v3398
        %3432 = vmatprep.subr.mxu0 0.0
        %3433 = vmatpush1.xpose.msra.mxu0 %v3396
        %3434 = vmatprep.subr.mxu0 0.0
        %3435 = vmatpush2.xpose.msra.mxu0 0.0
        %3436 = vmatprep.subr.mxu0 0.0
        %3437 = vmatpush2.xpose.msra.mxu0 0.0
        %3438 = vmatprep.subr.mxu0 0.0
        %3439 = vmatpush2.xpose.msra.mxu0 0.0
        %3440 = vmatprep.subr.mxu0 0.0
        %3441 = vmatpush2.xpose.msra.mxu0 0.0
        %3442 = vmatprep.subr.mxu0 0.0
        %3443 = vmatpush2.xpose.msra.mxu0 0.0
        %3444 = vmatprep.subr.mxu0 0.0
        %3445 = vmatpush2.xpose.msra.mxu0 0.0
        %3446 = vmatprep.subr.mxu0 0.0
        %3447 = vmatpush2.xpose.msra.mxu0 0.0
        %3448 = vmatprep.subr.mxu0 0.0
        %3449 = vmatpush2.xpose.msra.mxu0 0.0
        %3450 = vmatprep.subr.mxu0 0.0
        %3451 = vmatpush2.xpose.msra.mxu0 0.0
        %3452 = vmatprep.subr.mxu0 0.0
        %3453 = vmatpush2.xpose.msra.mxu0 0.0
        %3454 = vmatprep.subr.mxu0 0.0
        %3455 = vmatpush2.xpose.msra.mxu0 0.0
        %3456 = vmatprep.subr.mxu0 0.0
        %3457 = vmatpush2.xpose.msra.mxu0 0.0
        %3458 = vmatprep.subr.mxu0 0.0
        %3459 = vmatpush2.xpose.msra.mxu0 0.0
        %3460 = vmatprep.subr.mxu0 0.0
        %3461 = vmatpush2.xpose.msra.mxu0 0.0
        %3462 = vmatprep.subr.mxu0 0.0
        %3463 = vmatpush2.xpose.msra.mxu0 0.0
        %3464 = vmatprep.subr.mxu0 0.0
        %3465 = vmatpush2.xpose.msra.mxu0 0.0
        %3466 = vmatprep.mubr.f32.mxu0 0.0
        %3467 = vmatmul.mubr.f32.gmra.mxu0 %v3390
        %v3468 = vpop.f32.mrf.mxu0
        %v3469 = vadd.f32 %v661, %v3468
        %v3470 = vpop.f32.mrf.mxu0
        %3471 = vmatprep.mubr.f32.mxu0 0.0
        %3472 = vmatmul.mubr.f32.gmra.mxu0 %v3392
        %v3473 = vpop.f32.mrf.mxu0
        %v3474 = vadd.f32 %v661, %v3473
        %v3475 = vpop.f32.mrf.mxu0
        %3476 = vmatprep.mubr.f32.mxu0 0.0
        %3477 = vmatmul.mubr.f32.gmra.mxu0 %v3394
        %v3478 = vpop.f32.mrf.mxu0
        %v3479 = vadd.f32 %v661, %v3478
        %v3480 = vpop.f32.mrf.mxu0
        %3481 = vdwg.mxu0
        %v3482 = vsel %vm764, %v3469, -inf
        %3483 = vmax.xlane.f32.xlu0 %v3482
        %v3484 = vpop.xlane.xlu0 %3483
        %v3485 = vsel %vm764, %v3474, -inf
        %3486 = vmax.xlane.f32.xlu0 %v3485
        %v3487 = vpop.xlane.xlu0 %3486
        %v3488 = vsel %vm764, %v3479, -inf
        %3489 = vmax.xlane.f32.xlu0 %v3488
        %v3490 = vpop.xlane.xlu0 %3489
        %v3491 = vsub.f32 %v3469, %v3484
        %v3492 = vsub.f32 %v3474, %v3487
        %v3493 = vsub.f32 %v3479, %v3490
        %v3494 = vmul.f32 %v3491, 1.442695
        %v3495 = vpow.pop %v3494
        %v3496 = vmul.f32 %v3492, 1.442695
        %v3497 = vpow.pop %v3496
        %v3498 = vmul.f32 %v3493, 1.442695
        %v3499 = vpow.pop %v3498
        %v3500 = vsel %vm764, %v3495, 0.0
        %3501 = vadd.xlane.f32.xlu0 %v3500
        %v3502 = vpop.xlane.xlu0 %3501
        %v3503 = vsel %vm764, %v3497, 0.0
        %3504 = vadd.xlane.f32.xlu0 %v3503
        %v3505 = vpop.xlane.xlu0 %3504
        %v3506 = vsel %vm764, %v3499, 0.0
        %3507 = vadd.xlane.f32.xlu0 %v3506
        %v3508 = vpop.xlane.xlu0 %3507
        %v3509 = vrcp.pop %v3502
        %v3510 = vrcp.pop %v3505
        %v3511 = vrcp.pop %v3508
        %v3512 = vmul.f32 %v3495, %v3509
        %v3513 = vmul.f32 %v3497, %v3510
        %v3514 = vmul.f32 %v3499, %v3511
        %3515 = vrot.lane.b32.xlu0 %v3353, 64
        %v3516 = vpop.permute.xlu0 %3515
        %3517 = vrot.lane.b32.xlu0 %v3358, 64
        %v3518 = vpop.permute.xlu0 %3517
        %3519 = vrot.lane.b32.xlu0 %v3363, 64
        %v3520 = vpop.permute.xlu0 %3519
        %v3525 = vsel %vm764, %v3512, 0
        %v3528 = vsel %vm764, %v3513, 0
        %v3531 = vsel %vm764, %v3514, 0
        %3533 = vmatprep.subr.mxu0 0.0
        %3534 = vmatpush1.msra.mxu0 0.0
        %3535 = vmatprep.subr.mxu0 0.0
        %3536 = vmatpush1.msra.mxu0 0.0
        %3537 = vmatprep.subr.mxu0 0.0
        %3538 = vmatpush1.msra.mxu0 0.0
        %3539 = vmatprep.subr.mxu0 0.0
        %3540 = vmatpush1.msra.mxu0 0.0
        %3541 = vmatprep.subr.mxu0 0.0
        %3542 = vmatpush1.msra.mxu0 0.0
        %3543 = vmatprep.subr.mxu0 0.0
        %3544 = vmatpush1.msra.mxu0 0.0
        %3545 = vmatprep.subr.mxu0 0.0
        %3546 = vmatpush1.msra.mxu0 0.0
        %3547 = vmatprep.subr.mxu0 0.0
        %3548 = vmatpush1.msra.mxu0 0.0
        %3549 = vmatprep.subr.mxu0 0.0
        %3550 = vmatpush1.msra.mxu0 0.0
        %3551 = vmatprep.subr.mxu0 0.0
        %3552 = vmatpush1.msra.mxu0 0.0
        %3553 = vmatprep.subr.mxu0 0.0
        %3554 = vmatpush1.msra.mxu0 0.0
        %3555 = vmatprep.subr.mxu0 0.0
        %3556 = vmatpush1.msra.mxu0 0.0
        %3557 = vmatprep.subr.mxu0 0.0
        %3558 = vmatpush1.msra.mxu0 0.0
        %3559 = vmatprep.subr.mxu0 0.0
        %3560 = vmatpush1.msra.mxu0 %v3520
        %3561 = vmatprep.subr.mxu0 0.0
        %3562 = vmatpush1.msra.mxu0 %v3518
        %3563 = vmatprep.subr.mxu0 0.0
        %3564 = vmatpush1.msra.mxu0 %v3516
        %3565 = vmatprep.subr.mxu0 0.0
        %3566 = vmatpush2.msra.mxu0 0.0
        %3567 = vmatprep.subr.mxu0 0.0
        %3568 = vmatpush2.msra.mxu0 0.0
        %3569 = vmatprep.subr.mxu0 0.0
        %3570 = vmatpush2.msra.mxu0 0.0
        %3571 = vmatprep.subr.mxu0 0.0
        %3572 = vmatpush2.msra.mxu0 0.0
        %3573 = vmatprep.subr.mxu0 0.0
        %3574 = vmatpush2.msra.mxu0 0.0
        %3575 = vmatprep.subr.mxu0 0.0
        %3576 = vmatpush2.msra.mxu0 0.0
        %3577 = vmatprep.subr.mxu0 0.0
        %3578 = vmatpush2.msra.mxu0 0.0
        %3579 = vmatprep.subr.mxu0 0.0
        %3580 = vmatpush2.msra.mxu0 0.0
        %3581 = vmatprep.subr.mxu0 0.0
        %3582 = vmatpush2.msra.mxu0 0.0
        %3583 = vmatprep.subr.mxu0 0.0
        %3584 = vmatpush2.msra.mxu0 0.0
        %3585 = vmatprep.subr.mxu0 0.0
        %3586 = vmatpush2.msra.mxu0 0.0
        %3587 = vmatprep.subr.mxu0 0.0
        %3588 = vmatpush2.msra.mxu0 0.0
        %3589 = vmatprep.subr.mxu0 0.0
        %3590 = vmatpush2.msra.mxu0 0.0
        %3591 = vmatprep.subr.mxu0 0.0
        %3592 = vmatpush2.msra.mxu0 0.0
        %3593 = vmatprep.subr.mxu0 0.0
        %3594 = vmatpush2.msra.mxu0 0.0
        %3595 = vmatprep.subr.mxu0 0.0
        %3596 = vmatpush2.msra.mxu0 0.0
        %3597 = vmatprep.mubr.f32.mxu0 0.0
        %3598 = vmatmul.mubr.f32.gmra.mxu0 %v3525
        %v3599 = vpop.f32.mrf.mxu0
        %v3600 = vadd.f32 0.0, %v3599
        %v3601 = vpop.f32.mrf.mxu0
        %3602 = vmatprep.mubr.f32.mxu0 0.0
        %3603 = vmatmul.mubr.f32.gmra.mxu0 %v3528
        %v3604 = vpop.f32.mrf.mxu0
        %v3605 = vadd.f32 0.0, %v3604
        %v3606 = vpop.f32.mrf.mxu0
        %3607 = vmatprep.mubr.f32.mxu0 0.0
        %3608 = vmatmul.mubr.f32.gmra.mxu0 %v3531
        %v3609 = vpop.f32.mrf.mxu0
        %v3610 = vadd.f32 0.0, %v3609
        %v3611 = vpop.f32.mrf.mxu0
        %3612 = vdwg.mxu0
        %3613 = vrot.lane.b32.xlu0 %v3353, 120
        %v3614 = vpop.permute.xlu0 %3613
        %3615 = vrot.lane.b32.xlu0 %v3358, 120
        %v3616 = vpop.permute.xlu0 %3615
        %3617 = vrot.lane.b32.xlu0 %v3363, 120
        %v3618 = vpop.permute.xlu0 %3617
        %3619 = vrot.lane.b32.xlu0 %v3353, 88
        %v3620 = vpop.permute.xlu0 %3619
        %3621 = vrot.lane.b32.xlu0 %v3358, 88
        %v3622 = vpop.permute.xlu0 %3621
        %3623 = vrot.lane.b32.xlu0 %v3363, 88
        %v3624 = vpop.permute.xlu0 %3623
        %v3625 = vsel %vm671, %v3614, 0
        %v3627 = vsel %vm671, %v3616, 0
        %v3629 = vsel %vm671, %v3618, 0
        %v3631 = vsel %vm671, %v3620, 0
        %v3633 = vsel %vm671, %v3622, 0
        %v3635 = vsel %vm671, %v3624, 0
        %3637 = vmatprep.subr.mxu0 0.0
        %3638 = vmatpush1.xpose.msra.mxu0 0.0
        %3639 = vmatprep.subr.mxu0 0.0
        %3640 = vmatpush1.xpose.msra.mxu0 0.0
        %3641 = vmatprep.subr.mxu0 0.0
        %3642 = vmatpush1.xpose.msra.mxu0 0.0
        %3643 = vmatprep.subr.mxu0 0.0
        %3644 = vmatpush1.xpose.msra.mxu0 0.0
        %3645 = vmatprep.subr.mxu0 0.0
        %3646 = vmatpush1.xpose.msra.mxu0 0.0
        %3647 = vmatprep.subr.mxu0 0.0
        %3648 = vmatpush1.xpose.msra.mxu0 0.0
        %3649 = vmatprep.subr.mxu0 0.0
        %3650 = vmatpush1.xpose.msra.mxu0 0.0
        %3651 = vmatprep.subr.mxu0 0.0
        %3652 = vmatpush1.xpose.msra.mxu0 0.0
        %3653 = vmatprep.subr.mxu0 0.0
        %3654 = vmatpush1.xpose.msra.mxu0 0.0
        %3655 = vmatprep.subr.mxu0 0.0
        %3656 = vmatpush1.xpose.msra.mxu0 0.0
        %3657 = vmatprep.subr.mxu0 0.0
        %3658 = vmatpush1.xpose.msra.mxu0 0.0
        %3659 = vmatprep.subr.mxu0 0.0
        %3660 = vmatpush1.xpose.msra.mxu0 0.0
        %3661 = vmatprep.subr.mxu0 0.0
        %3662 = vmatpush1.xpose.msra.mxu0 0.0
        %3663 = vmatprep.subr.mxu0 0.0
        %3664 = vmatpush1.xpose.msra.mxu0 %v3635
        %3665 = vmatprep.subr.mxu0 0.0
        %3666 = vmatpush1.xpose.msra.mxu0 %v3633
        %3667 = vmatprep.subr.mxu0 0.0
        %3668 = vmatpush1.xpose.msra.mxu0 %v3631
        %3669 = vmatprep.subr.mxu0 0.0
        %3670 = vmatpush2.xpose.msra.mxu0 0.0
        %3671 = vmatprep.subr.mxu0 0.0
        %3672 = vmatpush2.xpose.msra.mxu0 0.0
        %3673 = vmatprep.subr.mxu0 0.0
        %3674 = vmatpush2.xpose.msra.mxu0 0.0
        %3675 = vmatprep.subr.mxu0 0.0
        %3676 = vmatpush2.xpose.msra.mxu0 0.0
        %3677 = vmatprep.subr.mxu0 0.0
        %3678 = vmatpush2.xpose.msra.mxu0 0.0
        %3679 = vmatprep.subr.mxu0 0.0
        %3680 = vmatpush2.xpose.msra.mxu0 0.0
        %3681 = vmatprep.subr.mxu0 0.0
        %3682 = vmatpush2.xpose.msra.mxu0 0.0
        %3683 = vmatprep.subr.mxu0 0.0
        %3684 = vmatpush2.xpose.msra.mxu0 0.0
        %3685 = vmatprep.subr.mxu0 0.0
        %3686 = vmatpush2.xpose.msra.mxu0 0.0
        %3687 = vmatprep.subr.mxu0 0.0
        %3688 = vmatpush2.xpose.msra.mxu0 0.0
        %3689 = vmatprep.subr.mxu0 0.0
        %3690 = vmatpush2.xpose.msra.mxu0 0.0
        %3691 = vmatprep.subr.mxu0 0.0
        %3692 = vmatpush2.xpose.msra.mxu0 0.0
        %3693 = vmatprep.subr.mxu0 0.0
        %3694 = vmatpush2.xpose.msra.mxu0 0.0
        %3695 = vmatprep.subr.mxu0 0.0
        %3696 = vmatpush2.xpose.msra.mxu0 0.0
        %3697 = vmatprep.subr.mxu0 0.0
        %3698 = vmatpush2.xpose.msra.mxu0 0.0
        %3699 = vmatprep.subr.mxu0 0.0
        %3700 = vmatpush2.xpose.msra.mxu0 0.0
        %3701 = vmatprep.mubr.f32.mxu0 0.0
        %3702 = vmatmul.mubr.f32.gmra.mxu0 %v3625
        %v3703 = vpop.f32.mrf.mxu0
        %v3704 = vadd.f32 %v661, %v3703
        %v3705 = vpop.f32.mrf.mxu0
        %3706 = vmatprep.mubr.f32.mxu0 0.0
        %3707 = vmatmul.mubr.f32.gmra.mxu0 %v3627
        %v3708 = vpop.f32.mrf.mxu0
        %v3709 = vadd.f32 %v661, %v3708
        %v3710 = vpop.f32.mrf.mxu0
        %3711 = vmatprep.mubr.f32.mxu0 0.0
        %3712 = vmatmul.mubr.f32.gmra.mxu0 %v3629
        %v3713 = vpop.f32.mrf.mxu0
        %v3714 = vadd.f32 %v661, %v3713
        %v3715 = vpop.f32.mrf.mxu0
        %3716 = vdwg.mxu0
        %v3717 = vsel %vm764, %v3704, -inf
        %3718 = vmax.xlane.f32.xlu0 %v3717
        %v3719 = vpop.xlane.xlu0 %3718
        %v3720 = vsel %vm764, %v3709, -inf
        %3721 = vmax.xlane.f32.xlu0 %v3720
        %v3722 = vpop.xlane.xlu0 %3721
        %v3723 = vsel %vm764, %v3714, -inf
        %3724 = vmax.xlane.f32.xlu0 %v3723
        %v3725 = vpop.xlane.xlu0 %3724
        %v3726 = vsub.f32 %v3704, %v3719
        %v3727 = vsub.f32 %v3709, %v3722
        %v3728 = vsub.f32 %v3714, %v3725
        %v3729 = vmul.f32 %v3726, 1.442695
        %v3730 = vpow.pop %v3729
        %v3731 = vmul.f32 %v3727, 1.442695
        %v3732 = vpow.pop %v3731
        %v3733 = vmul.f32 %v3728, 1.442695
        %v3734 = vpow.pop %v3733
        %v3735 = vsel %vm764, %v3730, 0.0
        %3736 = vadd.xlane.f32.xlu0 %v3735
        %v3737 = vpop.xlane.xlu0 %3736
        %v3738 = vsel %vm764, %v3732, 0.0
        %3739 = vadd.xlane.f32.xlu0 %v3738
        %v3740 = vpop.xlane.xlu0 %3739
        %v3741 = vsel %vm764, %v3734, 0.0
        %3742 = vadd.xlane.f32.xlu0 %v3741
        %v3743 = vpop.xlane.xlu0 %3742
        %v3744 = vrcp.pop %v3737
        %v3745 = vrcp.pop %v3740
        %v3746 = vrcp.pop %v3743
        %v3747 = vmul.f32 %v3730, %v3744
        %v3748 = vmul.f32 %v3732, %v3745
        %v3749 = vmul.f32 %v3734, %v3746
        %3750 = vrot.lane.b32.xlu0 %v3353, 56
        %v3751 = vpop.permute.xlu0 %3750
        %3752 = vrot.lane.b32.xlu0 %v3358, 56
        %v3753 = vpop.permute.xlu0 %3752
        %3754 = vrot.lane.b32.xlu0 %v3363, 56
        %v3755 = vpop.permute.xlu0 %3754
        %v3760 = vsel %vm764, %v3747, 0
        %v3763 = vsel %vm764, %v3748, 0
        %v3766 = vsel %vm764, %v3749, 0
        %3768 = vmatprep.subr.mxu0 0.0
        %3769 = vmatpush1.msra.mxu0 0.0
        %3770 = vmatprep.subr.mxu0 0.0
        %3771 = vmatpush1.msra.mxu0 0.0
        %3772 = vmatprep.subr.mxu0 0.0
        %3773 = vmatpush1.msra.mxu0 0.0
        %3774 = vmatprep.subr.mxu0 0.0
        %3775 = vmatpush1.msra.mxu0 0.0
        %3776 = vmatprep.subr.mxu0 0.0
        %3777 = vmatpush1.msra.mxu0 0.0
        %3778 = vmatprep.subr.mxu0 0.0
        %3779 = vmatpush1.msra.mxu0 0.0
        %3780 = vmatprep.subr.mxu0 0.0
        %3781 = vmatpush1.msra.mxu0 0.0
        %3782 = vmatprep.subr.mxu0 0.0
        %3783 = vmatpush1.msra.mxu0 0.0
        %3784 = vmatprep.subr.mxu0 0.0
        %3785 = vmatpush1.msra.mxu0 0.0
        %3786 = vmatprep.subr.mxu0 0.0
        %3787 = vmatpush1.msra.mxu0 0.0
        %3788 = vmatprep.subr.mxu0 0.0
        %3789 = vmatpush1.msra.mxu0 0.0
        %3790 = vmatprep.subr.mxu0 0.0
        %3791 = vmatpush1.msra.mxu0 0.0
        %3792 = vmatprep.subr.mxu0 0.0
        %3793 = vmatpush1.msra.mxu0 0.0
        %3794 = vmatprep.subr.mxu0 0.0
        %3795 = vmatpush1.msra.mxu0 %v3755
        %3796 = vmatprep.subr.mxu0 0.0
        %3797 = vmatpush1.msra.mxu0 %v3753
        %3798 = vmatprep.subr.mxu0 0.0
        %3799 = vmatpush1.msra.mxu0 %v3751
        %3800 = vmatprep.subr.mxu0 0.0
        %3801 = vmatpush2.msra.mxu0 0.0
        %3802 = vmatprep.subr.mxu0 0.0
        %3803 = vmatpush2.msra.mxu0 0.0
        %3804 = vmatprep.subr.mxu0 0.0
        %3805 = vmatpush2.msra.mxu0 0.0
        %3806 = vmatprep.subr.mxu0 0.0
        %3807 = vmatpush2.msra.mxu0 0.0
        %3808 = vmatprep.subr.mxu0 0.0
        %3809 = vmatpush2.msra.mxu0 0.0
        %3810 = vmatprep.subr.mxu0 0.0
        %3811 = vmatpush2.msra.mxu0 0.0
        %3812 = vmatprep.subr.mxu0 0.0
        %3813 = vmatpush2.msra.mxu0 0.0
        %3814 = vmatprep.subr.mxu0 0.0
        %3815 = vmatpush2.msra.mxu0 0.0
        %3816 = vmatprep.subr.mxu0 0.0
        %3817 = vmatpush2.msra.mxu0 0.0
        %3818 = vmatprep.subr.mxu0 0.0
        %3819 = vmatpush2.msra.mxu0 0.0
        %3820 = vmatprep.subr.mxu0 0.0
        %3821 = vmatpush2.msra.mxu0 0.0
        %3822 = vmatprep.subr.mxu0 0.0
        %3823 = vmatpush2.msra.mxu0 0.0
        %3824 = vmatprep.subr.mxu0 0.0
        %3825 = vmatpush2.msra.mxu0 0.0
        %3826 = vmatprep.subr.mxu0 0.0
        %3827 = vmatpush2.msra.mxu0 0.0
        %3828 = vmatprep.subr.mxu0 0.0
        %3829 = vmatpush2.msra.mxu0 0.0
        %3830 = vmatprep.subr.mxu0 0.0
        %3831 = vmatpush2.msra.mxu0 0.0
        %3832 = vmatprep.mubr.f32.mxu0 0.0
        %3833 = vmatmul.mubr.f32.gmra.mxu0 %v3760
        %v3834 = vpop.f32.mrf.mxu0
        %v3835 = vadd.f32 0.0, %v3834
        %v3836 = vpop.f32.mrf.mxu0
        %3837 = vmatprep.mubr.f32.mxu0 0.0
        %3838 = vmatmul.mubr.f32.gmra.mxu0 %v3763
        %v3839 = vpop.f32.mrf.mxu0
        %v3840 = vadd.f32 0.0, %v3839
        %v3841 = vpop.f32.mrf.mxu0
        %3842 = vmatprep.mubr.f32.mxu0 0.0
        %3843 = vmatmul.mubr.f32.gmra.mxu0 %v3766
        %v3844 = vpop.f32.mrf.mxu0
        %v3845 = vadd.f32 0.0, %v3844
        %v3846 = vpop.f32.mrf.mxu0
        %3847 = vdwg.mxu0
        %3848 = vrot.lane.b32.xlu0 %v3353, 112
        %v3849 = vpop.permute.xlu0 %3848
        %3850 = vrot.lane.b32.xlu0 %v3358, 112
        %v3851 = vpop.permute.xlu0 %3850
        %3852 = vrot.lane.b32.xlu0 %v3363, 112
        %v3853 = vpop.permute.xlu0 %3852
        %3854 = vrot.lane.b32.xlu0 %v3353, 80
        %v3855 = vpop.permute.xlu0 %3854
        %3856 = vrot.lane.b32.xlu0 %v3358, 80
        %v3857 = vpop.permute.xlu0 %3856
        %3858 = vrot.lane.b32.xlu0 %v3363, 80
        %v3859 = vpop.permute.xlu0 %3858
        %v3860 = vsel %vm671, %v3849, 0
        %v3862 = vsel %vm671, %v3851, 0
        %v3864 = vsel %vm671, %v3853, 0
        %v3866 = vsel %vm671, %v3855, 0
        %v3868 = vsel %vm671, %v3857, 0
        %v3870 = vsel %vm671, %v3859, 0
        %3872 = vmatprep.subr.mxu0 0.0
        %3873 = vmatpush1.xpose.msra.mxu0 0.0
        %3874 = vmatprep.subr.mxu0 0.0
        %3875 = vmatpush1.xpose.msra.mxu0 0.0
        %3876 = vmatprep.subr.mxu0 0.0
        %3877 = vmatpush1.xpose.msra.mxu0 0.0
        %3878 = vmatprep.subr.mxu0 0.0
        %3879 = vmatpush1.xpose.msra.mxu0 0.0
        %3880 = vmatprep.subr.mxu0 0.0
        %3881 = vmatpush1.xpose.msra.mxu0 0.0
        %3882 = vmatprep.subr.mxu0 0.0
        %3883 = vmatpush1.xpose.msra.mxu0 0.0
        %3884 = vmatprep.subr.mxu0 0.0
        %3885 = vmatpush1.xpose.msra.mxu0 0.0
        %3886 = vmatprep.subr.mxu0 0.0
        %3887 = vmatpush1.xpose.msra.mxu0 0.0
        %3888 = vmatprep.subr.mxu0 0.0
        %3889 = vmatpush1.xpose.msra.mxu0 0.0
        %3890 = vmatprep.subr.mxu0 0.0
        %3891 = vmatpush1.xpose.msra.mxu0 0.0
        %3892 = vmatprep.subr.mxu0 0.0
        %3893 = vmatpush1.xpose.msra.mxu0 0.0
        %3894 = vmatprep.subr.mxu0 0.0
        %3895 = vmatpush1.xpose.msra.mxu0 0.0
        %3896 = vmatprep.subr.mxu0 0.0
        %3897 = vmatpush1.xpose.msra.mxu0 0.0
        %3898 = vmatprep.subr.mxu0 0.0
        %3899 = vmatpush1.xpose.msra.mxu0 %v3870
        %3900 = vmatprep.subr.mxu0 0.0
        %3901 = vmatpush1.xpose.msra.mxu0 %v3868
        %3902 = vmatprep.subr.mxu0 0.0
        %3903 = vmatpush1.xpose.msra.mxu0 %v3866
        %3904 = vmatprep.subr.mxu0 0.0
        %3905 = vmatpush2.xpose.msra.mxu0 0.0
        %3906 = vmatprep.subr.mxu0 0.0
        %3907 = vmatpush2.xpose.msra.mxu0 0.0
        %3908 = vmatprep.subr.mxu0 0.0
        %3909 = vmatpush2.xpose.msra.mxu0 0.0
        %3910 = vmatprep.subr.mxu0 0.0
        %3911 = vmatpush2.xpose.msra.mxu0 0.0
        %3912 = vmatprep.subr.mxu0 0.0
        %3913 = vmatpush2.xpose.msra.mxu0 0.0
        %3914 = vmatprep.subr.mxu0 0.0
        %3915 = vmatpush2.xpose.msra.mxu0 0.0
        %3916 = vmatprep.subr.mxu0 0.0
        %3917 = vmatpush2.xpose.msra.mxu0 0.0
        %3918 = vmatprep.subr.mxu0 0.0
        %3919 = vmatpush2.xpose.msra.mxu0 0.0
        %3920 = vmatprep.subr.mxu0 0.0
        %3921 = vmatpush2.xpose.msra.mxu0 0.0
        %3922 = vmatprep.subr.mxu0 0.0
        %3923 = vmatpush2.xpose.msra.mxu0 0.0
        %3924 = vmatprep.subr.mxu0 0.0
        %3925 = vmatpush2.xpose.msra.mxu0 0.0
        %3926 = vmatprep.subr.mxu0 0.0
        %3927 = vmatpush2.xpose.msra.mxu0 0.0
        %3928 = vmatprep.subr.mxu0 0.0
        %3929 = vmatpush2.xpose.msra.mxu0 0.0
        %3930 = vmatprep.subr.mxu0 0.0
        %3931 = vmatpush2.xpose.msra.mxu0 0.0
        %3932 = vmatprep.subr.mxu0 0.0
        %3933 = vmatpush2.xpose.msra.mxu0 0.0
        %3934 = vmatprep.subr.mxu0 0.0
        %3935 = vmatpush2.xpose.msra.mxu0 0.0
        %3936 = vmatprep.mubr.f32.mxu0 0.0
        %3937 = vmatmul.mubr.f32.gmra.mxu0 %v3860
        %v3938 = vpop.f32.mrf.mxu0
        %v3939 = vadd.f32 %v661, %v3938
        %v3940 = vpop.f32.mrf.mxu0
        %3941 = vmatprep.mubr.f32.mxu0 0.0
        %3942 = vmatmul.mubr.f32.gmra.mxu0 %v3862
        %v3943 = vpop.f32.mrf.mxu0
        %v3944 = vadd.f32 %v661, %v3943
        %v3945 = vpop.f32.mrf.mxu0
        %3946 = vmatprep.mubr.f32.mxu0 0.0
        %3947 = vmatmul.mubr.f32.gmra.mxu0 %v3864
        %v3948 = vpop.f32.mrf.mxu0
        %v3949 = vadd.f32 %v661, %v3948
        %v3950 = vpop.f32.mrf.mxu0
        %3951 = vdwg.mxu0
        %v3952 = vsel %vm764, %v3939, -inf
        %3953 = vmax.xlane.f32.xlu0 %v3952
        %v3954 = vpop.xlane.xlu0 %3953
        %v3955 = vsel %vm764, %v3944, -inf
        %3956 = vmax.xlane.f32.xlu0 %v3955
        %v3957 = vpop.xlane.xlu0 %3956
        %v3958 = vsel %vm764, %v3949, -inf
        %3959 = vmax.xlane.f32.xlu0 %v3958
        %v3960 = vpop.xlane.xlu0 %3959
        %v3961 = vsub.f32 %v3939, %v3954
        %v3962 = vsub.f32 %v3944, %v3957
        %v3963 = vsub.f32 %v3949, %v3960
        %v3964 = vmul.f32 %v3961, 1.442695
        %v3965 = vpow.pop %v3964
        %v3966 = vmul.f32 %v3962, 1.442695
        %v3967 = vpow.pop %v3966
        %v3968 = vmul.f32 %v3963, 1.442695
        %v3969 = vpow.pop %v3968
        %v3970 = vsel %vm764, %v3965, 0.0
        %3971 = vadd.xlane.f32.xlu0 %v3970
        %v3972 = vpop.xlane.xlu0 %3971
        %v3973 = vsel %vm764, %v3967, 0.0
        %3974 = vadd.xlane.f32.xlu0 %v3973
        %v3975 = vpop.xlane.xlu0 %3974
        %v3976 = vsel %vm764, %v3969, 0.0
        %3977 = vadd.xlane.f32.xlu0 %v3976
        %v3978 = vpop.xlane.xlu0 %3977
        %v3979 = vrcp.pop %v3972
        %v3980 = vrcp.pop %v3975
        %v3981 = vrcp.pop %v3978
        %v3982 = vmul.f32 %v3965, %v3979
        %v3983 = vmul.f32 %v3967, %v3980
        %v3984 = vmul.f32 %v3969, %v3981
        %3985 = vrot.lane.b32.xlu0 %v3353, 48
        %v3986 = vpop.permute.xlu0 %3985
        %3987 = vrot.lane.b32.xlu0 %v3358, 48
        %v3988 = vpop.permute.xlu0 %3987
        %3989 = vrot.lane.b32.xlu0 %v3363, 48
        %v3990 = vpop.permute.xlu0 %3989
        %v3995 = vsel %vm764, %v3982, 0
        %v3998 = vsel %vm764, %v3983, 0
        %v4001 = vsel %vm764, %v3984, 0
        %4003 = vmatprep.subr.mxu0 0.0
        %4004 = vmatpush1.msra.mxu0 0.0
        %4005 = vmatprep.subr.mxu0 0.0
        %4006 = vmatpush1.msra.mxu0 0.0
        %4007 = vmatprep.subr.mxu0 0.0
        %4008 = vmatpush1.msra.mxu0 0.0
        %4009 = vmatprep.subr.mxu0 0.0
        %4010 = vmatpush1.msra.mxu0 0.0
        %4011 = vmatprep.subr.mxu0 0.0
        %4012 = vmatpush1.msra.mxu0 0.0
        %4013 = vmatprep.subr.mxu0 0.0
        %4014 = vmatpush1.msra.mxu0 0.0
        %4015 = vmatprep.subr.mxu0 0.0
        %4016 = vmatpush1.msra.mxu0 0.0
        %4017 = vmatprep.subr.mxu0 0.0
        %4018 = vmatpush1.msra.mxu0 0.0
        %4019 = vmatprep.subr.mxu0 0.0
        %4020 = vmatpush1.msra.mxu0 0.0
        %4021 = vmatprep.subr.mxu0 0.0
        %4022 = vmatpush1.msra.mxu0 0.0
        %4023 = vmatprep.subr.mxu0 0.0
        %4024 = vmatpush1.msra.mxu0 0.0
        %4025 = vmatprep.subr.mxu0 0.0
        %4026 = vmatpush1.msra.mxu0 0.0
        %4027 = vmatprep.subr.mxu0 0.0
        %4028 = vmatpush1.msra.mxu0 0.0
        %4029 = vmatprep.subr.mxu0 0.0
        %4030 = vmatpush1.msra.mxu0 %v3990
        %4031 = vmatprep.subr.mxu0 0.0
        %4032 = vmatpush1.msra.mxu0 %v3988
        %4033 = vmatprep.subr.mxu0 0.0
        %4034 = vmatpush1.msra.mxu0 %v3986
        %4035 = vmatprep.subr.mxu0 0.0
        %4036 = vmatpush2.msra.mxu0 0.0
        %4037 = vmatprep.subr.mxu0 0.0
        %4038 = vmatpush2.msra.mxu0 0.0
        %4039 = vmatprep.subr.mxu0 0.0
        %4040 = vmatpush2.msra.mxu0 0.0
        %4041 = vmatprep.subr.mxu0 0.0
        %4042 = vmatpush2.msra.mxu0 0.0
        %4043 = vmatprep.subr.mxu0 0.0
        %4044 = vmatpush2.msra.mxu0 0.0
        %4045 = vmatprep.subr.mxu0 0.0
        %4046 = vmatpush2.msra.mxu0 0.0
        %4047 = vmatprep.subr.mxu0 0.0
        %4048 = vmatpush2.msra.mxu0 0.0
        %4049 = vmatprep.subr.mxu0 0.0
        %4050 = vmatpush2.msra.mxu0 0.0
        %4051 = vmatprep.subr.mxu0 0.0
        %4052 = vmatpush2.msra.mxu0 0.0
        %4053 = vmatprep.subr.mxu0 0.0
        %4054 = vmatpush2.msra.mxu0 0.0
        %4055 = vmatprep.subr.mxu0 0.0
        %4056 = vmatpush2.msra.mxu0 0.0
        %4057 = vmatprep.subr.mxu0 0.0
        %4058 = vmatpush2.msra.mxu0 0.0
        %4059 = vmatprep.subr.mxu0 0.0
        %4060 = vmatpush2.msra.mxu0 0.0
        %4061 = vmatprep.subr.mxu0 0.0
        %4062 = vmatpush2.msra.mxu0 0.0
        %4063 = vmatprep.subr.mxu0 0.0
        %4064 = vmatpush2.msra.mxu0 0.0
        %4065 = vmatprep.subr.mxu0 0.0
        %4066 = vmatpush2.msra.mxu0 0.0
        %4067 = vmatprep.mubr.f32.mxu0 0.0
        %4068 = vmatmul.mubr.f32.gmra.mxu0 %v3995
        %v4069 = vpop.f32.mrf.mxu0
        %v4070 = vadd.f32 0.0, %v4069
        %v4071 = vpop.f32.mrf.mxu0
        %4072 = vmatprep.mubr.f32.mxu0 0.0
        %4073 = vmatmul.mubr.f32.gmra.mxu0 %v3998
        %v4074 = vpop.f32.mrf.mxu0
        %v4075 = vadd.f32 0.0, %v4074
        %v4076 = vpop.f32.mrf.mxu0
        %4077 = vmatprep.mubr.f32.mxu0 0.0
        %4078 = vmatmul.mubr.f32.gmra.mxu0 %v4001
        %v4079 = vpop.f32.mrf.mxu0
        %v4080 = vadd.f32 0.0, %v4079
        %v4081 = vpop.f32.mrf.mxu0
        %4082 = vdwg.mxu0
        %4083 = vrot.lane.b32.xlu0 %v3353, 104
        %v4084 = vpop.permute.xlu0 %4083
        %4085 = vrot.lane.b32.xlu0 %v3358, 104
        %v4086 = vpop.permute.xlu0 %4085
        %4087 = vrot.lane.b32.xlu0 %v3363, 104
        %v4088 = vpop.permute.xlu0 %4087
        %4089 = vrot.lane.b32.xlu0 %v3353, 72
        %v4090 = vpop.permute.xlu0 %4089
        %4091 = vrot.lane.b32.xlu0 %v3358, 72
        %v4092 = vpop.permute.xlu0 %4091
        %4093 = vrot.lane.b32.xlu0 %v3363, 72
        %v4094 = vpop.permute.xlu0 %4093
        %v4095 = vsel %vm671, %v4084, 0
        %v4097 = vsel %vm671, %v4086, 0
        %v4099 = vsel %vm671, %v4088, 0
        %v4101 = vsel %vm671, %v4090, 0
        %v4103 = vsel %vm671, %v4092, 0
        %v4105 = vsel %vm671, %v4094, 0
        %4107 = vmatprep.subr.mxu0 0.0
        %4108 = vmatpush1.xpose.msra.mxu0 0.0
        %4109 = vmatprep.subr.mxu0 0.0
        %4110 = vmatpush1.xpose.msra.mxu0 0.0
        %4111 = vmatprep.subr.mxu0 0.0
        %4112 = vmatpush1.xpose.msra.mxu0 0.0
        %4113 = vmatprep.subr.mxu0 0.0
        %4114 = vmatpush1.xpose.msra.mxu0 0.0
        %4115 = vmatprep.subr.mxu0 0.0
        %4116 = vmatpush1.xpose.msra.mxu0 0.0
        %4117 = vmatprep.subr.mxu0 0.0
        %4118 = vmatpush1.xpose.msra.mxu0 0.0
        %4119 = vmatprep.subr.mxu0 0.0
        %4120 = vmatpush1.xpose.msra.mxu0 0.0
        %4121 = vmatprep.subr.mxu0 0.0
        %4122 = vmatpush1.xpose.msra.mxu0 0.0
        %4123 = vmatprep.subr.mxu0 0.0
        %4124 = vmatpush1.xpose.msra.mxu0 0.0
        %4125 = vmatprep.subr.mxu0 0.0
        %4126 = vmatpush1.xpose.msra.mxu0 0.0
        %4127 = vmatprep.subr.mxu0 0.0
        %4128 = vmatpush1.xpose.msra.mxu0 0.0
        %4129 = vmatprep.subr.mxu0 0.0
        %4130 = vmatpush1.xpose.msra.mxu0 0.0
        %4131 = vmatprep.subr.mxu0 0.0
        %4132 = vmatpush1.xpose.msra.mxu0 0.0
        %4133 = vmatprep.subr.mxu0 0.0
        %4134 = vmatpush1.xpose.msra.mxu0 %v4105
        %4135 = vmatprep.subr.mxu0 0.0
        %4136 = vmatpush1.xpose.msra.mxu0 %v4103
        %4137 = vmatprep.subr.mxu0 0.0
        %4138 = vmatpush1.xpose.msra.mxu0 %v4101
        %4139 = vmatprep.subr.mxu0 0.0
        %4140 = vmatpush2.xpose.msra.mxu0 0.0
        %4141 = vmatprep.subr.mxu0 0.0
        %4142 = vmatpush2.xpose.msra.mxu0 0.0
        %4143 = vmatprep.subr.mxu0 0.0
        %4144 = vmatpush2.xpose.msra.mxu0 0.0
        %4145 = vmatprep.subr.mxu0 0.0
        %4146 = vmatpush2.xpose.msra.mxu0 0.0
        %4147 = vmatprep.subr.mxu0 0.0
        %4148 = vmatpush2.xpose.msra.mxu0 0.0
        %4149 = vmatprep.subr.mxu0 0.0
        %4150 = vmatpush2.xpose.msra.mxu0 0.0
        %4151 = vmatprep.subr.mxu0 0.0
        %4152 = vmatpush2.xpose.msra.mxu0 0.0
        %4153 = vmatprep.subr.mxu0 0.0
        %4154 = vmatpush2.xpose.msra.mxu0 0.0
        %4155 = vmatprep.subr.mxu0 0.0
        %4156 = vmatpush2.xpose.msra.mxu0 0.0
        %4157 = vmatprep.subr.mxu0 0.0
        %4158 = vmatpush2.xpose.msra.mxu0 0.0
        %4159 = vmatprep.subr.mxu0 0.0
        %4160 = vmatpush2.xpose.msra.mxu0 0.0
        %4161 = vmatprep.subr.mxu0 0.0
        %4162 = vmatpush2.xpose.msra.mxu0 0.0
        %4163 = vmatprep.subr.mxu0 0.0
        %4164 = vmatpush2.xpose.msra.mxu0 0.0
        %4165 = vmatprep.subr.mxu0 0.0
        %4166 = vmatpush2.xpose.msra.mxu0 0.0
        %4167 = vmatprep.subr.mxu0 0.0
        %4168 = vmatpush2.xpose.msra.mxu0 0.0
        %4169 = vmatprep.subr.mxu0 0.0
        %4170 = vmatpush2.xpose.msra.mxu0 0.0
        %4171 = vmatprep.mubr.f32.mxu0 0.0
        %4172 = vmatmul.mubr.f32.gmra.mxu0 %v4095
        %v4173 = vpop.f32.mrf.mxu0
        %v4174 = vadd.f32 %v661, %v4173
        %v4175 = vpop.f32.mrf.mxu0
        %4176 = vmatprep.mubr.f32.mxu0 0.0
        %4177 = vmatmul.mubr.f32.gmra.mxu0 %v4097
        %v4178 = vpop.f32.mrf.mxu0
        %v4179 = vadd.f32 %v661, %v4178
        %v4180 = vpop.f32.mrf.mxu0
        %4181 = vmatprep.mubr.f32.mxu0 0.0
        %4182 = vmatmul.mubr.f32.gmra.mxu0 %v4099
        %v4183 = vpop.f32.mrf.mxu0
        %v4184 = vadd.f32 %v661, %v4183
        %v4185 = vpop.f32.mrf.mxu0
        %4186 = vdwg.mxu0
        %v4187 = vsel %vm764, %v4174, -inf
        %4188 = vmax.xlane.f32.xlu0 %v4187
        %v4189 = vpop.xlane.xlu0 %4188
        %v4190 = vsel %vm764, %v4179, -inf
        %4191 = vmax.xlane.f32.xlu0 %v4190
        %v4192 = vpop.xlane.xlu0 %4191
        %v4193 = vsel %vm764, %v4184, -inf
        %4194 = vmax.xlane.f32.xlu0 %v4193
        %v4195 = vpop.xlane.xlu0 %4194
        %v4196 = vsub.f32 %v4174, %v4189
        %v4197 = vsub.f32 %v4179, %v4192
        %v4198 = vsub.f32 %v4184, %v4195
        %v4199 = vmul.f32 %v4196, 1.442695
        %v4200 = vpow.pop %v4199
        %v4201 = vmul.f32 %v4197, 1.442695
        %v4202 = vpow.pop %v4201
        %v4203 = vmul.f32 %v4198, 1.442695
        %v4204 = vpow.pop %v4203
        %v4205 = vsel %vm764, %v4200, 0.0
        %4206 = vadd.xlane.f32.xlu0 %v4205
        %v4207 = vpop.xlane.xlu0 %4206
        %v4208 = vsel %vm764, %v4202, 0.0
        %4209 = vadd.xlane.f32.xlu0 %v4208
        %v4210 = vpop.xlane.xlu0 %4209
        %v4211 = vsel %vm764, %v4204, 0.0
        %4212 = vadd.xlane.f32.xlu0 %v4211
        %v4213 = vpop.xlane.xlu0 %4212
        %v4214 = vrcp.pop %v4207
        %v4215 = vrcp.pop %v4210
        %v4216 = vrcp.pop %v4213
        %v4217 = vmul.f32 %v4200, %v4214
        %v4218 = vmul.f32 %v4202, %v4215
        %v4219 = vmul.f32 %v4204, %v4216
        %4220 = vrot.lane.b32.xlu0 %v3353, 40
        %v4221 = vpop.permute.xlu0 %4220
        %4222 = vrot.lane.b32.xlu0 %v3358, 40
        %v4223 = vpop.permute.xlu0 %4222
        %4224 = vrot.lane.b32.xlu0 %v3363, 40
        %v4225 = vpop.permute.xlu0 %4224
        %v4230 = vsel %vm764, %v4217, 0
        %v4233 = vsel %vm764, %v4218, 0
        %v4236 = vsel %vm764, %v4219, 0
        %4238 = vmatprep.subr.mxu0 0.0
        %4239 = vmatpush1.msra.mxu0 0.0
        %4240 = vmatprep.subr.mxu0 0.0
        %4241 = vmatpush1.msra.mxu0 0.0
        %4242 = vmatprep.subr.mxu0 0.0
        %4243 = vmatpush1.msra.mxu0 0.0
        %4244 = vmatprep.subr.mxu0 0.0
        %4245 = vmatpush1.msra.mxu0 0.0
        %4246 = vmatprep.subr.mxu0 0.0
        %4247 = vmatpush1.msra.mxu0 0.0
        %4248 = vmatprep.subr.mxu0 0.0
        %4249 = vmatpush1.msra.mxu0 0.0
        %4250 = vmatprep.subr.mxu0 0.0
        %4251 = vmatpush1.msra.mxu0 0.0
        %4252 = vmatprep.subr.mxu0 0.0
        %4253 = vmatpush1.msra.mxu0 0.0
        %4254 = vmatprep.subr.mxu0 0.0
        %4255 = vmatpush1.msra.mxu0 0.0
        %4256 = vmatprep.subr.mxu0 0.0
        %4257 = vmatpush1.msra.mxu0 0.0
        %4258 = vmatprep.subr.mxu0 0.0
        %4259 = vmatpush1.msra.mxu0 0.0
        %4260 = vmatprep.subr.mxu0 0.0
        %4261 = vmatpush1.msra.mxu0 0.0
        %4262 = vmatprep.subr.mxu0 0.0
        %4263 = vmatpush1.msra.mxu0 0.0
        %4264 = vmatprep.subr.mxu0 0.0
        %4265 = vmatpush1.msra.mxu0 %v4225
        %4266 = vmatprep.subr.mxu0 0.0
        %4267 = vmatpush1.msra.mxu0 %v4223
        %4268 = vmatprep.subr.mxu0 0.0
        %4269 = vmatpush1.msra.mxu0 %v4221
        %4270 = vmatprep.subr.mxu0 0.0
        %4271 = vmatpush2.msra.mxu0 0.0
        %4272 = vmatprep.subr.mxu0 0.0
        %4273 = vmatpush2.msra.mxu0 0.0
        %4274 = vmatprep.subr.mxu0 0.0
        %4275 = vmatpush2.msra.mxu0 0.0
        %4276 = vmatprep.subr.mxu0 0.0
        %4277 = vmatpush2.msra.mxu0 0.0
        %4278 = vmatprep.subr.mxu0 0.0
        %4279 = vmatpush2.msra.mxu0 0.0
        %4280 = vmatprep.subr.mxu0 0.0
        %4281 = vmatpush2.msra.mxu0 0.0
        %4282 = vmatprep.subr.mxu0 0.0
        %4283 = vmatpush2.msra.mxu0 0.0
        %4284 = vmatprep.subr.mxu0 0.0
        %4285 = vmatpush2.msra.mxu0 0.0
        %4286 = vmatprep.subr.mxu0 0.0
        %4287 = vmatpush2.msra.mxu0 0.0
        %4288 = vmatprep.subr.mxu0 0.0
        %4289 = vmatpush2.msra.mxu0 0.0
        %4290 = vmatprep.subr.mxu0 0.0
        %4291 = vmatpush2.msra.mxu0 0.0
        %4292 = vmatprep.subr.mxu0 0.0
        %4293 = vmatpush2.msra.mxu0 0.0
        %4294 = vmatprep.subr.mxu0 0.0
        %4295 = vmatpush2.msra.mxu0 0.0
        %4296 = vmatprep.subr.mxu0 0.0
        %4297 = vmatpush2.msra.mxu0 0.0
        %4298 = vmatprep.subr.mxu0 0.0
        %4299 = vmatpush2.msra.mxu0 0.0
        %4300 = vmatprep.subr.mxu0 0.0
        %4301 = vmatpush2.msra.mxu0 0.0
        %4302 = vmatprep.mubr.f32.mxu0 0.0
        %4303 = vmatmul.mubr.f32.gmra.mxu0 %v4230
        %v4304 = vpop.f32.mrf.mxu0
        %v4305 = vadd.f32 0.0, %v4304
        %v4306 = vpop.f32.mrf.mxu0
        %4307 = vmatprep.mubr.f32.mxu0 0.0
        %4308 = vmatmul.mubr.f32.gmra.mxu0 %v4233
        %v4309 = vpop.f32.mrf.mxu0
        %v4310 = vadd.f32 0.0, %v4309
        %v4311 = vpop.f32.mrf.mxu0
        %4312 = vmatprep.mubr.f32.mxu0 0.0
        %4313 = vmatmul.mubr.f32.gmra.mxu0 %v4236
        %v4314 = vpop.f32.mrf.mxu0
        %v4315 = vadd.f32 0.0, %v4314
        %v4316 = vpop.f32.mrf.mxu0
        %4317 = vdwg.mxu0
        %4321 = vrot.lane.b32.xlu0 %v3835, 8
        %v4322 = vpop.permute.xlu0 %4321
        %4323 = vrot.lane.b32.xlu0 %v3840, 8
        %v4324 = vpop.permute.xlu0 %4323
        %4325 = vrot.lane.b32.xlu0 %v3845, 8
        %v4326 = vpop.permute.xlu0 %4325
        %4333 = vrot.lane.b32.xlu0 %v4070, 16
        %v4334 = vpop.permute.xlu0 %4333
        %4335 = vrot.lane.b32.xlu0 %v4075, 16
        %v4336 = vpop.permute.xlu0 %4335
        %4337 = vrot.lane.b32.xlu0 %v4080, 16
        %v4338 = vpop.permute.xlu0 %4337
        %4345 = vrot.lane.b32.xlu0 %v4305, 24
        %v4346 = vpop.permute.xlu0 %4345
        %4347 = vrot.lane.b32.xlu0 %v4310, 24
        %v4348 = vpop.permute.xlu0 %4347
        %4349 = vrot.lane.b32.xlu0 %v4315, 24
        %v4350 = vpop.permute.xlu0 %4349
        %v4354 = vsel %vm671, %v3600, %v4322
        %v4355 = vsel %vm671, %v3605, %v4324
        %v4356 = vsel %vm671, %v3610, %v4326
        %v4357 = vsel %vm1640, %v4354, %v4334
        %v4358 = vsel %vm1640, %v4355, %v4336
        %v4359 = vsel %vm1640, %v4356, %v4338
        %v4360 = vsel %vm764, %v4357, %v4346
        %v4361 = vsel %vm764, %v4358, %v4348
        %v4362 = vsel %vm764, %v4359, %v4350
        %4366 = vrot.lane.b32.xlu0 %v3368, 96
        %v4367 = vpop.permute.xlu0 %4366
        %4368 = vrot.lane.b32.xlu0 %v3373, 96
        %v4369 = vpop.permute.xlu0 %4368
        %4370 = vrot.lane.b32.xlu0 %v3378, 96
        %v4371 = vpop.permute.xlu0 %4370
        %v4372 = vsel %vm671, %v3368, 0
        %v4374 = vsel %vm671, %v3373, 0
        %v4376 = vsel %vm671, %v3378, 0
        %v4378 = vsel %vm671, %v4367, 0
        %v4380 = vsel %vm671, %v4369, 0
        %v4382 = vsel %vm671, %v4371, 0
        %4384 = vmatprep.subr.mxu0 0.0
        %4385 = vmatpush1.xpose.msra.mxu0 0.0
        %4386 = vmatprep.subr.mxu0 0.0
        %4387 = vmatpush1.xpose.msra.mxu0 0.0
        %4388 = vmatprep.subr.mxu0 0.0
        %4389 = vmatpush1.xpose.msra.mxu0 0.0
        %4390 = vmatprep.subr.mxu0 0.0
        %4391 = vmatpush1.xpose.msra.mxu0 0.0
        %4392 = vmatprep.subr.mxu0 0.0
        %4393 = vmatpush1.xpose.msra.mxu0 0.0
        %4394 = vmatprep.subr.mxu0 0.0
        %4395 = vmatpush1.xpose.msra.mxu0 0.0
        %4396 = vmatprep.subr.mxu0 0.0
        %4397 = vmatpush1.xpose.msra.mxu0 0.0
        %4398 = vmatprep.subr.mxu0 0.0
        %4399 = vmatpush1.xpose.msra.mxu0 0.0
        %4400 = vmatprep.subr.mxu0 0.0
        %4401 = vmatpush1.xpose.msra.mxu0 0.0
        %4402 = vmatprep.subr.mxu0 0.0
        %4403 = vmatpush1.xpose.msra.mxu0 0.0
        %4404 = vmatprep.subr.mxu0 0.0
        %4405 = vmatpush1.xpose.msra.mxu0 0.0
        %4406 = vmatprep.subr.mxu0 0.0
        %4407 = vmatpush1.xpose.msra.mxu0 0.0
        %4408 = vmatprep.subr.mxu0 0.0
        %4409 = vmatpush1.xpose.msra.mxu0 0.0
        %4410 = vmatprep.subr.mxu0 0.0
        %4411 = vmatpush1.xpose.msra.mxu0 %v4382
        %4412 = vmatprep.subr.mxu0 0.0
        %4413 = vmatpush1.xpose.msra.mxu0 %v4380
        %4414 = vmatprep.subr.mxu0 0.0
        %4415 = vmatpush1.xpose.msra.mxu0 %v4378
        %4416 = vmatprep.subr.mxu0 0.0
        %4417 = vmatpush2.xpose.msra.mxu0 0.0
        %4418 = vmatprep.subr.mxu0 0.0
        %4419 = vmatpush2.xpose.msra.mxu0 0.0
        %4420 = vmatprep.subr.mxu0 0.0
        %4421 = vmatpush2.xpose.msra.mxu0 0.0
        %4422 = vmatprep.subr.mxu0 0.0
        %4423 = vmatpush2.xpose.msra.mxu0 0.0
        %4424 = vmatprep.subr.mxu0 0.0
        %4425 = vmatpush2.xpose.msra.mxu0 0.0
        %4426 = vmatprep.subr.mxu0 0.0
        %4427 = vmatpush2.xpose.msra.mxu0 0.0
        %4428 = vmatprep.subr.mxu0 0.0
        %4429 = vmatpush2.xpose.msra.mxu0 0.0
        %4430 = vmatprep.subr.mxu0 0.0
        %4431 = vmatpush2.xpose.msra.mxu0 0.0
        %4432 = vmatprep.subr.mxu0 0.0
        %4433 = vmatpush2.xpose.msra.mxu0 0.0
        %4434 = vmatprep.subr.mxu0 0.0
        %4435 = vmatpush2.xpose.msra.mxu0 0.0
        %4436 = vmatprep.subr.mxu0 0.0
        %4437 = vmatpush2.xpose.msra.mxu0 0.0
        %4438 = vmatprep.subr.mxu0 0.0
        %4439 = vmatpush2.xpose.msra.mxu0 0.0
        %4440 = vmatprep.subr.mxu0 0.0
        %4441 = vmatpush2.xpose.msra.mxu0 0.0
        %4442 = vmatprep.subr.mxu0 0.0
        %4443 = vmatpush2.xpose.msra.mxu0 0.0
        %4444 = vmatprep.subr.mxu0 0.0
        %4445 = vmatpush2.xpose.msra.mxu0 0.0
        %4446 = vmatprep.subr.mxu0 0.0
        %4447 = vmatpush2.xpose.msra.mxu0 0.0
        %4448 = vmatprep.mubr.f32.mxu0 0.0
        %4449 = vmatmul.mubr.f32.gmra.mxu0 %v4372
        %v4450 = vpop.f32.mrf.mxu0
        %v4451 = vadd.f32 %v661, %v4450
        %v4452 = vpop.f32.mrf.mxu0
        %4453 = vmatprep.mubr.f32.mxu0 0.0
        %4454 = vmatmul.mubr.f32.gmra.mxu0 %v4374
        %v4455 = vpop.f32.mrf.mxu0
        %v4456 = vadd.f32 %v661, %v4455
        %v4457 = vpop.f32.mrf.mxu0
        %4458 = vmatprep.mubr.f32.mxu0 0.0
        %4459 = vmatmul.mubr.f32.gmra.mxu0 %v4376
        %v4460 = vpop.f32.mrf.mxu0
        %v4461 = vadd.f32 %v661, %v4460
        %v4462 = vpop.f32.mrf.mxu0
        %4463 = vdwg.mxu0
        %v4464 = vsel %vm764, %v4451, -inf
        %4465 = vmax.xlane.f32.xlu0 %v4464
        %v4466 = vpop.xlane.xlu0 %4465
        %v4467 = vsel %vm764, %v4456, -inf
        %4468 = vmax.xlane.f32.xlu0 %v4467
        %v4469 = vpop.xlane.xlu0 %4468
        %v4470 = vsel %vm764, %v4461, -inf
        %4471 = vmax.xlane.f32.xlu0 %v4470
        %v4472 = vpop.xlane.xlu0 %4471
        %v4473 = vsub.f32 %v4451, %v4466
        %v4474 = vsub.f32 %v4456, %v4469
        %v4475 = vsub.f32 %v4461, %v4472
        %v4476 = vmul.f32 %v4473, 1.442695
        %v4477 = vpow.pop %v4476
        %v4478 = vmul.f32 %v4474, 1.442695
        %v4479 = vpow.pop %v4478
        %v4480 = vmul.f32 %v4475, 1.442695
        %v4481 = vpow.pop %v4480
        %v4482 = vsel %vm764, %v4477, 0.0
        %4483 = vadd.xlane.f32.xlu0 %v4482
        %v4484 = vpop.xlane.xlu0 %4483
        %v4485 = vsel %vm764, %v4479, 0.0
        %4486 = vadd.xlane.f32.xlu0 %v4485
        %v4487 = vpop.xlane.xlu0 %4486
        %v4488 = vsel %vm764, %v4481, 0.0
        %4489 = vadd.xlane.f32.xlu0 %v4488
        %v4490 = vpop.xlane.xlu0 %4489
        %v4491 = vrcp.pop %v4484
        %v4492 = vrcp.pop %v4487
        %v4493 = vrcp.pop %v4490
        %v4494 = vmul.f32 %v4477, %v4491
        %v4495 = vmul.f32 %v4479, %v4492
        %v4496 = vmul.f32 %v4481, %v4493
        %4497 = vrot.lane.b32.xlu0 %v3368, 64
        %v4498 = vpop.permute.xlu0 %4497
        %4499 = vrot.lane.b32.xlu0 %v3373, 64
        %v4500 = vpop.permute.xlu0 %4499
        %4501 = vrot.lane.b32.xlu0 %v3378, 64
        %v4502 = vpop.permute.xlu0 %4501
        %v4507 = vsel %vm764, %v4494, 0
        %v4510 = vsel %vm764, %v4495, 0
        %v4513 = vsel %vm764, %v4496, 0
        %4515 = vmatprep.subr.mxu0 0.0
        %4516 = vmatpush1.msra.mxu0 0.0
        %4517 = vmatprep.subr.mxu0 0.0
        %4518 = vmatpush1.msra.mxu0 0.0
        %4519 = vmatprep.subr.mxu0 0.0
        %4520 = vmatpush1.msra.mxu0 0.0
        %4521 = vmatprep.subr.mxu0 0.0
        %4522 = vmatpush1.msra.mxu0 0.0
        %4523 = vmatprep.subr.mxu0 0.0
        %4524 = vmatpush1.msra.mxu0 0.0
        %4525 = vmatprep.subr.mxu0 0.0
        %4526 = vmatpush1.msra.mxu0 0.0
        %4527 = vmatprep.subr.mxu0 0.0
        %4528 = vmatpush1.msra.mxu0 0.0
        %4529 = vmatprep.subr.mxu0 0.0
        %4530 = vmatpush1.msra.mxu0 0.0
        %4531 = vmatprep.subr.mxu0 0.0
        %4532 = vmatpush1.msra.mxu0 0.0
        %4533 = vmatprep.subr.mxu0 0.0
        %4534 = vmatpush1.msra.mxu0 0.0
        %4535 = vmatprep.subr.mxu0 0.0
        %4536 = vmatpush1.msra.mxu0 0.0
        %4537 = vmatprep.subr.mxu0 0.0
        %4538 = vmatpush1.msra.mxu0 0.0
        %4539 = vmatprep.subr.mxu0 0.0
        %4540 = vmatpush1.msra.mxu0 0.0
        %4541 = vmatprep.subr.mxu0 0.0
        %4542 = vmatpush1.msra.mxu0 %v4502
        %4543 = vmatprep.subr.mxu0 0.0
        %4544 = vmatpush1.msra.mxu0 %v4500
        %4545 = vmatprep.subr.mxu0 0.0
        %4546 = vmatpush1.msra.mxu0 %v4498
        %4547 = vmatprep.subr.mxu0 0.0
        %4548 = vmatpush2.msra.mxu0 0.0
        %4549 = vmatprep.subr.mxu0 0.0
        %4550 = vmatpush2.msra.mxu0 0.0
        %4551 = vmatprep.subr.mxu0 0.0
        %4552 = vmatpush2.msra.mxu0 0.0
        %4553 = vmatprep.subr.mxu0 0.0
        %4554 = vmatpush2.msra.mxu0 0.0
        %4555 = vmatprep.subr.mxu0 0.0
        %4556 = vmatpush2.msra.mxu0 0.0
        %4557 = vmatprep.subr.mxu0 0.0
        %4558 = vmatpush2.msra.mxu0 0.0
        %4559 = vmatprep.subr.mxu0 0.0
        %4560 = vmatpush2.msra.mxu0 0.0
        %4561 = vmatprep.subr.mxu0 0.0
        %4562 = vmatpush2.msra.mxu0 0.0
        %4563 = vmatprep.subr.mxu0 0.0
        %4564 = vmatpush2.msra.mxu0 0.0
        %4565 = vmatprep.subr.mxu0 0.0
        %4566 = vmatpush2.msra.mxu0 0.0
        %4567 = vmatprep.subr.mxu0 0.0
        %4568 = vmatpush2.msra.mxu0 0.0
        %4569 = vmatprep.subr.mxu0 0.0
        %4570 = vmatpush2.msra.mxu0 0.0
        %4571 = vmatprep.subr.mxu0 0.0
        %4572 = vmatpush2.msra.mxu0 0.0
        %4573 = vmatprep.subr.mxu0 0.0
        %4574 = vmatpush2.msra.mxu0 0.0
        %4575 = vmatprep.subr.mxu0 0.0
        %4576 = vmatpush2.msra.mxu0 0.0
        %4577 = vmatprep.subr.mxu0 0.0
        %4578 = vmatpush2.msra.mxu0 0.0
        %4579 = vmatprep.mubr.f32.mxu0 0.0
        %4580 = vmatmul.mubr.f32.gmra.mxu0 %v4507
        %v4581 = vpop.f32.mrf.mxu0
        %v4582 = vadd.f32 0.0, %v4581
        %v4583 = vpop.f32.mrf.mxu0
        %4584 = vmatprep.mubr.f32.mxu0 0.0
        %4585 = vmatmul.mubr.f32.gmra.mxu0 %v4510
        %v4586 = vpop.f32.mrf.mxu0
        %v4587 = vadd.f32 0.0, %v4586
        %v4588 = vpop.f32.mrf.mxu0
        %4589 = vmatprep.mubr.f32.mxu0 0.0
        %4590 = vmatmul.mubr.f32.gmra.mxu0 %v4513
        %v4591 = vpop.f32.mrf.mxu0
        %v4592 = vadd.f32 0.0, %v4591
        %v4593 = vpop.f32.mrf.mxu0
        %4594 = vdwg.mxu0
        %4595 = vrot.lane.b32.xlu0 %v3368, 120
        %v4596 = vpop.permute.xlu0 %4595
        %4597 = vrot.lane.b32.xlu0 %v3373, 120
        %v4598 = vpop.permute.xlu0 %4597
        %4599 = vrot.lane.b32.xlu0 %v3378, 120
        %v4600 = vpop.permute.xlu0 %4599
        %4601 = vrot.lane.b32.xlu0 %v3368, 88
        %v4602 = vpop.permute.xlu0 %4601
        %4603 = vrot.lane.b32.xlu0 %v3373, 88
        %v4604 = vpop.permute.xlu0 %4603
        %4605 = vrot.lane.b32.xlu0 %v3378, 88
        %v4606 = vpop.permute.xlu0 %4605
        %v4607 = vsel %vm671, %v4596, 0
        %v4609 = vsel %vm671, %v4598, 0
        %v4611 = vsel %vm671, %v4600, 0
        %v4613 = vsel %vm671, %v4602, 0
        %v4615 = vsel %vm671, %v4604, 0
        %v4617 = vsel %vm671, %v4606, 0
        %4619 = vmatprep.subr.mxu0 0.0
        %4620 = vmatpush1.xpose.msra.mxu0 0.0
        %4621 = vmatprep.subr.mxu0 0.0
        %4622 = vmatpush1.xpose.msra.mxu0 0.0
        %4623 = vmatprep.subr.mxu0 0.0
        %4624 = vmatpush1.xpose.msra.mxu0 0.0
        %4625 = vmatprep.subr.mxu0 0.0
        %4626 = vmatpush1.xpose.msra.mxu0 0.0
        %4627 = vmatprep.subr.mxu0 0.0
        %4628 = vmatpush1.xpose.msra.mxu0 0.0
        %4629 = vmatprep.subr.mxu0 0.0
        %4630 = vmatpush1.xpose.msra.mxu0 0.0
        %4631 = vmatprep.subr.mxu0 0.0
        %4632 = vmatpush1.xpose.msra.mxu0 0.0
        %4633 = vmatprep.subr.mxu0 0.0
        %4634 = vmatpush1.xpose.msra.mxu0 0.0
        %4635 = vmatprep.subr.mxu0 0.0
        %4636 = vmatpush1.xpose.msra.mxu0 0.0
        %4637 = vmatprep.subr.mxu0 0.0
        %4638 = vmatpush1.xpose.msra.mxu0 0.0
        %4639 = vmatprep.subr.mxu0 0.0
        %4640 = vmatpush1.xpose.msra.mxu0 0.0
        %4641 = vmatprep.subr.mxu0 0.0
        %4642 = vmatpush1.xpose.msra.mxu0 0.0
        %4643 = vmatprep.subr.mxu0 0.0
        %4644 = vmatpush1.xpose.msra.mxu0 0.0
        %4645 = vmatprep.subr.mxu0 0.0
        %4646 = vmatpush1.xpose.msra.mxu0 %v4617
        %4647 = vmatprep.subr.mxu0 0.0
        %4648 = vmatpush1.xpose.msra.mxu0 %v4615
        %4649 = vmatprep.subr.mxu0 0.0
        %4650 = vmatpush1.xpose.msra.mxu0 %v4613
        %4651 = vmatprep.subr.mxu0 0.0
        %4652 = vmatpush2.xpose.msra.mxu0 0.0
        %4653 = vmatprep.subr.mxu0 0.0
        %4654 = vmatpush2.xpose.msra.mxu0 0.0
        %4655 = vmatprep.subr.mxu0 0.0
        %4656 = vmatpush2.xpose.msra.mxu0 0.0
        %4657 = vmatprep.subr.mxu0 0.0
        %4658 = vmatpush2.xpose.msra.mxu0 0.0
        %4659 = vmatprep.subr.mxu0 0.0
        %4660 = vmatpush2.xpose.msra.mxu0 0.0
        %4661 = vmatprep.subr.mxu0 0.0
        %4662 = vmatpush2.xpose.msra.mxu0 0.0
        %4663 = vmatprep.subr.mxu0 0.0
        %4664 = vmatpush2.xpose.msra.mxu0 0.0
        %4665 = vmatprep.subr.mxu0 0.0
        %4666 = vmatpush2.xpose.msra.mxu0 0.0
        %4667 = vmatprep.subr.mxu0 0.0
        %4668 = vmatpush2.xpose.msra.mxu0 0.0
        %4669 = vmatprep.subr.mxu0 0.0
        %4670 = vmatpush2.xpose.msra.mxu0 0.0
        %4671 = vmatprep.subr.mxu0 0.0
        %4672 = vmatpush2.xpose.msra.mxu0 0.0
        %4673 = vmatprep.subr.mxu0 0.0
        %4674 = vmatpush2.xpose.msra.mxu0 0.0
        %4675 = vmatprep.subr.mxu0 0.0
        %4676 = vmatpush2.xpose.msra.mxu0 0.0
        %4677 = vmatprep.subr.mxu0 0.0
        %4678 = vmatpush2.xpose.msra.mxu0 0.0
        %4679 = vmatprep.subr.mxu0 0.0
        %4680 = vmatpush2.xpose.msra.mxu0 0.0
        %4681 = vmatprep.subr.mxu0 0.0
        %4682 = vmatpush2.xpose.msra.mxu0 0.0
        %4683 = vmatprep.mubr.f32.mxu0 0.0
        %4684 = vmatmul.mubr.f32.gmra.mxu0 %v4607
        %v4685 = vpop.f32.mrf.mxu0
        %v4686 = vadd.f32 %v661, %v4685
        %v4687 = vpop.f32.mrf.mxu0
        %4688 = vmatprep.mubr.f32.mxu0 0.0
        %4689 = vmatmul.mubr.f32.gmra.mxu0 %v4609
        %v4690 = vpop.f32.mrf.mxu0
        %v4691 = vadd.f32 %v661, %v4690
        %v4692 = vpop.f32.mrf.mxu0
        %4693 = vmatprep.mubr.f32.mxu0 0.0
        %4694 = vmatmul.mubr.f32.gmra.mxu0 %v4611
        %v4695 = vpop.f32.mrf.mxu0
        %v4696 = vadd.f32 %v661, %v4695
        %v4697 = vpop.f32.mrf.mxu0
        %4698 = vdwg.mxu0
        %v4699 = vsel %vm764, %v4686, -inf
        %4700 = vmax.xlane.f32.xlu0 %v4699
        %v4701 = vpop.xlane.xlu0 %4700
        %v4702 = vsel %vm764, %v4691, -inf
        %4703 = vmax.xlane.f32.xlu0 %v4702
        %v4704 = vpop.xlane.xlu0 %4703
        %v4705 = vsel %vm764, %v4696, -inf
        %4706 = vmax.xlane.f32.xlu0 %v4705
        %v4707 = vpop.xlane.xlu0 %4706
        %v4708 = vsub.f32 %v4686, %v4701
        %v4709 = vsub.f32 %v4691, %v4704
        %v4710 = vsub.f32 %v4696, %v4707
        %v4711 = vmul.f32 %v4708, 1.442695
        %v4712 = vpow.pop %v4711
        %v4713 = vmul.f32 %v4709, 1.442695
        %v4714 = vpow.pop %v4713
        %v4715 = vmul.f32 %v4710, 1.442695
        %v4716 = vpow.pop %v4715
        %v4717 = vsel %vm764, %v4712, 0.0
        %4718 = vadd.xlane.f32.xlu0 %v4717
        %v4719 = vpop.xlane.xlu0 %4718
        %v4720 = vsel %vm764, %v4714, 0.0
        %4721 = vadd.xlane.f32.xlu0 %v4720
        %v4722 = vpop.xlane.xlu0 %4721
        %v4723 = vsel %vm764, %v4716, 0.0
        %4724 = vadd.xlane.f32.xlu0 %v4723
        %v4725 = vpop.xlane.xlu0 %4724
        %v4726 = vrcp.pop %v4719
        %v4727 = vrcp.pop %v4722
        %v4728 = vrcp.pop %v4725
        %v4729 = vmul.f32 %v4712, %v4726
        %v4730 = vmul.f32 %v4714, %v4727
        %v4731 = vmul.f32 %v4716, %v4728
        %4732 = vrot.lane.b32.xlu0 %v3368, 56
        %v4733 = vpop.permute.xlu0 %4732
        %4734 = vrot.lane.b32.xlu0 %v3373, 56
        %v4735 = vpop.permute.xlu0 %4734
        %4736 = vrot.lane.b32.xlu0 %v3378, 56
        %v4737 = vpop.permute.xlu0 %4736
        %v4742 = vsel %vm764, %v4729, 0
        %v4745 = vsel %vm764, %v4730, 0
        %v4748 = vsel %vm764, %v4731, 0
        %4750 = vmatprep.subr.mxu0 0.0
        %4751 = vmatpush1.msra.mxu0 0.0
        %4752 = vmatprep.subr.mxu0 0.0
        %4753 = vmatpush1.msra.mxu0 0.0
        %4754 = vmatprep.subr.mxu0 0.0
        %4755 = vmatpush1.msra.mxu0 0.0
        %4756 = vmatprep.subr.mxu0 0.0
        %4757 = vmatpush1.msra.mxu0 0.0
        %4758 = vmatprep.subr.mxu0 0.0
        %4759 = vmatpush1.msra.mxu0 0.0
        %4760 = vmatprep.subr.mxu0 0.0
        %4761 = vmatpush1.msra.mxu0 0.0
        %4762 = vmatprep.subr.mxu0 0.0
        %4763 = vmatpush1.msra.mxu0 0.0
        %4764 = vmatprep.subr.mxu0 0.0
        %4765 = vmatpush1.msra.mxu0 0.0
        %4766 = vmatprep.subr.mxu0 0.0
        %4767 = vmatpush1.msra.mxu0 0.0
        %4768 = vmatprep.subr.mxu0 0.0
        %4769 = vmatpush1.msra.mxu0 0.0
        %4770 = vmatprep.subr.mxu0 0.0
        %4771 = vmatpush1.msra.mxu0 0.0
        %4772 = vmatprep.subr.mxu0 0.0
        %4773 = vmatpush1.msra.mxu0 0.0
        %4774 = vmatprep.subr.mxu0 0.0
        %4775 = vmatpush1.msra.mxu0 0.0
        %4776 = vmatprep.subr.mxu0 0.0
        %4777 = vmatpush1.msra.mxu0 %v4737
        %4778 = vmatprep.subr.mxu0 0.0
        %4779 = vmatpush1.msra.mxu0 %v4735
        %4780 = vmatprep.subr.mxu0 0.0
        %4781 = vmatpush1.msra.mxu0 %v4733
        %4782 = vmatprep.subr.mxu0 0.0
        %4783 = vmatpush2.msra.mxu0 0.0
        %4784 = vmatprep.subr.mxu0 0.0
        %4785 = vmatpush2.msra.mxu0 0.0
        %4786 = vmatprep.subr.mxu0 0.0
        %4787 = vmatpush2.msra.mxu0 0.0
        %4788 = vmatprep.subr.mxu0 0.0
        %4789 = vmatpush2.msra.mxu0 0.0
        %4790 = vmatprep.subr.mxu0 0.0
        %4791 = vmatpush2.msra.mxu0 0.0
        %4792 = vmatprep.subr.mxu0 0.0
        %4793 = vmatpush2.msra.mxu0 0.0
        %4794 = vmatprep.subr.mxu0 0.0
        %4795 = vmatpush2.msra.mxu0 0.0
        %4796 = vmatprep.subr.mxu0 0.0
        %4797 = vmatpush2.msra.mxu0 0.0
        %4798 = vmatprep.subr.mxu0 0.0
        %4799 = vmatpush2.msra.mxu0 0.0
        %4800 = vmatprep.subr.mxu0 0.0
        %4801 = vmatpush2.msra.mxu0 0.0
        %4802 = vmatprep.subr.mxu0 0.0
        %4803 = vmatpush2.msra.mxu0 0.0
        %4804 = vmatprep.subr.mxu0 0.0
        %4805 = vmatpush2.msra.mxu0 0.0
        %4806 = vmatprep.subr.mxu0 0.0
        %4807 = vmatpush2.msra.mxu0 0.0
        %4808 = vmatprep.subr.mxu0 0.0
        %4809 = vmatpush2.msra.mxu0 0.0
        %4810 = vmatprep.subr.mxu0 0.0
        %4811 = vmatpush2.msra.mxu0 0.0
        %4812 = vmatprep.subr.mxu0 0.0
        %4813 = vmatpush2.msra.mxu0 0.0
        %4814 = vmatprep.mubr.f32.mxu0 0.0
        %4815 = vmatmul.mubr.f32.gmra.mxu0 %v4742
        %v4816 = vpop.f32.mrf.mxu0
        %v4817 = vadd.f32 0.0, %v4816
        %v4818 = vpop.f32.mrf.mxu0
        %4819 = vmatprep.mubr.f32.mxu0 0.0
        %4820 = vmatmul.mubr.f32.gmra.mxu0 %v4745
        %v4821 = vpop.f32.mrf.mxu0
        %v4822 = vadd.f32 0.0, %v4821
        %v4823 = vpop.f32.mrf.mxu0
        %4824 = vmatprep.mubr.f32.mxu0 0.0
        %4825 = vmatmul.mubr.f32.gmra.mxu0 %v4748
        %v4826 = vpop.f32.mrf.mxu0
        %v4827 = vadd.f32 0.0, %v4826
        %v4828 = vpop.f32.mrf.mxu0
        %4829 = vdwg.mxu0
        %4830 = vrot.lane.b32.xlu0 %v3368, 112
        %v4831 = vpop.permute.xlu0 %4830
        %4832 = vrot.lane.b32.xlu0 %v3373, 112
        %v4833 = vpop.permute.xlu0 %4832
        %4834 = vrot.lane.b32.xlu0 %v3378, 112
        %v4835 = vpop.permute.xlu0 %4834
        %4836 = vrot.lane.b32.xlu0 %v3368, 80
        %v4837 = vpop.permute.xlu0 %4836
        %4838 = vrot.lane.b32.xlu0 %v3373, 80
        %v4839 = vpop.permute.xlu0 %4838
        %4840 = vrot.lane.b32.xlu0 %v3378, 80
        %v4841 = vpop.permute.xlu0 %4840
        %v4842 = vsel %vm671, %v4831, 0
        %v4844 = vsel %vm671, %v4833, 0
        %v4846 = vsel %vm671, %v4835, 0
        %v4848 = vsel %vm671, %v4837, 0
        %v4850 = vsel %vm671, %v4839, 0
        %v4852 = vsel %vm671, %v4841, 0
        %4854 = vmatprep.subr.mxu0 0.0
        %4855 = vmatpush1.xpose.msra.mxu0 0.0
        %4856 = vmatprep.subr.mxu0 0.0
        %4857 = vmatpush1.xpose.msra.mxu0 0.0
        %4858 = vmatprep.subr.mxu0 0.0
        %4859 = vmatpush1.xpose.msra.mxu0 0.0
        %4860 = vmatprep.subr.mxu0 0.0
        %4861 = vmatpush1.xpose.msra.mxu0 0.0
        %4862 = vmatprep.subr.mxu0 0.0
        %4863 = vmatpush1.xpose.msra.mxu0 0.0
        %4864 = vmatprep.subr.mxu0 0.0
        %4865 = vmatpush1.xpose.msra.mxu0 0.0
        %4866 = vmatprep.subr.mxu0 0.0
        %4867 = vmatpush1.xpose.msra.mxu0 0.0
        %4868 = vmatprep.subr.mxu0 0.0
        %4869 = vmatpush1.xpose.msra.mxu0 0.0
        %4870 = vmatprep.subr.mxu0 0.0
        %4871 = vmatpush1.xpose.msra.mxu0 0.0
        %4872 = vmatprep.subr.mxu0 0.0
        %4873 = vmatpush1.xpose.msra.mxu0 0.0
        %4874 = vmatprep.subr.mxu0 0.0
        %4875 = vmatpush1.xpose.msra.mxu0 0.0
        %4876 = vmatprep.subr.mxu0 0.0
        %4877 = vmatpush1.xpose.msra.mxu0 0.0
        %4878 = vmatprep.subr.mxu0 0.0
        %4879 = vmatpush1.xpose.msra.mxu0 0.0
        %4880 = vmatprep.subr.mxu0 0.0
        %4881 = vmatpush1.xpose.msra.mxu0 %v4852
        %4882 = vmatprep.subr.mxu0 0.0
        %4883 = vmatpush1.xpose.msra.mxu0 %v4850
        %4884 = vmatprep.subr.mxu0 0.0
        %4885 = vmatpush1.xpose.msra.mxu0 %v4848
        %4886 = vmatprep.subr.mxu0 0.0
        %4887 = vmatpush2.xpose.msra.mxu0 0.0
        %4888 = vmatprep.subr.mxu0 0.0
        %4889 = vmatpush2.xpose.msra.mxu0 0.0
        %4890 = vmatprep.subr.mxu0 0.0
        %4891 = vmatpush2.xpose.msra.mxu0 0.0
        %4892 = vmatprep.subr.mxu0 0.0
        %4893 = vmatpush2.xpose.msra.mxu0 0.0
        %4894 = vmatprep.subr.mxu0 0.0
        %4895 = vmatpush2.xpose.msra.mxu0 0.0
        %4896 = vmatprep.subr.mxu0 0.0
        %4897 = vmatpush2.xpose.msra.mxu0 0.0
        %4898 = vmatprep.subr.mxu0 0.0
        %4899 = vmatpush2.xpose.msra.mxu0 0.0
        %4900 = vmatprep.subr.mxu0 0.0
        %4901 = vmatpush2.xpose.msra.mxu0 0.0
        %4902 = vmatprep.subr.mxu0 0.0
        %4903 = vmatpush2.xpose.msra.mxu0 0.0
        %4904 = vmatprep.subr.mxu0 0.0
        %4905 = vmatpush2.xpose.msra.mxu0 0.0
        %4906 = vmatprep.subr.mxu0 0.0
        %4907 = vmatpush2.xpose.msra.mxu0 0.0
        %4908 = vmatprep.subr.mxu0 0.0
        %4909 = vmatpush2.xpose.msra.mxu0 0.0
        %4910 = vmatprep.subr.mxu0 0.0
        %4911 = vmatpush2.xpose.msra.mxu0 0.0
        %4912 = vmatprep.subr.mxu0 0.0
        %4913 = vmatpush2.xpose.msra.mxu0 0.0
        %4914 = vmatprep.subr.mxu0 0.0
        %4915 = vmatpush2.xpose.msra.mxu0 0.0
        %4916 = vmatprep.subr.mxu0 0.0
        %4917 = vmatpush2.xpose.msra.mxu0 0.0
        %4918 = vmatprep.mubr.f32.mxu0 0.0
        %4919 = vmatmul.mubr.f32.gmra.mxu0 %v4842
        %v4920 = vpop.f32.mrf.mxu0
        %v4921 = vadd.f32 %v661, %v4920
        %v4922 = vpop.f32.mrf.mxu0
        %4923 = vmatprep.mubr.f32.mxu0 0.0
        %4924 = vmatmul.mubr.f32.gmra.mxu0 %v4844
        %v4925 = vpop.f32.mrf.mxu0
        %v4926 = vadd.f32 %v661, %v4925
        %v4927 = vpop.f32.mrf.mxu0
        %4928 = vmatprep.mubr.f32.mxu0 0.0
        %4929 = vmatmul.mubr.f32.gmra.mxu0 %v4846
        %v4930 = vpop.f32.mrf.mxu0
        %v4931 = vadd.f32 %v661, %v4930
        %v4932 = vpop.f32.mrf.mxu0
        %4933 = vdwg.mxu0
        %v4934 = vsel %vm764, %v4921, -inf
        %4935 = vmax.xlane.f32.xlu0 %v4934
        %v4936 = vpop.xlane.xlu0 %4935
        %v4937 = vsel %vm764, %v4926, -inf
        %4938 = vmax.xlane.f32.xlu0 %v4937
        %v4939 = vpop.xlane.xlu0 %4938
        %v4940 = vsel %vm764, %v4931, -inf
        %4941 = vmax.xlane.f32.xlu0 %v4940
        %v4942 = vpop.xlane.xlu0 %4941
        %v4943 = vsub.f32 %v4921, %v4936
        %v4944 = vsub.f32 %v4926, %v4939
        %v4945 = vsub.f32 %v4931, %v4942
        %v4946 = vmul.f32 %v4943, 1.442695
        %v4947 = vpow.pop %v4946
        %v4948 = vmul.f32 %v4944, 1.442695
        %v4949 = vpow.pop %v4948
        %v4950 = vmul.f32 %v4945, 1.442695
        %v4951 = vpow.pop %v4950
        %v4952 = vsel %vm764, %v4947, 0.0
        %4953 = vadd.xlane.f32.xlu0 %v4952
        %v4954 = vpop.xlane.xlu0 %4953
        %v4955 = vsel %vm764, %v4949, 0.0
        %4956 = vadd.xlane.f32.xlu0 %v4955
        %v4957 = vpop.xlane.xlu0 %4956
        %v4958 = vsel %vm764, %v4951, 0.0
        %4959 = vadd.xlane.f32.xlu0 %v4958
        %v4960 = vpop.xlane.xlu0 %4959
        %v4961 = vrcp.pop %v4954
        %v4962 = vrcp.pop %v4957
        %v4963 = vrcp.pop %v4960
        %v4964 = vmul.f32 %v4947, %v4961
        %v4965 = vmul.f32 %v4949, %v4962
        %v4966 = vmul.f32 %v4951, %v4963
        %4967 = vrot.lane.b32.xlu0 %v3368, 48
        %v4968 = vpop.permute.xlu0 %4967
        %4969 = vrot.lane.b32.xlu0 %v3373, 48
        %v4970 = vpop.permute.xlu0 %4969
        %4971 = vrot.lane.b32.xlu0 %v3378, 48
        %v4972 = vpop.permute.xlu0 %4971
        %v4977 = vsel %vm764, %v4964, 0
        %v4980 = vsel %vm764, %v4965, 0
        %v4983 = vsel %vm764, %v4966, 0
        %4985 = vmatprep.subr.mxu0 0.0
        %4986 = vmatpush1.msra.mxu0 0.0
        %4987 = vmatprep.subr.mxu0 0.0
        %4988 = vmatpush1.msra.mxu0 0.0
        %4989 = vmatprep.subr.mxu0 0.0
        %4990 = vmatpush1.msra.mxu0 0.0
        %4991 = vmatprep.subr.mxu0 0.0
        %4992 = vmatpush1.msra.mxu0 0.0
        %4993 = vmatprep.subr.mxu0 0.0
        %4994 = vmatpush1.msra.mxu0 0.0
        %4995 = vmatprep.subr.mxu0 0.0
        %4996 = vmatpush1.msra.mxu0 0.0
        %4997 = vmatprep.subr.mxu0 0.0
        %4998 = vmatpush1.msra.mxu0 0.0
        %4999 = vmatprep.subr.mxu0 0.0
        %5000 = vmatpush1.msra.mxu0 0.0
        %5001 = vmatprep.subr.mxu0 0.0
        %5002 = vmatpush1.msra.mxu0 0.0
        %5003 = vmatprep.subr.mxu0 0.0
        %5004 = vmatpush1.msra.mxu0 0.0
        %5005 = vmatprep.subr.mxu0 0.0
        %5006 = vmatpush1.msra.mxu0 0.0
        %5007 = vmatprep.subr.mxu0 0.0
        %5008 = vmatpush1.msra.mxu0 0.0
        %5009 = vmatprep.subr.mxu0 0.0
        %5010 = vmatpush1.msra.mxu0 0.0
        %5011 = vmatprep.subr.mxu0 0.0
        %5012 = vmatpush1.msra.mxu0 %v4972
        %5013 = vmatprep.subr.mxu0 0.0
        %5014 = vmatpush1.msra.mxu0 %v4970
        %5015 = vmatprep.subr.mxu0 0.0
        %5016 = vmatpush1.msra.mxu0 %v4968
        %5017 = vmatprep.subr.mxu0 0.0
        %5018 = vmatpush2.msra.mxu0 0.0
        %5019 = vmatprep.subr.mxu0 0.0
        %5020 = vmatpush2.msra.mxu0 0.0
        %5021 = vmatprep.subr.mxu0 0.0
        %5022 = vmatpush2.msra.mxu0 0.0
        %5023 = vmatprep.subr.mxu0 0.0
        %5024 = vmatpush2.msra.mxu0 0.0
        %5025 = vmatprep.subr.mxu0 0.0
        %5026 = vmatpush2.msra.mxu0 0.0
        %5027 = vmatprep.subr.mxu0 0.0
        %5028 = vmatpush2.msra.mxu0 0.0
        %5029 = vmatprep.subr.mxu0 0.0
        %5030 = vmatpush2.msra.mxu0 0.0
        %5031 = vmatprep.subr.mxu0 0.0
        %5032 = vmatpush2.msra.mxu0 0.0
        %5033 = vmatprep.subr.mxu0 0.0
        %5034 = vmatpush2.msra.mxu0 0.0
        %5035 = vmatprep.subr.mxu0 0.0
        %5036 = vmatpush2.msra.mxu0 0.0
        %5037 = vmatprep.subr.mxu0 0.0
        %5038 = vmatpush2.msra.mxu0 0.0
        %5039 = vmatprep.subr.mxu0 0.0
        %5040 = vmatpush2.msra.mxu0 0.0
        %5041 = vmatprep.subr.mxu0 0.0
        %5042 = vmatpush2.msra.mxu0 0.0
        %5043 = vmatprep.subr.mxu0 0.0
        %5044 = vmatpush2.msra.mxu0 0.0
        %5045 = vmatprep.subr.mxu0 0.0
        %5046 = vmatpush2.msra.mxu0 0.0
        %5047 = vmatprep.subr.mxu0 0.0
        %5048 = vmatpush2.msra.mxu0 0.0
        %5049 = vmatprep.mubr.f32.mxu0 0.0
        %5050 = vmatmul.mubr.f32.gmra.mxu0 %v4977
        %v5051 = vpop.f32.mrf.mxu0
        %v5052 = vadd.f32 0.0, %v5051
        %v5053 = vpop.f32.mrf.mxu0
        %5054 = vmatprep.mubr.f32.mxu0 0.0
        %5055 = vmatmul.mubr.f32.gmra.mxu0 %v4980
        %v5056 = vpop.f32.mrf.mxu0
        %v5057 = vadd.f32 0.0, %v5056
        %v5058 = vpop.f32.mrf.mxu0
        %5059 = vmatprep.mubr.f32.mxu0 0.0
        %5060 = vmatmul.mubr.f32.gmra.mxu0 %v4983
        %v5061 = vpop.f32.mrf.mxu0
        %v5062 = vadd.f32 0.0, %v5061
        %v5063 = vpop.f32.mrf.mxu0
        %5064 = vdwg.mxu0
        %5065 = vrot.lane.b32.xlu0 %v3368, 104
        %v5066 = vpop.permute.xlu0 %5065
        %5067 = vrot.lane.b32.xlu0 %v3373, 104
        %v5068 = vpop.permute.xlu0 %5067
        %5069 = vrot.lane.b32.xlu0 %v3378, 104
        %v5070 = vpop.permute.xlu0 %5069
        %5071 = vrot.lane.b32.xlu0 %v3368, 72
        %v5072 = vpop.permute.xlu0 %5071
        %5073 = vrot.lane.b32.xlu0 %v3373, 72
        %v5074 = vpop.permute.xlu0 %5073
        %5075 = vrot.lane.b32.xlu0 %v3378, 72
        %v5076 = vpop.permute.xlu0 %5075
        %v5077 = vsel %vm671, %v5066, 0
        %v5079 = vsel %vm671, %v5068, 0
        %v5081 = vsel %vm671, %v5070, 0
        %v5083 = vsel %vm671, %v5072, 0
        %v5085 = vsel %vm671, %v5074, 0
        %v5087 = vsel %vm671, %v5076, 0
        %5089 = vmatprep.subr.mxu0 0.0
        %5090 = vmatpush1.xpose.msra.mxu0 0.0
        %5091 = vmatprep.subr.mxu0 0.0
        %5092 = vmatpush1.xpose.msra.mxu0 0.0
        %5093 = vmatprep.subr.mxu0 0.0
        %5094 = vmatpush1.xpose.msra.mxu0 0.0
        %5095 = vmatprep.subr.mxu0 0.0
        %5096 = vmatpush1.xpose.msra.mxu0 0.0
        %5097 = vmatprep.subr.mxu0 0.0
        %5098 = vmatpush1.xpose.msra.mxu0 0.0
        %5099 = vmatprep.subr.mxu0 0.0
        %5100 = vmatpush1.xpose.msra.mxu0 0.0
        %5101 = vmatprep.subr.mxu0 0.0
        %5102 = vmatpush1.xpose.msra.mxu0 0.0
        %5103 = vmatprep.subr.mxu0 0.0
        %5104 = vmatpush1.xpose.msra.mxu0 0.0
        %5105 = vmatprep.subr.mxu0 0.0
        %5106 = vmatpush1.xpose.msra.mxu0 0.0
        %5107 = vmatprep.subr.mxu0 0.0
        %5108 = vmatpush1.xpose.msra.mxu0 0.0
        %5109 = vmatprep.subr.mxu0 0.0
        %5110 = vmatpush1.xpose.msra.mxu0 0.0
        %5111 = vmatprep.subr.mxu0 0.0
        %5112 = vmatpush1.xpose.msra.mxu0 0.0
        %5113 = vmatprep.subr.mxu0 0.0
        %5114 = vmatpush1.xpose.msra.mxu0 0.0
        %5115 = vmatprep.subr.mxu0 0.0
        %5116 = vmatpush1.xpose.msra.mxu0 %v5087
        %5117 = vmatprep.subr.mxu0 0.0
        %5118 = vmatpush1.xpose.msra.mxu0 %v5085
        %5119 = vmatprep.subr.mxu0 0.0
        %5120 = vmatpush1.xpose.msra.mxu0 %v5083
        %5121 = vmatprep.subr.mxu0 0.0
        %5122 = vmatpush2.xpose.msra.mxu0 0.0
        %5123 = vmatprep.subr.mxu0 0.0
        %5124 = vmatpush2.xpose.msra.mxu0 0.0
        %5125 = vmatprep.subr.mxu0 0.0
        %5126 = vmatpush2.xpose.msra.mxu0 0.0
        %5127 = vmatprep.subr.mxu0 0.0
        %5128 = vmatpush2.xpose.msra.mxu0 0.0
        %5129 = vmatprep.subr.mxu0 0.0
        %5130 = vmatpush2.xpose.msra.mxu0 0.0
        %5131 = vmatprep.subr.mxu0 0.0
        %5132 = vmatpush2.xpose.msra.mxu0 0.0
        %5133 = vmatprep.subr.mxu0 0.0
        %5134 = vmatpush2.xpose.msra.mxu0 0.0
        %5135 = vmatprep.subr.mxu0 0.0
        %5136 = vmatpush2.xpose.msra.mxu0 0.0
        %5137 = vmatprep.subr.mxu0 0.0
        %5138 = vmatpush2.xpose.msra.mxu0 0.0
        %5139 = vmatprep.subr.mxu0 0.0
        %5140 = vmatpush2.xpose.msra.mxu0 0.0
        %5141 = vmatprep.subr.mxu0 0.0
        %5142 = vmatpush2.xpose.msra.mxu0 0.0
        %5143 = vmatprep.subr.mxu0 0.0
        %5144 = vmatpush2.xpose.msra.mxu0 0.0
        %5145 = vmatprep.subr.mxu0 0.0
        %5146 = vmatpush2.xpose.msra.mxu0 0.0
        %5147 = vmatprep.subr.mxu0 0.0
        %5148 = vmatpush2.xpose.msra.mxu0 0.0
        %5149 = vmatprep.subr.mxu0 0.0
        %5150 = vmatpush2.xpose.msra.mxu0 0.0
        %5151 = vmatprep.subr.mxu0 0.0
        %5152 = vmatpush2.xpose.msra.mxu0 0.0
        %5153 = vmatprep.mubr.f32.mxu0 0.0
        %5154 = vmatmul.mubr.f32.gmra.mxu0 %v5077
        %v5155 = vpop.f32.mrf.mxu0
        %v5156 = vadd.f32 %v661, %v5155
        %v5157 = vpop.f32.mrf.mxu0
        %5158 = vmatprep.mubr.f32.mxu0 0.0
        %5159 = vmatmul.mubr.f32.gmra.mxu0 %v5079
        %v5160 = vpop.f32.mrf.mxu0
        %v5161 = vadd.f32 %v661, %v5160
        %v5162 = vpop.f32.mrf.mxu0
        %5163 = vmatprep.mubr.f32.mxu0 0.0
        %5164 = vmatmul.mubr.f32.gmra.mxu0 %v5081
        %v5165 = vpop.f32.mrf.mxu0
        %v5166 = vadd.f32 %v661, %v5165
        %v5167 = vpop.f32.mrf.mxu0
        %5168 = vdwg.mxu0
        %v5169 = vsel %vm764, %v5156, -inf
        %5170 = vmax.xlane.f32.xlu0 %v5169
        %v5171 = vpop.xlane.xlu0 %5170
        %v5172 = vsel %vm764, %v5161, -inf
        %5173 = vmax.xlane.f32.xlu0 %v5172
        %v5174 = vpop.xlane.xlu0 %5173
        %v5175 = vsel %vm764, %v5166, -inf
        %5176 = vmax.xlane.f32.xlu0 %v5175
        %v5177 = vpop.xlane.xlu0 %5176
        %v5178 = vsub.f32 %v5156, %v5171
        %v5179 = vsub.f32 %v5161, %v5174
        %v5180 = vsub.f32 %v5166, %v5177
        %v5181 = vmul.f32 %v5178, 1.442695
        %v5182 = vpow.pop %v5181
        %v5183 = vmul.f32 %v5179, 1.442695
        %v5184 = vpow.pop %v5183
        %v5185 = vmul.f32 %v5180, 1.442695
        %v5186 = vpow.pop %v5185
        %v5187 = vsel %vm764, %v5182, 0.0
        %5188 = vadd.xlane.f32.xlu0 %v5187
        %v5189 = vpop.xlane.xlu0 %5188
        %v5190 = vsel %vm764, %v5184, 0.0
        %5191 = vadd.xlane.f32.xlu0 %v5190
        %v5192 = vpop.xlane.xlu0 %5191
        %v5193 = vsel %vm764, %v5186, 0.0
        %5194 = vadd.xlane.f32.xlu0 %v5193
        %v5195 = vpop.xlane.xlu0 %5194
        %v5196 = vrcp.pop %v5189
        %v5197 = vrcp.pop %v5192
        %v5198 = vrcp.pop %v5195
        %v5199 = vmul.f32 %v5182, %v5196
        %v5200 = vmul.f32 %v5184, %v5197
        %v5201 = vmul.f32 %v5186, %v5198
        %5202 = vrot.lane.b32.xlu0 %v3368, 40
        %v5203 = vpop.permute.xlu0 %5202
        %5204 = vrot.lane.b32.xlu0 %v3373, 40
        %v5205 = vpop.permute.xlu0 %5204
        %5206 = vrot.lane.b32.xlu0 %v3378, 40
        %v5207 = vpop.permute.xlu0 %5206
        %v5212 = vsel %vm764, %v5199, 0
        %v5215 = vsel %vm764, %v5200, 0
        %v5218 = vsel %vm764, %v5201, 0
        %5220 = vmatprep.subr.mxu0 0.0
        %5221 = vmatpush1.msra.mxu0 0.0
        %5222 = vmatprep.subr.mxu0 0.0
        %5223 = vmatpush1.msra.mxu0 0.0
        %5224 = vmatprep.subr.mxu0 0.0
        %5225 = vmatpush1.msra.mxu0 0.0
        %5226 = vmatprep.subr.mxu0 0.0
        %5227 = vmatpush1.msra.mxu0 0.0
        %5228 = vmatprep.subr.mxu0 0.0
        %5229 = vmatpush1.msra.mxu0 0.0
        %5230 = vmatprep.subr.mxu0 0.0
        %5231 = vmatpush1.msra.mxu0 0.0
        %5232 = vmatprep.subr.mxu0 0.0
        %5233 = vmatpush1.msra.mxu0 0.0
        %5234 = vmatprep.subr.mxu0 0.0
        %5235 = vmatpush1.msra.mxu0 0.0
        %5236 = vmatprep.subr.mxu0 0.0
        %5237 = vmatpush1.msra.mxu0 0.0
        %5238 = vmatprep.subr.mxu0 0.0
        %5239 = vmatpush1.msra.mxu0 0.0
        %5240 = vmatprep.subr.mxu0 0.0
        %5241 = vmatpush1.msra.mxu0 0.0
        %5242 = vmatprep.subr.mxu0 0.0
        %5243 = vmatpush1.msra.mxu0 0.0
        %5244 = vmatprep.subr.mxu0 0.0
        %5245 = vmatpush1.msra.mxu0 0.0
        %5246 = vmatprep.subr.mxu0 0.0
        %5247 = vmatpush1.msra.mxu0 %v5207
        %5248 = vmatprep.subr.mxu0 0.0
        %5249 = vmatpush1.msra.mxu0 %v5205
        %5250 = vmatprep.subr.mxu0 0.0
        %5251 = vmatpush1.msra.mxu0 %v5203
        %5252 = vmatprep.subr.mxu0 0.0
        %5253 = vmatpush2.msra.mxu0 0.0
        %5254 = vmatprep.subr.mxu0 0.0
        %5255 = vmatpush2.msra.mxu0 0.0
        %5256 = vmatprep.subr.mxu0 0.0
        %5257 = vmatpush2.msra.mxu0 0.0
        %5258 = vmatprep.subr.mxu0 0.0
        %5259 = vmatpush2.msra.mxu0 0.0
        %5260 = vmatprep.subr.mxu0 0.0
        %5261 = vmatpush2.msra.mxu0 0.0
        %5262 = vmatprep.subr.mxu0 0.0
        %5263 = vmatpush2.msra.mxu0 0.0
        %5264 = vmatprep.subr.mxu0 0.0
        %5265 = vmatpush2.msra.mxu0 0.0
        %5266 = vmatprep.subr.mxu0 0.0
        %5267 = vmatpush2.msra.mxu0 0.0
        %5268 = vmatprep.subr.mxu0 0.0
        %5269 = vmatpush2.msra.mxu0 0.0
        %5270 = vmatprep.subr.mxu0 0.0
        %5271 = vmatpush2.msra.mxu0 0.0
        %5272 = vmatprep.subr.mxu0 0.0
        %5273 = vmatpush2.msra.mxu0 0.0
        %5274 = vmatprep.subr.mxu0 0.0
        %5275 = vmatpush2.msra.mxu0 0.0
        %5276 = vmatprep.subr.mxu0 0.0
        %5277 = vmatpush2.msra.mxu0 0.0
        %5278 = vmatprep.subr.mxu0 0.0
        %5279 = vmatpush2.msra.mxu0 0.0
        %5280 = vmatprep.subr.mxu0 0.0
        %5281 = vmatpush2.msra.mxu0 0.0
        %5282 = vmatprep.subr.mxu0 0.0
        %5283 = vmatpush2.msra.mxu0 0.0
        %5284 = vmatprep.mubr.f32.mxu0 0.0
        %5285 = vmatmul.mubr.f32.gmra.mxu0 %v5212
        %v5286 = vpop.f32.mrf.mxu0
        %v5287 = vadd.f32 0.0, %v5286
        %v5288 = vpop.f32.mrf.mxu0
        %5289 = vmatprep.mubr.f32.mxu0 0.0
        %5290 = vmatmul.mubr.f32.gmra.mxu0 %v5215
        %v5291 = vpop.f32.mrf.mxu0
        %v5292 = vadd.f32 0.0, %v5291
        %v5293 = vpop.f32.mrf.mxu0
        %5294 = vmatprep.mubr.f32.mxu0 0.0
        %5295 = vmatmul.mubr.f32.gmra.mxu0 %v5218
        %v5296 = vpop.f32.mrf.mxu0
        %v5297 = vadd.f32 0.0, %v5296
        %v5298 = vpop.f32.mrf.mxu0
        %5299 = vdwg.mxu0
        %5303 = vrot.lane.b32.xlu0 %v4817, 8
        %v5304 = vpop.permute.xlu0 %5303
        %5305 = vrot.lane.b32.xlu0 %v4822, 8
        %v5306 = vpop.permute.xlu0 %5305
        %5307 = vrot.lane.b32.xlu0 %v4827, 8
        %v5308 = vpop.permute.xlu0 %5307
        %5315 = vrot.lane.b32.xlu0 %v5052, 16
        %v5316 = vpop.permute.xlu0 %5315
        %5317 = vrot.lane.b32.xlu0 %v5057, 16
        %v5318 = vpop.permute.xlu0 %5317
        %5319 = vrot.lane.b32.xlu0 %v5062, 16
        %v5320 = vpop.permute.xlu0 %5319
        %5327 = vrot.lane.b32.xlu0 %v5287, 24
        %v5328 = vpop.permute.xlu0 %5327
        %5329 = vrot.lane.b32.xlu0 %v5292, 24
        %v5330 = vpop.permute.xlu0 %5329
        %5331 = vrot.lane.b32.xlu0 %v5297, 24
        %v5332 = vpop.permute.xlu0 %5331
        %v5336 = vsel %vm671, %v4582, %v5304
        %v5337 = vsel %vm671, %v4587, %v5306
        %v5338 = vsel %vm671, %v4592, %v5308
        %v5339 = vsel %vm1640, %v5336, %v5316
        %v5340 = vsel %vm1640, %v5337, %v5318
        %v5341 = vsel %vm1640, %v5338, %v5320
        %v5342 = vsel %vm764, %v5339, %v5328
        %v5343 = vsel %vm764, %v5340, %v5330
        %v5344 = vsel %vm764, %v5341, %v5332
        %v5345 = vld [vmem:[#allocation5 + $0x208] sm:$0xff]
        %v5346 = vld [vmem:[#allocation5 + $0x210] sm:$0xff]
        %v5347 = vld [vmem:[#allocation5 + $0x218] sm:$0xff]
        %v5348 = vld [vmem:[#allocation5 + $0x220] sm:$0xff]
        %v5349 = vld [vmem:[#allocation5 + $0x228] sm:$0x1]
        %v5350 = vlaneseq
        %v5351 = vshrl.u32 %v5350, 7
        %v5352 = vsub.s32 0, %v5351
        %v5353 = vrot.slane %v5349, %v5352
        %v5355 = vsel %vm335, %v4360, 0
        %v5358 = vsel %vm335, %v4361, 0
        %v5361 = vsel %vm335, %v4362, 0
        %v5364 = vsel %vm335, %v5342, 0
        %v5367 = vsel %vm335, %v5343, 0
        %v5370 = vsel %vm335, %v5344, 0
        %5372 = vmatprep.subr.mxu0 0.0
        %5373 = vmatpush1.msra.mxu0 0.0
        %5374 = vmatprep.subr.mxu0 0.0
        %5375 = vmatpush1.msra.mxu0 0.0
        %5376 = vmatprep.subr.mxu0 0.0
        %5377 = vmatpush1.msra.mxu0 0.0
        %5378 = vmatprep.subr.mxu0 0.0
        %5379 = vmatpush1.msra.mxu0 0.0
        %5380 = vmatprep.subr.mxu0 0.0
        %5381 = vmatpush1.msra.mxu0 0.0
        %5382 = vmatprep.subr.mxu0 0.0
        %5383 = vmatpush1.msra.mxu0 0.0
        %5384 = vmatprep.subr.mxu0 0.0
        %5385 = vmatpush1.msra.mxu0 0.0
        %5386 = vmatprep.subr.mxu0 0.0
        %5387 = vmatpush1.msra.mxu0 0.0
        %5388 = vmatprep.subr.mxu0 0.0
        %5389 = vmatpush1.msra.mxu0 0.0
        %5390 = vmatprep.subr.mxu0 0.0
        %5391 = vmatpush1.msra.mxu0 0.0
        %5392 = vmatprep.subr.mxu0 0.0
        %5393 = vmatpush1.msra.mxu0 0.0
        %5394 = vmatprep.subr.mxu0 0.0
        %5395 = vmatpush1.msra.mxu0 0.0
        %5396 = vmatprep.subr.mxu0 0.0
        %5397 = vmatpush1.msra.mxu0 %v5348
        %5398 = vmatprep.subr.mxu0 0.0
        %5399 = vmatpush1.msra.mxu0 %v5347
        %5400 = vmatprep.subr.mxu0 0.0
        %5401 = vmatpush1.msra.mxu0 %v5346
        %5402 = vmatprep.subr.mxu0 0.0
        %5403 = vmatpush1.msra.mxu0 %v5345
        %5404 = vmatprep.subr.mxu0 0.0
        %5405 = vmatpush2.msra.mxu0 0.0
        %5406 = vmatprep.subr.mxu0 0.0
        %5407 = vmatpush2.msra.mxu0 0.0
        %5408 = vmatprep.subr.mxu0 0.0
        %5409 = vmatpush2.msra.mxu0 0.0
        %5410 = vmatprep.subr.mxu0 0.0
        %5411 = vmatpush2.msra.mxu0 0.0
        %5412 = vmatprep.subr.mxu0 0.0
        %5413 = vmatpush2.msra.mxu0 0.0
        %5414 = vmatprep.subr.mxu0 0.0
        %5415 = vmatpush2.msra.mxu0 0.0
        %5416 = vmatprep.subr.mxu0 0.0
        %5417 = vmatpush2.msra.mxu0 0.0
        %5418 = vmatprep.subr.mxu0 0.0
        %5419 = vmatpush2.msra.mxu0 0.0
        %5420 = vmatprep.subr.mxu0 0.0
        %5421 = vmatpush2.msra.mxu0 0.0
        %5422 = vmatprep.subr.mxu0 0.0
        %5423 = vmatpush2.msra.mxu0 0.0
        %5424 = vmatprep.subr.mxu0 0.0
        %5425 = vmatpush2.msra.mxu0 0.0
        %5426 = vmatprep.subr.mxu0 0.0
        %5427 = vmatpush2.msra.mxu0 0.0
        %5428 = vmatprep.subr.mxu0 0.0
        %5429 = vmatpush2.msra.mxu0 0.0
        %5430 = vmatprep.subr.mxu0 0.0
        %5431 = vmatpush2.msra.mxu0 0.0
        %5432 = vmatprep.subr.mxu0 0.0
        %5433 = vmatpush2.msra.mxu0 0.0
        %5434 = vmatprep.subr.mxu0 0.0
        %5435 = vmatpush2.msra.mxu0 0.0
        %5436 = vmatprep.mubr.f32.mxu0 0.0
        %5437 = vmatmul.mubr.f32.gmra.mxu0 %v5355
        %v5438 = vpop.f32.mrf.mxu0
        %v5439 = vadd.f32 %v5353, %v5438
        %v5440 = vpop.f32.mrf.mxu0
        %5441 = vmatprep.mubr.f32.mxu0 0.0
        %5442 = vmatmul.mubr.f32.gmra.mxu0 %v5358
        %v5443 = vpop.f32.mrf.mxu0
        %v5444 = vadd.f32 %v5353, %v5443
        %v5445 = vpop.f32.mrf.mxu0
        %5446 = vmatprep.mubr.f32.mxu0 0.0
        %5447 = vmatmul.mubr.f32.gmra.mxu0 %v5361
        %v5448 = vpop.f32.mrf.mxu0
        %v5449 = vadd.f32 %v5353, %v5448
        %v5450 = vpop.f32.mrf.mxu0
        %5451 = vmatprep.mubr.f32.mxu0 0.0
        %5452 = vmatmul.mubr.f32.gmra.mxu0 %v5364
        %v5453 = vpop.f32.mrf.mxu0
        %v5454 = vadd.f32 %v5353, %v5453
        %v5455 = vpop.f32.mrf.mxu0
        %5456 = vmatprep.mubr.f32.mxu0 0.0
        %5457 = vmatmul.mubr.f32.gmra.mxu0 %v5367
        %v5458 = vpop.f32.mrf.mxu0
        %v5459 = vadd.f32 %v5353, %v5458
        %v5460 = vpop.f32.mrf.mxu0
        %5461 = vmatprep.mubr.f32.mxu0 0.0
        %5462 = vmatmul.mubr.f32.gmra.mxu0 %v5370
        %v5463 = vpop.f32.mrf.mxu0
        %v5464 = vadd.f32 %v5353, %v5463
        %v5465 = vpop.f32.mrf.mxu0
        %5466 = vdwg.mxu0
        %v5467 = vadd.f32 %v3153, %v5439
        %v5468 = vadd.f32 %v3154, %v5444
        %v5469 = vadd.f32 %v3155, %v5449
        %v5470 = vadd.f32 %v3156, %v5454
        %v5471 = vadd.f32 %v3157, %v5459
        %v5472 = vadd.f32 %v3158, %v5464
        %v5473 = vld [vmem:[#allocation5 + $0x230] sm:$0x1]
        %v5474 = vld [vmem:[#allocation5 + $0x238] sm:$0x1]
        %v5475 = vsel %vm335, %v5467, 0.0
        %5476 = vadd.xlane.f32.xlu0 %v5475
        %v5477 = vpop.xlane.xlu0 %5476
        %v5478 = vsel %vm335, %v5468, 0.0
        %5479 = vadd.xlane.f32.xlu0 %v5478
        %v5480 = vpop.xlane.xlu0 %5479
        %v5481 = vsel %vm335, %v5469, 0.0
        %5482 = vadd.xlane.f32.xlu0 %v5481
        %v5483 = vpop.xlane.xlu0 %5482
        %v5484 = vsel %vm335, %v5470, 0.0
        %5485 = vadd.xlane.f32.xlu0 %v5484
        %v5486 = vpop.xlane.xlu0 %5485
        %v5487 = vsel %vm335, %v5471, 0.0
        %5488 = vadd.xlane.f32.xlu0 %v5487
        %v5489 = vpop.xlane.xlu0 %5488
        %v5490 = vsel %vm335, %v5472, 0.0
        %5491 = vadd.xlane.f32.xlu0 %v5490
        %v5492 = vpop.xlane.xlu0 %5491
        %v5493 = vmul.f32 %v5477, %v354
        %v5494 = vmul.f32 %v5480, %v354
        %v5495 = vmul.f32 %v5483, %v354
        %v5496 = vmul.f32 %v5486, %v354
        %v5497 = vmul.f32 %v5489, %v354
        %v5498 = vmul.f32 %v5492, %v354
        %v5499 = vsub.f32 %v5467, %v5493
        %v5500 = vsub.f32 %v5468, %v5494
        %v5501 = vsub.f32 %v5469, %v5495
        %v5502 = vsub.f32 %v5470, %v5496
        %v5503 = vsub.f32 %v5471, %v5497
        %v5504 = vsub.f32 %v5472, %v5498
        %v5505 = vmul.f32 %v5499, %v5499
        %v5506 = vmul.f32 %v5500, %v5500
        %v5507 = vmul.f32 %v5501, %v5501
        %v5508 = vmul.f32 %v5502, %v5502
        %v5509 = vmul.f32 %v5503, %v5503
        %v5510 = vmul.f32 %v5504, %v5504
        %v5511 = vsel %vm335, %v5505, 0.0
        %5512 = vadd.xlane.f32.xlu0 %v5511
        %v5513 = vpop.xlane.xlu0 %5512
        %v5514 = vsel %vm335, %v5506, 0.0
        %5515 = vadd.xlane.f32.xlu0 %v5514
        %v5516 = vpop.xlane.xlu0 %5515
        %v5517 = vsel %vm335, %v5507, 0.0
        %5518 = vadd.xlane.f32.xlu0 %v5517
        %v5519 = vpop.xlane.xlu0 %5518
        %v5520 = vsel %vm335, %v5508, 0.0
        %5521 = vadd.xlane.f32.xlu0 %v5520
        %v5522 = vpop.xlane.xlu0 %5521
        %v5523 = vsel %vm335, %v5509, 0.0
        %5524 = vadd.xlane.f32.xlu0 %v5523
        %v5525 = vpop.xlane.xlu0 %5524
        %v5526 = vsel %vm335, %v5510, 0.0
        %5527 = vadd.xlane.f32.xlu0 %v5526
        %v5528 = vpop.xlane.xlu0 %5527
        %v5529 = vmul.f32 %v5513, %v354
        %v5530 = vmul.f32 %v5516, %v354
        %v5531 = vmul.f32 %v5519, %v354
        %v5532 = vmul.f32 %v5522, %v354
        %v5533 = vmul.f32 %v5525, %v354
        %v5534 = vmul.f32 %v5528, %v354
        %v5535 = vadd.f32 %v5529, 1e-05
        %v5536 = vadd.f32 %v5530, 1e-05
        %v5537 = vadd.f32 %v5531, 1e-05
        %v5538 = vadd.f32 %v5532, 1e-05
        %v5539 = vadd.f32 %v5533, 1e-05
        %v5540 = vadd.f32 %v5534, 1e-05
        %v5541 = vrsqrt.pop %v5535
        %v5542 = vrsqrt.pop %v5536
        %v5543 = vrsqrt.pop %v5537
        %v5544 = vrsqrt.pop %v5538
        %v5545 = vrsqrt.pop %v5539
        %v5546 = vrsqrt.pop %v5540
        %v5547 = vmul.f32 %v5499, %v5541
        %v5548 = vmul.f32 %v5500, %v5542
        %v5549 = vmul.f32 %v5501, %v5543
        %v5550 = vmul.f32 %v5502, %v5544
        %v5551 = vmul.f32 %v5503, %v5545
        %v5552 = vmul.f32 %v5504, %v5546
        %v5553 = vlaneseq
        %v5554 = vshrl.u32 %v5553, 7
        %v5555 = vsub.s32 0, %v5554
        %v5556 = vrot.slane %v5473, %v5555
        %v5557 = vmul.f32 %v5547, %v5556
        %v5558 = vmul.f32 %v5548, %v5556
        %v5559 = vmul.f32 %v5549, %v5556
        %v5560 = vmul.f32 %v5550, %v5556
        %v5561 = vmul.f32 %v5551, %v5556
        %v5562 = vmul.f32 %v5552, %v5556
        %v5563 = vlaneseq
        %v5564 = vshrl.u32 %v5563, 7
        %v5565 = vsub.s32 0, %v5564
        %v5566 = vrot.slane %v5474, %v5565
        %v5567 = vadd.f32 %v5557, %v5566
        %v5568 = vadd.f32 %v5558, %v5566
        %v5569 = vadd.f32 %v5559, %v5566
        %v5570 = vadd.f32 %v5560, %v5566
        %v5571 = vadd.f32 %v5561, %v5566
        %v5572 = vadd.f32 %v5562, %v5566
        %v5573 = vld [vmem:[#allocation5 + $0x240] sm:$0xff]
        %v5574 = vld [vmem:[#allocation5 + $0x248] sm:$0xff]
        %v5575 = vld [vmem:[#allocation5 + $0x250] sm:$0xff]
        %v5576 = vld [vmem:[#allocation5 + $0x258] sm:$0xff]
        %v5577 = vld [vmem:[#allocation5 + $0x260] sm:$0x1]
        %v5578 = vlaneseq
        %v5579 = vshrl.u32 %v5578, 7
        %v5580 = vsub.s32 0, %v5579
        %v5581 = vrot.slane %v5577, %v5580
        %v5583 = vsel %vm335, %v5567, 0
        %v5586 = vsel %vm335, %v5568, 0
        %v5589 = vsel %vm335, %v5569, 0
        %v5592 = vsel %vm335, %v5570, 0
        %v5595 = vsel %vm335, %v5571, 0
        %v5598 = vsel %vm335, %v5572, 0
        %5600 = vmatprep.subr.mxu0 0.0
        %5601 = vmatpush1.msra.mxu0 0.0
        %5602 = vmatprep.subr.mxu0 0.0
        %5603 = vmatpush1.msra.mxu0 0.0
        %5604 = vmatprep.subr.mxu0 0.0
        %5605 = vmatpush1.msra.mxu0 0.0
        %5606 = vmatprep.subr.mxu0 0.0
        %5607 = vmatpush1.msra.mxu0 0.0
        %5608 = vmatprep.subr.mxu0 0.0
        %5609 = vmatpush1.msra.mxu0 0.0
        %5610 = vmatprep.subr.mxu0 0.0
        %5611 = vmatpush1.msra.mxu0 0.0
        %5612 = vmatprep.subr.mxu0 0.0
        %5613 = vmatpush1.msra.mxu0 0.0
        %5614 = vmatprep.subr.mxu0 0.0
        %5615 = vmatpush1.msra.mxu0 0.0
        %5616 = vmatprep.subr.mxu0 0.0
        %5617 = vmatpush1.msra.mxu0 0.0
        %5618 = vmatprep.subr.mxu0 0.0
        %5619 = vmatpush1.msra.mxu0 0.0
        %5620 = vmatprep.subr.mxu0 0.0
        %5621 = vmatpush1.msra.mxu0 0.0
        %5622 = vmatprep.subr.mxu0 0.0
        %5623 = vmatpush1.msra.mxu0 0.0
        %5624 = vmatprep.subr.mxu0 0.0
        %5625 = vmatpush1.msra.mxu0 %v5576
        %5626 = vmatprep.subr.mxu0 0.0
        %5627 = vmatpush1.msra.mxu0 %v5575
        %5628 = vmatprep.subr.mxu0 0.0
        %5629 = vmatpush1.msra.mxu0 %v5574
        %5630 = vmatprep.subr.mxu0 0.0
        %5631 = vmatpush1.msra.mxu0 %v5573
        %5632 = vmatprep.subr.mxu0 0.0
        %5633 = vmatpush2.msra.mxu0 0.0
        %5634 = vmatprep.subr.mxu0 0.0
        %5635 = vmatpush2.msra.mxu0 0.0
        %5636 = vmatprep.subr.mxu0 0.0
        %5637 = vmatpush2.msra.mxu0 0.0
        %5638 = vmatprep.subr.mxu0 0.0
        %5639 = vmatpush2.msra.mxu0 0.0
        %5640 = vmatprep.subr.mxu0 0.0
        %5641 = vmatpush2.msra.mxu0 0.0
        %5642 = vmatprep.subr.mxu0 0.0
        %5643 = vmatpush2.msra.mxu0 0.0
        %5644 = vmatprep.subr.mxu0 0.0
        %5645 = vmatpush2.msra.mxu0 0.0
        %5646 = vmatprep.subr.mxu0 0.0
        %5647 = vmatpush2.msra.mxu0 0.0
        %5648 = vmatprep.subr.mxu0 0.0
        %5649 = vmatpush2.msra.mxu0 0.0
        %5650 = vmatprep.subr.mxu0 0.0
        %5651 = vmatpush2.msra.mxu0 0.0
        %5652 = vmatprep.subr.mxu0 0.0
        %5653 = vmatpush2.msra.mxu0 0.0
        %5654 = vmatprep.subr.mxu0 0.0
        %5655 = vmatpush2.msra.mxu0 0.0
        %5656 = vmatprep.subr.mxu0 0.0
        %5657 = vmatpush2.msra.mxu0 0.0
        %5658 = vmatprep.subr.mxu0 0.0
        %5659 = vmatpush2.msra.mxu0 0.0
        %5660 = vmatprep.subr.mxu0 0.0
        %5661 = vmatpush2.msra.mxu0 0.0
        %5662 = vmatprep.subr.mxu0 0.0
        %5663 = vmatpush2.msra.mxu0 0.0
        %5664 = vmatprep.mubr.f32.mxu0 0.0
        %5665 = vmatmul.mubr.f32.gmra.mxu0 %v5583
        %v5666 = vpop.f32.mrf.mxu0
        %v5667 = vadd.f32 %v5581, %v5666
        %v5668 = vpop.f32.mrf.mxu0
        %5669 = vmatprep.mubr.f32.mxu0 0.0
        %5670 = vmatmul.mubr.f32.gmra.mxu0 %v5586
        %v5671 = vpop.f32.mrf.mxu0
        %v5672 = vadd.f32 %v5581, %v5671
        %v5673 = vpop.f32.mrf.mxu0
        %5674 = vmatprep.mubr.f32.mxu0 0.0
        %5675 = vmatmul.mubr.f32.gmra.mxu0 %v5589
        %v5676 = vpop.f32.mrf.mxu0
        %v5677 = vadd.f32 %v5581, %v5676
        %v5678 = vpop.f32.mrf.mxu0
        %5679 = vmatprep.mubr.f32.mxu0 0.0
        %5680 = vmatmul.mubr.f32.gmra.mxu0 %v5592
        %v5681 = vpop.f32.mrf.mxu0
        %v5682 = vadd.f32 %v5581, %v5681
        %v5683 = vpop.f32.mrf.mxu0
        %5684 = vmatprep.mubr.f32.mxu0 0.0
        %5685 = vmatmul.mubr.f32.gmra.mxu0 %v5595
        %v5686 = vpop.f32.mrf.mxu0
        %v5687 = vadd.f32 %v5581, %v5686
        %v5688 = vpop.f32.mrf.mxu0
        %5689 = vmatprep.mubr.f32.mxu0 0.0
        %5690 = vmatmul.mubr.f32.gmra.mxu0 %v5598
        %v5691 = vpop.f32.mrf.mxu0
        %v5692 = vadd.f32 %v5581, %v5691
        %v5693 = vpop.f32.mrf.mxu0
        %5694 = vdwg.mxu0
        %v5695 = vmul.f32 %v5667, 1.702
        %v5696 = vmul.f32 %v5672, 1.702
        %v5697 = vmul.f32 %v5677, 1.702
        %v5698 = vmul.f32 %v5682, 1.702
        %v5699 = vmul.f32 %v5687, 1.702
        %v5700 = vmul.f32 %v5692, 1.702
        %v5701 = vxor.u32 %v5695, 2147483648
        %v5702 = vxor.u32 %v5696, 2147483648
        %v5703 = vxor.u32 %v5697, 2147483648
        %v5704 = vxor.u32 %v5698, 2147483648
        %v5705 = vxor.u32 %v5699, 2147483648
        %v5706 = vxor.u32 %v5700, 2147483648
        %v5707 = vmul.f32 %v5701, 1.442695
        %v5708 = vpow.pop %v5707
        %v5709 = vmul.f32 %v5702, 1.442695
        %v5710 = vpow.pop %v5709
        %v5711 = vmul.f32 %v5703, 1.442695
        %v5712 = vpow.pop %v5711
        %v5713 = vmul.f32 %v5704, 1.442695
        %v5714 = vpow.pop %v5713
        %v5715 = vmul.f32 %v5705, 1.442695
        %v5716 = vpow.pop %v5715
        %v5717 = vmul.f32 %v5706, 1.442695
        %v5718 = vpow.pop %v5717
        %v5719 = vadd.f32 %v5708, 1.0
        %v5720 = vadd.f32 %v5710, 1.0
        %v5721 = vadd.f32 %v5712, 1.0
        %v5722 = vadd.f32 %v5714, 1.0
        %v5723 = vadd.f32 %v5716, 1.0
        %v5724 = vadd.f32 %v5718, 1.0
        %v5725 = vrcp.pop %v5719
        %v5726 = vmul.f32 1.0, %v5725
        %v5727 = vrcp.pop %v5720
        %v5728 = vmul.f32 1.0, %v5727
        %v5729 = vrcp.pop %v5721
        %v5730 = vmul.f32 1.0, %v5729
        %v5731 = vrcp.pop %v5722
        %v5732 = vmul.f32 1.0, %v5731
        %v5733 = vrcp.pop %v5723
        %v5734 = vmul.f32 1.0, %v5733
        %v5735 = vrcp.pop %v5724
        %v5736 = vmul.f32 1.0, %v5735
        %v5737 = vmul.f32 %v5667, %v5726
        %v5738 = vmul.f32 %v5672, %v5728
        %v5739 = vmul.f32 %v5677, %v5730
        %v5740 = vmul.f32 %v5682, %v5732
        %v5741 = vmul.f32 %v5687, %v5734
        %v5742 = vmul.f32 %v5692, %v5736
        %v5743 = vld [vmem:[#allocation5 + $0x268] sm:$0xff]
        %v5744 = vld [vmem:[#allocation5 + $0x270] sm:$0xff]
        %v5745 = vld [vmem:[#allocation5 + $0x278] sm:$0xff]
        %v5746 = vld [vmem:[#allocation5 + $0x280] sm:$0xff]
        %v5747 = vld [vmem:[#allocation5 + $0x288] sm:$0xff]
        %v5748 = vld [vmem:[#allocation5 + $0x290] sm:$0xff]
        %v5749 = vld [vmem:[#allocation5 + $0x298] sm:$0xff]
        %v5750 = vld [vmem:[#allocation5 + $0x2a0] sm:$0xff]
        %v5751 = vld [vmem:[#allocation5 + $0x2a8] sm:$0x1]
        %v5752 = vlaneseq
        %v5753 = vshrl.u32 %v5752, 7
        %v5754 = vsub.s32 0, %v5753
        %v5755 = vrot.slane %v5751, %v5754
        %v5757 = vsel %vm219, %v5737, 0
        %v5760 = vsel %vm219, %v5738, 0
        %v5763 = vsel %vm219, %v5739, 0
        %v5766 = vsel %vm219, %v5740, 0
        %v5769 = vsel %vm219, %v5741, 0
        %v5772 = vsel %vm219, %v5742, 0
        %5774 = vmatprep.subr.mxu0 0.0
        %5775 = vmatpush1.msra.mxu0 0.0
        %5776 = vmatprep.subr.mxu0 0.0
        %5777 = vmatpush1.msra.mxu0 0.0
        %5778 = vmatprep.subr.mxu0 0.0
        %5779 = vmatpush1.msra.mxu0 0.0
        %5780 = vmatprep.subr.mxu0 0.0
        %5781 = vmatpush1.msra.mxu0 0.0
        %5782 = vmatprep.subr.mxu0 0.0
        %5783 = vmatpush1.msra.mxu0 0.0
        %5784 = vmatprep.subr.mxu0 0.0
        %5785 = vmatpush1.msra.mxu0 0.0
        %5786 = vmatprep.subr.mxu0 0.0
        %5787 = vmatpush1.msra.mxu0 0.0
        %5788 = vmatprep.subr.mxu0 0.0
        %5789 = vmatpush1.msra.mxu0 0.0
        %5790 = vmatprep.subr.mxu0 0.0
        %5791 = vmatpush1.msra.mxu0 %v5750
        %5792 = vmatprep.subr.mxu0 0.0
        %5793 = vmatpush1.msra.mxu0 %v5749
        %5794 = vmatprep.subr.mxu0 0.0
        %5795 = vmatpush1.msra.mxu0 %v5748
        %5796 = vmatprep.subr.mxu0 0.0
        %5797 = vmatpush1.msra.mxu0 %v5747
        %5798 = vmatprep.subr.mxu0 0.0
        %5799 = vmatpush1.msra.mxu0 %v5746
        %5800 = vmatprep.subr.mxu0 0.0
        %5801 = vmatpush1.msra.mxu0 %v5745
        %5802 = vmatprep.subr.mxu0 0.0
        %5803 = vmatpush1.msra.mxu0 %v5744
        %5804 = vmatprep.subr.mxu0 0.0
        %5805 = vmatpush1.msra.mxu0 %v5743
        %5806 = vmatprep.subr.mxu0 0.0
        %5807 = vmatpush2.msra.mxu0 0.0
        %5808 = vmatprep.subr.mxu0 0.0
        %5809 = vmatpush2.msra.mxu0 0.0
        %5810 = vmatprep.subr.mxu0 0.0
        %5811 = vmatpush2.msra.mxu0 0.0
        %5812 = vmatprep.subr.mxu0 0.0
        %5813 = vmatpush2.msra.mxu0 0.0
        %5814 = vmatprep.subr.mxu0 0.0
        %5815 = vmatpush2.msra.mxu0 0.0
        %5816 = vmatprep.subr.mxu0 0.0
        %5817 = vmatpush2.msra.mxu0 0.0
        %5818 = vmatprep.subr.mxu0 0.0
        %5819 = vmatpush2.msra.mxu0 0.0
        %5820 = vmatprep.subr.mxu0 0.0
        %5821 = vmatpush2.msra.mxu0 0.0
        %5822 = vmatprep.subr.mxu0 0.0
        %5823 = vmatpush2.msra.mxu0 0.0
        %5824 = vmatprep.subr.mxu0 0.0
        %5825 = vmatpush2.msra.mxu0 0.0
        %5826 = vmatprep.subr.mxu0 0.0
        %5827 = vmatpush2.msra.mxu0 0.0
        %5828 = vmatprep.subr.mxu0 0.0
        %5829 = vmatpush2.msra.mxu0 0.0
        %5830 = vmatprep.subr.mxu0 0.0
        %5831 = vmatpush2.msra.mxu0 0.0
        %5832 = vmatprep.subr.mxu0 0.0
        %5833 = vmatpush2.msra.mxu0 0.0
        %5834 = vmatprep.subr.mxu0 0.0
        %5835 = vmatpush2.msra.mxu0 0.0
        %5836 = vmatprep.subr.mxu0 0.0
        %5837 = vmatpush2.msra.mxu0 0.0
        %5838 = vmatprep.mubr.f32.mxu0 0.0
        %5839 = vmatmul.mubr.f32.gmra.mxu0 %v5757
        %v5840 = vpop.f32.mrf.mxu0
        %v5841 = vadd.f32 %v5755, %v5840
        %v5842 = vpop.f32.mrf.mxu0
        %5843 = vmatprep.mubr.f32.mxu0 0.0
        %5844 = vmatmul.mubr.f32.gmra.mxu0 %v5760
        %v5845 = vpop.f32.mrf.mxu0
        %v5846 = vpop.f32.mrf.mxu0
        %5847 = vmatprep.mubr.f32.mxu0 0.0
        %5848 = vmatmul.mubr.f32.gmra.mxu0 %v5763
        %v5849 = vpop.f32.mrf.mxu0
        %v5850 = vpop.f32.mrf.mxu0
        %5851 = vmatprep.mubr.f32.mxu0 0.0
        %5852 = vmatmul.mubr.f32.gmra.mxu0 %v5766
        %v5853 = vpop.f32.mrf.mxu0
        %v5854 = vadd.f32 %v5755, %v5853
        %v5855 = vpop.f32.mrf.mxu0
        %5856 = vmatprep.mubr.f32.mxu0 0.0
        %5857 = vmatmul.mubr.f32.gmra.mxu0 %v5769
        %v5858 = vpop.f32.mrf.mxu0
        %v5859 = vpop.f32.mrf.mxu0
        %5860 = vmatprep.mubr.f32.mxu0 0.0
        %5861 = vmatmul.mubr.f32.gmra.mxu0 %v5772
        %v5862 = vpop.f32.mrf.mxu0
        %v5863 = vpop.f32.mrf.mxu0
        %5864 = vdwg.mxu0
        %v5865 = vadd.f32 %v5467, %v5841
        %v5866 = vadd.f32 %v5470, %v5854
        %v5868 = vrot.slane %v5866, 7
        %vm5870 = vcmask 1040384
        %v5871 = vsel %vm5870, %v5865, %v5868
        %v5872 = vld [vmem:[#allocation5 + $0x2b0] sm:$0xff]
        %v5873 = vld [vmem:[#allocation5 + $0x2b8] sm:$0xff]
        %v5874 = vld [vmem:[#allocation5 + $0x2c0] sm:$0xff]
        %v5875 = vld [vmem:[#allocation5 + $0x2c8] sm:$0xff]
        %v5876 = vld [vmem:[#allocation5 + $0x2d0] sm:$0x1]
        %v5877 = vlaneseq
        %v5878 = vshrl.u32 %v5877, 7
        %v5879 = vsub.s32 0, %v5878
        %v5880 = vrot.slane %v5876, %v5879
        %v5882 = vsel %vm335, %v5871, 0
        %5884 = vmatprep.subr.mxu0 0.0
        %5885 = vmatpush1.msra.mxu0 0.0
        %5886 = vmatprep.subr.mxu0 0.0
        %5887 = vmatpush1.msra.mxu0 0.0
        %5888 = vmatprep.subr.mxu0 0.0
        %5889 = vmatpush1.msra.mxu0 0.0
        %5890 = vmatprep.subr.mxu0 0.0
        %5891 = vmatpush1.msra.mxu0 0.0
        %5892 = vmatprep.subr.mxu0 0.0
        %5893 = vmatpush1.msra.mxu0 0.0
        %5894 = vmatprep.subr.mxu0 0.0
        %5895 = vmatpush1.msra.mxu0 0.0
        %5896 = vmatprep.subr.mxu0 0.0
        %5897 = vmatpush1.msra.mxu0 0.0
        %5898 = vmatprep.subr.mxu0 0.0
        %5899 = vmatpush1.msra.mxu0 0.0
        %5900 = vmatprep.subr.mxu0 0.0
        %5901 = vmatpush1.msra.mxu0 0.0
        %5902 = vmatprep.subr.mxu0 0.0
        %5903 = vmatpush1.msra.mxu0 0.0
        %5904 = vmatprep.subr.mxu0 0.0
        %5905 = vmatpush1.msra.mxu0 0.0
        %5906 = vmatprep.subr.mxu0 0.0
        %5907 = vmatpush1.msra.mxu0 0.0
        %5908 = vmatprep.subr.mxu0 0.0
        %5909 = vmatpush1.msra.mxu0 %v5875
        %5910 = vmatprep.subr.mxu0 0.0
        %5911 = vmatpush1.msra.mxu0 %v5874
        %5912 = vmatprep.subr.mxu0 0.0
        %5913 = vmatpush1.msra.mxu0 %v5873
        %5914 = vmatprep.subr.mxu0 0.0
        %5915 = vmatpush1.msra.mxu0 %v5872
        %5916 = vmatprep.subr.mxu0 0.0
        %5917 = vmatpush2.msra.mxu0 0.0
        %5918 = vmatprep.subr.mxu0 0.0
        %5919 = vmatpush2.msra.mxu0 0.0
        %5920 = vmatprep.subr.mxu0 0.0
        %5921 = vmatpush2.msra.mxu0 0.0
        %5922 = vmatprep.subr.mxu0 0.0
        %5923 = vmatpush2.msra.mxu0 0.0
        %5924 = vmatprep.subr.mxu0 0.0
        %5925 = vmatpush2.msra.mxu0 0.0
        %5926 = vmatprep.subr.mxu0 0.0
        %5927 = vmatpush2.msra.mxu0 0.0
        %5928 = vmatprep.subr.mxu0 0.0
        %5929 = vmatpush2.msra.mxu0 0.0
        %5930 = vmatprep.subr.mxu0 0.0
        %5931 = vmatpush2.msra.mxu0 0.0
        %5932 = vmatprep.subr.mxu0 0.0
        %5933 = vmatpush2.msra.mxu0 0.0
        %5934 = vmatprep.subr.mxu0 0.0
        %5935 = vmatpush2.msra.mxu0 0.0
        %5936 = vmatprep.subr.mxu0 0.0
        %5937 = vmatpush2.msra.mxu0 0.0
        %5938 = vmatprep.subr.mxu0 0.0
        %5939 = vmatpush2.msra.mxu0 0.0
        %5940 = vmatprep.subr.mxu0 0.0
        %5941 = vmatpush2.msra.mxu0 0.0
        %5942 = vmatprep.subr.mxu0 0.0
        %5943 = vmatpush2.msra.mxu0 0.0
        %5944 = vmatprep.subr.mxu0 0.0
        %5945 = vmatpush2.msra.mxu0 0.0
        %5946 = vmatprep.subr.mxu0 0.0
        %5947 = vmatpush2.msra.mxu0 0.0
        %5948 = vmatprep.mubr.f32.mxu0 0.0
        %5949 = vmatmul.mubr.f32.gmra.mxu0 %v5882
        %v5950 = vpop.f32.mrf.mxu0
        %v5951 = vadd.f32 %v5880, %v5950
        %v5952 = vpop.f32.mrf.mxu0
        %5953 = vdwg.mxu0
        %vm5954 = vcmask 123904
        %5955 = vst.msk [vmem:[%s177] sm:$0x3] %vm5954, %v5951
        %s5956 = sand.u32 %s75, 1
        %s5957 = scalar_lea.sflag [#allocation4], %s5956
        %s5958 = sand.u32 %s75, 1
        %s5959 = smul.addr %s5958, 2
        %s5960 = scalar_lea.vmem [#allocation7], %s5959
        // Predicated region
        $region37: #{tpu_custom_call.1} parent=27 // pred_check
          %p5961 = pneg %p85
        $region38: #{tpu_custom_call.1} parent=27 // pred_check_branch
          %5963 = sbr.rel (%p5961) target = $region40
        $region39: #{tpu_custom_call.1} parent=27 // pred_region
          %s5965 = ssub.s32 32, 32
          %5966 = vsyncadd %s5957, %s5965
          %s5967 = smul.addr %s20, 32
          %s5968 = scalar_lea.hbm %s2, %s5967
          %s5970 = sshll.u32 %s5960, 4
          %s5971 = int_to_ptr.vmem [resolvable:$true] %s5970
          %5973 = dma.vmem_to_hbm [thread:$0]  %s5971, 32, %s5968, %s5957
        $region40: #{tpu_custom_call.1} parent=27 // pred_fallthru
          _
      $region28: #{tpu_custom_call.1} parent=5 // pred_fallthru
        _
      %p5974 = scmp.le.s32.totalorder 2, %s15
      // Predicated region
      $region41: #{tpu_custom_call.1} parent=5 // pred_check
        %p5975 = pneg %p5974
      $region42: #{tpu_custom_call.1} parent=5 // pred_check_branch
        %5977 = sbr.rel (%p5975) target = $region44
      $region43: #{tpu_custom_call.1} parent=5 // pred_region
        %s5978 = ssub.s32 %s15, 2
        // Predicated region
        $region45: #{tpu_custom_call.1} parent=43 // pred_check
          %p5979 = pneg %p91
        $region46: #{tpu_custom_call.1} parent=43 // pred_check_branch
          %5981 = sbr.rel (%p5979) target = $region48
        $region47: #{tpu_custom_call.1} parent=43 // pred_region
          %s5982 = sand.u32 %s76, 1
          %s5983 = scalar_lea.sflag [#allocation4], %s5982
          %s5984 = sand.u32 %s76, 1
          %s5985 = smul.addr %s5984, 2
          %s5986 = scalar_lea.vmem [#allocation7], %s5985
          %5987 = dma.done %s5983, 32
        $region48: #{tpu_custom_call.1} parent=43 // pred_fallthru
          _
      $region44: #{tpu_custom_call.1} parent=5 // pred_fallthru
        _
    $region6: #{tpu_custom_call.1} parent=1 // loop_footer
      %s19 = sadd.s32 1, %s15
    $region7: #{tpu_custom_call.1} parent=1 // loop_footer_branch
      %14 = sbr.rel target = $region3
    $region8: #{tpu_custom_call.1} parent=1 // loop_exit
      _
    %5988 = vsyncpa [#allocation3], 1
    %s5989 = scalar_lea.sflag [#allocation3], 1
    %5990 = vsyncpa %s5989, 1
    %5991 = vsyncpa [#allocation6], 1
    %5992 = vsyncpa [#allocation4], 1
    %s5993 = scalar_lea.sflag [#allocation4], 1
    %5994 = vsyncpa %s5993, 1

</llo_original>
